<compile_context>
chip_gen: v7x
topology: tpu7x:2x2x1
jax: 0.10.0
libtpu: 0.0.40
codegen_flags: <defaults>
</compile_context>

<pallas_src>
import functools
import math

import jax
import jax.numpy as jnp
import numpy as np
from jax.experimental import pallas as pl
from jax.experimental.pallas import tpu as pltpu


# ---------------------------------------------------------------------------
# VMEM limit (generation-aware)
# ---------------------------------------------------------------------------

def _compute_vmem_limit():
    try:
        info = pltpu.get_tpu_info()
        cap = getattr(info, "vmem_capacity_bytes", None)
        if cap:
            # ~3/4 of physical VMEM: ~96 MiB on v5e/v6e (128 MiB), 48 MiB on v7x (64 MiB).
            return int(min(cap * 3 // 4, 100 * 1024 * 1024))
    except Exception:
        pass
    return 48 * 1024 * 1024


_VMEM_LIMIT = _compute_vmem_limit()


# ---------------------------------------------------------------------------
# Pallas kernels
# ---------------------------------------------------------------------------

def convblock_kernel(*refs, normalize, has_bias):
    """Fused conv-as-matmul [+ bias] + InstanceNorm + LeakyReLU for one tile.

    p_ref : (1, P_tile, F)  im2col patches (bf16), F = KH*KW*Cin_pad (lane aligned)
    w_ref : (F, Cout_pad)   flattened HWIO conv weight (bf16, Cout lane padded)
    b_ref : (1, Cout_pad)   bias (f32) -- only present when has_bias
    o_ref : (1, P_tile, Cout_pad)  bf16 activation
    """
    if has_bias:
        p_ref, w_ref, b_ref, o_ref = refs
    else:
        p_ref, w_ref, o_ref = refs
        b_ref = None

    x = p_ref[0]                                                      # (P, F) bf16
    y = jnp.dot(x, w_ref[...], preferred_element_type=jnp.float32)    # (P, Cout) f32
    if has_bias:
        y = y + b_ref[...]
    if normalize:
        # InstanceNorm2d(affine=False, track_running_stats=False), eps=1e-5,
        # biased variance over the spatial axis (axis 0), single-pass stats.
        p = y.shape[0]
        s1 = jnp.sum(y, axis=0, keepdims=True)                        # (1, Cout)
        s2 = jnp.sum(y * y, axis=0, keepdims=True)
        mean = s1 * (1.0 / p)
        var = jnp.maximum(s2 * (1.0 / p) - mean * mean, 0.0)          # clamp >= 0
        y = (y - mean) * jax.lax.rsqrt(var + 1e-5)
    # LeakyReLU(0.2)
    y = jnp.where(y > 0, y, 0.2 * y)
    o_ref[0] = y.astype(o_ref.dtype)


def head_kernel(p_ref, w4_ref, w5_ref, b5_ref, o_ref, *, batch, p_spatial):
    """layer4 (conv + InstanceNorm + LeakyReLU) fused with layer5 + spatial mean.

    Batch is folded into the matmul M. Per-sample stats / broadcasts are done
    with tiny selection-matrix matmuls (iota-built), so no in-kernel reshapes.

    p_ref  : (N*P, F)    im2col patches of layer4's input (bf16)
    w4_ref : (F, 512)    layer4 weight (bf16)
    w5_ref : (512, 128)  layer5 1x1 weight, lane-padded (col 0 real, rest 0)
    b5_ref : (1, 128)    layer5 bias, lane-padded
    o_ref  : (N, 128)    f32 head output (col 0 real)
    """
    np_rows = batch * p_spatial
    x = p_ref[...]                                                    # (NP, F) bf16
    y = jnp.dot(x, w4_ref[...], preferred_element_type=jnp.float32)   # (NP, 512) f32

    # sel  (N, NP): sel[i, j]  = 1  iff row j belongs to sample i.
    # selT (NP, N): its transpose, built directly (no XLU transpose needed).
    row = jax.lax.broadcasted_iota(jnp.int32, (batch, np_rows), 0)
    col = jax.lax.broadcasted_iota(jnp.int32, (batch, np_rows), 1)
    lo = row * p_spatial
    sel = ((col >= lo) & (col < lo + p_spatial)).astype(jnp.float32)  # (N, NP)
    rowT = jax.lax.broadcasted_iota(jnp.int32, (np_rows, batch), 0)
    colT = jax.lax.broadcasted_iota(jnp.int32, (np_rows, batch), 1)
    loT = colT * p_spatial
    selT = ((rowT >= loT) & (rowT < loT + p_spatial)).astype(jnp.float32)  # (NP, N)

    inv_p = 1.0 / p_spatial
    s1 = jnp.dot(sel, y, preferred_element_type=jnp.float32)          # (N, 512)
    s2 = jnp.dot(sel, y * y, preferred_element_type=jnp.float32)
    mean = s1 * inv_p
    var = jnp.maximum(s2 * inv_p - mean * mean, 0.0)
    scale = jax.lax.rsqrt(var + 1e-5)                                 # (N, 512)

    mean_r = jnp.dot(selT, mean, preferred_element_type=jnp.float32)  # (NP, 512)
    scale_r = jnp.dot(selT, scale, preferred_element_type=jnp.float32)
    yn = (y - mean_r) * scale_r
    yn = jnp.where(yn > 0, yn, 0.2 * yn)                              # LeakyReLU(0.2)

    # Per-sample spatial mean, then layer5:  mean(y @ w5 + b5) == mean(y) @ w5 + b5.
    xm = jnp.dot(sel, yn, preferred_element_type=jnp.float32) * inv_p  # (N, 512)
    out = jnp.dot(xm, w5_ref[...], preferred_element_type=jnp.float32) + b5_ref[...]
    o_ref[...] = out.astype(o_ref.dtype)                              # (N, 128)


# ---------------------------------------------------------------------------
# JAX glue (im2col, pallas_call wrappers)
# ---------------------------------------------------------------------------

def _round_up(v, m):
    return (v + m - 1) // m * m


def _extract_patches(x, k, stride, pad):
    """im2col.  x: (N, H, W, C) -> (N, Ho*Wo, K*K*C) with (kh, kw, cin) order."""
    n, h, w, c = x.shape
    xp = jnp.pad(x, ((0, 0), (pad, pad), (pad, pad), (0, 0)))
    ho = (h + 2 * pad - k) // stride + 1
    wo = (w + 2 * pad - k) // stride + 1
    taps = []
    for kh in range(k):
        for kw in range(k):
            taps.append(xp[:, kh:kh + stride * ho:stride,
                            kw:kw + stride * wo:stride, :])
    p = jnp.stack(taps, axis=3)               # (N, Ho, Wo, K*K, C)
    return p.reshape(n, ho * wo, k * k * c), ho, wo


def conv_block(x, w, b, *, stride, normalize, p_tile=None):
    """ConvBlock forward.

    x: (N, H, W, Cx) NHWC; only the first Cin (= w.shape[2]) channels are used,
       so lane-padded activations from the previous layer can be fed directly.
    w: (K, K, Cin, Cout) HWIO.  Returns a (possibly Cout-lane-padded) NHWC bf16
       activation; padded channels are exact zeros.
    """
    n = x.shape[0]
    k, _, cin, cout = w.shape

    # Slice off any lane padding from the previous layer; fuses into the im2col.
    if x.shape[-1] != cin:
        x = x[..., :cin]

    # Lane-align the contraction dim by padding Cin BEFORE im2col
    # (layer1: 6 -> 8 so F = 16*8 = 128).  Exact: padded weights are zero.
    cin_p = _round_up(cin, max(1, 128 // math.gcd(k * k, 128)))
    if cin_p != cin:
        x = jnp.pad(x, ((0, 0), (0, 0), (0, 0), (0, cin_p - cin)))
        w = jnp.pad(w, ((0, 0), (0, 0), (0, cin_p - cin), (0, 0)))

    # bf16 before im2col: halves HBM traffic of the inflated patch tensor.
    patches, ho, wo = _extract_patches(x.astype(jnp.bfloat16), k, stride, pad=1)
    p, f = patches.shape[1], patches.shape[2]          # f = k*k*cin_p (mult of 128)

    # Lane-pad the output channel dim (layer1: 64 -> 128) for unmasked stores.
    c_pad = _round_up(cout, 128)
    wf = w.reshape(f, cout).astype(jnp.bfloat16)
    if c_pad != cout:
        wf = jnp.pad(wf, ((0, 0), (0, c_pad - cout)))

    has_bias = b is not None
    args = [patches, wf]
    in_specs = [
        pl.BlockSpec((1, p_tile_ph := None, f), None),  # placeholder, fixed below
    ]

    # Normalized layers need full-spatial stats per sample -> one P block.
    if p_tile is None or normalize or (p % p_tile != 0):
        p_tile = p
    grid = (n, p // p_tile)

    in_specs = [
        pl.BlockSpec((1, p_tile, f), lambda i, j: (i, j, 0)),
        pl.BlockSpec((f, c_pad), lambda i, j: (0, 0)),
    ]
    if has_bias:
        bb = b.astype(jnp.float32)
        if c_pad != cout:
            bb = jnp.pad(bb, (0, c_pad - cout))
        args.append(bb.reshape(1, c_pad))
        in_specs.append(pl.BlockSpec((1, c_pad), lambda i, j: (0, 0)))

    kern = functools.partial(convblock_kernel, normalize=normalize,
                             has_bias=has_bias)
    out = pl.pallas_call(
        kern,
        out_shape=jax.ShapeDtypeStruct((n, p, c_pad), jnp.bfloat16),
        grid_spec=pltpu.PrefetchScalarGridSpec(
            num_scalar_prefetch=0,
            grid=grid,
            in_specs=in_specs,
            out_specs=pl.BlockSpec((1, p_tile, c_pad), lambda i, j: (i, j, 0)),
        ),
        compiler_params=pltpu.CompilerParams(
            dimension_semantics=("parallel", "parallel"),
            vmem_limit_bytes=_VMEM_LIMIT),
    )(*args)

    # Keep the lane-padded activation (no standalone HBM slice copy); the next
    # layer slices channels as part of its own im2col.
    return out.reshape(n, ho, wo, c_pad)


def conv_block_head(x, w4, w5, b5):
    """layer4 (4x4 stride-1 conv, InstanceNorm, LeakyReLU) fused with
    layer5 (1x1 conv 512->1 + bias) and the spatial mean.  x: (N, H, W, >=256)."""
    n = x.shape[0]
    k, _, cin, cout = w4.shape
    if x.shape[-1] != cin:
        x = x[..., :cin]
    patches, ho, wo = _extract_patches(x.astype(jnp.bfloat16), k, 1, pad=1)
    p, f = patches.shape[1], patches.shape[2]
    patches = patches.reshape(n * p, f)            # fold batch into the matmul M
    wf = w4.reshape(f, cout).astype(jnp.bfloat16)

    # Lane-pad the 1-wide head output to 128 (column 0 is the real output).
    w5p = jnp.zeros((cout, 128), jnp.float32).at[:, 0:1].set(w5)
    b5p = jnp.zeros((1, 128), jnp.float32).at[0, 0].set(b5[0, 0])

    kern = functools.partial(head_kernel, batch=n, p_spatial=p)
    out = pl.pallas_call(
        kern,
        out_shape=jax.ShapeDtypeStruct((n, 128), jnp.float32),
        grid_spec=pltpu.PrefetchScalarGridSpec(
            num_scalar_prefetch=0,
            grid=(1,),
            in_specs=[
                pl.BlockSpec((n * p, f), lambda i: (0, 0)),
                pl.BlockSpec((f, cout), lambda i: (0, 0)),
                pl.BlockSpec((cout, 128), lambda i: (0, 0)),
                pl.BlockSpec((1, 128), lambda i: (0, 0)),
            ],
            out_specs=pl.BlockSpec((n, 128), lambda i: (0, 0)),
        ),
        compiler_params=pltpu.CompilerParams(
            dimension_semantics=("arbitrary",),
            vmem_limit_bytes=_VMEM_LIMIT),
    )(patches, wf, w5p, b5p)
    return out[:, 0:1]                                                # (N, 1)


# ---------------------------------------------------------------------------
# Parameters (deterministic synthetic init, matches torch module shapes)
# ---------------------------------------------------------------------------

def init_params(key, in_channels):
    ks = jax.random.split(key, 5)
    f32 = jnp.float32
    return {
        # Conv2d weights ~ N(0, 0.02), stored HWIO.
        "w1": 0.02 * jax.random.normal(ks[0], (4, 4, in_channels, 64), f32),
        "b1": 0.02 * jax.random.normal(ks[1], (64,), f32),   # layer1 has bias
        "w2": 0.02 * jax.random.normal(ks[2], (4, 4, 64, 128), f32),   # bias=False
        "w3": 0.02 * jax.random.normal(ks[3], (4, 4, 128, 256), f32),  # bias=False
        "w4": 0.02 * jax.random.normal(ks[4], (4, 4, 256, 512), f32),  # bias=False
        "w5": 0.02 * jax.random.normal(jax.random.fold_in(key, 5), (512, 1), f32),
        "b5": 0.02 * jax.random.normal(jax.random.fold_in(key, 6), (1, 1), f32),
    }


# ---------------------------------------------------------------------------
# Discriminator forward
# ---------------------------------------------------------------------------

@jax.jit
def discriminator_forward(params, src_image, trg_image):
    # Inputs are NCHW (PyTorch convention); concat over channels then go NHWC.
    x = jnp.concatenate([src_image, trg_image], axis=1)      # (N, 2C, H, W)
    x = jnp.transpose(x, (0, 2, 3, 1))                       # NHWC
    x = conv_block(x, params["w1"], params["b1"], stride=2, normalize=False,
                   p_tile=512)
    x = conv_block(x, params["w2"], None, stride=2, normalize=True)
    x = conv_block(x, params["w3"], None, stride=2, normalize=True)
    x = conv_block_head(x, params["w4"], params["w5"], params["b5"])  # (N, 1)
    return x


# Pure-JAX reference (no Pallas) with the same bf16 conv-operand convention,
# for a correctness check of the Pallas implementation.
@jax.jit
def reference_forward(params, src_image, trg_image):
    x = jnp.concatenate([src_image, trg_image], axis=1)
    x = jnp.transpose(x, (0, 2, 3, 1))

    def conv(y, w, stride):
        return jax.lax.conv_general_dilated(
            y.astype(jnp.bfloat16), w.astype(jnp.bfloat16),
            (stride, stride), [(1, 1), (1, 1)],
            dimension_numbers=("NHWC", "HWIO", "NHWC"),
            preferred_element_type=jnp.float32)

    def inorm(y):
        m = jnp.mean(y, axis=(1, 2), keepdims=True)
        v = jnp.mean(jnp.square(y - m), axis=(1, 2), keepdims=True)
        return (y - m) * jax.lax.rsqrt(v + 1e-5)

    def lrelu(y):
        return jnp.where(y > 0, y, 0.2 * y)

    y = lrelu(conv(x, params["w1"], 2) + params["b1"].reshape(1, 1, 1, -1))
    y = lrelu(inorm(conv(y, params["w2"], 2)))
    y = lrelu(inorm(conv(y, params["w3"], 2)))
    y = lrelu(inorm(conv(y, params["w4"], 1)))
    y = jnp.einsum("nhwc,co->nhwo", y, params["w5"]) + params["b5"].reshape(1, 1, 1, -1)
    return jnp.mean(y, axis=(1, 2))


if __name__ == "__main__":
    key = jax.random.PRNGKey(0)
    k_src, k_trg, k_par = jax.random.split(key, 3)

    N, C, H, W = 2, 3, 32, 32                 # each image has 3 channels
    src = jax.random.normal(k_src, (N, C, H, W), jnp.float32)
    trg = jax.random.normal(k_trg, (N, C, H, W), jnp.float32)

    params = init_params(k_par, in_channels=2 * C)   # Discriminator(in_channels=6)

    out = discriminator_forward(params, src, trg)
    out = jax.block_until_ready(out)

    ref = jax.block_until_ready(reference_forward(params, src, trg))
    assert out.shape == (N, 1), out.shape
    np.testing.assert_allclose(np.asarray(out), np.asarray(ref),
                               rtol=2e-3, atol=2e-3)

    print("KERNEL_OK")
</pallas_src>

<mosaic_0001>
module attributes {stable_mosaic.version = 11 : i64} {
  func.func @convblock_kernel(%arg0: i32, %arg1: i32, %arg2: memref<1x256x128xbf16, #tpu.memory_space<vmem>>, %arg3: memref<128x128xbf16, #tpu.memory_space<vmem>>, %arg4: memref<1x128xf32, #tpu.memory_space<vmem>>, %arg5: memref<1x256x128xbf16, #tpu.memory_space<vmem>>) attributes {dimension_semantics = [#tpu.dimension_semantics<parallel>, #tpu.dimension_semantics<parallel>], iteration_bounds = array<i64: 2, 1>, scalar_prefetch = 0 : i64, scratch_operands = 0 : i64, tpu.core_type = #tpu.core_type<tc>, window_params = [{transform_indices = @transform_0, window_bounds = array<i64: 1, 256, 128>}, {pipeline_mode = #tpu.pipeline_mode<synchronous>, transform_indices = @transform_1, window_bounds = array<i64: 128, 128>}, {pipeline_mode = #tpu.pipeline_mode<synchronous>, transform_indices = @transform_2, window_bounds = array<i64: 1, 128>}, {transform_indices = @transform_3, window_bounds = array<i64: 1, 256, 128>}]} {
    %c0 = arith.constant 0 : index
    %c0_0 = arith.constant 0 : index
    %c0_1 = arith.constant 0 : index
    %0 = vector.load %arg2[%c0, %c0_0, %c0_1] : memref<1x256x128xbf16, #tpu.memory_space<vmem>>, vector<1x256x128xbf16>
    %1 = vector.shape_cast %0 : vector<1x256x128xbf16> to vector<256x128xbf16>
    %c0_2 = arith.constant 0 : index
    %c0_3 = arith.constant 0 : index
    %2 = vector.load %arg3[%c0_2, %c0_3] : memref<128x128xbf16, #tpu.memory_space<vmem>>, vector<128x128xbf16>
    %cst = arith.constant dense<0.000000e+00> : vector<256x128xf32>
    %3 = tpu.matmul %1, %2, %cst {dimension_numbers = #tpu.dot_dimension_numbers<[1], [0], [0], [1], [0, 0, 1, 1], [], []>} : vector<256x128xbf16>, vector<128x128xbf16>, vector<256x128xf32> -> vector<256x128xf32>
    %c0_4 = arith.constant 0 : index
    %c0_5 = arith.constant 0 : index
    %4 = vector.load %arg4[%c0_4, %c0_5] : memref<1x128xf32, #tpu.memory_space<vmem>>, vector<1x128xf32>
    %5 = vector.broadcast %4 : vector<1x128xf32> to vector<256x128xf32>
    %6 = arith.addf %3, %5 : vector<256x128xf32>
    %cst_6 = arith.constant 0.000000e+00 : f32
    %7 = vector.broadcast %cst_6 : f32 to vector<256x128xf32>
    %8 = arith.cmpf ogt, %6, %7 : vector<256x128xf32>
    %cst_7 = arith.constant 2.000000e-01 : f32
    %9 = vector.broadcast %cst_7 : f32 to vector<256x128xf32>
    %10 = arith.mulf %9, %6 : vector<256x128xf32>
    %11 = arith.select %8, %6, %10 : vector<256x128xi1>, vector<256x128xf32>
    %12 = arith.truncf %11 : vector<256x128xf32> to vector<256x128xbf16>
    %c0_8 = arith.constant 0 : index
    %c0_9 = arith.constant 0 : index
    %c0_10 = arith.constant 0 : index
    %13 = vector.load %arg5[%c0_8, %c0_9, %c0_10] : memref<1x256x128xbf16, #tpu.memory_space<vmem>>, vector<1x256x128xbf16>
    %14 = vector.shape_cast %13 : vector<1x256x128xbf16> to vector<256x128xbf16>
    %15 = vector.shape_cast %12 : vector<256x128xbf16> to vector<1x256x128xbf16>
    tpu.vector_store %arg5[%c0_8, %c0_9, %c0_10], %15 {strides = array<i32>} : memref<1x256x128xbf16, #tpu.memory_space<vmem>>, vector<1x256x128xbf16>,
    return
  }
  func.func @transform_0(%arg0: i32, %arg1: i32) -> (i32, i32, i32) {
    %c0_i32 = arith.constant 0 : i32
    %c0_i32_0 = arith.constant 0 : i32
    return %arg0, %arg1, %c0_i32 : i32, i32, i32
  }
  func.func @transform_1(%arg0: i32, %arg1: i32) -> (i32, i32) {
    %c0_i32 = arith.constant 0 : i32
    %c0_i32_0 = arith.constant 0 : i32
    %c0_i32_1 = arith.constant 0 : i32
    return %c0_i32, %c0_i32_0 : i32, i32
  }
  func.func @transform_2(%arg0: i32, %arg1: i32) -> (i32, i32) {
    %c0_i32 = arith.constant 0 : i32
    %c0_i32_0 = arith.constant 0 : i32
    %c0_i32_1 = arith.constant 0 : i32
    return %c0_i32, %c0_i32_0 : i32, i32
  }
  func.func @transform_3(%arg0: i32, %arg1: i32) -> (i32, i32, i32) {
    %c0_i32 = arith.constant 0 : i32
    %c0_i32_0 = arith.constant 0 : i32
    return %arg0, %arg1, %c0_i32 : i32, i32, i32
  }
}

module attributes {stable_mosaic.version = 11 : i64} {
  func.func @convblock_kernel(%arg0: i32, %arg1: i32, %arg2: memref<1x64x1024xbf16, #tpu.memory_space<vmem>>, %arg3: memref<1024x128xbf16, #tpu.memory_space<vmem>>, %arg4: memref<1x64x128xbf16, #tpu.memory_space<vmem>>) attributes {dimension_semantics = [#tpu.dimension_semantics<parallel>, #tpu.dimension_semantics<parallel>], iteration_bounds = array<i64: 2, 1>, scalar_prefetch = 0 : i64, scratch_operands = 0 : i64, tpu.core_type = #tpu.core_type<tc>, window_params = [{transform_indices = @transform_0, window_bounds = array<i64: 1, 64, 1024>}, {pipeline_mode = #tpu.pipeline_mode<synchronous>, transform_indices = @transform_1, window_bounds = array<i64: 1024, 128>}, {transform_indices = @transform_2, window_bounds = array<i64: 1, 64, 128>}]} {
    %c0 = arith.constant 0 : index
    %c0_0 = arith.constant 0 : index
    %c0_1 = arith.constant 0 : index
    %0 = vector.load %arg2[%c0, %c0_0, %c0_1] : memref<1x64x1024xbf16, #tpu.memory_space<vmem>>, vector<1x64x1024xbf16>
    %1 = vector.shape_cast %0 : vector<1x64x1024xbf16> to vector<64x1024xbf16>
    %c0_2 = arith.constant 0 : index
    %c0_3 = arith.constant 0 : index
    %2 = vector.load %arg3[%c0_2, %c0_3] : memref<1024x128xbf16, #tpu.memory_space<vmem>>, vector<1024x128xbf16>
    %cst = arith.constant dense<0.000000e+00> : vector<64x128xf32>
    %3 = tpu.matmul %1, %2, %cst {dimension_numbers = #tpu.dot_dimension_numbers<[1], [0], [0], [1], [0, 0, 1, 1], [], []>} : vector<64x1024xbf16>, vector<1024x128xbf16>, vector<64x128xf32> -> vector<64x128xf32>
    %cst_4 = arith.constant dense<0.000000e+00> : vector<128xf32>
    %4 = vector.multi_reduction <add>, %3, %cst_4 [0] : vector<64x128xf32> to vector<128xf32>
    %5 = vector.shape_cast %4 : vector<128xf32> to vector<1x128xf32>
    %6 = arith.mulf %3, %3 : vector<64x128xf32>
    %cst_5 = arith.constant dense<0.000000e+00> : vector<128xf32>
    %7 = vector.multi_reduction <add>, %6, %cst_5 [0] : vector<64x128xf32> to vector<128xf32>
    %8 = vector.shape_cast %7 : vector<128xf32> to vector<1x128xf32>
    %cst_6 = arith.constant 1.562500e-02 : f32
    %9 = vector.broadcast %cst_6 : f32 to vector<1x128xf32>
    %10 = arith.mulf %5, %9 : vector<1x128xf32>
    %cst_7 = arith.constant 1.562500e-02 : f32
    %11 = vector.broadcast %cst_7 : f32 to vector<1x128xf32>
    %12 = arith.mulf %8, %11 : vector<1x128xf32>
    %13 = arith.mulf %10, %10 : vector<1x128xf32>
    %14 = arith.subf %12, %13 : vector<1x128xf32>
    %cst_8 = arith.constant 0.000000e+00 : f32
    %15 = vector.broadcast %cst_8 : f32 to vector<1x128xf32>
    %16 = arith.maximumf %14, %15 : vector<1x128xf32>
    %17 = vector.broadcast %10 : vector<1x128xf32> to vector<64x128xf32>
    %18 = arith.subf %3, %17 : vector<64x128xf32>
    %cst_9 = arith.constant 9.99999974E-6 : f32
    %19 = vector.broadcast %cst_9 : f32 to vector<1x128xf32>
    %20 = arith.addf %16, %19 : vector<1x128xf32>
    %21 = math.rsqrt %20 : vector<1x128xf32>
    %22 = vector.broadcast %21 : vector<1x128xf32> to vector<64x128xf32>
    %23 = arith.mulf %18, %22 : vector<64x128xf32>
    %cst_10 = arith.constant 0.000000e+00 : f32
    %24 = vector.broadcast %cst_10 : f32 to vector<64x128xf32>
    %25 = arith.cmpf ogt, %23, %24 : vector<64x128xf32>
    %cst_11 = arith.constant 2.000000e-01 : f32
    %26 = vector.broadcast %cst_11 : f32 to vector<64x128xf32>
    %27 = arith.mulf %26, %23 : vector<64x128xf32>
    %28 = arith.select %25, %23, %27 : vector<64x128xi1>, vector<64x128xf32>
    %29 = arith.truncf %28 : vector<64x128xf32> to vector<64x128xbf16>
    %c0_12 = arith.constant 0 : index
    %c0_13 = arith.constant 0 : index
    %c0_14 = arith.constant 0 : index
    %30 = vector.load %arg4[%c0_12, %c0_13, %c0_14] : memref<1x64x128xbf16, #tpu.memory_space<vmem>>, vector<1x64x128xbf16>
    %31 = vector.shape_cast %30 : vector<1x64x128xbf16> to vector<64x128xbf16>
    %32 = vector.shape_cast %29 : vector<64x128xbf16> to vector<1x64x128xbf16>
    tpu.vector_store %arg4[%c0_12, %c0_13, %c0_14], %32 {strides = array<i32>} : memref<1x64x128xbf16, #tpu.memory_space<vmem>>, vector<1x64x128xbf16>,
    return
  }
  func.func @transform_0(%arg0: i32, %arg1: i32) -> (i32, i32, i32) {
    %c0_i32 = arith.constant 0 : i32
    %c0_i32_0 = arith.constant 0 : i32
    return %arg0, %arg1, %c0_i32 : i32, i32, i32
  }
  func.func @transform_1(%arg0: i32, %arg1: i32) -> (i32, i32) {
    %c0_i32 = arith.constant 0 : i32
    %c0_i32_0 = arith.constant 0 : i32
    %c0_i32_1 = arith.constant 0 : i32
    return %c0_i32, %c0_i32_0 : i32, i32
  }
  func.func @transform_2(%arg0: i32, %arg1: i32) -> (i32, i32, i32) {
    %c0_i32 = arith.constant 0 : i32
    %c0_i32_0 = arith.constant 0 : i32
    return %arg0, %arg1, %c0_i32 : i32, i32, i32
  }
}

module attributes {stable_mosaic.version = 11 : i64} {
  func.func @convblock_kernel(%arg0: i32, %arg1: i32, %arg2: memref<1x16x2048xbf16, #tpu.memory_space<vmem>>, %arg3: memref<2048x256xbf16, #tpu.memory_space<vmem>>, %arg4: memref<1x16x256xbf16, #tpu.memory_space<vmem>>) attributes {dimension_semantics = [#tpu.dimension_semantics<parallel>, #tpu.dimension_semantics<parallel>], iteration_bounds = array<i64: 2, 1>, scalar_prefetch = 0 : i64, scratch_operands = 0 : i64, tpu.core_type = #tpu.core_type<tc>, window_params = [{transform_indices = @transform_0, window_bounds = array<i64: 1, 16, 2048>}, {pipeline_mode = #tpu.pipeline_mode<synchronous>, transform_indices = @transform_1, window_bounds = array<i64: 2048, 256>}, {transform_indices = @transform_2, window_bounds = array<i64: 1, 16, 256>}]} {
    %c0 = arith.constant 0 : index
    %c0_0 = arith.constant 0 : index
    %c0_1 = arith.constant 0 : index
    %0 = vector.load %arg2[%c0, %c0_0, %c0_1] : memref<1x16x2048xbf16, #tpu.memory_space<vmem>>, vector<1x16x2048xbf16>
    %1 = vector.shape_cast %0 : vector<1x16x2048xbf16> to vector<16x2048xbf16>
    %c0_2 = arith.constant 0 : index
    %c0_3 = arith.constant 0 : index
    %2 = vector.load %arg3[%c0_2, %c0_3] : memref<2048x256xbf16, #tpu.memory_space<vmem>>, vector<2048x256xbf16>
    %cst = arith.constant dense<0.000000e+00> : vector<16x256xf32>
    %3 = tpu.matmul %1, %2, %cst {dimension_numbers = #tpu.dot_dimension_numbers<[1], [0], [0], [1], [0, 0, 1, 1], [], []>} : vector<16x2048xbf16>, vector<2048x256xbf16>, vector<16x256xf32> -> vector<16x256xf32>
    %cst_4 = arith.constant dense<0.000000e+00> : vector<256xf32>
    %4 = vector.multi_reduction <add>, %3, %cst_4 [0] : vector<16x256xf32> to vector<256xf32>
    %5 = vector.shape_cast %4 : vector<256xf32> to vector<1x256xf32>
    %6 = arith.mulf %3, %3 : vector<16x256xf32>
    %cst_5 = arith.constant dense<0.000000e+00> : vector<256xf32>
    %7 = vector.multi_reduction <add>, %6, %cst_5 [0] : vector<16x256xf32> to vector<256xf32>
    %8 = vector.shape_cast %7 : vector<256xf32> to vector<1x256xf32>
    %cst_6 = arith.constant 6.250000e-02 : f32
    %9 = vector.broadcast %cst_6 : f32 to vector<1x256xf32>
    %10 = arith.mulf %5, %9 : vector<1x256xf32>
    %cst_7 = arith.constant 6.250000e-02 : f32
    %11 = vector.broadcast %cst_7 : f32 to vector<1x256xf32>
    %12 = arith.mulf %8, %11 : vector<1x256xf32>
    %13 = arith.mulf %10, %10 : vector<1x256xf32>
    %14 = arith.subf %12, %13 : vector<1x256xf32>
    %cst_8 = arith.constant 0.000000e+00 : f32
    %15 = vector.broadcast %cst_8 : f32 to vector<1x256xf32>
    %16 = arith.maximumf %14, %15 : vector<1x256xf32>
    %17 = vector.broadcast %10 : vector<1x256xf32> to vector<16x256xf32>
    %18 = arith.subf %3, %17 : vector<16x256xf32>
    %cst_9 = arith.constant 9.99999974E-6 : f32
    %19 = vector.broadcast %cst_9 : f32 to vector<1x256xf32>
    %20 = arith.addf %16, %19 : vector<1x256xf32>
    %21 = math.rsqrt %20 : vector<1x256xf32>
    %22 = vector.broadcast %21 : vector<1x256xf32> to vector<16x256xf32>
    %23 = arith.mulf %18, %22 : vector<16x256xf32>
    %cst_10 = arith.constant 0.000000e+00 : f32
    %24 = vector.broadcast %cst_10 : f32 to vector<16x256xf32>
    %25 = arith.cmpf ogt, %23, %24 : vector<16x256xf32>
    %cst_11 = arith.constant 2.000000e-01 : f32
    %26 = vector.broadcast %cst_11 : f32 to vector<16x256xf32>
    %27 = arith.mulf %26, %23 : vector<16x256xf32>
    %28 = arith.select %25, %23, %27 : vector<16x256xi1>, vector<16x256xf32>
    %29 = arith.truncf %28 : vector<16x256xf32> to vector<16x256xbf16>
    %c0_12 = arith.constant 0 : index
    %c0_13 = arith.constant 0 : index
    %c0_14 = arith.constant 0 : index
    %30 = vector.load %arg4[%c0_12, %c0_13, %c0_14] : memref<1x16x256xbf16, #tpu.memory_space<vmem>>, vector<1x16x256xbf16>
    %31 = vector.shape_cast %30 : vector<1x16x256xbf16> to vector<16x256xbf16>
    %32 = vector.shape_cast %29 : vector<16x256xbf16> to vector<1x16x256xbf16>
    tpu.vector_store %arg4[%c0_12, %c0_13, %c0_14], %32 {strides = array<i32>} : memref<1x16x256xbf16, #tpu.memory_space<vmem>>, vector<1x16x256xbf16>,
    return
  }
  func.func @transform_0(%arg0: i32, %arg1: i32) -> (i32, i32, i32) {
    %c0_i32 = arith.constant 0 : i32
    %c0_i32_0 = arith.constant 0 : i32
    return %arg0, %arg1, %c0_i32 : i32, i32, i32
  }
  func.func @transform_1(%arg0: i32, %arg1: i32) -> (i32, i32) {
    %c0_i32 = arith.constant 0 : i32
    %c0_i32_0 = arith.constant 0 : i32
    %c0_i32_1 = arith.constant 0 : i32
    return %c0_i32, %c0_i32_0 : i32, i32
  }
  func.func @transform_2(%arg0: i32, %arg1: i32) -> (i32, i32, i32) {
    %c0_i32 = arith.constant 0 : i32
    %c0_i32_0 = arith.constant 0 : i32
    return %arg0, %arg1, %c0_i32 : i32, i32, i32
  }
}

module attributes {stable_mosaic.version = 11 : i64} {
  func.func @head_kernel(%arg0: i32, %arg1: memref<18x4096xbf16, #tpu.memory_space<vmem>>, %arg2: memref<4096x512xbf16, #tpu.memory_space<vmem>>, %arg3: memref<512x128xf32, #tpu.memory_space<vmem>>, %arg4: memref<1x128xf32, #tpu.memory_space<vmem>>, %arg5: memref<2x128xf32, #tpu.memory_space<vmem>>) attributes {dimension_semantics = [#tpu.dimension_semantics<arbitrary>], iteration_bounds = array<i64: 1>, scalar_prefetch = 0 : i64, scratch_operands = 0 : i64, tpu.core_type = #tpu.core_type<tc>, window_params = [{pipeline_mode = #tpu.pipeline_mode<synchronous>, transform_indices = @transform_0, window_bounds = array<i64: 18, 4096>}, {pipeline_mode = #tpu.pipeline_mode<synchronous>, transform_indices = @transform_1, window_bounds = array<i64: 4096, 512>}, {pipeline_mode = #tpu.pipeline_mode<synchronous>, transform_indices = @transform_2, window_bounds = array<i64: 512, 128>}, {pipeline_mode = #tpu.pipeline_mode<synchronous>, transform_indices = @transform_3, window_bounds = array<i64: 1, 128>}, {pipeline_mode = #tpu.pipeline_mode<synchronous>, transform_indices = @transform_4, window_bounds = array<i64: 2, 128>}]} {
    %c0 = arith.constant 0 : index
    %c0_0 = arith.constant 0 : index
    %0 = vector.load %arg1[%c0, %c0_0] : memref<18x4096xbf16, #tpu.memory_space<vmem>>, vector<18x4096xbf16>
    %c0_1 = arith.constant 0 : index
    %c0_2 = arith.constant 0 : index
    %1 = vector.load %arg2[%c0_1, %c0_2] : memref<4096x512xbf16, #tpu.memory_space<vmem>>, vector<4096x512xbf16>
    %cst = arith.constant dense<0.000000e+00> : vector<18x512xf32>
    %2 = tpu.matmul %0, %1, %cst {dimension_numbers = #tpu.dot_dimension_numbers<[1], [0], [0], [1], [0, 0, 1, 1], [], []>} : vector<18x4096xbf16>, vector<4096x512xbf16>, vector<18x512xf32> -> vector<18x512xf32>
    %3 = tpu.iota {dimensions = array<i32: 0>} : vector<2x18xi32>
    %4 = tpu.iota {dimensions = array<i32: 1>} : vector<2x18xi32>
    %c9_i32 = arith.constant 9 : i32
    %5 = vector.broadcast %c9_i32 : i32 to vector<2x18xi32>
    %6 = arith.muli %3, %5 : vector<2x18xi32>
    %7 = arith.cmpi sge, %4, %6 : vector<2x18xi32>
    %c9_i32_3 = arith.constant 9 : i32
    %8 = vector.broadcast %c9_i32_3 : i32 to vector<2x18xi32>
    %9 = arith.addi %6, %8 : vector<2x18xi32>
    %10 = arith.cmpi slt, %4, %9 : vector<2x18xi32>
    %11 = arith.andi %7, %10 : vector<2x18xi1>
    %12 = arith.extui %11 : vector<2x18xi1> to vector<2x18xi32>
    %13 = arith.sitofp %12 : vector<2x18xi32> to vector<2x18xf32>
    %14 = tpu.iota {dimensions = array<i32: 0>} : vector<18x2xi32>
    %15 = tpu.iota {dimensions = array<i32: 1>} : vector<18x2xi32>
    %c9_i32_4 = arith.constant 9 : i32
    %16 = vector.broadcast %c9_i32_4 : i32 to vector<18x2xi32>
    %17 = arith.muli %15, %16 : vector<18x2xi32>
    %18 = arith.cmpi sge, %14, %17 : vector<18x2xi32>
    %c9_i32_5 = arith.constant 9 : i32
    %19 = vector.broadcast %c9_i32_5 : i32 to vector<18x2xi32>
    %20 = arith.addi %17, %19 : vector<18x2xi32>
    %21 = arith.cmpi slt, %14, %20 : vector<18x2xi32>
    %22 = arith.andi %18, %21 : vector<18x2xi1>
    %23 = arith.extui %22 : vector<18x2xi1> to vector<18x2xi32>
    %24 = arith.sitofp %23 : vector<18x2xi32> to vector<18x2xf32>
    %cst_6 = arith.constant dense<0.000000e+00> : vector<2x512xf32>
    %25 = tpu.matmul %13, %2, %cst_6 {dimension_numbers = #tpu.dot_dimension_numbers<[1], [0], [0], [1], [0, 0, 1, 1], [], []>} : vector<2x18xf32>, vector<18x512xf32>, vector<2x512xf32> -> vector<2x512xf32>
    %26 = arith.mulf %2, %2 : vector<18x512xf32>
    %cst_7 = arith.constant dense<0.000000e+00> : vector<2x512xf32>
    %27 = tpu.matmul %13, %26, %cst_7 {dimension_numbers = #tpu.dot_dimension_numbers<[1], [0], [0], [1], [0, 0, 1, 1], [], []>} : vector<2x18xf32>, vector<18x512xf32>, vector<2x512xf32> -> vector<2x512xf32>
    %cst_8 = arith.constant 0.111111112 : f32
    %28 = vector.broadcast %cst_8 : f32 to vector<2x512xf32>
    %29 = arith.mulf %25, %28 : vector<2x512xf32>
    %cst_9 = arith.constant 0.111111112 : f32
    %30 = vector.broadcast %cst_9 : f32 to vector<2x512xf32>
    %31 = arith.mulf %27, %30 : vector<2x512xf32>
    %32 = arith.mulf %29, %29 : vector<2x512xf32>
    %33 = arith.subf %31, %32 : vector<2x512xf32>
    %cst_10 = arith.constant 0.000000e+00 : f32
    %34 = vector.broadcast %cst_10 : f32 to vector<2x512xf32>
    %35 = arith.maximumf %33, %34 : vector<2x512xf32>
    %cst_11 = arith.constant 9.99999974E-6 : f32
    %36 = vector.broadcast %cst_11 : f32 to vector<2x512xf32>
    %37 = arith.addf %35, %36 : vector<2x512xf32>
    %38 = math.rsqrt %37 : vector<2x512xf32>
    %cst_12 = arith.constant dense<0.000000e+00> : vector<18x512xf32>
    %39 = tpu.matmul %24, %29, %cst_12 {dimension_numbers = #tpu.dot_dimension_numbers<[1], [0], [0], [1], [0, 0, 1, 1], [], []>} : vector<18x2xf32>, vector<2x512xf32>, vector<18x512xf32> -> vector<18x512xf32>
    %cst_13 = arith.constant dense<0.000000e+00> : vector<18x512xf32>
    %40 = tpu.matmul %24, %38, %cst_13 {dimension_numbers = #tpu.dot_dimension_numbers<[1], [0], [0], [1], [0, 0, 1, 1], [], []>} : vector<18x2xf32>, vector<2x512xf32>, vector<18x512xf32> -> vector<18x512xf32>
    %41 = arith.subf %2, %39 : vector<18x512xf32>
    %42 = arith.mulf %41, %40 : vector<18x512xf32>
    %cst_14 = arith.constant 0.000000e+00 : f32
    %43 = vector.broadcast %cst_14 : f32 to vector<18x512xf32>
    %44 = arith.cmpf ogt, %42, %43 : vector<18x512xf32>
    %cst_15 = arith.constant 2.000000e-01 : f32
    %45 = vector.broadcast %cst_15 : f32 to vector<18x512xf32>
    %46 = arith.mulf %45, %42 : vector<18x512xf32>
    %47 = arith.select %44, %42, %46 : vector<18x512xi1>, vector<18x512xf32>
    %cst_16 = arith.constant dense<0.000000e+00> : vector<2x512xf32>
    %48 = tpu.matmul %13, %47, %cst_16 {dimension_numbers = #tpu.dot_dimension_numbers<[1], [0], [0], [1], [0, 0, 1, 1], [], []>} : vector<2x18xf32>, vector<18x512xf32>, vector<2x512xf32> -> vector<2x512xf32>
    %cst_17 = arith.constant 0.111111112 : f32
    %49 = vector.broadcast %cst_17 : f32 to vector<2x512xf32>
    %50 = arith.mulf %48, %49 : vector<2x512xf32>
    %c0_18 = arith.constant 0 : index
    %c0_19 = arith.constant 0 : index
    %51 = vector.load %arg3[%c0_18, %c0_19] : memref<512x128xf32, #tpu.memory_space<vmem>>, vector<512x128xf32>
    %cst_20 = arith.constant dense<0.000000e+00> : vector<2x128xf32>
    %52 = tpu.matmul %50, %51, %cst_20 {dimension_numbers = #tpu.dot_dimension_numbers<[1], [0], [0], [1], [0, 0, 1, 1], [], []>} : vector<2x512xf32>, vector<512x128xf32>, vector<2x128xf32> -> vector<2x128xf32>
    %c0_21 = arith.constant 0 : index
    %c0_22 = arith.constant 0 : index
    %53 = vector.load %arg4[%c0_21, %c0_22] : memref<1x128xf32, #tpu.memory_space<vmem>>, vector<1x128xf32>
    %54 = vector.broadcast %53 : vector<1x128xf32> to vector<2x128xf32>
    %55 = arith.addf %52, %54 : vector<2x128xf32>
    %c0_23 = arith.constant 0 : index
    %c0_24 = arith.constant 0 : index
    %56 = vector.load %arg5[%c0_23, %c0_24] : memref<2x128xf32, #tpu.memory_space<vmem>>, vector<2x128xf32>
    tpu.vector_store %arg5[%c0_23, %c0_24], %55 {strides = array<i32>} : memref<2x128xf32, #tpu.memory_space<vmem>>, vector<2x128xf32>,
    return
  }
  func.func @transform_0(%arg0: i32) -> (i32, i32) {
    %c0_i32 = arith.constant 0 : i32
    %c0_i32_0 = arith.constant 0 : i32
    %c0_i32_1 = arith.constant 0 : i32
    return %c0_i32, %c0_i32_0 : i32, i32
  }
  func.func @transform_1(%arg0: i32) -> (i32, i32) {
    %c0_i32 = arith.constant 0 : i32
    %c0_i32_0 = arith.constant 0 : i32
    %c0_i32_1 = arith.constant 0 : i32
    return %c0_i32, %c0_i32_0 : i32, i32
  }
  func.func @transform_2(%arg0: i32) -> (i32, i32) {
    %c0_i32 = arith.constant 0 : i32
    %c0_i32_0 = arith.constant 0 : i32
    %c0_i32_1 = arith.constant 0 : i32
    return %c0_i32, %c0_i32_0 : i32, i32
  }
  func.func @transform_3(%arg0: i32) -> (i32, i32) {
    %c0_i32 = arith.constant 0 : i32
    %c0_i32_0 = arith.constant 0 : i32
    %c0_i32_1 = arith.constant 0 : i32
    return %c0_i32, %c0_i32_0 : i32, i32
  }
  func.func @transform_4(%arg0: i32) -> (i32, i32) {
    %c0_i32 = arith.constant 0 : i32
    %c0_i32_0 = arith.constant 0 : i32
    %c0_i32_1 = arith.constant 0 : i32
    return %c0_i32, %c0_i32_0 : i32, i32
  }
}

</mosaic_0001>

<llo_original>
// kernel: discriminator_forward.4
$region0: #{discriminator_forward.4}
  #allocation0 [shape = 'u32[]', space=smem, size = 0x4, offset = 0x4, fixed_abs, tag = 'smem constant byte address 0x4 - core index']
  #allocation1 [shape = 'u32[144,128]{1,0:T(1,128)}', space=vmem, size = 0x12000, scoped, tag = 'internal scratch']
  %s0 = inlined_call_operand.vmem [shape: bf16[2,256,128], index: 0, kind: input, shape index: {}]
  %s1 = inlined_call_operand.vmem [shape: bf16[128,128], index: 1, kind: input, shape index: {}]
  %s2 = inlined_call_operand.vmem [shape: f32[1,128], index: 2, kind: input, shape index: {}]
  %s3 = inlined_call_operand.vmem [shape: bf16[2,256,128], index: 3, kind: output, shape index: {}]
  %s4 = sld [smem:[#allocation0]]
  $region45: #{discriminator_forward.4} parent=0
    _
  %s6 = ssub.s32 1, %s4
  %s7 = scalar_select 0, %s6, %s4
  loop: start=0, step=1, limit=4
  $region2: #{discriminator_forward.4} parent=0 // loop_pre_header
    _
  $region3: #{discriminator_forward.4} parent=0 // loop_header
    %s9 = sphi 0, %s13
    %p10 = scmp.ge.s32.totalorder %s9, 4
    %s16 = sphi 0, %s28
    %s17 = sphi 0, %s24
    %s18 = sphi 0, %s16
    %s19 = sphi 0, %s17
    %s20 = sphi 0, %s18
    %s21 = sphi 0, %s19
    %s33 = sphi 0, %s35
    %s36 = sphi 0, %s33
    %s37 = sphi 0, %s36
    %s53 = sphi 0, %s37
    %s57 = sphi 0, %s57
    %s59 = sphi 0, %s57
    %s60 = sphi 0, %s59
    %s74 = sphi 0, %s60
    %s78 = sphi 0, %s78
    %s80 = sphi 0, %s78
    %s81 = sphi 0, %s80
    %s95 = sphi 0, %s81
    %s103 = sphi 0, %s105
    %s106 = sphi 0, %s103
    %s107 = sphi 0, %s106
    %s123 = sphi 0, %s107
  $region4: #{discriminator_forward.4} parent=0 // loop_header_branch
    %12 = sbr.rel (%p10) target = $region8
  $region5: #{discriminator_forward.4} parent=0 // loop_body
    %s14 = ssub.s32 %s9, 1
    %s15 = ssub.s32 %s9, 2
    %s22 = sadd.s32 1, %s17
    %p23 = scmp.ge.s32.totalorder %s22, 1
    %s24 = scalar_select %p23, 0, %s22
    %s25 = sadd.s32 1, %s16
    %s26 = scalar_select %p23, %s25, %s16
    %p27 = scmp.ge.s32.totalorder %s26, 2
    %s28 = scalar_select %p27, 0, %s26
    %s29 = ssub.s32 %s16, %s28
    %s30 = ssub.s32 %s17, %s24
    %s31 = sor.u32 %s29, %s30
    %p32 = scmp.eq.s32.totalorder %s31, 0
    %s34 = sadd.s32 %s33, 1
    %s35 = scalar_select %p32, %s33, %s34
    %p38 = pneg %p32
    %p39 = scmp.eq.s32.totalorder %s9, 1
    %p40 = por %p38, %p39
    %p41 = scmp.ne.s32.totalorder %s33, %s36
    %p42 = scmp.eq.s32.totalorder %s9, 0
    %p43 = por %p41, %p42
    %p44 = scmp.ne.s32.totalorder %s33, %s36
    %p45 = scmp.eq.s32.totalorder %s14, 1
    %p46 = por %p44, %p45
    %p47 = scmp.ne.s32.totalorder %s36, %s37
    %p48 = scmp.eq.s32.totalorder %s14, 0
    %p49 = por %p47, %p48
    %p50 = scmp.ne.s32.totalorder %s36, %s37
    %p51 = scmp.eq.s32.totalorder %s15, 1
    %p52 = por %p50, %p51
    %p54 = scmp.ne.s32.totalorder %s37, %s53
    %p55 = scmp.eq.s32.totalorder %s15, 0
    %p56 = por %p54, %p55
    %s58 = sadd.s32 %s57, 1
    %p61 = scmp.eq.s32.totalorder %s9, 1
    %p62 = scmp.ne.s32.totalorder %s57, %s59
    %p63 = scmp.eq.s32.totalorder %s9, 0
    %p64 = por %p62, %p63
    %p65 = scmp.ne.s32.totalorder %s57, %s59
    %p66 = scmp.eq.s32.totalorder %s14, 1
    %p67 = por %p65, %p66
    %p68 = scmp.ne.s32.totalorder %s59, %s60
    %p69 = scmp.eq.s32.totalorder %s14, 0
    %p70 = por %p68, %p69
    %p71 = scmp.ne.s32.totalorder %s59, %s60
    %p72 = scmp.eq.s32.totalorder %s15, 1
    %p73 = por %p71, %p72
    %p75 = scmp.ne.s32.totalorder %s60, %s74
    %p76 = scmp.eq.s32.totalorder %s15, 0
    %p77 = por %p75, %p76
    %s79 = sadd.s32 %s78, 1
    %p82 = scmp.eq.s32.totalorder %s9, 1
    %p83 = scmp.ne.s32.totalorder %s78, %s80
    %p84 = scmp.eq.s32.totalorder %s9, 0
    %p85 = por %p83, %p84
    %p86 = scmp.ne.s32.totalorder %s78, %s80
    %p87 = scmp.eq.s32.totalorder %s14, 1
    %p88 = por %p86, %p87
    %p89 = scmp.ne.s32.totalorder %s80, %s81
    %p90 = scmp.eq.s32.totalorder %s14, 0
    %p91 = por %p89, %p90
    %p92 = scmp.ne.s32.totalorder %s80, %s81
    %p93 = scmp.eq.s32.totalorder %s15, 1
    %p94 = por %p92, %p93
    %p96 = scmp.ne.s32.totalorder %s81, %s95
    %p97 = scmp.eq.s32.totalorder %s15, 0
    %p98 = por %p96, %p97
    %s99 = ssub.s32 %s16, %s28
    %s100 = ssub.s32 %s17, %s24
    %s101 = sor.u32 %s99, %s100
    %p102 = scmp.eq.s32.totalorder %s101, 0
    %s104 = sadd.s32 %s103, 1
    %s105 = scalar_select %p102, %s103, %s104
    %p108 = pneg %p102
    %p109 = scmp.eq.s32.totalorder %s9, 1
    %p110 = por %p108, %p109
    %p111 = scmp.ne.s32.totalorder %s103, %s106
    %p112 = scmp.eq.s32.totalorder %s9, 0
    %p113 = por %p111, %p112
    %p114 = scmp.ne.s32.totalorder %s103, %s106
    %p115 = scmp.eq.s32.totalorder %s14, 1
    %p116 = por %p114, %p115
    %p117 = scmp.ne.s32.totalorder %s106, %s107
    %p118 = scmp.eq.s32.totalorder %s14, 0
    %p119 = por %p117, %p118
    %p120 = scmp.ne.s32.totalorder %s106, %s107
    %p121 = scmp.eq.s32.totalorder %s15, 1
    %p122 = por %p120, %p121
    %p124 = scmp.ne.s32.totalorder %s107, %s123
    %p125 = scmp.eq.s32.totalorder %s15, 0
    %p126 = por %p124, %p125
    %p127 = scmp.le.s32.totalorder 1, %s9
    %p128 = scmp.lt.s32.totalorder %s9, 3
    %p129 = pnand %p127, %p128
    %p130 = pneg %p129
    // Predicated region
    $region9: #{discriminator_forward.4} parent=5 // pred_check
      _
    $region10: #{discriminator_forward.4} parent=5 // pred_check_branch
      %132 = sbr.rel (%p129) target = $region12
    $region11: #{discriminator_forward.4} parent=5 // pred_region
      %s133 = ssub.s32 %s9, 1
      // Predicated region
      $region13: #{discriminator_forward.4} parent=11 // pred_check
        %p134 = pneg %p70
      $region14: #{discriminator_forward.4} parent=11 // pred_check_branch
        %136 = sbr.rel (%p134) target = $region16
      $region15: #{discriminator_forward.4} parent=11 // pred_region
        _
      $region16: #{discriminator_forward.4} parent=11 // pred_fallthru
        _
      // Predicated region
      $region17: #{discriminator_forward.4} parent=11 // pred_check
        %p137 = pneg %p91
      $region18: #{discriminator_forward.4} parent=11 // pred_check_branch
        %139 = sbr.rel (%p137) target = $region20
      $region19: #{discriminator_forward.4} parent=11 // pred_region
        _
      $region20: #{discriminator_forward.4} parent=11 // pred_fallthru
        _
    $region12: #{discriminator_forward.4} parent=5 // pred_fallthru
      _
    %p140 = scmp.lt.s32.totalorder %s9, 2
    // Predicated region
    $region21: #{discriminator_forward.4} parent=5 // pred_check
      %p141 = pneg %p140
    $region22: #{discriminator_forward.4} parent=5 // pred_check_branch
      %143 = sbr.rel (%p141) target = $region24
    $region23: #{discriminator_forward.4} parent=5 // pred_region
      // Predicated region
      $region25: #{discriminator_forward.4} parent=23 // pred_check
        %p144 = pneg %p43
      $region26: #{discriminator_forward.4} parent=23 // pred_check_branch
        %146 = sbr.rel (%p144) target = $region28
      $region27: #{discriminator_forward.4} parent=23 // pred_region
        %s147 = smul.u32 32, %s17
        %p148 = scmp.lt.s32.totalorder %s16, 1
        %s149 = scalar_select %p148, %s16, 1
        %p150 = scmp.lt.s32.totalorder %s147, 31
        %s151 = scalar_select %p150, %s147, 31
        %s152 = smul.addr %s149, 32
        %s153 = sadd.s32 %s151, %s152
        %s154 = smul.addr %s153, 4
        %s155 = scalar_lea.vmem %s0, %s154
        %s156 = smul.u32 32, %s17
      $region28: #{discriminator_forward.4} parent=23 // pred_fallthru
        _
    $region24: #{discriminator_forward.4} parent=5 // pred_fallthru
      _
    %p157 = scmp.le.s32.totalorder 1, %s9
    %p158 = scmp.lt.s32.totalorder %s9, 3
    %p159 = pnand %p157, %p158
    %p160 = pneg %p159
    // Predicated region
    $region29: #{discriminator_forward.4} parent=5 // pred_check
      _
    $region30: #{discriminator_forward.4} parent=5 // pred_check_branch
      %162 = sbr.rel (%p159) target = $region32
    $region31: #{discriminator_forward.4} parent=5 // pred_region
      %s163 = ssub.s32 %s9, 1
      %s164 = smul.u32 32, %s19
      %p165 = scmp.lt.s32.totalorder %s18, 1
      %s166 = scalar_select %p165, %s18, 1
      %p167 = scmp.lt.s32.totalorder %s164, 31
      %s168 = scalar_select %p167, %s164, 31
      %s169 = smul.addr %s166, 32
      %s170 = sadd.s32 %s168, %s169
      %s171 = smul.addr %s170, 4
      %s172 = scalar_lea.vmem %s0, %s171
      %p173 = pneg %p49
      %p174 = pneg %p46
      %p175 = pneg %p70
      %p176 = pneg %p67
      %p177 = pneg %p91
      %p178 = pneg %p88
      %p179 = pneg %p119
      %p180 = pneg %p116
      %s181 = smul.u32 32, %s19
      %p182 = scmp.lt.s32.totalorder %s18, 1
      %s183 = scalar_select %p182, %s18, 1
      %p184 = scmp.lt.s32.totalorder %s181, 31
      %s185 = scalar_select %p184, %s181, 31
      %s186 = smul.addr %s183, 32
      %s187 = sadd.s32 %s185, %s186
      %s188 = smul.addr %s187, 4
      %s189 = scalar_lea.vmem %s3, %s188
      %s190 = smul.u32 32, %s19
      %p191 = scmp.lt.s32.totalorder %s18, 1
      %s192 = scalar_select %p191, %s18, 1
      %p193 = scmp.lt.s32.totalorder %s190, 31
      %s194 = scalar_select %p193, %s190, 31
      %s195 = smul.addr %s192, 32
      %s196 = sadd.s32 %s194, %s195
      %s197 = smul.addr %s196, 4
      %s198 = scalar_lea.vmem %s0, %s197
      %s199 = smul.u32 32, %s19
      %s200 = smul.u32 32, %s19
      %p201 = scmp.lt.s32.totalorder %s18, 1
      %s202 = scalar_select %p201, %s18, 1
      %p203 = scmp.lt.s32.totalorder %s200, 31
      %s204 = scalar_select %p203, %s200, 31
      %s205 = smul.addr %s202, 32
      %s206 = sadd.s32 %s204, %s205
      %s207 = smul.addr %s206, 4
      %s208 = scalar_lea.vmem %s3, %s207
      %s209 = smul.u32 32, %s19
      %v211 = vld [vmem:[%s198] sm:$0xf]
      %v212 = vld [vmem:[%s198 + $0x4] sm:$0xf]
      %v213 = vld [vmem:[%s198 + $0x8] sm:$0xf]
      %v214 = vld [vmem:[%s198 + $0xc] sm:$0xf]
      %v215 = vld [vmem:[%s198 + $0x10] sm:$0xf]
      %v216 = vld [vmem:[%s198 + $0x14] sm:$0xf]
      %v217 = vld [vmem:[%s198 + $0x18] sm:$0xf]
      %v218 = vld [vmem:[%s198 + $0x1c] sm:$0xf]
      %v219 = vld [vmem:[%s198 + $0x20] sm:$0xf]
      %v220 = vld [vmem:[%s198 + $0x24] sm:$0xf]
      %v221 = vld [vmem:[%s198 + $0x28] sm:$0xf]
      %v222 = vld [vmem:[%s198 + $0x2c] sm:$0xf]
      %v223 = vld [vmem:[%s198 + $0x30] sm:$0xf]
      %v224 = vld [vmem:[%s198 + $0x34] sm:$0xf]
      %v225 = vld [vmem:[%s198 + $0x38] sm:$0xf]
      %v226 = vld [vmem:[%s198 + $0x3c] sm:$0xf]
      %v227 = vld [vmem:[%s198 + $0x40] sm:$0xf]
      %v228 = vld [vmem:[%s198 + $0x44] sm:$0xf]
      %v229 = vld [vmem:[%s198 + $0x48] sm:$0xf]
      %v230 = vld [vmem:[%s198 + $0x4c] sm:$0xf]
      %v231 = vld [vmem:[%s198 + $0x50] sm:$0xf]
      %v232 = vld [vmem:[%s198 + $0x54] sm:$0xf]
      %v233 = vld [vmem:[%s198 + $0x58] sm:$0xf]
      %v234 = vld [vmem:[%s198 + $0x5c] sm:$0xf]
      %v235 = vld [vmem:[%s198 + $0x60] sm:$0xf]
      %v236 = vld [vmem:[%s198 + $0x64] sm:$0xf]
      %v237 = vld [vmem:[%s198 + $0x68] sm:$0xf]
      %v238 = vld [vmem:[%s198 + $0x6c] sm:$0xf]
      %v239 = vld [vmem:[%s198 + $0x70] sm:$0xf]
      %v240 = vld [vmem:[%s198 + $0x74] sm:$0xf]
      %v241 = vld [vmem:[%s198 + $0x78] sm:$0xf]
      %v242 = vld [vmem:[%s198 + $0x7c] sm:$0xf]
      %v243 = vld [vmem:[%s1] sm:$0xf]
      %v244 = vld [vmem:[%s1 + $0x4] sm:$0xf]
      %v245 = vld [vmem:[%s1 + $0x8] sm:$0xf]
      %v246 = vld [vmem:[%s1 + $0xc] sm:$0xf]
      %v247 = vld [vmem:[%s1 + $0x10] sm:$0xf]
      %v248 = vld [vmem:[%s1 + $0x14] sm:$0xf]
      %v249 = vld [vmem:[%s1 + $0x18] sm:$0xf]
      %v250 = vld [vmem:[%s1 + $0x1c] sm:$0xf]
      %v251 = vld [vmem:[%s1 + $0x20] sm:$0xf]
      %v252 = vld [vmem:[%s1 + $0x24] sm:$0xf]
      %v253 = vld [vmem:[%s1 + $0x28] sm:$0xf]
      %v254 = vld [vmem:[%s1 + $0x2c] sm:$0xf]
      %v255 = vld [vmem:[%s1 + $0x30] sm:$0xf]
      %v256 = vld [vmem:[%s1 + $0x34] sm:$0xf]
      %v257 = vld [vmem:[%s1 + $0x38] sm:$0xf]
      %v258 = vld [vmem:[%s1 + $0x3c] sm:$0xf]
      %v259 = vld [vmem:[%s2] sm:$0x1]
      %v261 = vlaneseq
      %v262 = vshrl.u32 %v261, 7
      %v263 = vsub.s32 0, %v262
      %v264 = vrot.slane %v259, %v263
      %v298 = vunpack.c.l.b16 %v211
      %v299 = vunpack.c.l.b16 %v212
      %v300 = vunpack.c.l.b16 %v213
      %v301 = vunpack.c.l.b16 %v214
      %v302 = vunpack.c.l.b16 %v215
      %v303 = vunpack.c.l.b16 %v216
      %v304 = vunpack.c.l.b16 %v217
      %v305 = vunpack.c.l.b16 %v218
      %v306 = vunpack.c.l.b16 %v219
      %v307 = vunpack.c.l.b16 %v220
      %v308 = vunpack.c.l.b16 %v221
      %v309 = vunpack.c.l.b16 %v222
      %v310 = vunpack.c.l.b16 %v223
      %v311 = vunpack.c.l.b16 %v224
      %v312 = vunpack.c.l.b16 %v225
      %v313 = vunpack.c.l.b16 %v226
      %v314 = vunpack.c.l.b16 %v227
      %v315 = vunpack.c.l.b16 %v228
      %v316 = vunpack.c.l.b16 %v229
      %v317 = vunpack.c.l.b16 %v230
      %v318 = vunpack.c.l.b16 %v231
      %v319 = vunpack.c.l.b16 %v232
      %v320 = vunpack.c.l.b16 %v233
      %v321 = vunpack.c.l.b16 %v234
      %v322 = vunpack.c.l.b16 %v235
      %v323 = vunpack.c.l.b16 %v236
      %v324 = vunpack.c.l.b16 %v237
      %v325 = vunpack.c.l.b16 %v238
      %v326 = vunpack.c.l.b16 %v239
      %v327 = vunpack.c.l.b16 %v240
      %v328 = vunpack.c.l.b16 %v241
      %v329 = vunpack.c.l.b16 %v242
      %v330 = vpack.c.b16 %v299, %v298
      %v331 = vpack.c.b16 %v301, %v300
      %v332 = vpack.c.b16 %v303, %v302
      %v333 = vpack.c.b16 %v305, %v304
      %v334 = vpack.c.b16 %v307, %v306
      %v335 = vpack.c.b16 %v309, %v308
      %v336 = vpack.c.b16 %v311, %v310
      %v337 = vpack.c.b16 %v313, %v312
      %v338 = vpack.c.b16 %v315, %v314
      %v339 = vpack.c.b16 %v317, %v316
      %v340 = vpack.c.b16 %v319, %v318
      %v341 = vpack.c.b16 %v321, %v320
      %v342 = vpack.c.b16 %v323, %v322
      %v343 = vpack.c.b16 %v325, %v324
      %v344 = vpack.c.b16 %v327, %v326
      %v345 = vpack.c.b16 %v329, %v328
      %v378 = vunpack.c.l.b16 %v243
      %v379 = vunpack.c.l.b16 %v244
      %v380 = vunpack.c.l.b16 %v245
      %v381 = vunpack.c.l.b16 %v246
      %v382 = vunpack.c.l.b16 %v247
      %v383 = vunpack.c.l.b16 %v248
      %v384 = vunpack.c.l.b16 %v249
      %v385 = vunpack.c.l.b16 %v250
      %v386 = vunpack.c.l.b16 %v251
      %v387 = vunpack.c.l.b16 %v252
      %v388 = vunpack.c.l.b16 %v253
      %v389 = vunpack.c.l.b16 %v254
      %v390 = vunpack.c.l.b16 %v255
      %v391 = vunpack.c.l.b16 %v256
      %v392 = vunpack.c.l.b16 %v257
      %v393 = vunpack.c.l.b16 %v258
      %v394 = vpack.c.b16 %v379, %v378
      %v395 = vpack.c.b16 %v381, %v380
      %v396 = vpack.c.b16 %v383, %v382
      %v397 = vpack.c.b16 %v385, %v384
      %v398 = vpack.c.b16 %v387, %v386
      %v399 = vpack.c.b16 %v389, %v388
      %v400 = vpack.c.b16 %v391, %v390
      %v401 = vpack.c.b16 %v393, %v392
      %410 = vmatprep.subr.bf16.mxu0 0
      %411 = vmatpush1.bf16.msra.mxu0 %v394
      %412 = vmatprep.subr.bf16.mxu0 0
      %413 = vmatpush1.bf16.msra.mxu0 %v395
      %414 = vmatprep.subr.bf16.mxu0 0
      %415 = vmatpush1.bf16.msra.mxu0 %v396
      %416 = vmatprep.subr.bf16.mxu0 0
      %417 = vmatpush1.bf16.msra.mxu0 %v397
      %418 = vmatprep.subr.bf16.mxu0 0
      %419 = vmatpush1.bf16.msra.mxu0 %v398
      %420 = vmatprep.subr.bf16.mxu0 0
      %421 = vmatpush1.bf16.msra.mxu0 %v399
      %422 = vmatprep.subr.bf16.mxu0 0
      %423 = vmatpush1.bf16.msra.mxu0 %v400
      %424 = vmatprep.subr.bf16.mxu0 0
      %425 = vmatpush1.bf16.msra.mxu0 %v401
      %426 = vmatprep.subr.bf16.mxu0 0
      %427 = vmatpush1.bf16.msra.mxu0 0
      %428 = vmatprep.subr.bf16.mxu0 0
      %429 = vmatpush1.bf16.msra.mxu0 0
      %430 = vmatprep.subr.bf16.mxu0 0
      %431 = vmatpush1.bf16.msra.mxu0 0
      %432 = vmatprep.subr.bf16.mxu0 0
      %433 = vmatpush1.bf16.msra.mxu0 0
      %434 = vmatprep.subr.bf16.mxu0 0
      %435 = vmatpush1.bf16.msra.mxu0 0
      %436 = vmatprep.subr.bf16.mxu0 0
      %437 = vmatpush1.bf16.msra.mxu0 0
      %438 = vmatprep.subr.bf16.mxu0 0
      %439 = vmatpush1.bf16.msra.mxu0 0
      %440 = vmatprep.subr.bf16.mxu0 0
      %441 = vmatpush1.bf16.msra.mxu0 0
      %442 = vmatprep.mubr.bf16.mxu0 0
      %443 = vmatmul.mubr.bf16.gmra.mrb[0].mxu0 %v330
      %v444 = vpop.f32.mrb[0].mxu0
      %v445 = vadd.f32 %v264, %v444
      %v446 = vpop.f32.mrb[0].mxu0
      %v447 = vpop.f32.mrb[0].mxu0
      %v448 = vadd.f32 %v264, %v447
      %v449 = vpop.f32.mrb[0].mxu0
      %450 = vmatprep.mubr.bf16.mxu0 0
      %451 = vmatmul.mubr.bf16.gmra.mrb[0].mxu0 %v331
      %v452 = vpop.f32.mrb[0].mxu0
      %v453 = vadd.f32 %v264, %v452
      %v454 = vpop.f32.mrb[0].mxu0
      %v455 = vpop.f32.mrb[0].mxu0
      %v456 = vadd.f32 %v264, %v455
      %v457 = vpop.f32.mrb[0].mxu0
      %458 = vmatprep.mubr.bf16.mxu0 0
      %459 = vmatmul.mubr.bf16.gmra.mrb[0].mxu0 %v332
      %v460 = vpop.f32.mrb[0].mxu0
      %v461 = vadd.f32 %v264, %v460
      %v462 = vpop.f32.mrb[0].mxu0
      %v463 = vpop.f32.mrb[0].mxu0
      %v464 = vadd.f32 %v264, %v463
      %v465 = vpop.f32.mrb[0].mxu0
      %466 = vmatprep.mubr.bf16.mxu0 0
      %467 = vmatmul.mubr.bf16.gmra.mrb[0].mxu0 %v333
      %v468 = vpop.f32.mrb[0].mxu0
      %v469 = vadd.f32 %v264, %v468
      %v470 = vpop.f32.mrb[0].mxu0
      %v471 = vpop.f32.mrb[0].mxu0
      %v472 = vadd.f32 %v264, %v471
      %v473 = vpop.f32.mrb[0].mxu0
      %474 = vmatprep.mubr.bf16.mxu0 0
      %475 = vmatmul.mubr.bf16.gmra.mrb[0].mxu0 %v334
      %v476 = vpop.f32.mrb[0].mxu0
      %v477 = vadd.f32 %v264, %v476
      %v478 = vpop.f32.mrb[0].mxu0
      %v479 = vpop.f32.mrb[0].mxu0
      %v480 = vadd.f32 %v264, %v479
      %v481 = vpop.f32.mrb[0].mxu0
      %482 = vmatprep.mubr.bf16.mxu0 0
      %483 = vmatmul.mubr.bf16.gmra.mrb[0].mxu0 %v335
      %v484 = vpop.f32.mrb[0].mxu0
      %v485 = vadd.f32 %v264, %v484
      %v486 = vpop.f32.mrb[0].mxu0
      %v487 = vpop.f32.mrb[0].mxu0
      %v488 = vadd.f32 %v264, %v487
      %v489 = vpop.f32.mrb[0].mxu0
      %490 = vmatprep.mubr.bf16.mxu0 0
      %491 = vmatmul.mubr.bf16.gmra.mrb[0].mxu0 %v336
      %v492 = vpop.f32.mrb[0].mxu0
      %v493 = vadd.f32 %v264, %v492
      %v494 = vpop.f32.mrb[0].mxu0
      %v495 = vpop.f32.mrb[0].mxu0
      %v496 = vadd.f32 %v264, %v495
      %v497 = vpop.f32.mrb[0].mxu0
      %498 = vmatprep.mubr.bf16.mxu0 0
      %499 = vmatmul.mubr.bf16.gmra.mrb[0].mxu0 %v337
      %v500 = vpop.f32.mrb[0].mxu0
      %v501 = vadd.f32 %v264, %v500
      %v502 = vpop.f32.mrb[0].mxu0
      %v503 = vpop.f32.mrb[0].mxu0
      %v504 = vadd.f32 %v264, %v503
      %v505 = vpop.f32.mrb[0].mxu0
      %506 = vmatprep.mubr.bf16.mxu0 0
      %507 = vmatmul.mubr.bf16.gmra.mrb[0].mxu0 %v338
      %v508 = vpop.f32.mrb[0].mxu0
      %v509 = vadd.f32 %v264, %v508
      %v510 = vpop.f32.mrb[0].mxu0
      %v511 = vpop.f32.mrb[0].mxu0
      %v512 = vadd.f32 %v264, %v511
      %v513 = vpop.f32.mrb[0].mxu0
      %514 = vmatprep.mubr.bf16.mxu0 0
      %515 = vmatmul.mubr.bf16.gmra.mrb[0].mxu0 %v339
      %v516 = vpop.f32.mrb[0].mxu0
      %v517 = vadd.f32 %v264, %v516
      %v518 = vpop.f32.mrb[0].mxu0
      %v519 = vpop.f32.mrb[0].mxu0
      %v520 = vadd.f32 %v264, %v519
      %v521 = vpop.f32.mrb[0].mxu0
      %522 = vmatprep.mubr.bf16.mxu0 0
      %523 = vmatmul.mubr.bf16.gmra.mrb[0].mxu0 %v340
      %v524 = vpop.f32.mrb[0].mxu0
      %v525 = vadd.f32 %v264, %v524
      %v526 = vpop.f32.mrb[0].mxu0
      %v527 = vpop.f32.mrb[0].mxu0
      %v528 = vadd.f32 %v264, %v527
      %v529 = vpop.f32.mrb[0].mxu0
      %530 = vmatprep.mubr.bf16.mxu0 0
      %531 = vmatmul.mubr.bf16.gmra.mrb[0].mxu0 %v341
      %v532 = vpop.f32.mrb[0].mxu0
      %v533 = vadd.f32 %v264, %v532
      %v534 = vpop.f32.mrb[0].mxu0
      %v535 = vpop.f32.mrb[0].mxu0
      %v536 = vadd.f32 %v264, %v535
      %v537 = vpop.f32.mrb[0].mxu0
      %538 = vmatprep.mubr.bf16.mxu0 0
      %539 = vmatmul.mubr.bf16.gmra.mrb[0].mxu0 %v342
      %v540 = vpop.f32.mrb[0].mxu0
      %v541 = vadd.f32 %v264, %v540
      %v542 = vpop.f32.mrb[0].mxu0
      %v543 = vpop.f32.mrb[0].mxu0
      %v544 = vadd.f32 %v264, %v543
      %v545 = vpop.f32.mrb[0].mxu0
      %546 = vmatprep.mubr.bf16.mxu0 0
      %547 = vmatmul.mubr.bf16.gmra.mrb[0].mxu0 %v343
      %v548 = vpop.f32.mrb[0].mxu0
      %v549 = vadd.f32 %v264, %v548
      %v550 = vpop.f32.mrb[0].mxu0
      %v551 = vpop.f32.mrb[0].mxu0
      %v552 = vadd.f32 %v264, %v551
      %v553 = vpop.f32.mrb[0].mxu0
      %554 = vmatprep.mubr.bf16.mxu0 0
      %555 = vmatmul.mubr.bf16.gmra.mrb[0].mxu0 %v344
      %v556 = vpop.f32.mrb[0].mxu0
      %v557 = vadd.f32 %v264, %v556
      %v558 = vpop.f32.mrb[0].mxu0
      %v559 = vpop.f32.mrb[0].mxu0
      %v560 = vadd.f32 %v264, %v559
      %v561 = vpop.f32.mrb[0].mxu0
      %562 = vmatprep.mubr.bf16.mxu0 0
      %563 = vmatmul.mubr.bf16.gmra.mrb[0].mxu0 %v345
      %v564 = vpop.f32.mrb[0].mxu0
      %v565 = vadd.f32 %v264, %v564
      %v566 = vpop.f32.mrb[0].mxu0
      %v567 = vpop.f32.mrb[0].mxu0
      %v568 = vadd.f32 %v264, %v567
      %v569 = vpop.f32.mrb[0].mxu0
      %570 = vdwg.mxu0
      %vm571 = vcmp.gt.f32.partialorder %v445, 0.0
      %vm572 = vcmp.gt.f32.partialorder %v448, 0.0
      %vm573 = vcmp.gt.f32.partialorder %v453, 0.0
      %vm574 = vcmp.gt.f32.partialorder %v456, 0.0
      %vm575 = vcmp.gt.f32.partialorder %v461, 0.0
      %vm576 = vcmp.gt.f32.partialorder %v464, 0.0
      %vm577 = vcmp.gt.f32.partialorder %v469, 0.0
      %vm578 = vcmp.gt.f32.partialorder %v472, 0.0
      %vm579 = vcmp.gt.f32.partialorder %v477, 0.0
      %vm580 = vcmp.gt.f32.partialorder %v480, 0.0
      %vm581 = vcmp.gt.f32.partialorder %v485, 0.0
      %vm582 = vcmp.gt.f32.partialorder %v488, 0.0
      %vm583 = vcmp.gt.f32.partialorder %v493, 0.0
      %vm584 = vcmp.gt.f32.partialorder %v496, 0.0
      %vm585 = vcmp.gt.f32.partialorder %v501, 0.0
      %vm586 = vcmp.gt.f32.partialorder %v504, 0.0
      %vm587 = vcmp.gt.f32.partialorder %v509, 0.0
      %vm588 = vcmp.gt.f32.partialorder %v512, 0.0
      %vm589 = vcmp.gt.f32.partialorder %v517, 0.0
      %vm590 = vcmp.gt.f32.partialorder %v520, 0.0
      %vm591 = vcmp.gt.f32.partialorder %v525, 0.0
      %vm592 = vcmp.gt.f32.partialorder %v528, 0.0
      %vm593 = vcmp.gt.f32.partialorder %v533, 0.0
      %vm594 = vcmp.gt.f32.partialorder %v536, 0.0
      %vm595 = vcmp.gt.f32.partialorder %v541, 0.0
      %vm596 = vcmp.gt.f32.partialorder %v544, 0.0
      %vm597 = vcmp.gt.f32.partialorder %v549, 0.0
      %vm598 = vcmp.gt.f32.partialorder %v552, 0.0
      %vm599 = vcmp.gt.f32.partialorder %v557, 0.0
      %vm600 = vcmp.gt.f32.partialorder %v560, 0.0
      %vm601 = vcmp.gt.f32.partialorder %v565, 0.0
      %vm602 = vcmp.gt.f32.partialorder %v568, 0.0
      %v603 = vmul.f32 %v445, 0.2
      %v604 = vmul.f32 %v448, 0.2
      %v605 = vmul.f32 %v453, 0.2
      %v606 = vmul.f32 %v456, 0.2
      %v607 = vmul.f32 %v461, 0.2
      %v608 = vmul.f32 %v464, 0.2
      %v609 = vmul.f32 %v469, 0.2
      %v610 = vmul.f32 %v472, 0.2
      %v611 = vmul.f32 %v477, 0.2
      %v612 = vmul.f32 %v480, 0.2
      %v613 = vmul.f32 %v485, 0.2
      %v614 = vmul.f32 %v488, 0.2
      %v615 = vmul.f32 %v493, 0.2
      %v616 = vmul.f32 %v496, 0.2
      %v617 = vmul.f32 %v501, 0.2
      %v618 = vmul.f32 %v504, 0.2
      %v619 = vmul.f32 %v509, 0.2
      %v620 = vmul.f32 %v512, 0.2
      %v621 = vmul.f32 %v517, 0.2
      %v622 = vmul.f32 %v520, 0.2
      %v623 = vmul.f32 %v525, 0.2
      %v624 = vmul.f32 %v528, 0.2
      %v625 = vmul.f32 %v533, 0.2
      %v626 = vmul.f32 %v536, 0.2
      %v627 = vmul.f32 %v541, 0.2
      %v628 = vmul.f32 %v544, 0.2
      %v629 = vmul.f32 %v549, 0.2
      %v630 = vmul.f32 %v552, 0.2
      %v631 = vmul.f32 %v557, 0.2
      %v632 = vmul.f32 %v560, 0.2
      %v633 = vmul.f32 %v565, 0.2
      %v634 = vmul.f32 %v568, 0.2
      %v635 = vsel %vm571, %v445, %v603
      %v636 = vsel %vm572, %v448, %v604
      %v637 = vsel %vm573, %v453, %v605
      %v638 = vsel %vm574, %v456, %v606
      %v639 = vsel %vm575, %v461, %v607
      %v640 = vsel %vm576, %v464, %v608
      %v641 = vsel %vm577, %v469, %v609
      %v642 = vsel %vm578, %v472, %v610
      %v643 = vsel %vm579, %v477, %v611
      %v644 = vsel %vm580, %v480, %v612
      %v645 = vsel %vm581, %v485, %v613
      %v646 = vsel %vm582, %v488, %v614
      %v647 = vsel %vm583, %v493, %v615
      %v648 = vsel %vm584, %v496, %v616
      %v649 = vsel %vm585, %v501, %v617
      %v650 = vsel %vm586, %v504, %v618
      %v651 = vsel %vm587, %v509, %v619
      %v652 = vsel %vm588, %v512, %v620
      %v653 = vsel %vm589, %v517, %v621
      %v654 = vsel %vm590, %v520, %v622
      %v655 = vsel %vm591, %v525, %v623
      %v656 = vsel %vm592, %v528, %v624
      %v657 = vsel %vm593, %v533, %v625
      %v658 = vsel %vm594, %v536, %v626
      %v659 = vsel %vm595, %v541, %v627
      %v660 = vsel %vm596, %v544, %v628
      %v661 = vsel %vm597, %v549, %v629
      %v662 = vsel %vm598, %v552, %v630
      %v663 = vsel %vm599, %v557, %v631
      %v664 = vsel %vm600, %v560, %v632
      %v665 = vsel %vm601, %v565, %v633
      %v666 = vsel %vm602, %v568, %v634
      %v667 = vpack.c.bf16 %v636, %v635
      %v668 = vpack.c.bf16 %v638, %v637
      %v669 = vpack.c.bf16 %v640, %v639
      %v670 = vpack.c.bf16 %v642, %v641
      %v671 = vpack.c.bf16 %v644, %v643
      %v672 = vpack.c.bf16 %v646, %v645
      %v673 = vpack.c.bf16 %v648, %v647
      %v674 = vpack.c.bf16 %v650, %v649
      %v675 = vpack.c.bf16 %v652, %v651
      %v676 = vpack.c.bf16 %v654, %v653
      %v677 = vpack.c.bf16 %v656, %v655
      %v678 = vpack.c.bf16 %v658, %v657
      %v679 = vpack.c.bf16 %v660, %v659
      %v680 = vpack.c.bf16 %v662, %v661
      %v681 = vpack.c.bf16 %v664, %v663
      %v682 = vpack.c.bf16 %v666, %v665
      %v699 = vunpack.c.l.b16 %v667
      %v700 = vunpack.c.h.b16 %v667
      %v701 = vunpack.c.l.b16 %v668
      %v702 = vunpack.c.h.b16 %v668
      %v703 = vunpack.c.l.b16 %v669
      %v704 = vunpack.c.h.b16 %v669
      %v705 = vunpack.c.l.b16 %v670
      %v706 = vunpack.c.h.b16 %v670
      %v707 = vunpack.c.l.b16 %v671
      %v708 = vunpack.c.h.b16 %v671
      %v709 = vunpack.c.l.b16 %v672
      %v710 = vunpack.c.h.b16 %v672
      %v711 = vunpack.c.l.b16 %v673
      %v712 = vunpack.c.h.b16 %v673
      %v713 = vunpack.c.l.b16 %v674
      %v714 = vunpack.c.h.b16 %v674
      %v715 = vunpack.c.l.b16 %v675
      %v716 = vunpack.c.h.b16 %v675
      %v717 = vunpack.c.l.b16 %v676
      %v718 = vunpack.c.h.b16 %v676
      %v719 = vunpack.c.l.b16 %v677
      %v720 = vunpack.c.h.b16 %v677
      %v721 = vunpack.c.l.b16 %v678
      %v722 = vunpack.c.h.b16 %v678
      %v723 = vunpack.c.l.b16 %v679
      %v724 = vunpack.c.h.b16 %v679
      %v725 = vunpack.c.l.b16 %v680
      %v726 = vunpack.c.h.b16 %v680
      %v727 = vunpack.c.l.b16 %v681
      %v728 = vunpack.c.h.b16 %v681
      %v729 = vunpack.c.l.b16 %v682
      %v730 = vunpack.c.h.b16 %v682
      %v731 = vpack.c.b16 %v699, %v699
      %v732 = vpack.c.b16 %v700, %v700
      %v733 = vpack.c.b16 %v701, %v701
      %v734 = vpack.c.b16 %v702, %v702
      %v735 = vpack.c.b16 %v703, %v703
      %v736 = vpack.c.b16 %v704, %v704
      %v737 = vpack.c.b16 %v705, %v705
      %v738 = vpack.c.b16 %v706, %v706
      %v739 = vpack.c.b16 %v707, %v707
      %v740 = vpack.c.b16 %v708, %v708
      %v741 = vpack.c.b16 %v709, %v709
      %v742 = vpack.c.b16 %v710, %v710
      %v743 = vpack.c.b16 %v711, %v711
      %v744 = vpack.c.b16 %v712, %v712
      %v745 = vpack.c.b16 %v713, %v713
      %v746 = vpack.c.b16 %v714, %v714
      %v747 = vpack.c.b16 %v715, %v715
      %v748 = vpack.c.b16 %v716, %v716
      %v749 = vpack.c.b16 %v717, %v717
      %v750 = vpack.c.b16 %v718, %v718
      %v751 = vpack.c.b16 %v719, %v719
      %v752 = vpack.c.b16 %v720, %v720
      %v753 = vpack.c.b16 %v721, %v721
      %v754 = vpack.c.b16 %v722, %v722
      %v755 = vpack.c.b16 %v723, %v723
      %v756 = vpack.c.b16 %v724, %v724
      %v757 = vpack.c.b16 %v725, %v725
      %v758 = vpack.c.b16 %v726, %v726
      %v759 = vpack.c.b16 %v727, %v727
      %v760 = vpack.c.b16 %v728, %v728
      %v761 = vpack.c.b16 %v729, %v729
      %v762 = vpack.c.b16 %v730, %v730
      %795 = vst [vmem:[%s208] sm:$0xf] %v731
      %796 = vst [vmem:[%s208 + $0x4] sm:$0xf] %v732
      %797 = vst [vmem:[%s208 + $0x8] sm:$0xf] %v733
      %798 = vst [vmem:[%s208 + $0xc] sm:$0xf] %v734
      %799 = vst [vmem:[%s208 + $0x10] sm:$0xf] %v735
      %800 = vst [vmem:[%s208 + $0x14] sm:$0xf] %v736
      %801 = vst [vmem:[%s208 + $0x18] sm:$0xf] %v737
      %802 = vst [vmem:[%s208 + $0x1c] sm:$0xf] %v738
      %803 = vst [vmem:[%s208 + $0x20] sm:$0xf] %v739
      %804 = vst [vmem:[%s208 + $0x24] sm:$0xf] %v740
      %805 = vst [vmem:[%s208 + $0x28] sm:$0xf] %v741
      %806 = vst [vmem:[%s208 + $0x2c] sm:$0xf] %v742
      %807 = vst [vmem:[%s208 + $0x30] sm:$0xf] %v743
      %808 = vst [vmem:[%s208 + $0x34] sm:$0xf] %v744
      %809 = vst [vmem:[%s208 + $0x38] sm:$0xf] %v745
      %810 = vst [vmem:[%s208 + $0x3c] sm:$0xf] %v746
      %811 = vst [vmem:[%s208 + $0x40] sm:$0xf] %v747
      %812 = vst [vmem:[%s208 + $0x44] sm:$0xf] %v748
      %813 = vst [vmem:[%s208 + $0x48] sm:$0xf] %v749
      %814 = vst [vmem:[%s208 + $0x4c] sm:$0xf] %v750
      %815 = vst [vmem:[%s208 + $0x50] sm:$0xf] %v751
      %816 = vst [vmem:[%s208 + $0x54] sm:$0xf] %v752
      %817 = vst [vmem:[%s208 + $0x58] sm:$0xf] %v753
      %818 = vst [vmem:[%s208 + $0x5c] sm:$0xf] %v754
      %819 = vst [vmem:[%s208 + $0x60] sm:$0xf] %v755
      %820 = vst [vmem:[%s208 + $0x64] sm:$0xf] %v756
      %821 = vst [vmem:[%s208 + $0x68] sm:$0xf] %v757
      %822 = vst [vmem:[%s208 + $0x6c] sm:$0xf] %v758
      %823 = vst [vmem:[%s208 + $0x70] sm:$0xf] %v759
      %824 = vst [vmem:[%s208 + $0x74] sm:$0xf] %v760
      %825 = vst [vmem:[%s208 + $0x78] sm:$0xf] %v761
      %826 = vst [vmem:[%s208 + $0x7c] sm:$0xf] %v762
      %s827 = smul.u32 32, %s19
      %p828 = scmp.lt.s32.totalorder %s18, 1
      %s829 = scalar_select %p828, %s18, 1
      %p830 = scmp.lt.s32.totalorder %s827, 31
      %s831 = scalar_select %p830, %s827, 31
      %s832 = smul.addr %s829, 32
      %s833 = sadd.s32 %s831, %s832
      %s834 = smul.addr %s833, 4
      %s835 = scalar_lea.vmem %s3, %s834
      // Predicated region
      $region33: #{discriminator_forward.4} parent=31 // pred_check
        %p836 = pneg %p116
      $region34: #{discriminator_forward.4} parent=31 // pred_check_branch
        %838 = sbr.rel (%p836) target = $region36
      $region35: #{discriminator_forward.4} parent=31 // pred_region
        %s839 = smul.u32 32, %s19
      $region36: #{discriminator_forward.4} parent=31 // pred_fallthru
        _
    $region32: #{discriminator_forward.4} parent=5 // pred_fallthru
      _
    %p840 = scmp.le.s32.totalorder 2, %s9
    // Predicated region
    $region37: #{discriminator_forward.4} parent=5 // pred_check
      %p841 = pneg %p840
    $region38: #{discriminator_forward.4} parent=5 // pred_check_branch
      %843 = sbr.rel (%p841) target = $region40
    $region39: #{discriminator_forward.4} parent=5 // pred_region
      %s844 = ssub.s32 %s9, 2
      // Predicated region
      $region41: #{discriminator_forward.4} parent=39 // pred_check
        %p845 = pneg %p122
      $region42: #{discriminator_forward.4} parent=39 // pred_check_branch
        %847 = sbr.rel (%p845) target = $region44
      $region43: #{discriminator_forward.4} parent=39 // pred_region
        %s848 = smul.u32 32, %s21
        %p849 = scmp.lt.s32.totalorder %s20, 1
        %s850 = scalar_select %p849, %s20, 1
        %p851 = scmp.lt.s32.totalorder %s848, 31
        %s852 = scalar_select %p851, %s848, 31
        %s853 = smul.addr %s850, 32
        %s854 = sadd.s32 %s852, %s853
        %s855 = smul.addr %s854, 4
        %s856 = scalar_lea.vmem %s3, %s855
      $region44: #{discriminator_forward.4} parent=39 // pred_fallthru
        _
    $region40: #{discriminator_forward.4} parent=5 // pred_fallthru
      _
  $region6: #{discriminator_forward.4} parent=0 // loop_footer
    %s13 = sadd.s32 1, %s9
  $region7: #{discriminator_forward.4} parent=0 // loop_footer_branch
    %8 = sbr.rel target = $region3
  $region8: #{discriminator_forward.4} parent=0 // loop_exit
    _

// kernel: discriminator_forward.5
$region0: #{discriminator_forward.5}
  #allocation0 [shape = 'u32[]', space=smem, size = 0x4, offset = 0x4, fixed_abs, tag = 'smem constant byte address 0x4 - core index']
  #allocation1 [shape = 'u32[144,128]{1,0:T(1,128)}', space=vmem, size = 0x12000, scoped, tag = 'internal scratch']
  %s0 = inlined_call_operand.vmem [shape: bf16[2,64,1024], index: 0, kind: input, shape index: {}]
  %s1 = inlined_call_operand.vmem [shape: bf16[1024,128], index: 1, kind: input, shape index: {}]
  %s2 = inlined_call_operand.vmem [shape: bf16[2,64,128], index: 2, kind: output, shape index: {}]
  %s3 = sld [smem:[#allocation0]]
  $region41: #{discriminator_forward.5} parent=0
    _
  %s5 = ssub.s32 1, %s3
  %s6 = scalar_select 0, %s5, %s3
  loop: start=0, step=1, limit=4
  $region2: #{discriminator_forward.5} parent=0 // loop_pre_header
    _
  $region3: #{discriminator_forward.5} parent=0 // loop_header
    %s8 = sphi 0, %s12
    %p9 = scmp.ge.s32.totalorder %s8, 4
    %s15 = sphi 0, %s27
    %s16 = sphi 0, %s23
    %s17 = sphi 0, %s15
    %s18 = sphi 0, %s16
    %s19 = sphi 0, %s17
    %s20 = sphi 0, %s18
    %s32 = sphi 0, %s34
    %s35 = sphi 0, %s32
    %s36 = sphi 0, %s35
    %s52 = sphi 0, %s36
    %s56 = sphi 0, %s56
    %s58 = sphi 0, %s56
    %s59 = sphi 0, %s58
    %s73 = sphi 0, %s59
    %s81 = sphi 0, %s83
    %s84 = sphi 0, %s81
    %s85 = sphi 0, %s84
    %s101 = sphi 0, %s85
  $region4: #{discriminator_forward.5} parent=0 // loop_header_branch
    %11 = sbr.rel (%p9) target = $region8
  $region5: #{discriminator_forward.5} parent=0 // loop_body
    %s13 = ssub.s32 %s8, 1
    %s14 = ssub.s32 %s8, 2
    %s21 = sadd.s32 1, %s16
    %p22 = scmp.ge.s32.totalorder %s21, 1
    %s23 = scalar_select %p22, 0, %s21
    %s24 = sadd.s32 1, %s15
    %s25 = scalar_select %p22, %s24, %s15
    %p26 = scmp.ge.s32.totalorder %s25, 2
    %s27 = scalar_select %p26, 0, %s25
    %s28 = ssub.s32 %s15, %s27
    %s29 = ssub.s32 %s16, %s23
    %s30 = sor.u32 %s28, %s29
    %p31 = scmp.eq.s32.totalorder %s30, 0
    %s33 = sadd.s32 %s32, 1
    %s34 = scalar_select %p31, %s32, %s33
    %p37 = pneg %p31
    %p38 = scmp.eq.s32.totalorder %s8, 1
    %p39 = por %p37, %p38
    %p40 = scmp.ne.s32.totalorder %s32, %s35
    %p41 = scmp.eq.s32.totalorder %s8, 0
    %p42 = por %p40, %p41
    %p43 = scmp.ne.s32.totalorder %s32, %s35
    %p44 = scmp.eq.s32.totalorder %s13, 1
    %p45 = por %p43, %p44
    %p46 = scmp.ne.s32.totalorder %s35, %s36
    %p47 = scmp.eq.s32.totalorder %s13, 0
    %p48 = por %p46, %p47
    %p49 = scmp.ne.s32.totalorder %s35, %s36
    %p50 = scmp.eq.s32.totalorder %s14, 1
    %p51 = por %p49, %p50
    %p53 = scmp.ne.s32.totalorder %s36, %s52
    %p54 = scmp.eq.s32.totalorder %s14, 0
    %p55 = por %p53, %p54
    %s57 = sadd.s32 %s56, 1
    %p60 = scmp.eq.s32.totalorder %s8, 1
    %p61 = scmp.ne.s32.totalorder %s56, %s58
    %p62 = scmp.eq.s32.totalorder %s8, 0
    %p63 = por %p61, %p62
    %p64 = scmp.ne.s32.totalorder %s56, %s58
    %p65 = scmp.eq.s32.totalorder %s13, 1
    %p66 = por %p64, %p65
    %p67 = scmp.ne.s32.totalorder %s58, %s59
    %p68 = scmp.eq.s32.totalorder %s13, 0
    %p69 = por %p67, %p68
    %p70 = scmp.ne.s32.totalorder %s58, %s59
    %p71 = scmp.eq.s32.totalorder %s14, 1
    %p72 = por %p70, %p71
    %p74 = scmp.ne.s32.totalorder %s59, %s73
    %p75 = scmp.eq.s32.totalorder %s14, 0
    %p76 = por %p74, %p75
    %s77 = ssub.s32 %s15, %s27
    %s78 = ssub.s32 %s16, %s23
    %s79 = sor.u32 %s77, %s78
    %p80 = scmp.eq.s32.totalorder %s79, 0
    %s82 = sadd.s32 %s81, 1
    %s83 = scalar_select %p80, %s81, %s82
    %p86 = pneg %p80
    %p87 = scmp.eq.s32.totalorder %s8, 1
    %p88 = por %p86, %p87
    %p89 = scmp.ne.s32.totalorder %s81, %s84
    %p90 = scmp.eq.s32.totalorder %s8, 0
    %p91 = por %p89, %p90
    %p92 = scmp.ne.s32.totalorder %s81, %s84
    %p93 = scmp.eq.s32.totalorder %s13, 1
    %p94 = por %p92, %p93
    %p95 = scmp.ne.s32.totalorder %s84, %s85
    %p96 = scmp.eq.s32.totalorder %s13, 0
    %p97 = por %p95, %p96
    %p98 = scmp.ne.s32.totalorder %s84, %s85
    %p99 = scmp.eq.s32.totalorder %s14, 1
    %p100 = por %p98, %p99
    %p102 = scmp.ne.s32.totalorder %s85, %s101
    %p103 = scmp.eq.s32.totalorder %s14, 0
    %p104 = por %p102, %p103
    %p105 = scmp.le.s32.totalorder 1, %s8
    %p106 = scmp.lt.s32.totalorder %s8, 3
    %p107 = pnand %p105, %p106
    %p108 = pneg %p107
    // Predicated region
    $region9: #{discriminator_forward.5} parent=5 // pred_check
      _
    $region10: #{discriminator_forward.5} parent=5 // pred_check_branch
      %110 = sbr.rel (%p107) target = $region12
    $region11: #{discriminator_forward.5} parent=5 // pred_region
      %s111 = ssub.s32 %s8, 1
      // Predicated region
      $region13: #{discriminator_forward.5} parent=11 // pred_check
        %p112 = pneg %p69
      $region14: #{discriminator_forward.5} parent=11 // pred_check_branch
        %114 = sbr.rel (%p112) target = $region16
      $region15: #{discriminator_forward.5} parent=11 // pred_region
        _
      $region16: #{discriminator_forward.5} parent=11 // pred_fallthru
        _
    $region12: #{discriminator_forward.5} parent=5 // pred_fallthru
      _
    %p115 = scmp.lt.s32.totalorder %s8, 2
    // Predicated region
    $region17: #{discriminator_forward.5} parent=5 // pred_check
      %p116 = pneg %p115
    $region18: #{discriminator_forward.5} parent=5 // pred_check_branch
      %118 = sbr.rel (%p116) target = $region20
    $region19: #{discriminator_forward.5} parent=5 // pred_region
      // Predicated region
      $region21: #{discriminator_forward.5} parent=19 // pred_check
        %p119 = pneg %p42
      $region22: #{discriminator_forward.5} parent=19 // pred_check_branch
        %121 = sbr.rel (%p119) target = $region24
      $region23: #{discriminator_forward.5} parent=19 // pred_region
        %s122 = smul.u32 8, %s16
        %p123 = scmp.lt.s32.totalorder %s15, 1
        %s124 = scalar_select %p123, %s15, 1
        %p125 = scmp.lt.s32.totalorder %s122, 7
        %s126 = scalar_select %p125, %s122, 7
        %s127 = smul.addr %s126, 8
        %s128 = smul.addr %s124, 64
        %s129 = sadd.s32 %s127, %s128
        %s130 = smul.addr %s129, 4
        %s131 = scalar_lea.vmem %s0, %s130
        %s132 = smul.u32 8, %s16
      $region24: #{discriminator_forward.5} parent=19 // pred_fallthru
        _
    $region20: #{discriminator_forward.5} parent=5 // pred_fallthru
      _
    %p133 = scmp.le.s32.totalorder 1, %s8
    %p134 = scmp.lt.s32.totalorder %s8, 3
    %p135 = pnand %p133, %p134
    %p136 = pneg %p135
    // Predicated region
    $region25: #{discriminator_forward.5} parent=5 // pred_check
      _
    $region26: #{discriminator_forward.5} parent=5 // pred_check_branch
      %138 = sbr.rel (%p135) target = $region28
    $region27: #{discriminator_forward.5} parent=5 // pred_region
      %s139 = ssub.s32 %s8, 1
      %s140 = smul.u32 8, %s18
      %p141 = scmp.lt.s32.totalorder %s17, 1
      %s142 = scalar_select %p141, %s17, 1
      %p143 = scmp.lt.s32.totalorder %s140, 7
      %s144 = scalar_select %p143, %s140, 7
      %s145 = smul.addr %s144, 8
      %s146 = smul.addr %s142, 64
      %s147 = sadd.s32 %s145, %s146
      %s148 = smul.addr %s147, 4
      %s149 = scalar_lea.vmem %s0, %s148
      %p150 = pneg %p48
      %p151 = pneg %p45
      %p152 = pneg %p69
      %p153 = pneg %p66
      %p154 = pneg %p97
      %p155 = pneg %p94
      %s156 = smul.u32 8, %s18
      %p157 = scmp.lt.s32.totalorder %s17, 1
      %s158 = scalar_select %p157, %s17, 1
      %p159 = scmp.lt.s32.totalorder %s156, 7
      %s160 = scalar_select %p159, %s156, 7
      %s161 = smul.addr %s158, 8
      %s162 = sadd.s32 %s160, %s161
      %s163 = smul.addr %s162, 4
      %s164 = scalar_lea.vmem %s2, %s163
      %s165 = smul.u32 8, %s18
      %p166 = scmp.lt.s32.totalorder %s17, 1
      %s167 = scalar_select %p166, %s17, 1
      %p168 = scmp.lt.s32.totalorder %s165, 7
      %s169 = scalar_select %p168, %s165, 7
      %s170 = smul.addr %s169, 8
      %s171 = smul.addr %s167, 64
      %s172 = sadd.s32 %s170, %s171
      %s173 = smul.addr %s172, 4
      %s174 = scalar_lea.vmem %s0, %s173
      %s175 = smul.u32 8, %s18
      %s176 = smul.u32 8, %s18
      %p177 = scmp.lt.s32.totalorder %s17, 1
      %s178 = scalar_select %p177, %s17, 1
      %p179 = scmp.lt.s32.totalorder %s176, 7
      %s180 = scalar_select %p179, %s176, 7
      %s181 = smul.addr %s178, 8
      %s182 = sadd.s32 %s180, %s181
      %s183 = smul.addr %s182, 4
      %s184 = scalar_lea.vmem %s2, %s183
      %s185 = smul.u32 8, %s18
      %v187 = vld [vmem:[%s174] sm:$0xff]
      %v188 = vld [vmem:[%s174 + $0x8] sm:$0xff]
      %v189 = vld [vmem:[%s174 + $0x10] sm:$0xff]
      %v190 = vld [vmem:[%s174 + $0x18] sm:$0xff]
      %v191 = vld [vmem:[%s174 + $0x20] sm:$0xff]
      %v192 = vld [vmem:[%s174 + $0x28] sm:$0xff]
      %v193 = vld [vmem:[%s174 + $0x30] sm:$0xff]
      %v194 = vld [vmem:[%s174 + $0x38] sm:$0xff]
      %v195 = vld [vmem:[%s174 + $0x40] sm:$0xff]
      %v196 = vld [vmem:[%s174 + $0x48] sm:$0xff]
      %v197 = vld [vmem:[%s174 + $0x50] sm:$0xff]
      %v198 = vld [vmem:[%s174 + $0x58] sm:$0xff]
      %v199 = vld [vmem:[%s174 + $0x60] sm:$0xff]
      %v200 = vld [vmem:[%s174 + $0x68] sm:$0xff]
      %v201 = vld [vmem:[%s174 + $0x70] sm:$0xff]
      %v202 = vld [vmem:[%s174 + $0x78] sm:$0xff]
      %v203 = vld [vmem:[%s174 + $0x80] sm:$0xff]
      %v204 = vld [vmem:[%s174 + $0x88] sm:$0xff]
      %v205 = vld [vmem:[%s174 + $0x90] sm:$0xff]
      %v206 = vld [vmem:[%s174 + $0x98] sm:$0xff]
      %v207 = vld [vmem:[%s174 + $0xa0] sm:$0xff]
      %v208 = vld [vmem:[%s174 + $0xa8] sm:$0xff]
      %v209 = vld [vmem:[%s174 + $0xb0] sm:$0xff]
      %v210 = vld [vmem:[%s174 + $0xb8] sm:$0xff]
      %v211 = vld [vmem:[%s174 + $0xc0] sm:$0xff]
      %v212 = vld [vmem:[%s174 + $0xc8] sm:$0xff]
      %v213 = vld [vmem:[%s174 + $0xd0] sm:$0xff]
      %v214 = vld [vmem:[%s174 + $0xd8] sm:$0xff]
      %v215 = vld [vmem:[%s174 + $0xe0] sm:$0xff]
      %v216 = vld [vmem:[%s174 + $0xe8] sm:$0xff]
      %v217 = vld [vmem:[%s174 + $0xf0] sm:$0xff]
      %v218 = vld [vmem:[%s174 + $0xf8] sm:$0xff]
      %v219 = vld [vmem:[%s1] sm:$0xf]
      %v220 = vld [vmem:[%s1 + $0x4] sm:$0xf]
      %v221 = vld [vmem:[%s1 + $0x8] sm:$0xf]
      %v222 = vld [vmem:[%s1 + $0xc] sm:$0xf]
      %v223 = vld [vmem:[%s1 + $0x10] sm:$0xf]
      %v224 = vld [vmem:[%s1 + $0x14] sm:$0xf]
      %v225 = vld [vmem:[%s1 + $0x18] sm:$0xf]
      %v226 = vld [vmem:[%s1 + $0x1c] sm:$0xf]
      %v227 = vld [vmem:[%s1 + $0x20] sm:$0xf]
      %v228 = vld [vmem:[%s1 + $0x24] sm:$0xf]
      %v229 = vld [vmem:[%s1 + $0x28] sm:$0xf]
      %v230 = vld [vmem:[%s1 + $0x2c] sm:$0xf]
      %v231 = vld [vmem:[%s1 + $0x30] sm:$0xf]
      %v232 = vld [vmem:[%s1 + $0x34] sm:$0xf]
      %v233 = vld [vmem:[%s1 + $0x38] sm:$0xf]
      %v234 = vld [vmem:[%s1 + $0x3c] sm:$0xf]
      %v235 = vld [vmem:[%s1 + $0x40] sm:$0xf]
      %v236 = vld [vmem:[%s1 + $0x44] sm:$0xf]
      %v237 = vld [vmem:[%s1 + $0x48] sm:$0xf]
      %v238 = vld [vmem:[%s1 + $0x4c] sm:$0xf]
      %v239 = vld [vmem:[%s1 + $0x50] sm:$0xf]
      %v240 = vld [vmem:[%s1 + $0x54] sm:$0xf]
      %v241 = vld [vmem:[%s1 + $0x58] sm:$0xf]
      %v242 = vld [vmem:[%s1 + $0x5c] sm:$0xf]
      %v243 = vld [vmem:[%s1 + $0x60] sm:$0xf]
      %v244 = vld [vmem:[%s1 + $0x64] sm:$0xf]
      %v245 = vld [vmem:[%s1 + $0x68] sm:$0xf]
      %v246 = vld [vmem:[%s1 + $0x6c] sm:$0xf]
      %v247 = vld [vmem:[%s1 + $0x70] sm:$0xf]
      %v248 = vld [vmem:[%s1 + $0x74] sm:$0xf]
      %v249 = vld [vmem:[%s1 + $0x78] sm:$0xf]
      %v250 = vld [vmem:[%s1 + $0x7c] sm:$0xf]
      %v251 = vld [vmem:[%s1 + $0x80] sm:$0xf]
      %v252 = vld [vmem:[%s1 + $0x84] sm:$0xf]
      %v253 = vld [vmem:[%s1 + $0x88] sm:$0xf]
      %v254 = vld [vmem:[%s1 + $0x8c] sm:$0xf]
      %v255 = vld [vmem:[%s1 + $0x90] sm:$0xf]
      %v256 = vld [vmem:[%s1 + $0x94] sm:$0xf]
      %v257 = vld [vmem:[%s1 + $0x98] sm:$0xf]
      %v258 = vld [vmem:[%s1 + $0x9c] sm:$0xf]
      %v259 = vld [vmem:[%s1 + $0xa0] sm:$0xf]
      %v260 = vld [vmem:[%s1 + $0xa4] sm:$0xf]
      %v261 = vld [vmem:[%s1 + $0xa8] sm:$0xf]
      %v262 = vld [vmem:[%s1 + $0xac] sm:$0xf]
      %v263 = vld [vmem:[%s1 + $0xb0] sm:$0xf]
      %v264 = vld [vmem:[%s1 + $0xb4] sm:$0xf]
      %v265 = vld [vmem:[%s1 + $0xb8] sm:$0xf]
      %v266 = vld [vmem:[%s1 + $0xbc] sm:$0xf]
      %v267 = vld [vmem:[%s1 + $0xc0] sm:$0xf]
      %v268 = vld [vmem:[%s1 + $0xc4] sm:$0xf]
      %v269 = vld [vmem:[%s1 + $0xc8] sm:$0xf]
      %v270 = vld [vmem:[%s1 + $0xcc] sm:$0xf]
      %v271 = vld [vmem:[%s1 + $0xd0] sm:$0xf]
      %v272 = vld [vmem:[%s1 + $0xd4] sm:$0xf]
      %v273 = vld [vmem:[%s1 + $0xd8] sm:$0xf]
      %v274 = vld [vmem:[%s1 + $0xdc] sm:$0xf]
      %v275 = vld [vmem:[%s1 + $0xe0] sm:$0xf]
      %v276 = vld [vmem:[%s1 + $0xe4] sm:$0xf]
      %v277 = vld [vmem:[%s1 + $0xe8] sm:$0xf]
      %v278 = vld [vmem:[%s1 + $0xec] sm:$0xf]
      %v279 = vld [vmem:[%s1 + $0xf0] sm:$0xf]
      %v280 = vld [vmem:[%s1 + $0xf4] sm:$0xf]
      %v281 = vld [vmem:[%s1 + $0xf8] sm:$0xf]
      %v282 = vld [vmem:[%s1 + $0xfc] sm:$0xf]
      %v283 = vld [vmem:[%s1 + $0x100] sm:$0xf]
      %v284 = vld [vmem:[%s1 + $0x104] sm:$0xf]
      %v285 = vld [vmem:[%s1 + $0x108] sm:$0xf]
      %v286 = vld [vmem:[%s1 + $0x10c] sm:$0xf]
      %v287 = vld [vmem:[%s1 + $0x110] sm:$0xf]
      %v288 = vld [vmem:[%s1 + $0x114] sm:$0xf]
      %v289 = vld [vmem:[%s1 + $0x118] sm:$0xf]
      %v290 = vld [vmem:[%s1 + $0x11c] sm:$0xf]
      %v291 = vld [vmem:[%s1 + $0x120] sm:$0xf]
      %v292 = vld [vmem:[%s1 + $0x124] sm:$0xf]
      %v293 = vld [vmem:[%s1 + $0x128] sm:$0xf]
      %v294 = vld [vmem:[%s1 + $0x12c] sm:$0xf]
      %v295 = vld [vmem:[%s1 + $0x130] sm:$0xf]
      %v296 = vld [vmem:[%s1 + $0x134] sm:$0xf]
      %v297 = vld [vmem:[%s1 + $0x138] sm:$0xf]
      %v298 = vld [vmem:[%s1 + $0x13c] sm:$0xf]
      %v299 = vld [vmem:[%s1 + $0x140] sm:$0xf]
      %v300 = vld [vmem:[%s1 + $0x144] sm:$0xf]
      %v301 = vld [vmem:[%s1 + $0x148] sm:$0xf]
      %v302 = vld [vmem:[%s1 + $0x14c] sm:$0xf]
      %v303 = vld [vmem:[%s1 + $0x150] sm:$0xf]
      %v304 = vld [vmem:[%s1 + $0x154] sm:$0xf]
      %v305 = vld [vmem:[%s1 + $0x158] sm:$0xf]
      %v306 = vld [vmem:[%s1 + $0x15c] sm:$0xf]
      %v307 = vld [vmem:[%s1 + $0x160] sm:$0xf]
      %v308 = vld [vmem:[%s1 + $0x164] sm:$0xf]
      %v309 = vld [vmem:[%s1 + $0x168] sm:$0xf]
      %v310 = vld [vmem:[%s1 + $0x16c] sm:$0xf]
      %v311 = vld [vmem:[%s1 + $0x170] sm:$0xf]
      %v312 = vld [vmem:[%s1 + $0x174] sm:$0xf]
      %v313 = vld [vmem:[%s1 + $0x178] sm:$0xf]
      %v314 = vld [vmem:[%s1 + $0x17c] sm:$0xf]
      %v315 = vld [vmem:[%s1 + $0x180] sm:$0xf]
      %v316 = vld [vmem:[%s1 + $0x184] sm:$0xf]
      %v317 = vld [vmem:[%s1 + $0x188] sm:$0xf]
      %v318 = vld [vmem:[%s1 + $0x18c] sm:$0xf]
      %v319 = vld [vmem:[%s1 + $0x190] sm:$0xf]
      %v320 = vld [vmem:[%s1 + $0x194] sm:$0xf]
      %v321 = vld [vmem:[%s1 + $0x198] sm:$0xf]
      %v322 = vld [vmem:[%s1 + $0x19c] sm:$0xf]
      %v323 = vld [vmem:[%s1 + $0x1a0] sm:$0xf]
      %v324 = vld [vmem:[%s1 + $0x1a4] sm:$0xf]
      %v325 = vld [vmem:[%s1 + $0x1a8] sm:$0xf]
      %v326 = vld [vmem:[%s1 + $0x1ac] sm:$0xf]
      %v327 = vld [vmem:[%s1 + $0x1b0] sm:$0xf]
      %v328 = vld [vmem:[%s1 + $0x1b4] sm:$0xf]
      %v329 = vld [vmem:[%s1 + $0x1b8] sm:$0xf]
      %v330 = vld [vmem:[%s1 + $0x1bc] sm:$0xf]
      %v331 = vld [vmem:[%s1 + $0x1c0] sm:$0xf]
      %v332 = vld [vmem:[%s1 + $0x1c4] sm:$0xf]
      %v333 = vld [vmem:[%s1 + $0x1c8] sm:$0xf]
      %v334 = vld [vmem:[%s1 + $0x1cc] sm:$0xf]
      %v335 = vld [vmem:[%s1 + $0x1d0] sm:$0xf]
      %v336 = vld [vmem:[%s1 + $0x1d4] sm:$0xf]
      %v337 = vld [vmem:[%s1 + $0x1d8] sm:$0xf]
      %v338 = vld [vmem:[%s1 + $0x1dc] sm:$0xf]
      %v339 = vld [vmem:[%s1 + $0x1e0] sm:$0xf]
      %v340 = vld [vmem:[%s1 + $0x1e4] sm:$0xf]
      %v341 = vld [vmem:[%s1 + $0x1e8] sm:$0xf]
      %v342 = vld [vmem:[%s1 + $0x1ec] sm:$0xf]
      %v343 = vld [vmem:[%s1 + $0x1f0] sm:$0xf]
      %v344 = vld [vmem:[%s1 + $0x1f4] sm:$0xf]
      %v345 = vld [vmem:[%s1 + $0x1f8] sm:$0xf]
      %v346 = vld [vmem:[%s1 + $0x1fc] sm:$0xf]
      %v379 = vunpack.c.l.b16 %v187
      %v380 = vunpack.c.h.b16 %v187
      %v381 = vunpack.c.l.b16 %v188
      %v382 = vunpack.c.h.b16 %v188
      %v383 = vunpack.c.l.b16 %v189
      %v384 = vunpack.c.h.b16 %v189
      %v385 = vunpack.c.l.b16 %v190
      %v386 = vunpack.c.h.b16 %v190
      %v387 = vunpack.c.l.b16 %v191
      %v388 = vunpack.c.h.b16 %v191
      %v389 = vunpack.c.l.b16 %v192
      %v390 = vunpack.c.h.b16 %v192
      %v391 = vunpack.c.l.b16 %v193
      %v392 = vunpack.c.h.b16 %v193
      %v393 = vunpack.c.l.b16 %v194
      %v394 = vunpack.c.h.b16 %v194
      %v395 = vunpack.c.l.b16 %v195
      %v396 = vunpack.c.h.b16 %v195
      %v397 = vunpack.c.l.b16 %v196
      %v398 = vunpack.c.h.b16 %v196
      %v399 = vunpack.c.l.b16 %v197
      %v400 = vunpack.c.h.b16 %v197
      %v401 = vunpack.c.l.b16 %v198
      %v402 = vunpack.c.h.b16 %v198
      %v403 = vunpack.c.l.b16 %v199
      %v404 = vunpack.c.h.b16 %v199
      %v405 = vunpack.c.l.b16 %v200
      %v406 = vunpack.c.h.b16 %v200
      %v407 = vunpack.c.l.b16 %v201
      %v408 = vunpack.c.h.b16 %v201
      %v409 = vunpack.c.l.b16 %v202
      %v410 = vunpack.c.h.b16 %v202
      %v411 = vunpack.c.l.b16 %v203
      %v412 = vunpack.c.h.b16 %v203
      %v413 = vunpack.c.l.b16 %v204
      %v414 = vunpack.c.h.b16 %v204
      %v415 = vunpack.c.l.b16 %v205
      %v416 = vunpack.c.h.b16 %v205
      %v417 = vunpack.c.l.b16 %v206
      %v418 = vunpack.c.h.b16 %v206
      %v419 = vunpack.c.l.b16 %v207
      %v420 = vunpack.c.h.b16 %v207
      %v421 = vunpack.c.l.b16 %v208
      %v422 = vunpack.c.h.b16 %v208
      %v423 = vunpack.c.l.b16 %v209
      %v424 = vunpack.c.h.b16 %v209
      %v425 = vunpack.c.l.b16 %v210
      %v426 = vunpack.c.h.b16 %v210
      %v427 = vunpack.c.l.b16 %v211
      %v428 = vunpack.c.h.b16 %v211
      %v429 = vunpack.c.l.b16 %v212
      %v430 = vunpack.c.h.b16 %v212
      %v431 = vunpack.c.l.b16 %v213
      %v432 = vunpack.c.h.b16 %v213
      %v433 = vunpack.c.l.b16 %v214
      %v434 = vunpack.c.h.b16 %v214
      %v435 = vunpack.c.l.b16 %v215
      %v436 = vunpack.c.h.b16 %v215
      %v437 = vunpack.c.l.b16 %v216
      %v438 = vunpack.c.h.b16 %v216
      %v439 = vunpack.c.l.b16 %v217
      %v440 = vunpack.c.h.b16 %v217
      %v441 = vunpack.c.l.b16 %v218
      %v442 = vunpack.c.h.b16 %v218
      %v443 = vpack.c.b16 %v387, %v379
      %v444 = vpack.c.b16 %v388, %v380
      %v445 = vpack.c.b16 %v389, %v381
      %v446 = vpack.c.b16 %v390, %v382
      %v447 = vpack.c.b16 %v391, %v383
      %v448 = vpack.c.b16 %v392, %v384
      %v449 = vpack.c.b16 %v393, %v385
      %v450 = vpack.c.b16 %v394, %v386
      %v451 = vpack.c.b16 %v403, %v395
      %v452 = vpack.c.b16 %v404, %v396
      %v453 = vpack.c.b16 %v405, %v397
      %v454 = vpack.c.b16 %v406, %v398
      %v455 = vpack.c.b16 %v407, %v399
      %v456 = vpack.c.b16 %v408, %v400
      %v457 = vpack.c.b16 %v409, %v401
      %v458 = vpack.c.b16 %v410, %v402
      %v459 = vpack.c.b16 %v419, %v411
      %v460 = vpack.c.b16 %v420, %v412
      %v461 = vpack.c.b16 %v421, %v413
      %v462 = vpack.c.b16 %v422, %v414
      %v463 = vpack.c.b16 %v423, %v415
      %v464 = vpack.c.b16 %v424, %v416
      %v465 = vpack.c.b16 %v425, %v417
      %v466 = vpack.c.b16 %v426, %v418
      %v467 = vpack.c.b16 %v435, %v427
      %v468 = vpack.c.b16 %v436, %v428
      %v469 = vpack.c.b16 %v437, %v429
      %v470 = vpack.c.b16 %v438, %v430
      %v471 = vpack.c.b16 %v439, %v431
      %v472 = vpack.c.b16 %v440, %v432
      %v473 = vpack.c.b16 %v441, %v433
      %v474 = vpack.c.b16 %v442, %v434
      %v635 = vunpack.c.l.b16 %v219
      %v636 = vunpack.c.l.b16 %v220
      %v637 = vunpack.c.l.b16 %v221
      %v638 = vunpack.c.l.b16 %v222
      %v639 = vunpack.c.l.b16 %v223
      %v640 = vunpack.c.l.b16 %v224
      %v641 = vunpack.c.l.b16 %v225
      %v642 = vunpack.c.l.b16 %v226
      %v643 = vunpack.c.l.b16 %v227
      %v644 = vunpack.c.l.b16 %v228
      %v645 = vunpack.c.l.b16 %v229
      %v646 = vunpack.c.l.b16 %v230
      %v647 = vunpack.c.l.b16 %v231
      %v648 = vunpack.c.l.b16 %v232
      %v649 = vunpack.c.l.b16 %v233
      %v650 = vunpack.c.l.b16 %v234
      %v651 = vunpack.c.l.b16 %v235
      %v652 = vunpack.c.l.b16 %v236
      %v653 = vunpack.c.l.b16 %v237
      %v654 = vunpack.c.l.b16 %v238
      %v655 = vunpack.c.l.b16 %v239
      %v656 = vunpack.c.l.b16 %v240
      %v657 = vunpack.c.l.b16 %v241
      %v658 = vunpack.c.l.b16 %v242
      %v659 = vunpack.c.l.b16 %v243
      %v660 = vunpack.c.l.b16 %v244
      %v661 = vunpack.c.l.b16 %v245
      %v662 = vunpack.c.l.b16 %v246
      %v663 = vunpack.c.l.b16 %v247
      %v664 = vunpack.c.l.b16 %v248
      %v665 = vunpack.c.l.b16 %v249
      %v666 = vunpack.c.l.b16 %v250
      %v667 = vunpack.c.l.b16 %v251
      %v668 = vunpack.c.l.b16 %v252
      %v669 = vunpack.c.l.b16 %v253
      %v670 = vunpack.c.l.b16 %v254
      %v671 = vunpack.c.l.b16 %v255
      %v672 = vunpack.c.l.b16 %v256
      %v673 = vunpack.c.l.b16 %v257
      %v674 = vunpack.c.l.b16 %v258
      %v675 = vunpack.c.l.b16 %v259
      %v676 = vunpack.c.l.b16 %v260
      %v677 = vunpack.c.l.b16 %v261
      %v678 = vunpack.c.l.b16 %v262
      %v679 = vunpack.c.l.b16 %v263
      %v680 = vunpack.c.l.b16 %v264
      %v681 = vunpack.c.l.b16 %v265
      %v682 = vunpack.c.l.b16 %v266
      %v683 = vunpack.c.l.b16 %v267
      %v684 = vunpack.c.l.b16 %v268
      %v685 = vunpack.c.l.b16 %v269
      %v686 = vunpack.c.l.b16 %v270
      %v687 = vunpack.c.l.b16 %v271
      %v688 = vunpack.c.l.b16 %v272
      %v689 = vunpack.c.l.b16 %v273
      %v690 = vunpack.c.l.b16 %v274
      %v691 = vunpack.c.l.b16 %v275
      %v692 = vunpack.c.l.b16 %v276
      %v693 = vunpack.c.l.b16 %v277
      %v694 = vunpack.c.l.b16 %v278
      %v695 = vunpack.c.l.b16 %v279
      %v696 = vunpack.c.l.b16 %v280
      %v697 = vunpack.c.l.b16 %v281
      %v698 = vunpack.c.l.b16 %v282
      %v699 = vunpack.c.l.b16 %v283
      %v700 = vunpack.c.l.b16 %v284
      %v701 = vunpack.c.l.b16 %v285
      %v702 = vunpack.c.l.b16 %v286
      %v703 = vunpack.c.l.b16 %v287
      %v704 = vunpack.c.l.b16 %v288
      %v705 = vunpack.c.l.b16 %v289
      %v706 = vunpack.c.l.b16 %v290
      %v707 = vunpack.c.l.b16 %v291
      %v708 = vunpack.c.l.b16 %v292
      %v709 = vunpack.c.l.b16 %v293
      %v710 = vunpack.c.l.b16 %v294
      %v711 = vunpack.c.l.b16 %v295
      %v712 = vunpack.c.l.b16 %v296
      %v713 = vunpack.c.l.b16 %v297
      %v714 = vunpack.c.l.b16 %v298
      %v715 = vunpack.c.l.b16 %v299
      %v716 = vunpack.c.l.b16 %v300
      %v717 = vunpack.c.l.b16 %v301
      %v718 = vunpack.c.l.b16 %v302
      %v719 = vunpack.c.l.b16 %v303
      %v720 = vunpack.c.l.b16 %v304
      %v721 = vunpack.c.l.b16 %v305
      %v722 = vunpack.c.l.b16 %v306
      %v723 = vunpack.c.l.b16 %v307
      %v724 = vunpack.c.l.b16 %v308
      %v725 = vunpack.c.l.b16 %v309
      %v726 = vunpack.c.l.b16 %v310
      %v727 = vunpack.c.l.b16 %v311
      %v728 = vunpack.c.l.b16 %v312
      %v729 = vunpack.c.l.b16 %v313
      %v730 = vunpack.c.l.b16 %v314
      %v731 = vunpack.c.l.b16 %v315
      %v732 = vunpack.c.l.b16 %v316
      %v733 = vunpack.c.l.b16 %v317
      %v734 = vunpack.c.l.b16 %v318
      %v735 = vunpack.c.l.b16 %v319
      %v736 = vunpack.c.l.b16 %v320
      %v737 = vunpack.c.l.b16 %v321
      %v738 = vunpack.c.l.b16 %v322
      %v739 = vunpack.c.l.b16 %v323
      %v740 = vunpack.c.l.b16 %v324
      %v741 = vunpack.c.l.b16 %v325
      %v742 = vunpack.c.l.b16 %v326
      %v743 = vunpack.c.l.b16 %v327
      %v744 = vunpack.c.l.b16 %v328
      %v745 = vunpack.c.l.b16 %v329
      %v746 = vunpack.c.l.b16 %v330
      %v747 = vunpack.c.l.b16 %v331
      %v748 = vunpack.c.l.b16 %v332
      %v749 = vunpack.c.l.b16 %v333
      %v750 = vunpack.c.l.b16 %v334
      %v751 = vunpack.c.l.b16 %v335
      %v752 = vunpack.c.l.b16 %v336
      %v753 = vunpack.c.l.b16 %v337
      %v754 = vunpack.c.l.b16 %v338
      %v755 = vunpack.c.l.b16 %v339
      %v756 = vunpack.c.l.b16 %v340
      %v757 = vunpack.c.l.b16 %v341
      %v758 = vunpack.c.l.b16 %v342
      %v759 = vunpack.c.l.b16 %v343
      %v760 = vunpack.c.l.b16 %v344
      %v761 = vunpack.c.l.b16 %v345
      %v762 = vunpack.c.l.b16 %v346
      %v763 = vpack.c.b16 %v636, %v635
      %v764 = vpack.c.b16 %v638, %v637
      %v765 = vpack.c.b16 %v640, %v639
      %v766 = vpack.c.b16 %v642, %v641
      %v767 = vpack.c.b16 %v644, %v643
      %v768 = vpack.c.b16 %v646, %v645
      %v769 = vpack.c.b16 %v648, %v647
      %v770 = vpack.c.b16 %v650, %v649
      %v771 = vpack.c.b16 %v652, %v651
      %v772 = vpack.c.b16 %v654, %v653
      %v773 = vpack.c.b16 %v656, %v655
      %v774 = vpack.c.b16 %v658, %v657
      %v775 = vpack.c.b16 %v660, %v659
      %v776 = vpack.c.b16 %v662, %v661
      %v777 = vpack.c.b16 %v664, %v663
      %v778 = vpack.c.b16 %v666, %v665
      %v779 = vpack.c.b16 %v668, %v667
      %v780 = vpack.c.b16 %v670, %v669
      %v781 = vpack.c.b16 %v672, %v671
      %v782 = vpack.c.b16 %v674, %v673
      %v783 = vpack.c.b16 %v676, %v675
      %v784 = vpack.c.b16 %v678, %v677
      %v785 = vpack.c.b16 %v680, %v679
      %v786 = vpack.c.b16 %v682, %v681
      %v787 = vpack.c.b16 %v684, %v683
      %v788 = vpack.c.b16 %v686, %v685
      %v789 = vpack.c.b16 %v688, %v687
      %v790 = vpack.c.b16 %v690, %v689
      %v791 = vpack.c.b16 %v692, %v691
      %v792 = vpack.c.b16 %v694, %v693
      %v793 = vpack.c.b16 %v696, %v695
      %v794 = vpack.c.b16 %v698, %v697
      %v795 = vpack.c.b16 %v700, %v699
      %v796 = vpack.c.b16 %v702, %v701
      %v797 = vpack.c.b16 %v704, %v703
      %v798 = vpack.c.b16 %v706, %v705
      %v799 = vpack.c.b16 %v708, %v707
      %v800 = vpack.c.b16 %v710, %v709
      %v801 = vpack.c.b16 %v712, %v711
      %v802 = vpack.c.b16 %v714, %v713
      %v803 = vpack.c.b16 %v716, %v715
      %v804 = vpack.c.b16 %v718, %v717
      %v805 = vpack.c.b16 %v720, %v719
      %v806 = vpack.c.b16 %v722, %v721
      %v807 = vpack.c.b16 %v724, %v723
      %v808 = vpack.c.b16 %v726, %v725
      %v809 = vpack.c.b16 %v728, %v727
      %v810 = vpack.c.b16 %v730, %v729
      %v811 = vpack.c.b16 %v732, %v731
      %v812 = vpack.c.b16 %v734, %v733
      %v813 = vpack.c.b16 %v736, %v735
      %v814 = vpack.c.b16 %v738, %v737
      %v815 = vpack.c.b16 %v740, %v739
      %v816 = vpack.c.b16 %v742, %v741
      %v817 = vpack.c.b16 %v744, %v743
      %v818 = vpack.c.b16 %v746, %v745
      %v819 = vpack.c.b16 %v748, %v747
      %v820 = vpack.c.b16 %v750, %v749
      %v821 = vpack.c.b16 %v752, %v751
      %v822 = vpack.c.b16 %v754, %v753
      %v823 = vpack.c.b16 %v756, %v755
      %v824 = vpack.c.b16 %v758, %v757
      %v825 = vpack.c.b16 %v760, %v759
      %v826 = vpack.c.b16 %v762, %v761
      %891 = vmatprep.subr.bf16.mxu0 0
      %892 = vmatpush1.bf16.msra.mxu0 %v763
      %893 = vmatprep.subr.bf16.mxu0 0
      %894 = vmatpush1.bf16.msra.mxu0 %v764
      %895 = vmatprep.subr.bf16.mxu0 0
      %896 = vmatpush1.bf16.msra.mxu0 %v765
      %897 = vmatprep.subr.bf16.mxu0 0
      %898 = vmatpush1.bf16.msra.mxu0 %v766
      %899 = vmatprep.subr.bf16.mxu0 0
      %900 = vmatpush1.bf16.msra.mxu0 %v767
      %901 = vmatprep.subr.bf16.mxu0 0
      %902 = vmatpush1.bf16.msra.mxu0 %v768
      %903 = vmatprep.subr.bf16.mxu0 0
      %904 = vmatpush1.bf16.msra.mxu0 %v769
      %905 = vmatprep.subr.bf16.mxu0 0
      %906 = vmatpush1.bf16.msra.mxu0 %v770
      %907 = vmatprep.subr.bf16.mxu0 0
      %908 = vmatpush1.bf16.msra.mxu0 %v771
      %909 = vmatprep.subr.bf16.mxu0 0
      %910 = vmatpush1.bf16.msra.mxu0 %v772
      %911 = vmatprep.subr.bf16.mxu0 0
      %912 = vmatpush1.bf16.msra.mxu0 %v773
      %913 = vmatprep.subr.bf16.mxu0 0
      %914 = vmatpush1.bf16.msra.mxu0 %v774
      %915 = vmatprep.subr.bf16.mxu0 0
      %916 = vmatpush1.bf16.msra.mxu0 %v775
      %917 = vmatprep.subr.bf16.mxu0 0
      %918 = vmatpush1.bf16.msra.mxu0 %v776
      %919 = vmatprep.subr.bf16.mxu0 0
      %920 = vmatpush1.bf16.msra.mxu0 %v777
      %921 = vmatprep.subr.bf16.mxu0 0
      %922 = vmatpush1.bf16.msra.mxu0 %v778
      %923 = vmatprep.mubr.bf16.mxu0 %v444
      %924 = vmatmul.mubr.bf16.gmra.mrb[0].mxu0 %v443
      %v925 = vpop.f32.mrb[0].mxu0
      %v926 = vadd.f32 0.0, %v925
      %v927 = vpop.f32.mrb[0].mxu0
      %v928 = vpop.f32.mrb[0].mxu0
      %v929 = vadd.f32 0.0, %v928
      %v930 = vpop.f32.mrb[0].mxu0
      %931 = vmatprep.mubr.bf16.mxu0 %v452
      %932 = vmatmul.mubr.bf16.gmra.mrb[0].mxu0 %v451
      %v933 = vpop.f32.mrb[0].mxu0
      %v934 = vadd.f32 0.0, %v933
      %v935 = vpop.f32.mrb[0].mxu0
      %v936 = vpop.f32.mrb[0].mxu0
      %v937 = vadd.f32 0.0, %v936
      %v938 = vpop.f32.mrb[0].mxu0
      %939 = vmatprep.mubr.bf16.mxu0 %v460
      %940 = vmatmul.mubr.bf16.gmra.mrb[0].mxu0 %v459
      %v941 = vpop.f32.mrb[0].mxu0
      %v942 = vadd.f32 0.0, %v941
      %v943 = vpop.f32.mrb[0].mxu0
      %v944 = vpop.f32.mrb[0].mxu0
      %v945 = vadd.f32 0.0, %v944
      %v946 = vpop.f32.mrb[0].mxu0
      %947 = vmatprep.mubr.bf16.mxu0 %v468
      %948 = vmatmul.mubr.bf16.gmra.mrb[0].mxu0 %v467
      %v949 = vpop.f32.mrb[0].mxu0
      %v950 = vadd.f32 0.0, %v949
      %v951 = vpop.f32.mrb[0].mxu0
      %v952 = vpop.f32.mrb[0].mxu0
      %v953 = vadd.f32 0.0, %v952
      %v954 = vpop.f32.mrb[0].mxu0
      %955 = vdwg.mxu0
      %956 = vmatprep.subr.bf16.mxu0 0
      %957 = vmatpush1.bf16.msra.mxu0 %v779
      %958 = vmatprep.subr.bf16.mxu0 0
      %959 = vmatpush1.bf16.msra.mxu0 %v780
      %960 = vmatprep.subr.bf16.mxu0 0
      %961 = vmatpush1.bf16.msra.mxu0 %v781
      %962 = vmatprep.subr.bf16.mxu0 0
      %963 = vmatpush1.bf16.msra.mxu0 %v782
      %964 = vmatprep.subr.bf16.mxu0 0
      %965 = vmatpush1.bf16.msra.mxu0 %v783
      %966 = vmatprep.subr.bf16.mxu0 0
      %967 = vmatpush1.bf16.msra.mxu0 %v784
      %968 = vmatprep.subr.bf16.mxu0 0
      %969 = vmatpush1.bf16.msra.mxu0 %v785
      %970 = vmatprep.subr.bf16.mxu0 0
      %971 = vmatpush1.bf16.msra.mxu0 %v786
      %972 = vmatprep.subr.bf16.mxu0 0
      %973 = vmatpush1.bf16.msra.mxu0 %v787
      %974 = vmatprep.subr.bf16.mxu0 0
      %975 = vmatpush1.bf16.msra.mxu0 %v788
      %976 = vmatprep.subr.bf16.mxu0 0
      %977 = vmatpush1.bf16.msra.mxu0 %v789
      %978 = vmatprep.subr.bf16.mxu0 0
      %979 = vmatpush1.bf16.msra.mxu0 %v790
      %980 = vmatprep.subr.bf16.mxu0 0
      %981 = vmatpush1.bf16.msra.mxu0 %v791
      %982 = vmatprep.subr.bf16.mxu0 0
      %983 = vmatpush1.bf16.msra.mxu0 %v792
      %984 = vmatprep.subr.bf16.mxu0 0
      %985 = vmatpush1.bf16.msra.mxu0 %v793
      %986 = vmatprep.subr.bf16.mxu0 0
      %987 = vmatpush1.bf16.msra.mxu0 %v794
      %988 = vmatprep.mubr.bf16.mxu0 %v446
      %989 = vmatmul.mubr.bf16.gmra.mrb[0].mxu0 %v445
      %v990 = vpop.f32.mrb[0].mxu0
      %v991 = vadd.f32 %v926, %v990
      %v992 = vpop.f32.mrb[0].mxu0
      %v993 = vpop.f32.mrb[0].mxu0
      %v994 = vadd.f32 %v929, %v993
      %v995 = vpop.f32.mrb[0].mxu0
      %996 = vmatprep.mubr.bf16.mxu0 %v454
      %997 = vmatmul.mubr.bf16.gmra.mrb[0].mxu0 %v453
      %v998 = vpop.f32.mrb[0].mxu0
      %v999 = vadd.f32 %v934, %v998
      %v1000 = vpop.f32.mrb[0].mxu0
      %v1001 = vpop.f32.mrb[0].mxu0
      %v1002 = vadd.f32 %v937, %v1001
      %v1003 = vpop.f32.mrb[0].mxu0
      %1004 = vmatprep.mubr.bf16.mxu0 %v462
      %1005 = vmatmul.mubr.bf16.gmra.mrb[0].mxu0 %v461
      %v1006 = vpop.f32.mrb[0].mxu0
      %v1007 = vadd.f32 %v942, %v1006
      %v1008 = vpop.f32.mrb[0].mxu0
      %v1009 = vpop.f32.mrb[0].mxu0
      %v1010 = vadd.f32 %v945, %v1009
      %v1011 = vpop.f32.mrb[0].mxu0
      %1012 = vmatprep.mubr.bf16.mxu0 %v470
      %1013 = vmatmul.mubr.bf16.gmra.mrb[0].mxu0 %v469
      %v1014 = vpop.f32.mrb[0].mxu0
      %v1015 = vadd.f32 %v950, %v1014
      %v1016 = vpop.f32.mrb[0].mxu0
      %v1017 = vpop.f32.mrb[0].mxu0
      %v1018 = vadd.f32 %v953, %v1017
      %v1019 = vpop.f32.mrb[0].mxu0
      %1020 = vdwg.mxu0
      %1021 = vmatprep.subr.bf16.mxu0 0
      %1022 = vmatpush1.bf16.msra.mxu0 %v795
      %1023 = vmatprep.subr.bf16.mxu0 0
      %1024 = vmatpush1.bf16.msra.mxu0 %v796
      %1025 = vmatprep.subr.bf16.mxu0 0
      %1026 = vmatpush1.bf16.msra.mxu0 %v797
      %1027 = vmatprep.subr.bf16.mxu0 0
      %1028 = vmatpush1.bf16.msra.mxu0 %v798
      %1029 = vmatprep.subr.bf16.mxu0 0
      %1030 = vmatpush1.bf16.msra.mxu0 %v799
      %1031 = vmatprep.subr.bf16.mxu0 0
      %1032 = vmatpush1.bf16.msra.mxu0 %v800
      %1033 = vmatprep.subr.bf16.mxu0 0
      %1034 = vmatpush1.bf16.msra.mxu0 %v801
      %1035 = vmatprep.subr.bf16.mxu0 0
      %1036 = vmatpush1.bf16.msra.mxu0 %v802
      %1037 = vmatprep.subr.bf16.mxu0 0
      %1038 = vmatpush1.bf16.msra.mxu0 %v803
      %1039 = vmatprep.subr.bf16.mxu0 0
      %1040 = vmatpush1.bf16.msra.mxu0 %v804
      %1041 = vmatprep.subr.bf16.mxu0 0
      %1042 = vmatpush1.bf16.msra.mxu0 %v805
      %1043 = vmatprep.subr.bf16.mxu0 0
      %1044 = vmatpush1.bf16.msra.mxu0 %v806
      %1045 = vmatprep.subr.bf16.mxu0 0
      %1046 = vmatpush1.bf16.msra.mxu0 %v807
      %1047 = vmatprep.subr.bf16.mxu0 0
      %1048 = vmatpush1.bf16.msra.mxu0 %v808
      %1049 = vmatprep.subr.bf16.mxu0 0
      %1050 = vmatpush1.bf16.msra.mxu0 %v809
      %1051 = vmatprep.subr.bf16.mxu0 0
      %1052 = vmatpush1.bf16.msra.mxu0 %v810
      %1053 = vmatprep.mubr.bf16.mxu0 %v448
      %1054 = vmatmul.mubr.bf16.gmra.mrb[0].mxu0 %v447
      %v1055 = vpop.f32.mrb[0].mxu0
      %v1056 = vadd.f32 %v991, %v1055
      %v1057 = vpop.f32.mrb[0].mxu0
      %v1058 = vpop.f32.mrb[0].mxu0
      %v1059 = vadd.f32 %v994, %v1058
      %v1060 = vpop.f32.mrb[0].mxu0
      %1061 = vmatprep.mubr.bf16.mxu0 %v456
      %1062 = vmatmul.mubr.bf16.gmra.mrb[0].mxu0 %v455
      %v1063 = vpop.f32.mrb[0].mxu0
      %v1064 = vadd.f32 %v999, %v1063
      %v1065 = vpop.f32.mrb[0].mxu0
      %v1066 = vpop.f32.mrb[0].mxu0
      %v1067 = vadd.f32 %v1002, %v1066
      %v1068 = vpop.f32.mrb[0].mxu0
      %1069 = vmatprep.mubr.bf16.mxu0 %v464
      %1070 = vmatmul.mubr.bf16.gmra.mrb[0].mxu0 %v463
      %v1071 = vpop.f32.mrb[0].mxu0
      %v1072 = vadd.f32 %v1007, %v1071
      %v1073 = vpop.f32.mrb[0].mxu0
      %v1074 = vpop.f32.mrb[0].mxu0
      %v1075 = vadd.f32 %v1010, %v1074
      %v1076 = vpop.f32.mrb[0].mxu0
      %1077 = vmatprep.mubr.bf16.mxu0 %v472
      %1078 = vmatmul.mubr.bf16.gmra.mrb[0].mxu0 %v471
      %v1079 = vpop.f32.mrb[0].mxu0
      %v1080 = vadd.f32 %v1015, %v1079
      %v1081 = vpop.f32.mrb[0].mxu0
      %v1082 = vpop.f32.mrb[0].mxu0
      %v1083 = vadd.f32 %v1018, %v1082
      %v1084 = vpop.f32.mrb[0].mxu0
      %1085 = vdwg.mxu0
      %1086 = vmatprep.subr.bf16.mxu0 0
      %1087 = vmatpush1.bf16.msra.mxu0 %v811
      %1088 = vmatprep.subr.bf16.mxu0 0
      %1089 = vmatpush1.bf16.msra.mxu0 %v812
      %1090 = vmatprep.subr.bf16.mxu0 0
      %1091 = vmatpush1.bf16.msra.mxu0 %v813
      %1092 = vmatprep.subr.bf16.mxu0 0
      %1093 = vmatpush1.bf16.msra.mxu0 %v814
      %1094 = vmatprep.subr.bf16.mxu0 0
      %1095 = vmatpush1.bf16.msra.mxu0 %v815
      %1096 = vmatprep.subr.bf16.mxu0 0
      %1097 = vmatpush1.bf16.msra.mxu0 %v816
      %1098 = vmatprep.subr.bf16.mxu0 0
      %1099 = vmatpush1.bf16.msra.mxu0 %v817
      %1100 = vmatprep.subr.bf16.mxu0 0
      %1101 = vmatpush1.bf16.msra.mxu0 %v818
      %1102 = vmatprep.subr.bf16.mxu0 0
      %1103 = vmatpush1.bf16.msra.mxu0 %v819
      %1104 = vmatprep.subr.bf16.mxu0 0
      %1105 = vmatpush1.bf16.msra.mxu0 %v820
      %1106 = vmatprep.subr.bf16.mxu0 0
      %1107 = vmatpush1.bf16.msra.mxu0 %v821
      %1108 = vmatprep.subr.bf16.mxu0 0
      %1109 = vmatpush1.bf16.msra.mxu0 %v822
      %1110 = vmatprep.subr.bf16.mxu0 0
      %1111 = vmatpush1.bf16.msra.mxu0 %v823
      %1112 = vmatprep.subr.bf16.mxu0 0
      %1113 = vmatpush1.bf16.msra.mxu0 %v824
      %1114 = vmatprep.subr.bf16.mxu0 0
      %1115 = vmatpush1.bf16.msra.mxu0 %v825
      %1116 = vmatprep.subr.bf16.mxu0 0
      %1117 = vmatpush1.bf16.msra.mxu0 %v826
      %1118 = vmatprep.mubr.bf16.mxu0 %v450
      %1119 = vmatmul.mubr.bf16.gmra.mrb[0].mxu0 %v449
      %v1120 = vpop.f32.mrb[0].mxu0
      %v1121 = vadd.f32 %v1056, %v1120
      %v1122 = vpop.f32.mrb[0].mxu0
      %v1123 = vpop.f32.mrb[0].mxu0
      %v1124 = vadd.f32 %v1059, %v1123
      %v1125 = vpop.f32.mrb[0].mxu0
      %1126 = vmatprep.mubr.bf16.mxu0 %v458
      %1127 = vmatmul.mubr.bf16.gmra.mrb[0].mxu0 %v457
      %v1128 = vpop.f32.mrb[0].mxu0
      %v1129 = vadd.f32 %v1064, %v1128
      %v1130 = vpop.f32.mrb[0].mxu0
      %v1131 = vpop.f32.mrb[0].mxu0
      %v1132 = vadd.f32 %v1067, %v1131
      %v1133 = vpop.f32.mrb[0].mxu0
      %1134 = vmatprep.mubr.bf16.mxu0 %v466
      %1135 = vmatmul.mubr.bf16.gmra.mrb[0].mxu0 %v465
      %v1136 = vpop.f32.mrb[0].mxu0
      %v1137 = vadd.f32 %v1072, %v1136
      %v1138 = vpop.f32.mrb[0].mxu0
      %v1139 = vpop.f32.mrb[0].mxu0
      %v1140 = vadd.f32 %v1075, %v1139
      %v1141 = vpop.f32.mrb[0].mxu0
      %1142 = vmatprep.mubr.bf16.mxu0 %v474
      %1143 = vmatmul.mubr.bf16.gmra.mrb[0].mxu0 %v473
      %v1144 = vpop.f32.mrb[0].mxu0
      %v1145 = vadd.f32 %v1080, %v1144
      %v1146 = vpop.f32.mrb[0].mxu0
      %v1147 = vpop.f32.mrb[0].mxu0
      %v1148 = vadd.f32 %v1083, %v1147
      %v1149 = vpop.f32.mrb[0].mxu0
      %1150 = vdwg.mxu0
      %v1151 = vadd.f32 %v1121, %v1124
      %v1152 = vadd.f32 %v1151, %v1129
      %v1153 = vadd.f32 %v1152, %v1132
      %v1154 = vadd.f32 %v1153, %v1137
      %v1155 = vadd.f32 %v1154, %v1140
      %v1156 = vadd.f32 %v1155, %v1145
      %v1157 = vadd.f32 %v1156, %v1148
      %v1158 = vrot.slane %v1157, 4
      %v1159 = vadd.f32 %v1157, %v1158
      %v1160 = vrot.slane %v1159, 2
      %v1161 = vadd.f32 %v1159, %v1160
      %v1162 = vrot.slane %v1161, 1
      %v1163 = vadd.f32 %v1161, %v1162
      %v1164 = vmul.f32 %v1121, %v1121
      %v1165 = vmul.f32 %v1124, %v1124
      %v1166 = vmul.f32 %v1129, %v1129
      %v1167 = vmul.f32 %v1132, %v1132
      %v1168 = vmul.f32 %v1137, %v1137
      %v1169 = vmul.f32 %v1140, %v1140
      %v1170 = vmul.f32 %v1145, %v1145
      %v1171 = vmul.f32 %v1148, %v1148
      %v1172 = vadd.f32 %v1164, %v1165
      %v1173 = vadd.f32 %v1172, %v1166
      %v1174 = vadd.f32 %v1173, %v1167
      %v1175 = vadd.f32 %v1174, %v1168
      %v1176 = vadd.f32 %v1175, %v1169
      %v1177 = vadd.f32 %v1176, %v1170
      %v1178 = vadd.f32 %v1177, %v1171
      %v1179 = vrot.slane %v1178, 4
      %v1180 = vadd.f32 %v1178, %v1179
      %v1181 = vrot.slane %v1180, 2
      %v1182 = vadd.f32 %v1180, %v1181
      %v1183 = vrot.slane %v1182, 1
      %v1184 = vadd.f32 %v1182, %v1183
      %v1185 = vmul.f32 %v1163, 0.015625
      %v1186 = vmul.f32 %v1184, 0.015625
      %v1187 = vmul.f32 %v1185, %v1185
      %v1188 = vsub.f32 %v1186, %v1187
      %v1189 = vmax.f32 %v1188, 0.0
      %v1190 = vsub.f32 %v1121, %v1185
      %v1191 = vsub.f32 %v1124, %v1185
      %v1192 = vsub.f32 %v1129, %v1185
      %v1193 = vsub.f32 %v1132, %v1185
      %v1194 = vsub.f32 %v1137, %v1185
      %v1195 = vsub.f32 %v1140, %v1185
      %v1196 = vsub.f32 %v1145, %v1185
      %v1197 = vsub.f32 %v1148, %v1185
      %v1198 = vadd.f32 %v1189, 1e-05
      %v1199 = vrsqrt.pop %v1198
      %v1200 = vmul.f32 %v1190, %v1199
      %v1201 = vmul.f32 %v1191, %v1199
      %v1202 = vmul.f32 %v1192, %v1199
      %v1203 = vmul.f32 %v1193, %v1199
      %v1204 = vmul.f32 %v1194, %v1199
      %v1205 = vmul.f32 %v1195, %v1199
      %v1206 = vmul.f32 %v1196, %v1199
      %v1207 = vmul.f32 %v1197, %v1199
      %vm1208 = vcmp.gt.f32.partialorder %v1200, 0.0
      %vm1209 = vcmp.gt.f32.partialorder %v1201, 0.0
      %vm1210 = vcmp.gt.f32.partialorder %v1202, 0.0
      %vm1211 = vcmp.gt.f32.partialorder %v1203, 0.0
      %vm1212 = vcmp.gt.f32.partialorder %v1204, 0.0
      %vm1213 = vcmp.gt.f32.partialorder %v1205, 0.0
      %vm1214 = vcmp.gt.f32.partialorder %v1206, 0.0
      %vm1215 = vcmp.gt.f32.partialorder %v1207, 0.0
      %v1216 = vmul.f32 %v1200, 0.2
      %v1217 = vmul.f32 %v1201, 0.2
      %v1218 = vmul.f32 %v1202, 0.2
      %v1219 = vmul.f32 %v1203, 0.2
      %v1220 = vmul.f32 %v1204, 0.2
      %v1221 = vmul.f32 %v1205, 0.2
      %v1222 = vmul.f32 %v1206, 0.2
      %v1223 = vmul.f32 %v1207, 0.2
      %v1224 = vsel %vm1208, %v1200, %v1216
      %v1225 = vsel %vm1209, %v1201, %v1217
      %v1226 = vsel %vm1210, %v1202, %v1218
      %v1227 = vsel %vm1211, %v1203, %v1219
      %v1228 = vsel %vm1212, %v1204, %v1220
      %v1229 = vsel %vm1213, %v1205, %v1221
      %v1230 = vsel %vm1214, %v1206, %v1222
      %v1231 = vsel %vm1215, %v1207, %v1223
      %v1232 = vpack.c.bf16 %v1225, %v1224
      %v1233 = vpack.c.bf16 %v1227, %v1226
      %v1234 = vpack.c.bf16 %v1229, %v1228
      %v1235 = vpack.c.bf16 %v1231, %v1230
      %v1240 = vunpack.c.l.b16 %v1232
      %v1241 = vunpack.c.h.b16 %v1232
      %v1242 = vunpack.c.l.b16 %v1233
      %v1243 = vunpack.c.h.b16 %v1233
      %v1244 = vunpack.c.l.b16 %v1234
      %v1245 = vunpack.c.h.b16 %v1234
      %v1246 = vunpack.c.l.b16 %v1235
      %v1247 = vunpack.c.h.b16 %v1235
      %v1248 = vpack.c.b16 %v1240, %v1240
      %v1249 = vpack.c.b16 %v1241, %v1241
      %v1250 = vpack.c.b16 %v1242, %v1242
      %v1251 = vpack.c.b16 %v1243, %v1243
      %v1252 = vpack.c.b16 %v1244, %v1244
      %v1253 = vpack.c.b16 %v1245, %v1245
      %v1254 = vpack.c.b16 %v1246, %v1246
      %v1255 = vpack.c.b16 %v1247, %v1247
      %1264 = vst [vmem:[%s184] sm:$0xf] %v1248
      %1265 = vst [vmem:[%s184 + $0x4] sm:$0xf] %v1249
      %1266 = vst [vmem:[%s184 + $0x8] sm:$0xf] %v1250
      %1267 = vst [vmem:[%s184 + $0xc] sm:$0xf] %v1251
      %1268 = vst [vmem:[%s184 + $0x10] sm:$0xf] %v1252
      %1269 = vst [vmem:[%s184 + $0x14] sm:$0xf] %v1253
      %1270 = vst [vmem:[%s184 + $0x18] sm:$0xf] %v1254
      %1271 = vst [vmem:[%s184 + $0x1c] sm:$0xf] %v1255
      %s1272 = smul.u32 8, %s18
      %p1273 = scmp.lt.s32.totalorder %s17, 1
      %s1274 = scalar_select %p1273, %s17, 1
      %p1275 = scmp.lt.s32.totalorder %s1272, 7
      %s1276 = scalar_select %p1275, %s1272, 7
      %s1277 = smul.addr %s1274, 8
      %s1278 = sadd.s32 %s1276, %s1277
      %s1279 = smul.addr %s1278, 4
      %s1280 = scalar_lea.vmem %s2, %s1279
      // Predicated region
      $region29: #{discriminator_forward.5} parent=27 // pred_check
        %p1281 = pneg %p94
      $region30: #{discriminator_forward.5} parent=27 // pred_check_branch
        %1283 = sbr.rel (%p1281) target = $region32
      $region31: #{discriminator_forward.5} parent=27 // pred_region
        %s1284 = smul.u32 8, %s18
      $region32: #{discriminator_forward.5} parent=27 // pred_fallthru
        _
    $region28: #{discriminator_forward.5} parent=5 // pred_fallthru
      _
    %p1285 = scmp.le.s32.totalorder 2, %s8
    // Predicated region
    $region33: #{discriminator_forward.5} parent=5 // pred_check
      %p1286 = pneg %p1285
    $region34: #{discriminator_forward.5} parent=5 // pred_check_branch
      %1288 = sbr.rel (%p1286) target = $region36
    $region35: #{discriminator_forward.5} parent=5 // pred_region
      %s1289 = ssub.s32 %s8, 2
      // Predicated region
      $region37: #{discriminator_forward.5} parent=35 // pred_check
        %p1290 = pneg %p100
      $region38: #{discriminator_forward.5} parent=35 // pred_check_branch
        %1292 = sbr.rel (%p1290) target = $region40
      $region39: #{discriminator_forward.5} parent=35 // pred_region
        %s1293 = smul.u32 8, %s20
        %p1294 = scmp.lt.s32.totalorder %s19, 1
        %s1295 = scalar_select %p1294, %s19, 1
        %p1296 = scmp.lt.s32.totalorder %s1293, 7
        %s1297 = scalar_select %p1296, %s1293, 7
        %s1298 = smul.addr %s1295, 8
        %s1299 = sadd.s32 %s1297, %s1298
        %s1300 = smul.addr %s1299, 4
        %s1301 = scalar_lea.vmem %s2, %s1300
      $region40: #{discriminator_forward.5} parent=35 // pred_fallthru
        _
    $region36: #{discriminator_forward.5} parent=5 // pred_fallthru
      _
  $region6: #{discriminator_forward.5} parent=0 // loop_footer
    %s12 = sadd.s32 1, %s8
  $region7: #{discriminator_forward.5} parent=0 // loop_footer_branch
    %7 = sbr.rel target = $region3
  $region8: #{discriminator_forward.5} parent=0 // loop_exit
    _

// kernel: discriminator_forward.6
$region0: #{discriminator_forward.6}
  #allocation0 [shape = 'u32[]', space=smem, size = 0x4, offset = 0x4, fixed_abs, tag = 'smem constant byte address 0x4 - core index']
  #allocation1 [shape = 'u32[144,128]{1,0:T(1,128)}', space=vmem, size = 0x12000, scoped, tag = 'internal scratch']
  %s0 = inlined_call_operand.vmem [shape: bf16[2,16,2048], index: 0, kind: input, shape index: {}]
  %s1 = inlined_call_operand.vmem [shape: bf16[2048,256], index: 1, kind: input, shape index: {}]
  %s2 = inlined_call_operand.vmem [shape: bf16[2,16,256], index: 2, kind: output, shape index: {}]
  %s3 = sld [smem:[#allocation0]]
  $region41: #{discriminator_forward.6} parent=0
    _
  %s5 = ssub.s32 1, %s3
  %s6 = scalar_select 0, %s5, %s3
  loop: start=0, step=1, limit=4
  $region2: #{discriminator_forward.6} parent=0 // loop_pre_header
    _
  $region3: #{discriminator_forward.6} parent=0 // loop_header
    %s8 = sphi 0, %s12
    %p9 = scmp.ge.s32.totalorder %s8, 4
    %s15 = sphi 0, %s27
    %s16 = sphi 0, %s23
    %s17 = sphi 0, %s15
    %s18 = sphi 0, %s16
    %s19 = sphi 0, %s17
    %s20 = sphi 0, %s18
    %s32 = sphi 0, %s34
    %s35 = sphi 0, %s32
    %s36 = sphi 0, %s35
    %s52 = sphi 0, %s36
    %s56 = sphi 0, %s56
    %s58 = sphi 0, %s56
    %s59 = sphi 0, %s58
    %s73 = sphi 0, %s59
    %s81 = sphi 0, %s83
    %s84 = sphi 0, %s81
    %s85 = sphi 0, %s84
    %s101 = sphi 0, %s85
  $region4: #{discriminator_forward.6} parent=0 // loop_header_branch
    %11 = sbr.rel (%p9) target = $region8
  $region5: #{discriminator_forward.6} parent=0 // loop_body
    %s13 = ssub.s32 %s8, 1
    %s14 = ssub.s32 %s8, 2
    %s21 = sadd.s32 1, %s16
    %p22 = scmp.ge.s32.totalorder %s21, 1
    %s23 = scalar_select %p22, 0, %s21
    %s24 = sadd.s32 1, %s15
    %s25 = scalar_select %p22, %s24, %s15
    %p26 = scmp.ge.s32.totalorder %s25, 2
    %s27 = scalar_select %p26, 0, %s25
    %s28 = ssub.s32 %s15, %s27
    %s29 = ssub.s32 %s16, %s23
    %s30 = sor.u32 %s28, %s29
    %p31 = scmp.eq.s32.totalorder %s30, 0
    %s33 = sadd.s32 %s32, 1
    %s34 = scalar_select %p31, %s32, %s33
    %p37 = pneg %p31
    %p38 = scmp.eq.s32.totalorder %s8, 1
    %p39 = por %p37, %p38
    %p40 = scmp.ne.s32.totalorder %s32, %s35
    %p41 = scmp.eq.s32.totalorder %s8, 0
    %p42 = por %p40, %p41
    %p43 = scmp.ne.s32.totalorder %s32, %s35
    %p44 = scmp.eq.s32.totalorder %s13, 1
    %p45 = por %p43, %p44
    %p46 = scmp.ne.s32.totalorder %s35, %s36
    %p47 = scmp.eq.s32.totalorder %s13, 0
    %p48 = por %p46, %p47
    %p49 = scmp.ne.s32.totalorder %s35, %s36
    %p50 = scmp.eq.s32.totalorder %s14, 1
    %p51 = por %p49, %p50
    %p53 = scmp.ne.s32.totalorder %s36, %s52
    %p54 = scmp.eq.s32.totalorder %s14, 0
    %p55 = por %p53, %p54
    %s57 = sadd.s32 %s56, 1
    %p60 = scmp.eq.s32.totalorder %s8, 1
    %p61 = scmp.ne.s32.totalorder %s56, %s58
    %p62 = scmp.eq.s32.totalorder %s8, 0
    %p63 = por %p61, %p62
    %p64 = scmp.ne.s32.totalorder %s56, %s58
    %p65 = scmp.eq.s32.totalorder %s13, 1
    %p66 = por %p64, %p65
    %p67 = scmp.ne.s32.totalorder %s58, %s59
    %p68 = scmp.eq.s32.totalorder %s13, 0
    %p69 = por %p67, %p68
    %p70 = scmp.ne.s32.totalorder %s58, %s59
    %p71 = scmp.eq.s32.totalorder %s14, 1
    %p72 = por %p70, %p71
    %p74 = scmp.ne.s32.totalorder %s59, %s73
    %p75 = scmp.eq.s32.totalorder %s14, 0
    %p76 = por %p74, %p75
    %s77 = ssub.s32 %s15, %s27
    %s78 = ssub.s32 %s16, %s23
    %s79 = sor.u32 %s77, %s78
    %p80 = scmp.eq.s32.totalorder %s79, 0
    %s82 = sadd.s32 %s81, 1
    %s83 = scalar_select %p80, %s81, %s82
    %p86 = pneg %p80
    %p87 = scmp.eq.s32.totalorder %s8, 1
    %p88 = por %p86, %p87
    %p89 = scmp.ne.s32.totalorder %s81, %s84
    %p90 = scmp.eq.s32.totalorder %s8, 0
    %p91 = por %p89, %p90
    %p92 = scmp.ne.s32.totalorder %s81, %s84
    %p93 = scmp.eq.s32.totalorder %s13, 1
    %p94 = por %p92, %p93
    %p95 = scmp.ne.s32.totalorder %s84, %s85
    %p96 = scmp.eq.s32.totalorder %s13, 0
    %p97 = por %p95, %p96
    %p98 = scmp.ne.s32.totalorder %s84, %s85
    %p99 = scmp.eq.s32.totalorder %s14, 1
    %p100 = por %p98, %p99
    %p102 = scmp.ne.s32.totalorder %s85, %s101
    %p103 = scmp.eq.s32.totalorder %s14, 0
    %p104 = por %p102, %p103
    %p105 = scmp.le.s32.totalorder 1, %s8
    %p106 = scmp.lt.s32.totalorder %s8, 3
    %p107 = pnand %p105, %p106
    %p108 = pneg %p107
    // Predicated region
    $region9: #{discriminator_forward.6} parent=5 // pred_check
      _
    $region10: #{discriminator_forward.6} parent=5 // pred_check_branch
      %110 = sbr.rel (%p107) target = $region12
    $region11: #{discriminator_forward.6} parent=5 // pred_region
      %s111 = ssub.s32 %s8, 1
      // Predicated region
      $region13: #{discriminator_forward.6} parent=11 // pred_check
        %p112 = pneg %p69
      $region14: #{discriminator_forward.6} parent=11 // pred_check_branch
        %114 = sbr.rel (%p112) target = $region16
      $region15: #{discriminator_forward.6} parent=11 // pred_region
        _
      $region16: #{discriminator_forward.6} parent=11 // pred_fallthru
        _
    $region12: #{discriminator_forward.6} parent=5 // pred_fallthru
      _
    %p115 = scmp.lt.s32.totalorder %s8, 2
    // Predicated region
    $region17: #{discriminator_forward.6} parent=5 // pred_check
      %p116 = pneg %p115
    $region18: #{discriminator_forward.6} parent=5 // pred_check_branch
      %118 = sbr.rel (%p116) target = $region20
    $region19: #{discriminator_forward.6} parent=5 // pred_region
      // Predicated region
      $region21: #{discriminator_forward.6} parent=19 // pred_check
        %p119 = pneg %p42
      $region22: #{discriminator_forward.6} parent=19 // pred_check_branch
        %121 = sbr.rel (%p119) target = $region24
      $region23: #{discriminator_forward.6} parent=19 // pred_region
        %s122 = smul.u32 2, %s16
        %p123 = scmp.lt.s32.totalorder %s15, 1
        %s124 = scalar_select %p123, %s15, 1
        %p125 = scmp.lt.s32.totalorder %s122, 1
        %s126 = scalar_select %p125, %s122, 1
        %s127 = smul.addr %s126, 16
        %s128 = smul.addr %s124, 32
        %s129 = sadd.s32 %s127, %s128
        %s130 = smul.addr %s129, 4
        %s131 = scalar_lea.vmem %s0, %s130
        %s132 = smul.u32 2, %s16
      $region24: #{discriminator_forward.6} parent=19 // pred_fallthru
        _
    $region20: #{discriminator_forward.6} parent=5 // pred_fallthru
      _
    %p133 = scmp.le.s32.totalorder 1, %s8
    %p134 = scmp.lt.s32.totalorder %s8, 3
    %p135 = pnand %p133, %p134
    %p136 = pneg %p135
    // Predicated region
    $region25: #{discriminator_forward.6} parent=5 // pred_check
      _
    $region26: #{discriminator_forward.6} parent=5 // pred_check_branch
      %138 = sbr.rel (%p135) target = $region28
    $region27: #{discriminator_forward.6} parent=5 // pred_region
      %s139 = ssub.s32 %s8, 1
      %s140 = smul.u32 2, %s18
      %p141 = scmp.lt.s32.totalorder %s17, 1
      %s142 = scalar_select %p141, %s17, 1
      %p143 = scmp.lt.s32.totalorder %s140, 1
      %s144 = scalar_select %p143, %s140, 1
      %s145 = smul.addr %s144, 16
      %s146 = smul.addr %s142, 32
      %s147 = sadd.s32 %s145, %s146
      %s148 = smul.addr %s147, 4
      %s149 = scalar_lea.vmem %s0, %s148
      %p150 = pneg %p48
      %p151 = pneg %p45
      %p152 = pneg %p69
      %p153 = pneg %p66
      %p154 = pneg %p97
      %p155 = pneg %p94
      %s156 = smul.u32 2, %s18
      %p157 = scmp.lt.s32.totalorder %s17, 1
      %s158 = scalar_select %p157, %s17, 1
      %p159 = scmp.lt.s32.totalorder %s156, 1
      %s160 = scalar_select %p159, %s156, 1
      %s161 = smul.addr %s160, 2
      %s162 = smul.addr %s158, 4
      %s163 = sadd.s32 %s161, %s162
      %s164 = smul.addr %s163, 4
      %s165 = scalar_lea.vmem %s2, %s164
      %s166 = smul.u32 2, %s18
      %p167 = scmp.lt.s32.totalorder %s17, 1
      %s168 = scalar_select %p167, %s17, 1
      %p169 = scmp.lt.s32.totalorder %s166, 1
      %s170 = scalar_select %p169, %s166, 1
      %s171 = smul.addr %s170, 16
      %s172 = smul.addr %s168, 32
      %s173 = sadd.s32 %s171, %s172
      %s174 = smul.addr %s173, 4
      %s175 = scalar_lea.vmem %s0, %s174
      %s176 = smul.u32 2, %s18
      %s177 = smul.u32 2, %s18
      %p178 = scmp.lt.s32.totalorder %s17, 1
      %s179 = scalar_select %p178, %s17, 1
      %p180 = scmp.lt.s32.totalorder %s177, 1
      %s181 = scalar_select %p180, %s177, 1
      %s182 = smul.addr %s181, 2
      %s183 = smul.addr %s179, 4
      %s184 = sadd.s32 %s182, %s183
      %s185 = smul.addr %s184, 4
      %s186 = scalar_lea.vmem %s2, %s185
      %s187 = smul.u32 2, %s18
      %v188 = vld [vmem:[%s175] sm:$0xff]
      %v189 = vld [vmem:[%s175 + $0x8] sm:$0xff]
      %v190 = vld [vmem:[%s175 + $0x10] sm:$0xff]
      %v191 = vld [vmem:[%s175 + $0x18] sm:$0xff]
      %v192 = vld [vmem:[%s175 + $0x20] sm:$0xff]
      %v193 = vld [vmem:[%s175 + $0x28] sm:$0xff]
      %v194 = vld [vmem:[%s175 + $0x30] sm:$0xff]
      %v195 = vld [vmem:[%s175 + $0x38] sm:$0xff]
      %v196 = vld [vmem:[%s175 + $0x40] sm:$0xff]
      %v197 = vld [vmem:[%s175 + $0x48] sm:$0xff]
      %v198 = vld [vmem:[%s175 + $0x50] sm:$0xff]
      %v199 = vld [vmem:[%s175 + $0x58] sm:$0xff]
      %v200 = vld [vmem:[%s175 + $0x60] sm:$0xff]
      %v201 = vld [vmem:[%s175 + $0x68] sm:$0xff]
      %v202 = vld [vmem:[%s175 + $0x70] sm:$0xff]
      %v203 = vld [vmem:[%s175 + $0x78] sm:$0xff]
      %v204 = vld [vmem:[%s1] sm:$0xff]
      %v205 = vld [vmem:[%s1 + $0x8] sm:$0xff]
      %v206 = vld [vmem:[%s1 + $0x10] sm:$0xff]
      %v207 = vld [vmem:[%s1 + $0x18] sm:$0xff]
      %v208 = vld [vmem:[%s1 + $0x20] sm:$0xff]
      %v209 = vld [vmem:[%s1 + $0x28] sm:$0xff]
      %v210 = vld [vmem:[%s1 + $0x30] sm:$0xff]
      %v211 = vld [vmem:[%s1 + $0x38] sm:$0xff]
      %v212 = vld [vmem:[%s1 + $0x40] sm:$0xff]
      %v213 = vld [vmem:[%s1 + $0x48] sm:$0xff]
      %v214 = vld [vmem:[%s1 + $0x50] sm:$0xff]
      %v215 = vld [vmem:[%s1 + $0x58] sm:$0xff]
      %v216 = vld [vmem:[%s1 + $0x60] sm:$0xff]
      %v217 = vld [vmem:[%s1 + $0x68] sm:$0xff]
      %v218 = vld [vmem:[%s1 + $0x70] sm:$0xff]
      %v219 = vld [vmem:[%s1 + $0x78] sm:$0xff]
      %v220 = vld [vmem:[%s1 + $0x80] sm:$0xff]
      %v221 = vld [vmem:[%s1 + $0x88] sm:$0xff]
      %v222 = vld [vmem:[%s1 + $0x90] sm:$0xff]
      %v223 = vld [vmem:[%s1 + $0x98] sm:$0xff]
      %v224 = vld [vmem:[%s1 + $0xa0] sm:$0xff]
      %v225 = vld [vmem:[%s1 + $0xa8] sm:$0xff]
      %v226 = vld [vmem:[%s1 + $0xb0] sm:$0xff]
      %v227 = vld [vmem:[%s1 + $0xb8] sm:$0xff]
      %v228 = vld [vmem:[%s1 + $0xc0] sm:$0xff]
      %v229 = vld [vmem:[%s1 + $0xc8] sm:$0xff]
      %v230 = vld [vmem:[%s1 + $0xd0] sm:$0xff]
      %v231 = vld [vmem:[%s1 + $0xd8] sm:$0xff]
      %v232 = vld [vmem:[%s1 + $0xe0] sm:$0xff]
      %v233 = vld [vmem:[%s1 + $0xe8] sm:$0xff]
      %v234 = vld [vmem:[%s1 + $0xf0] sm:$0xff]
      %v235 = vld [vmem:[%s1 + $0xf8] sm:$0xff]
      %v236 = vld [vmem:[%s1 + $0x100] sm:$0xff]
      %v237 = vld [vmem:[%s1 + $0x108] sm:$0xff]
      %v238 = vld [vmem:[%s1 + $0x110] sm:$0xff]
      %v239 = vld [vmem:[%s1 + $0x118] sm:$0xff]
      %v240 = vld [vmem:[%s1 + $0x120] sm:$0xff]
      %v241 = vld [vmem:[%s1 + $0x128] sm:$0xff]
      %v242 = vld [vmem:[%s1 + $0x130] sm:$0xff]
      %v243 = vld [vmem:[%s1 + $0x138] sm:$0xff]
      %v244 = vld [vmem:[%s1 + $0x140] sm:$0xff]
      %v245 = vld [vmem:[%s1 + $0x148] sm:$0xff]
      %v246 = vld [vmem:[%s1 + $0x150] sm:$0xff]
      %v247 = vld [vmem:[%s1 + $0x158] sm:$0xff]
      %v248 = vld [vmem:[%s1 + $0x160] sm:$0xff]
      %v249 = vld [vmem:[%s1 + $0x168] sm:$0xff]
      %v250 = vld [vmem:[%s1 + $0x170] sm:$0xff]
      %v251 = vld [vmem:[%s1 + $0x178] sm:$0xff]
      %v252 = vld [vmem:[%s1 + $0x180] sm:$0xff]
      %v253 = vld [vmem:[%s1 + $0x188] sm:$0xff]
      %v254 = vld [vmem:[%s1 + $0x190] sm:$0xff]
      %v255 = vld [vmem:[%s1 + $0x198] sm:$0xff]
      %v256 = vld [vmem:[%s1 + $0x1a0] sm:$0xff]
      %v257 = vld [vmem:[%s1 + $0x1a8] sm:$0xff]
      %v258 = vld [vmem:[%s1 + $0x1b0] sm:$0xff]
      %v259 = vld [vmem:[%s1 + $0x1b8] sm:$0xff]
      %v260 = vld [vmem:[%s1 + $0x1c0] sm:$0xff]
      %v261 = vld [vmem:[%s1 + $0x1c8] sm:$0xff]
      %v262 = vld [vmem:[%s1 + $0x1d0] sm:$0xff]
      %v263 = vld [vmem:[%s1 + $0x1d8] sm:$0xff]
      %v264 = vld [vmem:[%s1 + $0x1e0] sm:$0xff]
      %v265 = vld [vmem:[%s1 + $0x1e8] sm:$0xff]
      %v266 = vld [vmem:[%s1 + $0x1f0] sm:$0xff]
      %v267 = vld [vmem:[%s1 + $0x1f8] sm:$0xff]
      %v268 = vld [vmem:[%s1 + $0x200] sm:$0xff]
      %v269 = vld [vmem:[%s1 + $0x208] sm:$0xff]
      %v270 = vld [vmem:[%s1 + $0x210] sm:$0xff]
      %v271 = vld [vmem:[%s1 + $0x218] sm:$0xff]
      %v272 = vld [vmem:[%s1 + $0x220] sm:$0xff]
      %v273 = vld [vmem:[%s1 + $0x228] sm:$0xff]
      %v274 = vld [vmem:[%s1 + $0x230] sm:$0xff]
      %v275 = vld [vmem:[%s1 + $0x238] sm:$0xff]
      %v276 = vld [vmem:[%s1 + $0x240] sm:$0xff]
      %v277 = vld [vmem:[%s1 + $0x248] sm:$0xff]
      %v278 = vld [vmem:[%s1 + $0x250] sm:$0xff]
      %v279 = vld [vmem:[%s1 + $0x258] sm:$0xff]
      %v280 = vld [vmem:[%s1 + $0x260] sm:$0xff]
      %v281 = vld [vmem:[%s1 + $0x268] sm:$0xff]
      %v282 = vld [vmem:[%s1 + $0x270] sm:$0xff]
      %v283 = vld [vmem:[%s1 + $0x278] sm:$0xff]
      %v284 = vld [vmem:[%s1 + $0x280] sm:$0xff]
      %v285 = vld [vmem:[%s1 + $0x288] sm:$0xff]
      %v286 = vld [vmem:[%s1 + $0x290] sm:$0xff]
      %v287 = vld [vmem:[%s1 + $0x298] sm:$0xff]
      %v288 = vld [vmem:[%s1 + $0x2a0] sm:$0xff]
      %v289 = vld [vmem:[%s1 + $0x2a8] sm:$0xff]
      %v290 = vld [vmem:[%s1 + $0x2b0] sm:$0xff]
      %v291 = vld [vmem:[%s1 + $0x2b8] sm:$0xff]
      %v292 = vld [vmem:[%s1 + $0x2c0] sm:$0xff]
      %v293 = vld [vmem:[%s1 + $0x2c8] sm:$0xff]
      %v294 = vld [vmem:[%s1 + $0x2d0] sm:$0xff]
      %v295 = vld [vmem:[%s1 + $0x2d8] sm:$0xff]
      %v296 = vld [vmem:[%s1 + $0x2e0] sm:$0xff]
      %v297 = vld [vmem:[%s1 + $0x2e8] sm:$0xff]
      %v298 = vld [vmem:[%s1 + $0x2f0] sm:$0xff]
      %v299 = vld [vmem:[%s1 + $0x2f8] sm:$0xff]
      %v300 = vld [vmem:[%s1 + $0x300] sm:$0xff]
      %v301 = vld [vmem:[%s1 + $0x308] sm:$0xff]
      %v302 = vld [vmem:[%s1 + $0x310] sm:$0xff]
      %v303 = vld [vmem:[%s1 + $0x318] sm:$0xff]
      %v304 = vld [vmem:[%s1 + $0x320] sm:$0xff]
      %v305 = vld [vmem:[%s1 + $0x328] sm:$0xff]
      %v306 = vld [vmem:[%s1 + $0x330] sm:$0xff]
      %v307 = vld [vmem:[%s1 + $0x338] sm:$0xff]
      %v308 = vld [vmem:[%s1 + $0x340] sm:$0xff]
      %v309 = vld [vmem:[%s1 + $0x348] sm:$0xff]
      %v310 = vld [vmem:[%s1 + $0x350] sm:$0xff]
      %v311 = vld [vmem:[%s1 + $0x358] sm:$0xff]
      %v312 = vld [vmem:[%s1 + $0x360] sm:$0xff]
      %v313 = vld [vmem:[%s1 + $0x368] sm:$0xff]
      %v314 = vld [vmem:[%s1 + $0x370] sm:$0xff]
      %v315 = vld [vmem:[%s1 + $0x378] sm:$0xff]
      %v316 = vld [vmem:[%s1 + $0x380] sm:$0xff]
      %v317 = vld [vmem:[%s1 + $0x388] sm:$0xff]
      %v318 = vld [vmem:[%s1 + $0x390] sm:$0xff]
      %v319 = vld [vmem:[%s1 + $0x398] sm:$0xff]
      %v320 = vld [vmem:[%s1 + $0x3a0] sm:$0xff]
      %v321 = vld [vmem:[%s1 + $0x3a8] sm:$0xff]
      %v322 = vld [vmem:[%s1 + $0x3b0] sm:$0xff]
      %v323 = vld [vmem:[%s1 + $0x3b8] sm:$0xff]
      %v324 = vld [vmem:[%s1 + $0x3c0] sm:$0xff]
      %v325 = vld [vmem:[%s1 + $0x3c8] sm:$0xff]
      %v326 = vld [vmem:[%s1 + $0x3d0] sm:$0xff]
      %v327 = vld [vmem:[%s1 + $0x3d8] sm:$0xff]
      %v328 = vld [vmem:[%s1 + $0x3e0] sm:$0xff]
      %v329 = vld [vmem:[%s1 + $0x3e8] sm:$0xff]
      %v330 = vld [vmem:[%s1 + $0x3f0] sm:$0xff]
      %v331 = vld [vmem:[%s1 + $0x3f8] sm:$0xff]
      %v332 = vld [vmem:[%s1 + $0x400] sm:$0xff]
      %v333 = vld [vmem:[%s1 + $0x408] sm:$0xff]
      %v334 = vld [vmem:[%s1 + $0x410] sm:$0xff]
      %v335 = vld [vmem:[%s1 + $0x418] sm:$0xff]
      %v336 = vld [vmem:[%s1 + $0x420] sm:$0xff]
      %v337 = vld [vmem:[%s1 + $0x428] sm:$0xff]
      %v338 = vld [vmem:[%s1 + $0x430] sm:$0xff]
      %v339 = vld [vmem:[%s1 + $0x438] sm:$0xff]
      %v340 = vld [vmem:[%s1 + $0x440] sm:$0xff]
      %v341 = vld [vmem:[%s1 + $0x448] sm:$0xff]
      %v342 = vld [vmem:[%s1 + $0x450] sm:$0xff]
      %v343 = vld [vmem:[%s1 + $0x458] sm:$0xff]
      %v344 = vld [vmem:[%s1 + $0x460] sm:$0xff]
      %v345 = vld [vmem:[%s1 + $0x468] sm:$0xff]
      %v346 = vld [vmem:[%s1 + $0x470] sm:$0xff]
      %v347 = vld [vmem:[%s1 + $0x478] sm:$0xff]
      %v348 = vld [vmem:[%s1 + $0x480] sm:$0xff]
      %v349 = vld [vmem:[%s1 + $0x488] sm:$0xff]
      %v350 = vld [vmem:[%s1 + $0x490] sm:$0xff]
      %v351 = vld [vmem:[%s1 + $0x498] sm:$0xff]
      %v352 = vld [vmem:[%s1 + $0x4a0] sm:$0xff]
      %v353 = vld [vmem:[%s1 + $0x4a8] sm:$0xff]
      %v354 = vld [vmem:[%s1 + $0x4b0] sm:$0xff]
      %v355 = vld [vmem:[%s1 + $0x4b8] sm:$0xff]
      %v356 = vld [vmem:[%s1 + $0x4c0] sm:$0xff]
      %v357 = vld [vmem:[%s1 + $0x4c8] sm:$0xff]
      %v358 = vld [vmem:[%s1 + $0x4d0] sm:$0xff]
      %v359 = vld [vmem:[%s1 + $0x4d8] sm:$0xff]
      %v360 = vld [vmem:[%s1 + $0x4e0] sm:$0xff]
      %v361 = vld [vmem:[%s1 + $0x4e8] sm:$0xff]
      %v362 = vld [vmem:[%s1 + $0x4f0] sm:$0xff]
      %v363 = vld [vmem:[%s1 + $0x4f8] sm:$0xff]
      %v364 = vld [vmem:[%s1 + $0x500] sm:$0xff]
      %v365 = vld [vmem:[%s1 + $0x508] sm:$0xff]
      %v366 = vld [vmem:[%s1 + $0x510] sm:$0xff]
      %v367 = vld [vmem:[%s1 + $0x518] sm:$0xff]
      %v368 = vld [vmem:[%s1 + $0x520] sm:$0xff]
      %v369 = vld [vmem:[%s1 + $0x528] sm:$0xff]
      %v370 = vld [vmem:[%s1 + $0x530] sm:$0xff]
      %v371 = vld [vmem:[%s1 + $0x538] sm:$0xff]
      %v372 = vld [vmem:[%s1 + $0x540] sm:$0xff]
      %v373 = vld [vmem:[%s1 + $0x548] sm:$0xff]
      %v374 = vld [vmem:[%s1 + $0x550] sm:$0xff]
      %v375 = vld [vmem:[%s1 + $0x558] sm:$0xff]
      %v376 = vld [vmem:[%s1 + $0x560] sm:$0xff]
      %v377 = vld [vmem:[%s1 + $0x568] sm:$0xff]
      %v378 = vld [vmem:[%s1 + $0x570] sm:$0xff]
      %v379 = vld [vmem:[%s1 + $0x578] sm:$0xff]
      %v380 = vld [vmem:[%s1 + $0x580] sm:$0xff]
      %v381 = vld [vmem:[%s1 + $0x588] sm:$0xff]
      %v382 = vld [vmem:[%s1 + $0x590] sm:$0xff]
      %v383 = vld [vmem:[%s1 + $0x598] sm:$0xff]
      %v384 = vld [vmem:[%s1 + $0x5a0] sm:$0xff]
      %v385 = vld [vmem:[%s1 + $0x5a8] sm:$0xff]
      %v386 = vld [vmem:[%s1 + $0x5b0] sm:$0xff]
      %v387 = vld [vmem:[%s1 + $0x5b8] sm:$0xff]
      %v388 = vld [vmem:[%s1 + $0x5c0] sm:$0xff]
      %v389 = vld [vmem:[%s1 + $0x5c8] sm:$0xff]
      %v390 = vld [vmem:[%s1 + $0x5d0] sm:$0xff]
      %v391 = vld [vmem:[%s1 + $0x5d8] sm:$0xff]
      %v392 = vld [vmem:[%s1 + $0x5e0] sm:$0xff]
      %v393 = vld [vmem:[%s1 + $0x5e8] sm:$0xff]
      %v394 = vld [vmem:[%s1 + $0x5f0] sm:$0xff]
      %v395 = vld [vmem:[%s1 + $0x5f8] sm:$0xff]
      %v396 = vld [vmem:[%s1 + $0x600] sm:$0xff]
      %v397 = vld [vmem:[%s1 + $0x608] sm:$0xff]
      %v398 = vld [vmem:[%s1 + $0x610] sm:$0xff]
      %v399 = vld [vmem:[%s1 + $0x618] sm:$0xff]
      %v400 = vld [vmem:[%s1 + $0x620] sm:$0xff]
      %v401 = vld [vmem:[%s1 + $0x628] sm:$0xff]
      %v402 = vld [vmem:[%s1 + $0x630] sm:$0xff]
      %v403 = vld [vmem:[%s1 + $0x638] sm:$0xff]
      %v404 = vld [vmem:[%s1 + $0x640] sm:$0xff]
      %v405 = vld [vmem:[%s1 + $0x648] sm:$0xff]
      %v406 = vld [vmem:[%s1 + $0x650] sm:$0xff]
      %v407 = vld [vmem:[%s1 + $0x658] sm:$0xff]
      %v408 = vld [vmem:[%s1 + $0x660] sm:$0xff]
      %v409 = vld [vmem:[%s1 + $0x668] sm:$0xff]
      %v410 = vld [vmem:[%s1 + $0x670] sm:$0xff]
      %v411 = vld [vmem:[%s1 + $0x678] sm:$0xff]
      %v412 = vld [vmem:[%s1 + $0x680] sm:$0xff]
      %v413 = vld [vmem:[%s1 + $0x688] sm:$0xff]
      %v414 = vld [vmem:[%s1 + $0x690] sm:$0xff]
      %v415 = vld [vmem:[%s1 + $0x698] sm:$0xff]
      %v416 = vld [vmem:[%s1 + $0x6a0] sm:$0xff]
      %v417 = vld [vmem:[%s1 + $0x6a8] sm:$0xff]
      %v418 = vld [vmem:[%s1 + $0x6b0] sm:$0xff]
      %v419 = vld [vmem:[%s1 + $0x6b8] sm:$0xff]
      %v420 = vld [vmem:[%s1 + $0x6c0] sm:$0xff]
      %v421 = vld [vmem:[%s1 + $0x6c8] sm:$0xff]
      %v422 = vld [vmem:[%s1 + $0x6d0] sm:$0xff]
      %v423 = vld [vmem:[%s1 + $0x6d8] sm:$0xff]
      %v424 = vld [vmem:[%s1 + $0x6e0] sm:$0xff]
      %v425 = vld [vmem:[%s1 + $0x6e8] sm:$0xff]
      %v426 = vld [vmem:[%s1 + $0x6f0] sm:$0xff]
      %v427 = vld [vmem:[%s1 + $0x6f8] sm:$0xff]
      %v428 = vld [vmem:[%s1 + $0x700] sm:$0xff]
      %v429 = vld [vmem:[%s1 + $0x708] sm:$0xff]
      %v430 = vld [vmem:[%s1 + $0x710] sm:$0xff]
      %v431 = vld [vmem:[%s1 + $0x718] sm:$0xff]
      %v432 = vld [vmem:[%s1 + $0x720] sm:$0xff]
      %v433 = vld [vmem:[%s1 + $0x728] sm:$0xff]
      %v434 = vld [vmem:[%s1 + $0x730] sm:$0xff]
      %v435 = vld [vmem:[%s1 + $0x738] sm:$0xff]
      %v436 = vld [vmem:[%s1 + $0x740] sm:$0xff]
      %v437 = vld [vmem:[%s1 + $0x748] sm:$0xff]
      %v438 = vld [vmem:[%s1 + $0x750] sm:$0xff]
      %v439 = vld [vmem:[%s1 + $0x758] sm:$0xff]
      %v440 = vld [vmem:[%s1 + $0x760] sm:$0xff]
      %v441 = vld [vmem:[%s1 + $0x768] sm:$0xff]
      %v442 = vld [vmem:[%s1 + $0x770] sm:$0xff]
      %v443 = vld [vmem:[%s1 + $0x778] sm:$0xff]
      %v444 = vld [vmem:[%s1 + $0x780] sm:$0xff]
      %v445 = vld [vmem:[%s1 + $0x788] sm:$0xff]
      %v446 = vld [vmem:[%s1 + $0x790] sm:$0xff]
      %v447 = vld [vmem:[%s1 + $0x798] sm:$0xff]
      %v448 = vld [vmem:[%s1 + $0x7a0] sm:$0xff]
      %v449 = vld [vmem:[%s1 + $0x7a8] sm:$0xff]
      %v450 = vld [vmem:[%s1 + $0x7b0] sm:$0xff]
      %v451 = vld [vmem:[%s1 + $0x7b8] sm:$0xff]
      %v452 = vld [vmem:[%s1 + $0x7c0] sm:$0xff]
      %v453 = vld [vmem:[%s1 + $0x7c8] sm:$0xff]
      %v454 = vld [vmem:[%s1 + $0x7d0] sm:$0xff]
      %v455 = vld [vmem:[%s1 + $0x7d8] sm:$0xff]
      %v456 = vld [vmem:[%s1 + $0x7e0] sm:$0xff]
      %v457 = vld [vmem:[%s1 + $0x7e8] sm:$0xff]
      %v458 = vld [vmem:[%s1 + $0x7f0] sm:$0xff]
      %v459 = vld [vmem:[%s1 + $0x7f8] sm:$0xff]
      %v476 = vunpack.c.l.b16 %v188
      %v477 = vunpack.c.h.b16 %v188
      %v478 = vunpack.c.l.b16 %v189
      %v479 = vunpack.c.h.b16 %v189
      %v480 = vunpack.c.l.b16 %v190
      %v481 = vunpack.c.h.b16 %v190
      %v482 = vunpack.c.l.b16 %v191
      %v483 = vunpack.c.h.b16 %v191
      %v484 = vunpack.c.l.b16 %v192
      %v485 = vunpack.c.h.b16 %v192
      %v486 = vunpack.c.l.b16 %v193
      %v487 = vunpack.c.h.b16 %v193
      %v488 = vunpack.c.l.b16 %v194
      %v489 = vunpack.c.h.b16 %v194
      %v490 = vunpack.c.l.b16 %v195
      %v491 = vunpack.c.h.b16 %v195
      %v492 = vunpack.c.l.b16 %v196
      %v493 = vunpack.c.h.b16 %v196
      %v494 = vunpack.c.l.b16 %v197
      %v495 = vunpack.c.h.b16 %v197
      %v496 = vunpack.c.l.b16 %v198
      %v497 = vunpack.c.h.b16 %v198
      %v498 = vunpack.c.l.b16 %v199
      %v499 = vunpack.c.h.b16 %v199
      %v500 = vunpack.c.l.b16 %v200
      %v501 = vunpack.c.h.b16 %v200
      %v502 = vunpack.c.l.b16 %v201
      %v503 = vunpack.c.h.b16 %v201
      %v504 = vunpack.c.l.b16 %v202
      %v505 = vunpack.c.h.b16 %v202
      %v506 = vunpack.c.l.b16 %v203
      %v507 = vunpack.c.h.b16 %v203
      %v508 = vpack.c.b16 %v492, %v476
      %v509 = vpack.c.b16 %v493, %v477
      %v510 = vpack.c.b16 %v494, %v478
      %v511 = vpack.c.b16 %v495, %v479
      %v512 = vpack.c.b16 %v496, %v480
      %v513 = vpack.c.b16 %v497, %v481
      %v514 = vpack.c.b16 %v498, %v482
      %v515 = vpack.c.b16 %v499, %v483
      %v516 = vpack.c.b16 %v500, %v484
      %v517 = vpack.c.b16 %v501, %v485
      %v518 = vpack.c.b16 %v502, %v486
      %v519 = vpack.c.b16 %v503, %v487
      %v520 = vpack.c.b16 %v504, %v488
      %v521 = vpack.c.b16 %v505, %v489
      %v522 = vpack.c.b16 %v506, %v490
      %v523 = vpack.c.b16 %v507, %v491
      %v796 = vunpack.c.l.b16 %v204
      %v797 = vunpack.c.h.b16 %v204
      %v798 = vunpack.c.l.b16 %v205
      %v799 = vunpack.c.h.b16 %v205
      %v800 = vunpack.c.l.b16 %v206
      %v801 = vunpack.c.h.b16 %v206
      %v802 = vunpack.c.l.b16 %v207
      %v803 = vunpack.c.h.b16 %v207
      %v804 = vunpack.c.l.b16 %v208
      %v805 = vunpack.c.h.b16 %v208
      %v806 = vunpack.c.l.b16 %v209
      %v807 = vunpack.c.h.b16 %v209
      %v808 = vunpack.c.l.b16 %v210
      %v809 = vunpack.c.h.b16 %v210
      %v810 = vunpack.c.l.b16 %v211
      %v811 = vunpack.c.h.b16 %v211
      %v812 = vunpack.c.l.b16 %v212
      %v813 = vunpack.c.h.b16 %v212
      %v814 = vunpack.c.l.b16 %v213
      %v815 = vunpack.c.h.b16 %v213
      %v816 = vunpack.c.l.b16 %v214
      %v817 = vunpack.c.h.b16 %v214
      %v818 = vunpack.c.l.b16 %v215
      %v819 = vunpack.c.h.b16 %v215
      %v820 = vunpack.c.l.b16 %v216
      %v821 = vunpack.c.h.b16 %v216
      %v822 = vunpack.c.l.b16 %v217
      %v823 = vunpack.c.h.b16 %v217
      %v824 = vunpack.c.l.b16 %v218
      %v825 = vunpack.c.h.b16 %v218
      %v826 = vunpack.c.l.b16 %v219
      %v827 = vunpack.c.h.b16 %v219
      %v828 = vunpack.c.l.b16 %v220
      %v829 = vunpack.c.h.b16 %v220
      %v830 = vunpack.c.l.b16 %v221
      %v831 = vunpack.c.h.b16 %v221
      %v832 = vunpack.c.l.b16 %v222
      %v833 = vunpack.c.h.b16 %v222
      %v834 = vunpack.c.l.b16 %v223
      %v835 = vunpack.c.h.b16 %v223
      %v836 = vunpack.c.l.b16 %v224
      %v837 = vunpack.c.h.b16 %v224
      %v838 = vunpack.c.l.b16 %v225
      %v839 = vunpack.c.h.b16 %v225
      %v840 = vunpack.c.l.b16 %v226
      %v841 = vunpack.c.h.b16 %v226
      %v842 = vunpack.c.l.b16 %v227
      %v843 = vunpack.c.h.b16 %v227
      %v844 = vunpack.c.l.b16 %v228
      %v845 = vunpack.c.h.b16 %v228
      %v846 = vunpack.c.l.b16 %v229
      %v847 = vunpack.c.h.b16 %v229
      %v848 = vunpack.c.l.b16 %v230
      %v849 = vunpack.c.h.b16 %v230
      %v850 = vunpack.c.l.b16 %v231
      %v851 = vunpack.c.h.b16 %v231
      %v852 = vunpack.c.l.b16 %v232
      %v853 = vunpack.c.h.b16 %v232
      %v854 = vunpack.c.l.b16 %v233
      %v855 = vunpack.c.h.b16 %v233
      %v856 = vunpack.c.l.b16 %v234
      %v857 = vunpack.c.h.b16 %v234
      %v858 = vunpack.c.l.b16 %v235
      %v859 = vunpack.c.h.b16 %v235
      %v860 = vunpack.c.l.b16 %v236
      %v861 = vunpack.c.h.b16 %v236
      %v862 = vunpack.c.l.b16 %v237
      %v863 = vunpack.c.h.b16 %v237
      %v864 = vunpack.c.l.b16 %v238
      %v865 = vunpack.c.h.b16 %v238
      %v866 = vunpack.c.l.b16 %v239
      %v867 = vunpack.c.h.b16 %v239
      %v868 = vunpack.c.l.b16 %v240
      %v869 = vunpack.c.h.b16 %v240
      %v870 = vunpack.c.l.b16 %v241
      %v871 = vunpack.c.h.b16 %v241
      %v872 = vunpack.c.l.b16 %v242
      %v873 = vunpack.c.h.b16 %v242
      %v874 = vunpack.c.l.b16 %v243
      %v875 = vunpack.c.h.b16 %v243
      %v876 = vunpack.c.l.b16 %v244
      %v877 = vunpack.c.h.b16 %v244
      %v878 = vunpack.c.l.b16 %v245
      %v879 = vunpack.c.h.b16 %v245
      %v880 = vunpack.c.l.b16 %v246
      %v881 = vunpack.c.h.b16 %v246
      %v882 = vunpack.c.l.b16 %v247
      %v883 = vunpack.c.h.b16 %v247
      %v884 = vunpack.c.l.b16 %v248
      %v885 = vunpack.c.h.b16 %v248
      %v886 = vunpack.c.l.b16 %v249
      %v887 = vunpack.c.h.b16 %v249
      %v888 = vunpack.c.l.b16 %v250
      %v889 = vunpack.c.h.b16 %v250
      %v890 = vunpack.c.l.b16 %v251
      %v891 = vunpack.c.h.b16 %v251
      %v892 = vunpack.c.l.b16 %v252
      %v893 = vunpack.c.h.b16 %v252
      %v894 = vunpack.c.l.b16 %v253
      %v895 = vunpack.c.h.b16 %v253
      %v896 = vunpack.c.l.b16 %v254
      %v897 = vunpack.c.h.b16 %v254
      %v898 = vunpack.c.l.b16 %v255
      %v899 = vunpack.c.h.b16 %v255
      %v900 = vunpack.c.l.b16 %v256
      %v901 = vunpack.c.h.b16 %v256
      %v902 = vunpack.c.l.b16 %v257
      %v903 = vunpack.c.h.b16 %v257
      %v904 = vunpack.c.l.b16 %v258
      %v905 = vunpack.c.h.b16 %v258
      %v906 = vunpack.c.l.b16 %v259
      %v907 = vunpack.c.h.b16 %v259
      %v908 = vunpack.c.l.b16 %v260
      %v909 = vunpack.c.h.b16 %v260
      %v910 = vunpack.c.l.b16 %v261
      %v911 = vunpack.c.h.b16 %v261
      %v912 = vunpack.c.l.b16 %v262
      %v913 = vunpack.c.h.b16 %v262
      %v914 = vunpack.c.l.b16 %v263
      %v915 = vunpack.c.h.b16 %v263
      %v916 = vunpack.c.l.b16 %v264
      %v917 = vunpack.c.h.b16 %v264
      %v918 = vunpack.c.l.b16 %v265
      %v919 = vunpack.c.h.b16 %v265
      %v920 = vunpack.c.l.b16 %v266
      %v921 = vunpack.c.h.b16 %v266
      %v922 = vunpack.c.l.b16 %v267
      %v923 = vunpack.c.h.b16 %v267
      %v924 = vunpack.c.l.b16 %v268
      %v925 = vunpack.c.h.b16 %v268
      %v926 = vunpack.c.l.b16 %v269
      %v927 = vunpack.c.h.b16 %v269
      %v928 = vunpack.c.l.b16 %v270
      %v929 = vunpack.c.h.b16 %v270
      %v930 = vunpack.c.l.b16 %v271
      %v931 = vunpack.c.h.b16 %v271
      %v932 = vunpack.c.l.b16 %v272
      %v933 = vunpack.c.h.b16 %v272
      %v934 = vunpack.c.l.b16 %v273
      %v935 = vunpack.c.h.b16 %v273
      %v936 = vunpack.c.l.b16 %v274
      %v937 = vunpack.c.h.b16 %v274
      %v938 = vunpack.c.l.b16 %v275
      %v939 = vunpack.c.h.b16 %v275
      %v940 = vunpack.c.l.b16 %v276
      %v941 = vunpack.c.h.b16 %v276
      %v942 = vunpack.c.l.b16 %v277
      %v943 = vunpack.c.h.b16 %v277
      %v944 = vunpack.c.l.b16 %v278
      %v945 = vunpack.c.h.b16 %v278
      %v946 = vunpack.c.l.b16 %v279
      %v947 = vunpack.c.h.b16 %v279
      %v948 = vunpack.c.l.b16 %v280
      %v949 = vunpack.c.h.b16 %v280
      %v950 = vunpack.c.l.b16 %v281
      %v951 = vunpack.c.h.b16 %v281
      %v952 = vunpack.c.l.b16 %v282
      %v953 = vunpack.c.h.b16 %v282
      %v954 = vunpack.c.l.b16 %v283
      %v955 = vunpack.c.h.b16 %v283
      %v956 = vunpack.c.l.b16 %v284
      %v957 = vunpack.c.h.b16 %v284
      %v958 = vunpack.c.l.b16 %v285
      %v959 = vunpack.c.h.b16 %v285
      %v960 = vunpack.c.l.b16 %v286
      %v961 = vunpack.c.h.b16 %v286
      %v962 = vunpack.c.l.b16 %v287
      %v963 = vunpack.c.h.b16 %v287
      %v964 = vunpack.c.l.b16 %v288
      %v965 = vunpack.c.h.b16 %v288
      %v966 = vunpack.c.l.b16 %v289
      %v967 = vunpack.c.h.b16 %v289
      %v968 = vunpack.c.l.b16 %v290
      %v969 = vunpack.c.h.b16 %v290
      %v970 = vunpack.c.l.b16 %v291
      %v971 = vunpack.c.h.b16 %v291
      %v972 = vunpack.c.l.b16 %v292
      %v973 = vunpack.c.h.b16 %v292
      %v974 = vunpack.c.l.b16 %v293
      %v975 = vunpack.c.h.b16 %v293
      %v976 = vunpack.c.l.b16 %v294
      %v977 = vunpack.c.h.b16 %v294
      %v978 = vunpack.c.l.b16 %v295
      %v979 = vunpack.c.h.b16 %v295
      %v980 = vunpack.c.l.b16 %v296
      %v981 = vunpack.c.h.b16 %v296
      %v982 = vunpack.c.l.b16 %v297
      %v983 = vunpack.c.h.b16 %v297
      %v984 = vunpack.c.l.b16 %v298
      %v985 = vunpack.c.h.b16 %v298
      %v986 = vunpack.c.l.b16 %v299
      %v987 = vunpack.c.h.b16 %v299
      %v988 = vunpack.c.l.b16 %v300
      %v989 = vunpack.c.h.b16 %v300
      %v990 = vunpack.c.l.b16 %v301
      %v991 = vunpack.c.h.b16 %v301
      %v992 = vunpack.c.l.b16 %v302
      %v993 = vunpack.c.h.b16 %v302
      %v994 = vunpack.c.l.b16 %v303
      %v995 = vunpack.c.h.b16 %v303
      %v996 = vunpack.c.l.b16 %v304
      %v997 = vunpack.c.h.b16 %v304
      %v998 = vunpack.c.l.b16 %v305
      %v999 = vunpack.c.h.b16 %v305
      %v1000 = vunpack.c.l.b16 %v306
      %v1001 = vunpack.c.h.b16 %v306
      %v1002 = vunpack.c.l.b16 %v307
      %v1003 = vunpack.c.h.b16 %v307
      %v1004 = vunpack.c.l.b16 %v308
      %v1005 = vunpack.c.h.b16 %v308
      %v1006 = vunpack.c.l.b16 %v309
      %v1007 = vunpack.c.h.b16 %v309
      %v1008 = vunpack.c.l.b16 %v310
      %v1009 = vunpack.c.h.b16 %v310
      %v1010 = vunpack.c.l.b16 %v311
      %v1011 = vunpack.c.h.b16 %v311
      %v1012 = vunpack.c.l.b16 %v312
      %v1013 = vunpack.c.h.b16 %v312
      %v1014 = vunpack.c.l.b16 %v313
      %v1015 = vunpack.c.h.b16 %v313
      %v1016 = vunpack.c.l.b16 %v314
      %v1017 = vunpack.c.h.b16 %v314
      %v1018 = vunpack.c.l.b16 %v315
      %v1019 = vunpack.c.h.b16 %v315
      %v1020 = vunpack.c.l.b16 %v316
      %v1021 = vunpack.c.h.b16 %v316
      %v1022 = vunpack.c.l.b16 %v317
      %v1023 = vunpack.c.h.b16 %v317
      %v1024 = vunpack.c.l.b16 %v318
      %v1025 = vunpack.c.h.b16 %v318
      %v1026 = vunpack.c.l.b16 %v319
      %v1027 = vunpack.c.h.b16 %v319
      %v1028 = vunpack.c.l.b16 %v320
      %v1029 = vunpack.c.h.b16 %v320
      %v1030 = vunpack.c.l.b16 %v321
      %v1031 = vunpack.c.h.b16 %v321
      %v1032 = vunpack.c.l.b16 %v322
      %v1033 = vunpack.c.h.b16 %v322
      %v1034 = vunpack.c.l.b16 %v323
      %v1035 = vunpack.c.h.b16 %v323
      %v1036 = vunpack.c.l.b16 %v324
      %v1037 = vunpack.c.h.b16 %v324
      %v1038 = vunpack.c.l.b16 %v325
      %v1039 = vunpack.c.h.b16 %v325
      %v1040 = vunpack.c.l.b16 %v326
      %v1041 = vunpack.c.h.b16 %v326
      %v1042 = vunpack.c.l.b16 %v327
      %v1043 = vunpack.c.h.b16 %v327
      %v1044 = vunpack.c.l.b16 %v328
      %v1045 = vunpack.c.h.b16 %v328
      %v1046 = vunpack.c.l.b16 %v329
      %v1047 = vunpack.c.h.b16 %v329
      %v1048 = vunpack.c.l.b16 %v330
      %v1049 = vunpack.c.h.b16 %v330
      %v1050 = vunpack.c.l.b16 %v331
      %v1051 = vunpack.c.h.b16 %v331
      %v1052 = vunpack.c.l.b16 %v332
      %v1053 = vunpack.c.h.b16 %v332
      %v1054 = vunpack.c.l.b16 %v333
      %v1055 = vunpack.c.h.b16 %v333
      %v1056 = vunpack.c.l.b16 %v334
      %v1057 = vunpack.c.h.b16 %v334
      %v1058 = vunpack.c.l.b16 %v335
      %v1059 = vunpack.c.h.b16 %v335
      %v1060 = vunpack.c.l.b16 %v336
      %v1061 = vunpack.c.h.b16 %v336
      %v1062 = vunpack.c.l.b16 %v337
      %v1063 = vunpack.c.h.b16 %v337
      %v1064 = vunpack.c.l.b16 %v338
      %v1065 = vunpack.c.h.b16 %v338
      %v1066 = vunpack.c.l.b16 %v339
      %v1067 = vunpack.c.h.b16 %v339
      %v1068 = vunpack.c.l.b16 %v340
      %v1069 = vunpack.c.h.b16 %v340
      %v1070 = vunpack.c.l.b16 %v341
      %v1071 = vunpack.c.h.b16 %v341
      %v1072 = vunpack.c.l.b16 %v342
      %v1073 = vunpack.c.h.b16 %v342
      %v1074 = vunpack.c.l.b16 %v343
      %v1075 = vunpack.c.h.b16 %v343
      %v1076 = vunpack.c.l.b16 %v344
      %v1077 = vunpack.c.h.b16 %v344
      %v1078 = vunpack.c.l.b16 %v345
      %v1079 = vunpack.c.h.b16 %v345
      %v1080 = vunpack.c.l.b16 %v346
      %v1081 = vunpack.c.h.b16 %v346
      %v1082 = vunpack.c.l.b16 %v347
      %v1083 = vunpack.c.h.b16 %v347
      %v1084 = vunpack.c.l.b16 %v348
      %v1085 = vunpack.c.h.b16 %v348
      %v1086 = vunpack.c.l.b16 %v349
      %v1087 = vunpack.c.h.b16 %v349
      %v1088 = vunpack.c.l.b16 %v350
      %v1089 = vunpack.c.h.b16 %v350
      %v1090 = vunpack.c.l.b16 %v351
      %v1091 = vunpack.c.h.b16 %v351
      %v1092 = vunpack.c.l.b16 %v352
      %v1093 = vunpack.c.h.b16 %v352
      %v1094 = vunpack.c.l.b16 %v353
      %v1095 = vunpack.c.h.b16 %v353
      %v1096 = vunpack.c.l.b16 %v354
      %v1097 = vunpack.c.h.b16 %v354
      %v1098 = vunpack.c.l.b16 %v355
      %v1099 = vunpack.c.h.b16 %v355
      %v1100 = vunpack.c.l.b16 %v356
      %v1101 = vunpack.c.h.b16 %v356
      %v1102 = vunpack.c.l.b16 %v357
      %v1103 = vunpack.c.h.b16 %v357
      %v1104 = vunpack.c.l.b16 %v358
      %v1105 = vunpack.c.h.b16 %v358
      %v1106 = vunpack.c.l.b16 %v359
      %v1107 = vunpack.c.h.b16 %v359
      %v1108 = vunpack.c.l.b16 %v360
      %v1109 = vunpack.c.h.b16 %v360
      %v1110 = vunpack.c.l.b16 %v361
      %v1111 = vunpack.c.h.b16 %v361
      %v1112 = vunpack.c.l.b16 %v362
      %v1113 = vunpack.c.h.b16 %v362
      %v1114 = vunpack.c.l.b16 %v363
      %v1115 = vunpack.c.h.b16 %v363
      %v1116 = vunpack.c.l.b16 %v364
      %v1117 = vunpack.c.h.b16 %v364
      %v1118 = vunpack.c.l.b16 %v365
      %v1119 = vunpack.c.h.b16 %v365
      %v1120 = vunpack.c.l.b16 %v366
      %v1121 = vunpack.c.h.b16 %v366
      %v1122 = vunpack.c.l.b16 %v367
      %v1123 = vunpack.c.h.b16 %v367
      %v1124 = vunpack.c.l.b16 %v368
      %v1125 = vunpack.c.h.b16 %v368
      %v1126 = vunpack.c.l.b16 %v369
      %v1127 = vunpack.c.h.b16 %v369
      %v1128 = vunpack.c.l.b16 %v370
      %v1129 = vunpack.c.h.b16 %v370
      %v1130 = vunpack.c.l.b16 %v371
      %v1131 = vunpack.c.h.b16 %v371
      %v1132 = vunpack.c.l.b16 %v372
      %v1133 = vunpack.c.h.b16 %v372
      %v1134 = vunpack.c.l.b16 %v373
      %v1135 = vunpack.c.h.b16 %v373
      %v1136 = vunpack.c.l.b16 %v374
      %v1137 = vunpack.c.h.b16 %v374
      %v1138 = vunpack.c.l.b16 %v375
      %v1139 = vunpack.c.h.b16 %v375
      %v1140 = vunpack.c.l.b16 %v376
      %v1141 = vunpack.c.h.b16 %v376
      %v1142 = vunpack.c.l.b16 %v377
      %v1143 = vunpack.c.h.b16 %v377
      %v1144 = vunpack.c.l.b16 %v378
      %v1145 = vunpack.c.h.b16 %v378
      %v1146 = vunpack.c.l.b16 %v379
      %v1147 = vunpack.c.h.b16 %v379
      %v1148 = vunpack.c.l.b16 %v380
      %v1149 = vunpack.c.h.b16 %v380
      %v1150 = vunpack.c.l.b16 %v381
      %v1151 = vunpack.c.h.b16 %v381
      %v1152 = vunpack.c.l.b16 %v382
      %v1153 = vunpack.c.h.b16 %v382
      %v1154 = vunpack.c.l.b16 %v383
      %v1155 = vunpack.c.h.b16 %v383
      %v1156 = vunpack.c.l.b16 %v384
      %v1157 = vunpack.c.h.b16 %v384
      %v1158 = vunpack.c.l.b16 %v385
      %v1159 = vunpack.c.h.b16 %v385
      %v1160 = vunpack.c.l.b16 %v386
      %v1161 = vunpack.c.h.b16 %v386
      %v1162 = vunpack.c.l.b16 %v387
      %v1163 = vunpack.c.h.b16 %v387
      %v1164 = vunpack.c.l.b16 %v388
      %v1165 = vunpack.c.h.b16 %v388
      %v1166 = vunpack.c.l.b16 %v389
      %v1167 = vunpack.c.h.b16 %v389
      %v1168 = vunpack.c.l.b16 %v390
      %v1169 = vunpack.c.h.b16 %v390
      %v1170 = vunpack.c.l.b16 %v391
      %v1171 = vunpack.c.h.b16 %v391
      %v1172 = vunpack.c.l.b16 %v392
      %v1173 = vunpack.c.h.b16 %v392
      %v1174 = vunpack.c.l.b16 %v393
      %v1175 = vunpack.c.h.b16 %v393
      %v1176 = vunpack.c.l.b16 %v394
      %v1177 = vunpack.c.h.b16 %v394
      %v1178 = vunpack.c.l.b16 %v395
      %v1179 = vunpack.c.h.b16 %v395
      %v1180 = vunpack.c.l.b16 %v396
      %v1181 = vunpack.c.h.b16 %v396
      %v1182 = vunpack.c.l.b16 %v397
      %v1183 = vunpack.c.h.b16 %v397
      %v1184 = vunpack.c.l.b16 %v398
      %v1185 = vunpack.c.h.b16 %v398
      %v1186 = vunpack.c.l.b16 %v399
      %v1187 = vunpack.c.h.b16 %v399
      %v1188 = vunpack.c.l.b16 %v400
      %v1189 = vunpack.c.h.b16 %v400
      %v1190 = vunpack.c.l.b16 %v401
      %v1191 = vunpack.c.h.b16 %v401
      %v1192 = vunpack.c.l.b16 %v402
      %v1193 = vunpack.c.h.b16 %v402
      %v1194 = vunpack.c.l.b16 %v403
      %v1195 = vunpack.c.h.b16 %v403
      %v1196 = vunpack.c.l.b16 %v404
      %v1197 = vunpack.c.h.b16 %v404
      %v1198 = vunpack.c.l.b16 %v405
      %v1199 = vunpack.c.h.b16 %v405
      %v1200 = vunpack.c.l.b16 %v406
      %v1201 = vunpack.c.h.b16 %v406
      %v1202 = vunpack.c.l.b16 %v407
      %v1203 = vunpack.c.h.b16 %v407
      %v1204 = vunpack.c.l.b16 %v408
      %v1205 = vunpack.c.h.b16 %v408
      %v1206 = vunpack.c.l.b16 %v409
      %v1207 = vunpack.c.h.b16 %v409
      %v1208 = vunpack.c.l.b16 %v410
      %v1209 = vunpack.c.h.b16 %v410
      %v1210 = vunpack.c.l.b16 %v411
      %v1211 = vunpack.c.h.b16 %v411
      %v1212 = vunpack.c.l.b16 %v412
      %v1213 = vunpack.c.h.b16 %v412
      %v1214 = vunpack.c.l.b16 %v413
      %v1215 = vunpack.c.h.b16 %v413
      %v1216 = vunpack.c.l.b16 %v414
      %v1217 = vunpack.c.h.b16 %v414
      %v1218 = vunpack.c.l.b16 %v415
      %v1219 = vunpack.c.h.b16 %v415
      %v1220 = vunpack.c.l.b16 %v416
      %v1221 = vunpack.c.h.b16 %v416
      %v1222 = vunpack.c.l.b16 %v417
      %v1223 = vunpack.c.h.b16 %v417
      %v1224 = vunpack.c.l.b16 %v418
      %v1225 = vunpack.c.h.b16 %v418
      %v1226 = vunpack.c.l.b16 %v419
      %v1227 = vunpack.c.h.b16 %v419
      %v1228 = vunpack.c.l.b16 %v420
      %v1229 = vunpack.c.h.b16 %v420
      %v1230 = vunpack.c.l.b16 %v421
      %v1231 = vunpack.c.h.b16 %v421
      %v1232 = vunpack.c.l.b16 %v422
      %v1233 = vunpack.c.h.b16 %v422
      %v1234 = vunpack.c.l.b16 %v423
      %v1235 = vunpack.c.h.b16 %v423
      %v1236 = vunpack.c.l.b16 %v424
      %v1237 = vunpack.c.h.b16 %v424
      %v1238 = vunpack.c.l.b16 %v425
      %v1239 = vunpack.c.h.b16 %v425
      %v1240 = vunpack.c.l.b16 %v426
      %v1241 = vunpack.c.h.b16 %v426
      %v1242 = vunpack.c.l.b16 %v427
      %v1243 = vunpack.c.h.b16 %v427
      %v1244 = vunpack.c.l.b16 %v428
      %v1245 = vunpack.c.h.b16 %v428
      %v1246 = vunpack.c.l.b16 %v429
      %v1247 = vunpack.c.h.b16 %v429
      %v1248 = vunpack.c.l.b16 %v430
      %v1249 = vunpack.c.h.b16 %v430
      %v1250 = vunpack.c.l.b16 %v431
      %v1251 = vunpack.c.h.b16 %v431
      %v1252 = vunpack.c.l.b16 %v432
      %v1253 = vunpack.c.h.b16 %v432
      %v1254 = vunpack.c.l.b16 %v433
      %v1255 = vunpack.c.h.b16 %v433
      %v1256 = vunpack.c.l.b16 %v434
      %v1257 = vunpack.c.h.b16 %v434
      %v1258 = vunpack.c.l.b16 %v435
      %v1259 = vunpack.c.h.b16 %v435
      %v1260 = vunpack.c.l.b16 %v436
      %v1261 = vunpack.c.h.b16 %v436
      %v1262 = vunpack.c.l.b16 %v437
      %v1263 = vunpack.c.h.b16 %v437
      %v1264 = vunpack.c.l.b16 %v438
      %v1265 = vunpack.c.h.b16 %v438
      %v1266 = vunpack.c.l.b16 %v439
      %v1267 = vunpack.c.h.b16 %v439
      %v1268 = vunpack.c.l.b16 %v440
      %v1269 = vunpack.c.h.b16 %v440
      %v1270 = vunpack.c.l.b16 %v441
      %v1271 = vunpack.c.h.b16 %v441
      %v1272 = vunpack.c.l.b16 %v442
      %v1273 = vunpack.c.h.b16 %v442
      %v1274 = vunpack.c.l.b16 %v443
      %v1275 = vunpack.c.h.b16 %v443
      %v1276 = vunpack.c.l.b16 %v444
      %v1277 = vunpack.c.h.b16 %v444
      %v1278 = vunpack.c.l.b16 %v445
      %v1279 = vunpack.c.h.b16 %v445
      %v1280 = vunpack.c.l.b16 %v446
      %v1281 = vunpack.c.h.b16 %v446
      %v1282 = vunpack.c.l.b16 %v447
      %v1283 = vunpack.c.h.b16 %v447
      %v1284 = vunpack.c.l.b16 %v448
      %v1285 = vunpack.c.h.b16 %v448
      %v1286 = vunpack.c.l.b16 %v449
      %v1287 = vunpack.c.h.b16 %v449
      %v1288 = vunpack.c.l.b16 %v450
      %v1289 = vunpack.c.h.b16 %v450
      %v1290 = vunpack.c.l.b16 %v451
      %v1291 = vunpack.c.h.b16 %v451
      %v1292 = vunpack.c.l.b16 %v452
      %v1293 = vunpack.c.h.b16 %v452
      %v1294 = vunpack.c.l.b16 %v453
      %v1295 = vunpack.c.h.b16 %v453
      %v1296 = vunpack.c.l.b16 %v454
      %v1297 = vunpack.c.h.b16 %v454
      %v1298 = vunpack.c.l.b16 %v455
      %v1299 = vunpack.c.h.b16 %v455
      %v1300 = vunpack.c.l.b16 %v456
      %v1301 = vunpack.c.h.b16 %v456
      %v1302 = vunpack.c.l.b16 %v457
      %v1303 = vunpack.c.h.b16 %v457
      %v1304 = vunpack.c.l.b16 %v458
      %v1305 = vunpack.c.h.b16 %v458
      %v1306 = vunpack.c.l.b16 %v459
      %v1307 = vunpack.c.h.b16 %v459
      %v1308 = vpack.c.b16 %v798, %v796
      %v1309 = vpack.c.b16 %v799, %v797
      %v1310 = vpack.c.b16 %v802, %v800
      %v1311 = vpack.c.b16 %v803, %v801
      %v1312 = vpack.c.b16 %v806, %v804
      %v1313 = vpack.c.b16 %v807, %v805
      %v1314 = vpack.c.b16 %v810, %v808
      %v1315 = vpack.c.b16 %v811, %v809
      %v1316 = vpack.c.b16 %v814, %v812
      %v1317 = vpack.c.b16 %v815, %v813
      %v1318 = vpack.c.b16 %v818, %v816
      %v1319 = vpack.c.b16 %v819, %v817
      %v1320 = vpack.c.b16 %v822, %v820
      %v1321 = vpack.c.b16 %v823, %v821
      %v1322 = vpack.c.b16 %v826, %v824
      %v1323 = vpack.c.b16 %v827, %v825
      %v1324 = vpack.c.b16 %v830, %v828
      %v1325 = vpack.c.b16 %v831, %v829
      %v1326 = vpack.c.b16 %v834, %v832
      %v1327 = vpack.c.b16 %v835, %v833
      %v1328 = vpack.c.b16 %v838, %v836
      %v1329 = vpack.c.b16 %v839, %v837
      %v1330 = vpack.c.b16 %v842, %v840
      %v1331 = vpack.c.b16 %v843, %v841
      %v1332 = vpack.c.b16 %v846, %v844
      %v1333 = vpack.c.b16 %v847, %v845
      %v1334 = vpack.c.b16 %v850, %v848
      %v1335 = vpack.c.b16 %v851, %v849
      %v1336 = vpack.c.b16 %v854, %v852
      %v1337 = vpack.c.b16 %v855, %v853
      %v1338 = vpack.c.b16 %v858, %v856
      %v1339 = vpack.c.b16 %v859, %v857
      %v1340 = vpack.c.b16 %v862, %v860
      %v1341 = vpack.c.b16 %v863, %v861
      %v1342 = vpack.c.b16 %v866, %v864
      %v1343 = vpack.c.b16 %v867, %v865
      %v1344 = vpack.c.b16 %v870, %v868
      %v1345 = vpack.c.b16 %v871, %v869
      %v1346 = vpack.c.b16 %v874, %v872
      %v1347 = vpack.c.b16 %v875, %v873
      %v1348 = vpack.c.b16 %v878, %v876
      %v1349 = vpack.c.b16 %v879, %v877
      %v1350 = vpack.c.b16 %v882, %v880
      %v1351 = vpack.c.b16 %v883, %v881
      %v1352 = vpack.c.b16 %v886, %v884
      %v1353 = vpack.c.b16 %v887, %v885
      %v1354 = vpack.c.b16 %v890, %v888
      %v1355 = vpack.c.b16 %v891, %v889
      %v1356 = vpack.c.b16 %v894, %v892
      %v1357 = vpack.c.b16 %v895, %v893
      %v1358 = vpack.c.b16 %v898, %v896
      %v1359 = vpack.c.b16 %v899, %v897
      %v1360 = vpack.c.b16 %v902, %v900
      %v1361 = vpack.c.b16 %v903, %v901
      %v1362 = vpack.c.b16 %v906, %v904
      %v1363 = vpack.c.b16 %v907, %v905
      %v1364 = vpack.c.b16 %v910, %v908
      %v1365 = vpack.c.b16 %v911, %v909
      %v1366 = vpack.c.b16 %v914, %v912
      %v1367 = vpack.c.b16 %v915, %v913
      %v1368 = vpack.c.b16 %v918, %v916
      %v1369 = vpack.c.b16 %v919, %v917
      %v1370 = vpack.c.b16 %v922, %v920
      %v1371 = vpack.c.b16 %v923, %v921
      %v1372 = vpack.c.b16 %v926, %v924
      %v1373 = vpack.c.b16 %v927, %v925
      %v1374 = vpack.c.b16 %v930, %v928
      %v1375 = vpack.c.b16 %v931, %v929
      %v1376 = vpack.c.b16 %v934, %v932
      %v1377 = vpack.c.b16 %v935, %v933
      %v1378 = vpack.c.b16 %v938, %v936
      %v1379 = vpack.c.b16 %v939, %v937
      %v1380 = vpack.c.b16 %v942, %v940
      %v1381 = vpack.c.b16 %v943, %v941
      %v1382 = vpack.c.b16 %v946, %v944
      %v1383 = vpack.c.b16 %v947, %v945
      %v1384 = vpack.c.b16 %v950, %v948
      %v1385 = vpack.c.b16 %v951, %v949
      %v1386 = vpack.c.b16 %v954, %v952
      %v1387 = vpack.c.b16 %v955, %v953
      %v1388 = vpack.c.b16 %v958, %v956
      %v1389 = vpack.c.b16 %v959, %v957
      %v1390 = vpack.c.b16 %v962, %v960
      %v1391 = vpack.c.b16 %v963, %v961
      %v1392 = vpack.c.b16 %v966, %v964
      %v1393 = vpack.c.b16 %v967, %v965
      %v1394 = vpack.c.b16 %v970, %v968
      %v1395 = vpack.c.b16 %v971, %v969
      %v1396 = vpack.c.b16 %v974, %v972
      %v1397 = vpack.c.b16 %v975, %v973
      %v1398 = vpack.c.b16 %v978, %v976
      %v1399 = vpack.c.b16 %v979, %v977
      %v1400 = vpack.c.b16 %v982, %v980
      %v1401 = vpack.c.b16 %v983, %v981
      %v1402 = vpack.c.b16 %v986, %v984
      %v1403 = vpack.c.b16 %v987, %v985
      %v1404 = vpack.c.b16 %v990, %v988
      %v1405 = vpack.c.b16 %v991, %v989
      %v1406 = vpack.c.b16 %v994, %v992
      %v1407 = vpack.c.b16 %v995, %v993
      %v1408 = vpack.c.b16 %v998, %v996
      %v1409 = vpack.c.b16 %v999, %v997
      %v1410 = vpack.c.b16 %v1002, %v1000
      %v1411 = vpack.c.b16 %v1003, %v1001
      %v1412 = vpack.c.b16 %v1006, %v1004
      %v1413 = vpack.c.b16 %v1007, %v1005
      %v1414 = vpack.c.b16 %v1010, %v1008
      %v1415 = vpack.c.b16 %v1011, %v1009
      %v1416 = vpack.c.b16 %v1014, %v1012
      %v1417 = vpack.c.b16 %v1015, %v1013
      %v1418 = vpack.c.b16 %v1018, %v1016
      %v1419 = vpack.c.b16 %v1019, %v1017
      %v1420 = vpack.c.b16 %v1022, %v1020
      %v1421 = vpack.c.b16 %v1023, %v1021
      %v1422 = vpack.c.b16 %v1026, %v1024
      %v1423 = vpack.c.b16 %v1027, %v1025
      %v1424 = vpack.c.b16 %v1030, %v1028
      %v1425 = vpack.c.b16 %v1031, %v1029
      %v1426 = vpack.c.b16 %v1034, %v1032
      %v1427 = vpack.c.b16 %v1035, %v1033
      %v1428 = vpack.c.b16 %v1038, %v1036
      %v1429 = vpack.c.b16 %v1039, %v1037
      %v1430 = vpack.c.b16 %v1042, %v1040
      %v1431 = vpack.c.b16 %v1043, %v1041
      %v1432 = vpack.c.b16 %v1046, %v1044
      %v1433 = vpack.c.b16 %v1047, %v1045
      %v1434 = vpack.c.b16 %v1050, %v1048
      %v1435 = vpack.c.b16 %v1051, %v1049
      %v1436 = vpack.c.b16 %v1054, %v1052
      %v1437 = vpack.c.b16 %v1055, %v1053
      %v1438 = vpack.c.b16 %v1058, %v1056
      %v1439 = vpack.c.b16 %v1059, %v1057
      %v1440 = vpack.c.b16 %v1062, %v1060
      %v1441 = vpack.c.b16 %v1063, %v1061
      %v1442 = vpack.c.b16 %v1066, %v1064
      %v1443 = vpack.c.b16 %v1067, %v1065
      %v1444 = vpack.c.b16 %v1070, %v1068
      %v1445 = vpack.c.b16 %v1071, %v1069
      %v1446 = vpack.c.b16 %v1074, %v1072
      %v1447 = vpack.c.b16 %v1075, %v1073
      %v1448 = vpack.c.b16 %v1078, %v1076
      %v1449 = vpack.c.b16 %v1079, %v1077
      %v1450 = vpack.c.b16 %v1082, %v1080
      %v1451 = vpack.c.b16 %v1083, %v1081
      %v1452 = vpack.c.b16 %v1086, %v1084
      %v1453 = vpack.c.b16 %v1087, %v1085
      %v1454 = vpack.c.b16 %v1090, %v1088
      %v1455 = vpack.c.b16 %v1091, %v1089
      %v1456 = vpack.c.b16 %v1094, %v1092
      %v1457 = vpack.c.b16 %v1095, %v1093
      %v1458 = vpack.c.b16 %v1098, %v1096
      %v1459 = vpack.c.b16 %v1099, %v1097
      %v1460 = vpack.c.b16 %v1102, %v1100
      %v1461 = vpack.c.b16 %v1103, %v1101
      %v1462 = vpack.c.b16 %v1106, %v1104
      %v1463 = vpack.c.b16 %v1107, %v1105
      %v1464 = vpack.c.b16 %v1110, %v1108
      %v1465 = vpack.c.b16 %v1111, %v1109
      %v1466 = vpack.c.b16 %v1114, %v1112
      %v1467 = vpack.c.b16 %v1115, %v1113
      %v1468 = vpack.c.b16 %v1118, %v1116
      %v1469 = vpack.c.b16 %v1119, %v1117
      %v1470 = vpack.c.b16 %v1122, %v1120
      %v1471 = vpack.c.b16 %v1123, %v1121
      %v1472 = vpack.c.b16 %v1126, %v1124
      %v1473 = vpack.c.b16 %v1127, %v1125
      %v1474 = vpack.c.b16 %v1130, %v1128
      %v1475 = vpack.c.b16 %v1131, %v1129
      %v1476 = vpack.c.b16 %v1134, %v1132
      %v1477 = vpack.c.b16 %v1135, %v1133
      %v1478 = vpack.c.b16 %v1138, %v1136
      %v1479 = vpack.c.b16 %v1139, %v1137
      %v1480 = vpack.c.b16 %v1142, %v1140
      %v1481 = vpack.c.b16 %v1143, %v1141
      %v1482 = vpack.c.b16 %v1146, %v1144
      %v1483 = vpack.c.b16 %v1147, %v1145
      %v1484 = vpack.c.b16 %v1150, %v1148
      %v1485 = vpack.c.b16 %v1151, %v1149
      %v1486 = vpack.c.b16 %v1154, %v1152
      %v1487 = vpack.c.b16 %v1155, %v1153
      %v1488 = vpack.c.b16 %v1158, %v1156
      %v1489 = vpack.c.b16 %v1159, %v1157
      %v1490 = vpack.c.b16 %v1162, %v1160
      %v1491 = vpack.c.b16 %v1163, %v1161
      %v1492 = vpack.c.b16 %v1166, %v1164
      %v1493 = vpack.c.b16 %v1167, %v1165
      %v1494 = vpack.c.b16 %v1170, %v1168
      %v1495 = vpack.c.b16 %v1171, %v1169
      %v1496 = vpack.c.b16 %v1174, %v1172
      %v1497 = vpack.c.b16 %v1175, %v1173
      %v1498 = vpack.c.b16 %v1178, %v1176
      %v1499 = vpack.c.b16 %v1179, %v1177
      %v1500 = vpack.c.b16 %v1182, %v1180
      %v1501 = vpack.c.b16 %v1183, %v1181
      %v1502 = vpack.c.b16 %v1186, %v1184
      %v1503 = vpack.c.b16 %v1187, %v1185
      %v1504 = vpack.c.b16 %v1190, %v1188
      %v1505 = vpack.c.b16 %v1191, %v1189
      %v1506 = vpack.c.b16 %v1194, %v1192
      %v1507 = vpack.c.b16 %v1195, %v1193
      %v1508 = vpack.c.b16 %v1198, %v1196
      %v1509 = vpack.c.b16 %v1199, %v1197
      %v1510 = vpack.c.b16 %v1202, %v1200
      %v1511 = vpack.c.b16 %v1203, %v1201
      %v1512 = vpack.c.b16 %v1206, %v1204
      %v1513 = vpack.c.b16 %v1207, %v1205
      %v1514 = vpack.c.b16 %v1210, %v1208
      %v1515 = vpack.c.b16 %v1211, %v1209
      %v1516 = vpack.c.b16 %v1214, %v1212
      %v1517 = vpack.c.b16 %v1215, %v1213
      %v1518 = vpack.c.b16 %v1218, %v1216
      %v1519 = vpack.c.b16 %v1219, %v1217
      %v1520 = vpack.c.b16 %v1222, %v1220
      %v1521 = vpack.c.b16 %v1223, %v1221
      %v1522 = vpack.c.b16 %v1226, %v1224
      %v1523 = vpack.c.b16 %v1227, %v1225
      %v1524 = vpack.c.b16 %v1230, %v1228
      %v1525 = vpack.c.b16 %v1231, %v1229
      %v1526 = vpack.c.b16 %v1234, %v1232
      %v1527 = vpack.c.b16 %v1235, %v1233
      %v1528 = vpack.c.b16 %v1238, %v1236
      %v1529 = vpack.c.b16 %v1239, %v1237
      %v1530 = vpack.c.b16 %v1242, %v1240
      %v1531 = vpack.c.b16 %v1243, %v1241
      %v1532 = vpack.c.b16 %v1246, %v1244
      %v1533 = vpack.c.b16 %v1247, %v1245
      %v1534 = vpack.c.b16 %v1250, %v1248
      %v1535 = vpack.c.b16 %v1251, %v1249
      %v1536 = vpack.c.b16 %v1254, %v1252
      %v1537 = vpack.c.b16 %v1255, %v1253
      %v1538 = vpack.c.b16 %v1258, %v1256
      %v1539 = vpack.c.b16 %v1259, %v1257
      %v1540 = vpack.c.b16 %v1262, %v1260
      %v1541 = vpack.c.b16 %v1263, %v1261
      %v1542 = vpack.c.b16 %v1266, %v1264
      %v1543 = vpack.c.b16 %v1267, %v1265
      %v1544 = vpack.c.b16 %v1270, %v1268
      %v1545 = vpack.c.b16 %v1271, %v1269
      %v1546 = vpack.c.b16 %v1274, %v1272
      %v1547 = vpack.c.b16 %v1275, %v1273
      %v1548 = vpack.c.b16 %v1278, %v1276
      %v1549 = vpack.c.b16 %v1279, %v1277
      %v1550 = vpack.c.b16 %v1282, %v1280
      %v1551 = vpack.c.b16 %v1283, %v1281
      %v1552 = vpack.c.b16 %v1286, %v1284
      %v1553 = vpack.c.b16 %v1287, %v1285
      %v1554 = vpack.c.b16 %v1290, %v1288
      %v1555 = vpack.c.b16 %v1291, %v1289
      %v1556 = vpack.c.b16 %v1294, %v1292
      %v1557 = vpack.c.b16 %v1295, %v1293
      %v1558 = vpack.c.b16 %v1298, %v1296
      %v1559 = vpack.c.b16 %v1299, %v1297
      %v1560 = vpack.c.b16 %v1302, %v1300
      %v1561 = vpack.c.b16 %v1303, %v1301
      %v1562 = vpack.c.b16 %v1306, %v1304
      %v1563 = vpack.c.b16 %v1307, %v1305
      %1820 = vmatprep.subr.bf16.mxu0 %v1309
      %1821 = vmatpush1.bf16.msra.mxu0 %v1308
      %1822 = vmatprep.subr.bf16.mxu0 %v1311
      %1823 = vmatpush1.bf16.msra.mxu0 %v1310
      %1824 = vmatprep.subr.bf16.mxu0 %v1313
      %1825 = vmatpush1.bf16.msra.mxu0 %v1312
      %1826 = vmatprep.subr.bf16.mxu0 %v1315
      %1827 = vmatpush1.bf16.msra.mxu0 %v1314
      %1828 = vmatprep.subr.bf16.mxu0 %v1317
      %1829 = vmatpush1.bf16.msra.mxu0 %v1316
      %1830 = vmatprep.subr.bf16.mxu0 %v1319
      %1831 = vmatpush1.bf16.msra.mxu0 %v1318
      %1832 = vmatprep.subr.bf16.mxu0 %v1321
      %1833 = vmatpush1.bf16.msra.mxu0 %v1320
      %1834 = vmatprep.subr.bf16.mxu0 %v1323
      %1835 = vmatpush1.bf16.msra.mxu0 %v1322
      %1836 = vmatprep.subr.bf16.mxu0 %v1325
      %1837 = vmatpush1.bf16.msra.mxu0 %v1324
      %1838 = vmatprep.subr.bf16.mxu0 %v1327
      %1839 = vmatpush1.bf16.msra.mxu0 %v1326
      %1840 = vmatprep.subr.bf16.mxu0 %v1329
      %1841 = vmatpush1.bf16.msra.mxu0 %v1328
      %1842 = vmatprep.subr.bf16.mxu0 %v1331
      %1843 = vmatpush1.bf16.msra.mxu0 %v1330
      %1844 = vmatprep.subr.bf16.mxu0 %v1333
      %1845 = vmatpush1.bf16.msra.mxu0 %v1332
      %1846 = vmatprep.subr.bf16.mxu0 %v1335
      %1847 = vmatpush1.bf16.msra.mxu0 %v1334
      %1848 = vmatprep.subr.bf16.mxu0 %v1337
      %1849 = vmatpush1.bf16.msra.mxu0 %v1336
      %1850 = vmatprep.subr.bf16.mxu0 %v1339
      %1851 = vmatpush1.bf16.msra.mxu0 %v1338
      %1852 = vmatprep.mubr.bf16.mxu0 %v509
      %1853 = vmatmul.mubr.bf16.gmra.mrb[0].mxu0 %v508
      %v1854 = vpop.f32.mrb[0].mxu0
      %v1855 = vadd.f32 0.0, %v1854
      %v1856 = vpop.f32.mrb[0].mxu0
      %v1857 = vadd.f32 0.0, %v1856
      %v1858 = vpop.f32.mrb[0].mxu0
      %v1859 = vadd.f32 0.0, %v1858
      %v1860 = vpop.f32.mrb[0].mxu0
      %v1861 = vadd.f32 0.0, %v1860
      %1862 = vdwg.mxu0
      %1863 = vmatprep.subr.bf16.mxu0 %v1341
      %1864 = vmatpush1.bf16.msra.mxu0 %v1340
      %1865 = vmatprep.subr.bf16.mxu0 %v1343
      %1866 = vmatpush1.bf16.msra.mxu0 %v1342
      %1867 = vmatprep.subr.bf16.mxu0 %v1345
      %1868 = vmatpush1.bf16.msra.mxu0 %v1344
      %1869 = vmatprep.subr.bf16.mxu0 %v1347
      %1870 = vmatpush1.bf16.msra.mxu0 %v1346
      %1871 = vmatprep.subr.bf16.mxu0 %v1349
      %1872 = vmatpush1.bf16.msra.mxu0 %v1348
      %1873 = vmatprep.subr.bf16.mxu0 %v1351
      %1874 = vmatpush1.bf16.msra.mxu0 %v1350
      %1875 = vmatprep.subr.bf16.mxu0 %v1353
      %1876 = vmatpush1.bf16.msra.mxu0 %v1352
      %1877 = vmatprep.subr.bf16.mxu0 %v1355
      %1878 = vmatpush1.bf16.msra.mxu0 %v1354
      %1879 = vmatprep.subr.bf16.mxu0 %v1357
      %1880 = vmatpush1.bf16.msra.mxu0 %v1356
      %1881 = vmatprep.subr.bf16.mxu0 %v1359
      %1882 = vmatpush1.bf16.msra.mxu0 %v1358
      %1883 = vmatprep.subr.bf16.mxu0 %v1361
      %1884 = vmatpush1.bf16.msra.mxu0 %v1360
      %1885 = vmatprep.subr.bf16.mxu0 %v1363
      %1886 = vmatpush1.bf16.msra.mxu0 %v1362
      %1887 = vmatprep.subr.bf16.mxu0 %v1365
      %1888 = vmatpush1.bf16.msra.mxu0 %v1364
      %1889 = vmatprep.subr.bf16.mxu0 %v1367
      %1890 = vmatpush1.bf16.msra.mxu0 %v1366
      %1891 = vmatprep.subr.bf16.mxu0 %v1369
      %1892 = vmatpush1.bf16.msra.mxu0 %v1368
      %1893 = vmatprep.subr.bf16.mxu0 %v1371
      %1894 = vmatpush1.bf16.msra.mxu0 %v1370
      %1895 = vmatprep.mubr.bf16.mxu0 %v511
      %1896 = vmatmul.mubr.bf16.gmra.mrb[0].mxu0 %v510
      %v1897 = vpop.f32.mrb[0].mxu0
      %v1898 = vadd.f32 %v1855, %v1897
      %v1899 = vpop.f32.mrb[0].mxu0
      %v1900 = vadd.f32 %v1857, %v1899
      %v1901 = vpop.f32.mrb[0].mxu0
      %v1902 = vadd.f32 %v1859, %v1901
      %v1903 = vpop.f32.mrb[0].mxu0
      %v1904 = vadd.f32 %v1861, %v1903
      %1905 = vdwg.mxu0
      %1906 = vmatprep.subr.bf16.mxu0 %v1373
      %1907 = vmatpush1.bf16.msra.mxu0 %v1372
      %1908 = vmatprep.subr.bf16.mxu0 %v1375
      %1909 = vmatpush1.bf16.msra.mxu0 %v1374
      %1910 = vmatprep.subr.bf16.mxu0 %v1377
      %1911 = vmatpush1.bf16.msra.mxu0 %v1376
      %1912 = vmatprep.subr.bf16.mxu0 %v1379
      %1913 = vmatpush1.bf16.msra.mxu0 %v1378
      %1914 = vmatprep.subr.bf16.mxu0 %v1381
      %1915 = vmatpush1.bf16.msra.mxu0 %v1380
      %1916 = vmatprep.subr.bf16.mxu0 %v1383
      %1917 = vmatpush1.bf16.msra.mxu0 %v1382
      %1918 = vmatprep.subr.bf16.mxu0 %v1385
      %1919 = vmatpush1.bf16.msra.mxu0 %v1384
      %1920 = vmatprep.subr.bf16.mxu0 %v1387
      %1921 = vmatpush1.bf16.msra.mxu0 %v1386
      %1922 = vmatprep.subr.bf16.mxu0 %v1389
      %1923 = vmatpush1.bf16.msra.mxu0 %v1388
      %1924 = vmatprep.subr.bf16.mxu0 %v1391
      %1925 = vmatpush1.bf16.msra.mxu0 %v1390
      %1926 = vmatprep.subr.bf16.mxu0 %v1393
      %1927 = vmatpush1.bf16.msra.mxu0 %v1392
      %1928 = vmatprep.subr.bf16.mxu0 %v1395
      %1929 = vmatpush1.bf16.msra.mxu0 %v1394
      %1930 = vmatprep.subr.bf16.mxu0 %v1397
      %1931 = vmatpush1.bf16.msra.mxu0 %v1396
      %1932 = vmatprep.subr.bf16.mxu0 %v1399
      %1933 = vmatpush1.bf16.msra.mxu0 %v1398
      %1934 = vmatprep.subr.bf16.mxu0 %v1401
      %1935 = vmatpush1.bf16.msra.mxu0 %v1400
      %1936 = vmatprep.subr.bf16.mxu0 %v1403
      %1937 = vmatpush1.bf16.msra.mxu0 %v1402
      %1938 = vmatprep.mubr.bf16.mxu0 %v513
      %1939 = vmatmul.mubr.bf16.gmra.mrb[0].mxu0 %v512
      %v1940 = vpop.f32.mrb[0].mxu0
      %v1941 = vadd.f32 %v1898, %v1940
      %v1942 = vpop.f32.mrb[0].mxu0
      %v1943 = vadd.f32 %v1900, %v1942
      %v1944 = vpop.f32.mrb[0].mxu0
      %v1945 = vadd.f32 %v1902, %v1944
      %v1946 = vpop.f32.mrb[0].mxu0
      %v1947 = vadd.f32 %v1904, %v1946
      %1948 = vdwg.mxu0
      %1949 = vmatprep.subr.bf16.mxu0 %v1405
      %1950 = vmatpush1.bf16.msra.mxu0 %v1404
      %1951 = vmatprep.subr.bf16.mxu0 %v1407
      %1952 = vmatpush1.bf16.msra.mxu0 %v1406
      %1953 = vmatprep.subr.bf16.mxu0 %v1409
      %1954 = vmatpush1.bf16.msra.mxu0 %v1408
      %1955 = vmatprep.subr.bf16.mxu0 %v1411
      %1956 = vmatpush1.bf16.msra.mxu0 %v1410
      %1957 = vmatprep.subr.bf16.mxu0 %v1413
      %1958 = vmatpush1.bf16.msra.mxu0 %v1412
      %1959 = vmatprep.subr.bf16.mxu0 %v1415
      %1960 = vmatpush1.bf16.msra.mxu0 %v1414
      %1961 = vmatprep.subr.bf16.mxu0 %v1417
      %1962 = vmatpush1.bf16.msra.mxu0 %v1416
      %1963 = vmatprep.subr.bf16.mxu0 %v1419
      %1964 = vmatpush1.bf16.msra.mxu0 %v1418
      %1965 = vmatprep.subr.bf16.mxu0 %v1421
      %1966 = vmatpush1.bf16.msra.mxu0 %v1420
      %1967 = vmatprep.subr.bf16.mxu0 %v1423
      %1968 = vmatpush1.bf16.msra.mxu0 %v1422
      %1969 = vmatprep.subr.bf16.mxu0 %v1425
      %1970 = vmatpush1.bf16.msra.mxu0 %v1424
      %1971 = vmatprep.subr.bf16.mxu0 %v1427
      %1972 = vmatpush1.bf16.msra.mxu0 %v1426
      %1973 = vmatprep.subr.bf16.mxu0 %v1429
      %1974 = vmatpush1.bf16.msra.mxu0 %v1428
      %1975 = vmatprep.subr.bf16.mxu0 %v1431
      %1976 = vmatpush1.bf16.msra.mxu0 %v1430
      %1977 = vmatprep.subr.bf16.mxu0 %v1433
      %1978 = vmatpush1.bf16.msra.mxu0 %v1432
      %1979 = vmatprep.subr.bf16.mxu0 %v1435
      %1980 = vmatpush1.bf16.msra.mxu0 %v1434
      %1981 = vmatprep.mubr.bf16.mxu0 %v515
      %1982 = vmatmul.mubr.bf16.gmra.mrb[0].mxu0 %v514
      %v1983 = vpop.f32.mrb[0].mxu0
      %v1984 = vadd.f32 %v1941, %v1983
      %v1985 = vpop.f32.mrb[0].mxu0
      %v1986 = vadd.f32 %v1943, %v1985
      %v1987 = vpop.f32.mrb[0].mxu0
      %v1988 = vadd.f32 %v1945, %v1987
      %v1989 = vpop.f32.mrb[0].mxu0
      %v1990 = vadd.f32 %v1947, %v1989
      %1991 = vdwg.mxu0
      %1992 = vmatprep.subr.bf16.mxu0 %v1437
      %1993 = vmatpush1.bf16.msra.mxu0 %v1436
      %1994 = vmatprep.subr.bf16.mxu0 %v1439
      %1995 = vmatpush1.bf16.msra.mxu0 %v1438
      %1996 = vmatprep.subr.bf16.mxu0 %v1441
      %1997 = vmatpush1.bf16.msra.mxu0 %v1440
      %1998 = vmatprep.subr.bf16.mxu0 %v1443
      %1999 = vmatpush1.bf16.msra.mxu0 %v1442
      %2000 = vmatprep.subr.bf16.mxu0 %v1445
      %2001 = vmatpush1.bf16.msra.mxu0 %v1444
      %2002 = vmatprep.subr.bf16.mxu0 %v1447
      %2003 = vmatpush1.bf16.msra.mxu0 %v1446
      %2004 = vmatprep.subr.bf16.mxu0 %v1449
      %2005 = vmatpush1.bf16.msra.mxu0 %v1448
      %2006 = vmatprep.subr.bf16.mxu0 %v1451
      %2007 = vmatpush1.bf16.msra.mxu0 %v1450
      %2008 = vmatprep.subr.bf16.mxu0 %v1453
      %2009 = vmatpush1.bf16.msra.mxu0 %v1452
      %2010 = vmatprep.subr.bf16.mxu0 %v1455
      %2011 = vmatpush1.bf16.msra.mxu0 %v1454
      %2012 = vmatprep.subr.bf16.mxu0 %v1457
      %2013 = vmatpush1.bf16.msra.mxu0 %v1456
      %2014 = vmatprep.subr.bf16.mxu0 %v1459
      %2015 = vmatpush1.bf16.msra.mxu0 %v1458
      %2016 = vmatprep.subr.bf16.mxu0 %v1461
      %2017 = vmatpush1.bf16.msra.mxu0 %v1460
      %2018 = vmatprep.subr.bf16.mxu0 %v1463
      %2019 = vmatpush1.bf16.msra.mxu0 %v1462
      %2020 = vmatprep.subr.bf16.mxu0 %v1465
      %2021 = vmatpush1.bf16.msra.mxu0 %v1464
      %2022 = vmatprep.subr.bf16.mxu0 %v1467
      %2023 = vmatpush1.bf16.msra.mxu0 %v1466
      %2024 = vmatprep.mubr.bf16.mxu0 %v517
      %2025 = vmatmul.mubr.bf16.gmra.mrb[0].mxu0 %v516
      %v2026 = vpop.f32.mrb[0].mxu0
      %v2027 = vadd.f32 %v1984, %v2026
      %v2028 = vpop.f32.mrb[0].mxu0
      %v2029 = vadd.f32 %v1986, %v2028
      %v2030 = vpop.f32.mrb[0].mxu0
      %v2031 = vadd.f32 %v1988, %v2030
      %v2032 = vpop.f32.mrb[0].mxu0
      %v2033 = vadd.f32 %v1990, %v2032
      %2034 = vdwg.mxu0
      %2035 = vmatprep.subr.bf16.mxu0 %v1469
      %2036 = vmatpush1.bf16.msra.mxu0 %v1468
      %2037 = vmatprep.subr.bf16.mxu0 %v1471
      %2038 = vmatpush1.bf16.msra.mxu0 %v1470
      %2039 = vmatprep.subr.bf16.mxu0 %v1473
      %2040 = vmatpush1.bf16.msra.mxu0 %v1472
      %2041 = vmatprep.subr.bf16.mxu0 %v1475
      %2042 = vmatpush1.bf16.msra.mxu0 %v1474
      %2043 = vmatprep.subr.bf16.mxu0 %v1477
      %2044 = vmatpush1.bf16.msra.mxu0 %v1476
      %2045 = vmatprep.subr.bf16.mxu0 %v1479
      %2046 = vmatpush1.bf16.msra.mxu0 %v1478
      %2047 = vmatprep.subr.bf16.mxu0 %v1481
      %2048 = vmatpush1.bf16.msra.mxu0 %v1480
      %2049 = vmatprep.subr.bf16.mxu0 %v1483
      %2050 = vmatpush1.bf16.msra.mxu0 %v1482
      %2051 = vmatprep.subr.bf16.mxu0 %v1485
      %2052 = vmatpush1.bf16.msra.mxu0 %v1484
      %2053 = vmatprep.subr.bf16.mxu0 %v1487
      %2054 = vmatpush1.bf16.msra.mxu0 %v1486
      %2055 = vmatprep.subr.bf16.mxu0 %v1489
      %2056 = vmatpush1.bf16.msra.mxu0 %v1488
      %2057 = vmatprep.subr.bf16.mxu0 %v1491
      %2058 = vmatpush1.bf16.msra.mxu0 %v1490
      %2059 = vmatprep.subr.bf16.mxu0 %v1493
      %2060 = vmatpush1.bf16.msra.mxu0 %v1492
      %2061 = vmatprep.subr.bf16.mxu0 %v1495
      %2062 = vmatpush1.bf16.msra.mxu0 %v1494
      %2063 = vmatprep.subr.bf16.mxu0 %v1497
      %2064 = vmatpush1.bf16.msra.mxu0 %v1496
      %2065 = vmatprep.subr.bf16.mxu0 %v1499
      %2066 = vmatpush1.bf16.msra.mxu0 %v1498
      %2067 = vmatprep.mubr.bf16.mxu0 %v519
      %2068 = vmatmul.mubr.bf16.gmra.mrb[0].mxu0 %v518
      %v2069 = vpop.f32.mrb[0].mxu0
      %v2070 = vadd.f32 %v2027, %v2069
      %v2071 = vpop.f32.mrb[0].mxu0
      %v2072 = vadd.f32 %v2029, %v2071
      %v2073 = vpop.f32.mrb[0].mxu0
      %v2074 = vadd.f32 %v2031, %v2073
      %v2075 = vpop.f32.mrb[0].mxu0
      %v2076 = vadd.f32 %v2033, %v2075
      %2077 = vdwg.mxu0
      %2078 = vmatprep.subr.bf16.mxu0 %v1501
      %2079 = vmatpush1.bf16.msra.mxu0 %v1500
      %2080 = vmatprep.subr.bf16.mxu0 %v1503
      %2081 = vmatpush1.bf16.msra.mxu0 %v1502
      %2082 = vmatprep.subr.bf16.mxu0 %v1505
      %2083 = vmatpush1.bf16.msra.mxu0 %v1504
      %2084 = vmatprep.subr.bf16.mxu0 %v1507
      %2085 = vmatpush1.bf16.msra.mxu0 %v1506
      %2086 = vmatprep.subr.bf16.mxu0 %v1509
      %2087 = vmatpush1.bf16.msra.mxu0 %v1508
      %2088 = vmatprep.subr.bf16.mxu0 %v1511
      %2089 = vmatpush1.bf16.msra.mxu0 %v1510
      %2090 = vmatprep.subr.bf16.mxu0 %v1513
      %2091 = vmatpush1.bf16.msra.mxu0 %v1512
      %2092 = vmatprep.subr.bf16.mxu0 %v1515
      %2093 = vmatpush1.bf16.msra.mxu0 %v1514
      %2094 = vmatprep.subr.bf16.mxu0 %v1517
      %2095 = vmatpush1.bf16.msra.mxu0 %v1516
      %2096 = vmatprep.subr.bf16.mxu0 %v1519
      %2097 = vmatpush1.bf16.msra.mxu0 %v1518
      %2098 = vmatprep.subr.bf16.mxu0 %v1521
      %2099 = vmatpush1.bf16.msra.mxu0 %v1520
      %2100 = vmatprep.subr.bf16.mxu0 %v1523
      %2101 = vmatpush1.bf16.msra.mxu0 %v1522
      %2102 = vmatprep.subr.bf16.mxu0 %v1525
      %2103 = vmatpush1.bf16.msra.mxu0 %v1524
      %2104 = vmatprep.subr.bf16.mxu0 %v1527
      %2105 = vmatpush1.bf16.msra.mxu0 %v1526
      %2106 = vmatprep.subr.bf16.mxu0 %v1529
      %2107 = vmatpush1.bf16.msra.mxu0 %v1528
      %2108 = vmatprep.subr.bf16.mxu0 %v1531
      %2109 = vmatpush1.bf16.msra.mxu0 %v1530
      %2110 = vmatprep.mubr.bf16.mxu0 %v521
      %2111 = vmatmul.mubr.bf16.gmra.mrb[0].mxu0 %v520
      %v2112 = vpop.f32.mrb[0].mxu0
      %v2113 = vadd.f32 %v2070, %v2112
      %v2114 = vpop.f32.mrb[0].mxu0
      %v2115 = vadd.f32 %v2072, %v2114
      %v2116 = vpop.f32.mrb[0].mxu0
      %v2117 = vadd.f32 %v2074, %v2116
      %v2118 = vpop.f32.mrb[0].mxu0
      %v2119 = vadd.f32 %v2076, %v2118
      %2120 = vdwg.mxu0
      %2121 = vmatprep.subr.bf16.mxu0 %v1533
      %2122 = vmatpush1.bf16.msra.mxu0 %v1532
      %2123 = vmatprep.subr.bf16.mxu0 %v1535
      %2124 = vmatpush1.bf16.msra.mxu0 %v1534
      %2125 = vmatprep.subr.bf16.mxu0 %v1537
      %2126 = vmatpush1.bf16.msra.mxu0 %v1536
      %2127 = vmatprep.subr.bf16.mxu0 %v1539
      %2128 = vmatpush1.bf16.msra.mxu0 %v1538
      %2129 = vmatprep.subr.bf16.mxu0 %v1541
      %2130 = vmatpush1.bf16.msra.mxu0 %v1540
      %2131 = vmatprep.subr.bf16.mxu0 %v1543
      %2132 = vmatpush1.bf16.msra.mxu0 %v1542
      %2133 = vmatprep.subr.bf16.mxu0 %v1545
      %2134 = vmatpush1.bf16.msra.mxu0 %v1544
      %2135 = vmatprep.subr.bf16.mxu0 %v1547
      %2136 = vmatpush1.bf16.msra.mxu0 %v1546
      %2137 = vmatprep.subr.bf16.mxu0 %v1549
      %2138 = vmatpush1.bf16.msra.mxu0 %v1548
      %2139 = vmatprep.subr.bf16.mxu0 %v1551
      %2140 = vmatpush1.bf16.msra.mxu0 %v1550
      %2141 = vmatprep.subr.bf16.mxu0 %v1553
      %2142 = vmatpush1.bf16.msra.mxu0 %v1552
      %2143 = vmatprep.subr.bf16.mxu0 %v1555
      %2144 = vmatpush1.bf16.msra.mxu0 %v1554
      %2145 = vmatprep.subr.bf16.mxu0 %v1557
      %2146 = vmatpush1.bf16.msra.mxu0 %v1556
      %2147 = vmatprep.subr.bf16.mxu0 %v1559
      %2148 = vmatpush1.bf16.msra.mxu0 %v1558
      %2149 = vmatprep.subr.bf16.mxu0 %v1561
      %2150 = vmatpush1.bf16.msra.mxu0 %v1560
      %2151 = vmatprep.subr.bf16.mxu0 %v1563
      %2152 = vmatpush1.bf16.msra.mxu0 %v1562
      %2153 = vmatprep.mubr.bf16.mxu0 %v523
      %2154 = vmatmul.mubr.bf16.gmra.mrb[0].mxu0 %v522
      %v2155 = vpop.f32.mrb[0].mxu0
      %v2156 = vadd.f32 %v2113, %v2155
      %v2157 = vpop.f32.mrb[0].mxu0
      %v2158 = vadd.f32 %v2115, %v2157
      %v2159 = vpop.f32.mrb[0].mxu0
      %v2160 = vadd.f32 %v2117, %v2159
      %v2161 = vpop.f32.mrb[0].mxu0
      %v2162 = vadd.f32 %v2119, %v2161
      %2163 = vdwg.mxu0
      %v2164 = vadd.f32 %v2156, %v2160
      %v2165 = vrot.slane %v2164, 4
      %v2166 = vadd.f32 %v2164, %v2165
      %v2167 = vrot.slane %v2166, 2
      %v2168 = vadd.f32 %v2166, %v2167
      %v2169 = vrot.slane %v2168, 1
      %v2170 = vadd.f32 %v2168, %v2169
      %v2171 = vadd.f32 %v2158, %v2162
      %v2172 = vrot.slane %v2171, 4
      %v2173 = vadd.f32 %v2171, %v2172
      %v2174 = vrot.slane %v2173, 2
      %v2175 = vadd.f32 %v2173, %v2174
      %v2176 = vrot.slane %v2175, 1
      %v2177 = vadd.f32 %v2175, %v2176
      %v2178 = vmul.f32 %v2156, %v2156
      %v2179 = vmul.f32 %v2158, %v2158
      %v2180 = vmul.f32 %v2160, %v2160
      %v2181 = vmul.f32 %v2162, %v2162
      %v2182 = vadd.f32 %v2178, %v2180
      %v2183 = vrot.slane %v2182, 4
      %v2184 = vadd.f32 %v2182, %v2183
      %v2185 = vrot.slane %v2184, 2
      %v2186 = vadd.f32 %v2184, %v2185
      %v2187 = vrot.slane %v2186, 1
      %v2188 = vadd.f32 %v2186, %v2187
      %v2189 = vadd.f32 %v2179, %v2181
      %v2190 = vrot.slane %v2189, 4
      %v2191 = vadd.f32 %v2189, %v2190
      %v2192 = vrot.slane %v2191, 2
      %v2193 = vadd.f32 %v2191, %v2192
      %v2194 = vrot.slane %v2193, 1
      %v2195 = vadd.f32 %v2193, %v2194
      %v2196 = vmul.f32 %v2170, 0.0625
      %v2197 = vmul.f32 %v2177, 0.0625
      %v2198 = vmul.f32 %v2188, 0.0625
      %v2199 = vmul.f32 %v2195, 0.0625
      %v2200 = vmul.f32 %v2196, %v2196
      %v2201 = vmul.f32 %v2197, %v2197
      %v2202 = vsub.f32 %v2198, %v2200
      %v2203 = vsub.f32 %v2199, %v2201
      %v2204 = vmax.f32 %v2202, 0.0
      %v2205 = vmax.f32 %v2203, 0.0
      %v2206 = vsub.f32 %v2156, %v2196
      %v2207 = vsub.f32 %v2158, %v2197
      %v2208 = vsub.f32 %v2160, %v2196
      %v2209 = vsub.f32 %v2162, %v2197
      %v2210 = vadd.f32 %v2204, 1e-05
      %v2211 = vadd.f32 %v2205, 1e-05
      %v2212 = vrsqrt.pop %v2210
      %v2213 = vrsqrt.pop %v2211
      %v2214 = vmul.f32 %v2206, %v2212
      %v2215 = vmul.f32 %v2207, %v2213
      %v2216 = vmul.f32 %v2208, %v2212
      %v2217 = vmul.f32 %v2209, %v2213
      %vm2218 = vcmp.gt.f32.partialorder %v2214, 0.0
      %vm2219 = vcmp.gt.f32.partialorder %v2215, 0.0
      %vm2220 = vcmp.gt.f32.partialorder %v2216, 0.0
      %vm2221 = vcmp.gt.f32.partialorder %v2217, 0.0
      %v2222 = vmul.f32 %v2214, 0.2
      %v2223 = vmul.f32 %v2215, 0.2
      %v2224 = vmul.f32 %v2216, 0.2
      %v2225 = vmul.f32 %v2217, 0.2
      %v2226 = vsel %vm2218, %v2214, %v2222
      %v2227 = vsel %vm2219, %v2215, %v2223
      %v2228 = vsel %vm2220, %v2216, %v2224
      %v2229 = vsel %vm2221, %v2217, %v2225
      %v2230 = vpack.c.bf16 %v2228, %v2226
      %v2231 = vpack.c.bf16 %v2229, %v2227
      %v2234 = vunpack.c.l.b16 %v2230
      %v2235 = vunpack.c.l.b16 %v2231
      %v2236 = vunpack.c.h.b16 %v2230
      %v2237 = vunpack.c.h.b16 %v2231
      %v2238 = vpack.c.b16 %v2235, %v2234
      %v2239 = vpack.c.b16 %v2237, %v2236
      %2242 = vst [vmem:[%s186] sm:$0xff] %v2238
      %2243 = vst [vmem:[%s186 + $0x8] sm:$0xff] %v2239
      %s2244 = smul.u32 2, %s18
      %p2245 = scmp.lt.s32.totalorder %s17, 1
      %s2246 = scalar_select %p2245, %s17, 1
      %p2247 = scmp.lt.s32.totalorder %s2244, 1
      %s2248 = scalar_select %p2247, %s2244, 1
      %s2249 = smul.addr %s2248, 2
      %s2250 = smul.addr %s2246, 4
      %s2251 = sadd.s32 %s2249, %s2250
      %s2252 = smul.addr %s2251, 4
      %s2253 = scalar_lea.vmem %s2, %s2252
      // Predicated region
      $region29: #{discriminator_forward.6} parent=27 // pred_check
        %p2254 = pneg %p94
      $region30: #{discriminator_forward.6} parent=27 // pred_check_branch
        %2256 = sbr.rel (%p2254) target = $region32
      $region31: #{discriminator_forward.6} parent=27 // pred_region
        %s2257 = smul.u32 2, %s18
      $region32: #{discriminator_forward.6} parent=27 // pred_fallthru
        _
    $region28: #{discriminator_forward.6} parent=5 // pred_fallthru
      _
    %p2258 = scmp.le.s32.totalorder 2, %s8
    // Predicated region
    $region33: #{discriminator_forward.6} parent=5 // pred_check
      %p2259 = pneg %p2258
    $region34: #{discriminator_forward.6} parent=5 // pred_check_branch
      %2261 = sbr.rel (%p2259) target = $region36
    $region35: #{discriminator_forward.6} parent=5 // pred_region
      %s2262 = ssub.s32 %s8, 2
      // Predicated region
      $region37: #{discriminator_forward.6} parent=35 // pred_check
        %p2263 = pneg %p100
      $region38: #{discriminator_forward.6} parent=35 // pred_check_branch
        %2265 = sbr.rel (%p2263) target = $region40
      $region39: #{discriminator_forward.6} parent=35 // pred_region
        %s2266 = smul.u32 2, %s20
        %p2267 = scmp.lt.s32.totalorder %s19, 1
        %s2268 = scalar_select %p2267, %s19, 1
        %p2269 = scmp.lt.s32.totalorder %s2266, 1
        %s2270 = scalar_select %p2269, %s2266, 1
        %s2271 = smul.addr %s2270, 2
        %s2272 = smul.addr %s2268, 4
        %s2273 = sadd.s32 %s2271, %s2272
        %s2274 = smul.addr %s2273, 4
        %s2275 = scalar_lea.vmem %s2, %s2274
      $region40: #{discriminator_forward.6} parent=35 // pred_fallthru
        _
    $region36: #{discriminator_forward.6} parent=5 // pred_fallthru
      _
  $region6: #{discriminator_forward.6} parent=0 // loop_footer
    %s12 = sadd.s32 1, %s8
  $region7: #{discriminator_forward.6} parent=0 // loop_footer_branch
    %7 = sbr.rel target = $region3
  $region8: #{discriminator_forward.6} parent=0 // loop_exit
    _

// kernel: discriminator_forward.7
$region0: #{discriminator_forward.7}
  #allocation0 [shape = 'u32[]', space=smem, size = 0x4, offset = 0x4, fixed_abs, tag = 'smem constant byte address 0x4 - core index']
  #allocation1 [shape = 'u32[144,128]{1,0:T(1,128)}', space=vmem, size = 0x12000, scoped, tag = 'internal scratch']
  %s0 = inlined_call_operand.vmem [shape: bf16[18,4096], index: 0, kind: input, shape index: {}]
  %s1 = inlined_call_operand.vmem [shape: bf16[4096,512], index: 1, kind: input, shape index: {}]
  %s2 = inlined_call_operand.vmem [shape: f32[512,128], index: 2, kind: input, shape index: {}]
  %s3 = inlined_call_operand.vmem [shape: f32[1,128], index: 3, kind: input, shape index: {}]
  %s4 = inlined_call_operand.vmem [shape: f32[2,128], index: 4, kind: output, shape index: {}]
  %s5 = sld [smem:[#allocation0]]
  $region26: #{discriminator_forward.7} parent=0
    _
  %s7 = ssub.s32 1, %s5
  %s8 = scalar_select 0, %s7, %s5
  // Predicated region
  $region2: #{discriminator_forward.7} parent=0 // pred_check
    _
  $region3: #{discriminator_forward.7} parent=0 // pred_check_branch
    %10 = sbr.rel (0) target = $region5
  $region4: #{discriminator_forward.7} parent=0 // pred_region
    _
  $region5: #{discriminator_forward.7} parent=0 // pred_fallthru
    _
  // Predicated region
  $region6: #{discriminator_forward.7} parent=0 // pred_check
    _
  $region7: #{discriminator_forward.7} parent=0 // pred_check_branch
    %12 = sbr.rel (0) target = $region9
  $region8: #{discriminator_forward.7} parent=0 // pred_region
    _
  $region9: #{discriminator_forward.7} parent=0 // pred_fallthru
    _
  // Predicated region
  $region10: #{discriminator_forward.7} parent=0 // pred_check
    _
  $region11: #{discriminator_forward.7} parent=0 // pred_check_branch
    %14 = sbr.rel (0) target = $region13
  $region12: #{discriminator_forward.7} parent=0 // pred_region
    _
  $region13: #{discriminator_forward.7} parent=0 // pred_fallthru
    _
  // Predicated region
  $region14: #{discriminator_forward.7} parent=0 // pred_check
    _
  $region15: #{discriminator_forward.7} parent=0 // pred_check_branch
    %16 = sbr.rel (0) target = $region17
  $region16: #{discriminator_forward.7} parent=0 // pred_region
    _
  $region17: #{discriminator_forward.7} parent=0 // pred_fallthru
    _
  %v17 = vld [vmem:[%s0] sm:$0xff]
  %v18 = vld [vmem:[%s0 + $0x8] sm:$0xff]
  %v19 = vld [vmem:[%s0 + $0x10] sm:$0xff]
  %v20 = vld [vmem:[%s0 + $0x18] sm:$0xff]
  %v21 = vld [vmem:[%s0 + $0x20] sm:$0xff]
  %v22 = vld [vmem:[%s0 + $0x28] sm:$0xff]
  %v23 = vld [vmem:[%s0 + $0x30] sm:$0xff]
  %v24 = vld [vmem:[%s0 + $0x38] sm:$0xff]
  %v25 = vld [vmem:[%s0 + $0x40] sm:$0xff]
  %v26 = vld [vmem:[%s0 + $0x48] sm:$0xff]
  %v27 = vld [vmem:[%s0 + $0x50] sm:$0xff]
  %v28 = vld [vmem:[%s0 + $0x58] sm:$0xff]
  %v29 = vld [vmem:[%s0 + $0x60] sm:$0xff]
  %v30 = vld [vmem:[%s0 + $0x68] sm:$0xff]
  %v31 = vld [vmem:[%s0 + $0x70] sm:$0xff]
  %v32 = vld [vmem:[%s0 + $0x78] sm:$0xff]
  %v33 = vld [vmem:[%s0 + $0x80] sm:$0xff]
  %v34 = vld [vmem:[%s0 + $0x88] sm:$0xff]
  %v35 = vld [vmem:[%s0 + $0x90] sm:$0xff]
  %v36 = vld [vmem:[%s0 + $0x98] sm:$0xff]
  %v37 = vld [vmem:[%s0 + $0xa0] sm:$0xff]
  %v38 = vld [vmem:[%s0 + $0xa8] sm:$0xff]
  %v39 = vld [vmem:[%s0 + $0xb0] sm:$0xff]
  %v40 = vld [vmem:[%s0 + $0xb8] sm:$0xff]
  %v41 = vld [vmem:[%s0 + $0xc0] sm:$0xff]
  %v42 = vld [vmem:[%s0 + $0xc8] sm:$0xff]
  %v43 = vld [vmem:[%s0 + $0xd0] sm:$0xff]
  %v44 = vld [vmem:[%s0 + $0xd8] sm:$0xff]
  %v45 = vld [vmem:[%s0 + $0xe0] sm:$0xff]
  %v46 = vld [vmem:[%s0 + $0xe8] sm:$0xff]
  %v47 = vld [vmem:[%s0 + $0xf0] sm:$0xff]
  %v48 = vld [vmem:[%s0 + $0xf8] sm:$0xff]
  %v49 = vld [vmem:[%s0 + $0x100] sm:$0x11]
  %v50 = vld [vmem:[%s0 + $0x108] sm:$0x11]
  %v51 = vld [vmem:[%s0 + $0x110] sm:$0x11]
  %v52 = vld [vmem:[%s0 + $0x118] sm:$0x11]
  %v53 = vld [vmem:[%s0 + $0x120] sm:$0x11]
  %v54 = vld [vmem:[%s0 + $0x128] sm:$0x11]
  %v55 = vld [vmem:[%s0 + $0x130] sm:$0x11]
  %v56 = vld [vmem:[%s0 + $0x138] sm:$0x11]
  %v57 = vld [vmem:[%s0 + $0x140] sm:$0x11]
  %v58 = vld [vmem:[%s0 + $0x148] sm:$0x11]
  %v59 = vld [vmem:[%s0 + $0x150] sm:$0x11]
  %v60 = vld [vmem:[%s0 + $0x158] sm:$0x11]
  %v61 = vld [vmem:[%s0 + $0x160] sm:$0x11]
  %v62 = vld [vmem:[%s0 + $0x168] sm:$0x11]
  %v63 = vld [vmem:[%s0 + $0x170] sm:$0x11]
  %v64 = vld [vmem:[%s0 + $0x178] sm:$0x11]
  %v65 = vld [vmem:[%s1] sm:$0xff]
  %v66 = vld [vmem:[%s1 + $0x8] sm:$0xff]
  %v67 = vld [vmem:[%s1 + $0x10] sm:$0xff]
  %v68 = vld [vmem:[%s1 + $0x18] sm:$0xff]
  %v69 = vld [vmem:[%s1 + $0x20] sm:$0xff]
  %v70 = vld [vmem:[%s1 + $0x28] sm:$0xff]
  %v71 = vld [vmem:[%s1 + $0x30] sm:$0xff]
  %v72 = vld [vmem:[%s1 + $0x38] sm:$0xff]
  %v73 = vld [vmem:[%s1 + $0x40] sm:$0xff]
  %v74 = vld [vmem:[%s1 + $0x48] sm:$0xff]
  %v75 = vld [vmem:[%s1 + $0x50] sm:$0xff]
  %v76 = vld [vmem:[%s1 + $0x58] sm:$0xff]
  %v77 = vld [vmem:[%s1 + $0x60] sm:$0xff]
  %v78 = vld [vmem:[%s1 + $0x68] sm:$0xff]
  %v79 = vld [vmem:[%s1 + $0x70] sm:$0xff]
  %v80 = vld [vmem:[%s1 + $0x78] sm:$0xff]
  %v81 = vld [vmem:[%s1 + $0x80] sm:$0xff]
  %v82 = vld [vmem:[%s1 + $0x88] sm:$0xff]
  %v83 = vld [vmem:[%s1 + $0x90] sm:$0xff]
  %v84 = vld [vmem:[%s1 + $0x98] sm:$0xff]
  %v85 = vld [vmem:[%s1 + $0xa0] sm:$0xff]
  %v86 = vld [vmem:[%s1 + $0xa8] sm:$0xff]
  %v87 = vld [vmem:[%s1 + $0xb0] sm:$0xff]
  %v88 = vld [vmem:[%s1 + $0xb8] sm:$0xff]
  %v89 = vld [vmem:[%s1 + $0xc0] sm:$0xff]
  %v90 = vld [vmem:[%s1 + $0xc8] sm:$0xff]
  %v91 = vld [vmem:[%s1 + $0xd0] sm:$0xff]
  %v92 = vld [vmem:[%s1 + $0xd8] sm:$0xff]
  %v93 = vld [vmem:[%s1 + $0xe0] sm:$0xff]
  %v94 = vld [vmem:[%s1 + $0xe8] sm:$0xff]
  %v95 = vld [vmem:[%s1 + $0xf0] sm:$0xff]
  %v96 = vld [vmem:[%s1 + $0xf8] sm:$0xff]
  %v97 = vld [vmem:[%s1 + $0x100] sm:$0xff]
  %v98 = vld [vmem:[%s1 + $0x108] sm:$0xff]
  %v99 = vld [vmem:[%s1 + $0x110] sm:$0xff]
  %v100 = vld [vmem:[%s1 + $0x118] sm:$0xff]
  %v101 = vld [vmem:[%s1 + $0x120] sm:$0xff]
  %v102 = vld [vmem:[%s1 + $0x128] sm:$0xff]
  %v103 = vld [vmem:[%s1 + $0x130] sm:$0xff]
  %v104 = vld [vmem:[%s1 + $0x138] sm:$0xff]
  %v105 = vld [vmem:[%s1 + $0x140] sm:$0xff]
  %v106 = vld [vmem:[%s1 + $0x148] sm:$0xff]
  %v107 = vld [vmem:[%s1 + $0x150] sm:$0xff]
  %v108 = vld [vmem:[%s1 + $0x158] sm:$0xff]
  %v109 = vld [vmem:[%s1 + $0x160] sm:$0xff]
  %v110 = vld [vmem:[%s1 + $0x168] sm:$0xff]
  %v111 = vld [vmem:[%s1 + $0x170] sm:$0xff]
  %v112 = vld [vmem:[%s1 + $0x178] sm:$0xff]
  %v113 = vld [vmem:[%s1 + $0x180] sm:$0xff]
  %v114 = vld [vmem:[%s1 + $0x188] sm:$0xff]
  %v115 = vld [vmem:[%s1 + $0x190] sm:$0xff]
  %v116 = vld [vmem:[%s1 + $0x198] sm:$0xff]
  %v117 = vld [vmem:[%s1 + $0x1a0] sm:$0xff]
  %v118 = vld [vmem:[%s1 + $0x1a8] sm:$0xff]
  %v119 = vld [vmem:[%s1 + $0x1b0] sm:$0xff]
  %v120 = vld [vmem:[%s1 + $0x1b8] sm:$0xff]
  %v121 = vld [vmem:[%s1 + $0x1c0] sm:$0xff]
  %v122 = vld [vmem:[%s1 + $0x1c8] sm:$0xff]
  %v123 = vld [vmem:[%s1 + $0x1d0] sm:$0xff]
  %v124 = vld [vmem:[%s1 + $0x1d8] sm:$0xff]
  %v125 = vld [vmem:[%s1 + $0x1e0] sm:$0xff]
  %v126 = vld [vmem:[%s1 + $0x1e8] sm:$0xff]
  %v127 = vld [vmem:[%s1 + $0x1f0] sm:$0xff]
  %v128 = vld [vmem:[%s1 + $0x1f8] sm:$0xff]
  %v129 = vld [vmem:[%s1 + $0x200] sm:$0xff]
  %v130 = vld [vmem:[%s1 + $0x208] sm:$0xff]
  %v131 = vld [vmem:[%s1 + $0x210] sm:$0xff]
  %v132 = vld [vmem:[%s1 + $0x218] sm:$0xff]
  %v133 = vld [vmem:[%s1 + $0x220] sm:$0xff]
  %v134 = vld [vmem:[%s1 + $0x228] sm:$0xff]
  %v135 = vld [vmem:[%s1 + $0x230] sm:$0xff]
  %v136 = vld [vmem:[%s1 + $0x238] sm:$0xff]
  %v137 = vld [vmem:[%s1 + $0x240] sm:$0xff]
  %v138 = vld [vmem:[%s1 + $0x248] sm:$0xff]
  %v139 = vld [vmem:[%s1 + $0x250] sm:$0xff]
  %v140 = vld [vmem:[%s1 + $0x258] sm:$0xff]
  %v141 = vld [vmem:[%s1 + $0x260] sm:$0xff]
  %v142 = vld [vmem:[%s1 + $0x268] sm:$0xff]
  %v143 = vld [vmem:[%s1 + $0x270] sm:$0xff]
  %v144 = vld [vmem:[%s1 + $0x278] sm:$0xff]
  %v145 = vld [vmem:[%s1 + $0x280] sm:$0xff]
  %v146 = vld [vmem:[%s1 + $0x288] sm:$0xff]
  %v147 = vld [vmem:[%s1 + $0x290] sm:$0xff]
  %v148 = vld [vmem:[%s1 + $0x298] sm:$0xff]
  %v149 = vld [vmem:[%s1 + $0x2a0] sm:$0xff]
  %v150 = vld [vmem:[%s1 + $0x2a8] sm:$0xff]
  %v151 = vld [vmem:[%s1 + $0x2b0] sm:$0xff]
  %v152 = vld [vmem:[%s1 + $0x2b8] sm:$0xff]
  %v153 = vld [vmem:[%s1 + $0x2c0] sm:$0xff]
  %v154 = vld [vmem:[%s1 + $0x2c8] sm:$0xff]
  %v155 = vld [vmem:[%s1 + $0x2d0] sm:$0xff]
  %v156 = vld [vmem:[%s1 + $0x2d8] sm:$0xff]
  %v157 = vld [vmem:[%s1 + $0x2e0] sm:$0xff]
  %v158 = vld [vmem:[%s1 + $0x2e8] sm:$0xff]
  %v159 = vld [vmem:[%s1 + $0x2f0] sm:$0xff]
  %v160 = vld [vmem:[%s1 + $0x2f8] sm:$0xff]
  %v161 = vld [vmem:[%s1 + $0x300] sm:$0xff]
  %v162 = vld [vmem:[%s1 + $0x308] sm:$0xff]
  %v163 = vld [vmem:[%s1 + $0x310] sm:$0xff]
  %v164 = vld [vmem:[%s1 + $0x318] sm:$0xff]
  %v165 = vld [vmem:[%s1 + $0x320] sm:$0xff]
  %v166 = vld [vmem:[%s1 + $0x328] sm:$0xff]
  %v167 = vld [vmem:[%s1 + $0x330] sm:$0xff]
  %v168 = vld [vmem:[%s1 + $0x338] sm:$0xff]
  %v169 = vld [vmem:[%s1 + $0x340] sm:$0xff]
  %v170 = vld [vmem:[%s1 + $0x348] sm:$0xff]
  %v171 = vld [vmem:[%s1 + $0x350] sm:$0xff]
  %v172 = vld [vmem:[%s1 + $0x358] sm:$0xff]
  %v173 = vld [vmem:[%s1 + $0x360] sm:$0xff]
  %v174 = vld [vmem:[%s1 + $0x368] sm:$0xff]
  %v175 = vld [vmem:[%s1 + $0x370] sm:$0xff]
  %v176 = vld [vmem:[%s1 + $0x378] sm:$0xff]
  %v177 = vld [vmem:[%s1 + $0x380] sm:$0xff]
  %v178 = vld [vmem:[%s1 + $0x388] sm:$0xff]
  %v179 = vld [vmem:[%s1 + $0x390] sm:$0xff]
  %v180 = vld [vmem:[%s1 + $0x398] sm:$0xff]
  %v181 = vld [vmem:[%s1 + $0x3a0] sm:$0xff]
  %v182 = vld [vmem:[%s1 + $0x3a8] sm:$0xff]
  %v183 = vld [vmem:[%s1 + $0x3b0] sm:$0xff]
  %v184 = vld [vmem:[%s1 + $0x3b8] sm:$0xff]
  %v185 = vld [vmem:[%s1 + $0x3c0] sm:$0xff]
  %v186 = vld [vmem:[%s1 + $0x3c8] sm:$0xff]
  %v187 = vld [vmem:[%s1 + $0x3d0] sm:$0xff]
  %v188 = vld [vmem:[%s1 + $0x3d8] sm:$0xff]
  %v189 = vld [vmem:[%s1 + $0x3e0] sm:$0xff]
  %v190 = vld [vmem:[%s1 + $0x3e8] sm:$0xff]
  %v191 = vld [vmem:[%s1 + $0x3f0] sm:$0xff]
  %v192 = vld [vmem:[%s1 + $0x3f8] sm:$0xff]
  %v193 = vld [vmem:[%s1 + $0x400] sm:$0xff]
  %v194 = vld [vmem:[%s1 + $0x408] sm:$0xff]
  %v195 = vld [vmem:[%s1 + $0x410] sm:$0xff]
  %v196 = vld [vmem:[%s1 + $0x418] sm:$0xff]
  %v197 = vld [vmem:[%s1 + $0x420] sm:$0xff]
  %v198 = vld [vmem:[%s1 + $0x428] sm:$0xff]
  %v199 = vld [vmem:[%s1 + $0x430] sm:$0xff]
  %v200 = vld [vmem:[%s1 + $0x438] sm:$0xff]
  %v201 = vld [vmem:[%s1 + $0x440] sm:$0xff]
  %v202 = vld [vmem:[%s1 + $0x448] sm:$0xff]
  %v203 = vld [vmem:[%s1 + $0x450] sm:$0xff]
  %v204 = vld [vmem:[%s1 + $0x458] sm:$0xff]
  %v205 = vld [vmem:[%s1 + $0x460] sm:$0xff]
  %v206 = vld [vmem:[%s1 + $0x468] sm:$0xff]
  %v207 = vld [vmem:[%s1 + $0x470] sm:$0xff]
  %v208 = vld [vmem:[%s1 + $0x478] sm:$0xff]
  %v209 = vld [vmem:[%s1 + $0x480] sm:$0xff]
  %v210 = vld [vmem:[%s1 + $0x488] sm:$0xff]
  %v211 = vld [vmem:[%s1 + $0x490] sm:$0xff]
  %v212 = vld [vmem:[%s1 + $0x498] sm:$0xff]
  %v213 = vld [vmem:[%s1 + $0x4a0] sm:$0xff]
  %v214 = vld [vmem:[%s1 + $0x4a8] sm:$0xff]
  %v215 = vld [vmem:[%s1 + $0x4b0] sm:$0xff]
  %v216 = vld [vmem:[%s1 + $0x4b8] sm:$0xff]
  %v217 = vld [vmem:[%s1 + $0x4c0] sm:$0xff]
  %v218 = vld [vmem:[%s1 + $0x4c8] sm:$0xff]
  %v219 = vld [vmem:[%s1 + $0x4d0] sm:$0xff]
  %v220 = vld [vmem:[%s1 + $0x4d8] sm:$0xff]
  %v221 = vld [vmem:[%s1 + $0x4e0] sm:$0xff]
  %v222 = vld [vmem:[%s1 + $0x4e8] sm:$0xff]
  %v223 = vld [vmem:[%s1 + $0x4f0] sm:$0xff]
  %v224 = vld [vmem:[%s1 + $0x4f8] sm:$0xff]
  %v225 = vld [vmem:[%s1 + $0x500] sm:$0xff]
  %v226 = vld [vmem:[%s1 + $0x508] sm:$0xff]
  %v227 = vld [vmem:[%s1 + $0x510] sm:$0xff]
  %v228 = vld [vmem:[%s1 + $0x518] sm:$0xff]
  %v229 = vld [vmem:[%s1 + $0x520] sm:$0xff]
  %v230 = vld [vmem:[%s1 + $0x528] sm:$0xff]
  %v231 = vld [vmem:[%s1 + $0x530] sm:$0xff]
  %v232 = vld [vmem:[%s1 + $0x538] sm:$0xff]
  %v233 = vld [vmem:[%s1 + $0x540] sm:$0xff]
  %v234 = vld [vmem:[%s1 + $0x548] sm:$0xff]
  %v235 = vld [vmem:[%s1 + $0x550] sm:$0xff]
  %v236 = vld [vmem:[%s1 + $0x558] sm:$0xff]
  %v237 = vld [vmem:[%s1 + $0x560] sm:$0xff]
  %v238 = vld [vmem:[%s1 + $0x568] sm:$0xff]
  %v239 = vld [vmem:[%s1 + $0x570] sm:$0xff]
  %v240 = vld [vmem:[%s1 + $0x578] sm:$0xff]
  %v241 = vld [vmem:[%s1 + $0x580] sm:$0xff]
  %v242 = vld [vmem:[%s1 + $0x588] sm:$0xff]
  %v243 = vld [vmem:[%s1 + $0x590] sm:$0xff]
  %v244 = vld [vmem:[%s1 + $0x598] sm:$0xff]
  %v245 = vld [vmem:[%s1 + $0x5a0] sm:$0xff]
  %v246 = vld [vmem:[%s1 + $0x5a8] sm:$0xff]
  %v247 = vld [vmem:[%s1 + $0x5b0] sm:$0xff]
  %v248 = vld [vmem:[%s1 + $0x5b8] sm:$0xff]
  %v249 = vld [vmem:[%s1 + $0x5c0] sm:$0xff]
  %v250 = vld [vmem:[%s1 + $0x5c8] sm:$0xff]
  %v251 = vld [vmem:[%s1 + $0x5d0] sm:$0xff]
  %v252 = vld [vmem:[%s1 + $0x5d8] sm:$0xff]
  %v253 = vld [vmem:[%s1 + $0x5e0] sm:$0xff]
  %v254 = vld [vmem:[%s1 + $0x5e8] sm:$0xff]
  %v255 = vld [vmem:[%s1 + $0x5f0] sm:$0xff]
  %v256 = vld [vmem:[%s1 + $0x5f8] sm:$0xff]
  %v257 = vld [vmem:[%s1 + $0x600] sm:$0xff]
  %v258 = vld [vmem:[%s1 + $0x608] sm:$0xff]
  %v259 = vld [vmem:[%s1 + $0x610] sm:$0xff]
  %v260 = vld [vmem:[%s1 + $0x618] sm:$0xff]
  %v261 = vld [vmem:[%s1 + $0x620] sm:$0xff]
  %v262 = vld [vmem:[%s1 + $0x628] sm:$0xff]
  %v263 = vld [vmem:[%s1 + $0x630] sm:$0xff]
  %v264 = vld [vmem:[%s1 + $0x638] sm:$0xff]
  %v265 = vld [vmem:[%s1 + $0x640] sm:$0xff]
  %v266 = vld [vmem:[%s1 + $0x648] sm:$0xff]
  %v267 = vld [vmem:[%s1 + $0x650] sm:$0xff]
  %v268 = vld [vmem:[%s1 + $0x658] sm:$0xff]
  %v269 = vld [vmem:[%s1 + $0x660] sm:$0xff]
  %v270 = vld [vmem:[%s1 + $0x668] sm:$0xff]
  %v271 = vld [vmem:[%s1 + $0x670] sm:$0xff]
  %v272 = vld [vmem:[%s1 + $0x678] sm:$0xff]
  %v273 = vld [vmem:[%s1 + $0x680] sm:$0xff]
  %v274 = vld [vmem:[%s1 + $0x688] sm:$0xff]
  %v275 = vld [vmem:[%s1 + $0x690] sm:$0xff]
  %v276 = vld [vmem:[%s1 + $0x698] sm:$0xff]
  %v277 = vld [vmem:[%s1 + $0x6a0] sm:$0xff]
  %v278 = vld [vmem:[%s1 + $0x6a8] sm:$0xff]
  %v279 = vld [vmem:[%s1 + $0x6b0] sm:$0xff]
  %v280 = vld [vmem:[%s1 + $0x6b8] sm:$0xff]
  %v281 = vld [vmem:[%s1 + $0x6c0] sm:$0xff]
  %v282 = vld [vmem:[%s1 + $0x6c8] sm:$0xff]
  %v283 = vld [vmem:[%s1 + $0x6d0] sm:$0xff]
  %v284 = vld [vmem:[%s1 + $0x6d8] sm:$0xff]
  %v285 = vld [vmem:[%s1 + $0x6e0] sm:$0xff]
  %v286 = vld [vmem:[%s1 + $0x6e8] sm:$0xff]
  %v287 = vld [vmem:[%s1 + $0x6f0] sm:$0xff]
  %v288 = vld [vmem:[%s1 + $0x6f8] sm:$0xff]
  %v289 = vld [vmem:[%s1 + $0x700] sm:$0xff]
  %v290 = vld [vmem:[%s1 + $0x708] sm:$0xff]
  %v291 = vld [vmem:[%s1 + $0x710] sm:$0xff]
  %v292 = vld [vmem:[%s1 + $0x718] sm:$0xff]
  %v293 = vld [vmem:[%s1 + $0x720] sm:$0xff]
  %v294 = vld [vmem:[%s1 + $0x728] sm:$0xff]
  %v295 = vld [vmem:[%s1 + $0x730] sm:$0xff]
  %v296 = vld [vmem:[%s1 + $0x738] sm:$0xff]
  %v297 = vld [vmem:[%s1 + $0x740] sm:$0xff]
  %v298 = vld [vmem:[%s1 + $0x748] sm:$0xff]
  %v299 = vld [vmem:[%s1 + $0x750] sm:$0xff]
  %v300 = vld [vmem:[%s1 + $0x758] sm:$0xff]
  %v301 = vld [vmem:[%s1 + $0x760] sm:$0xff]
  %v302 = vld [vmem:[%s1 + $0x768] sm:$0xff]
  %v303 = vld [vmem:[%s1 + $0x770] sm:$0xff]
  %v304 = vld [vmem:[%s1 + $0x778] sm:$0xff]
  %v305 = vld [vmem:[%s1 + $0x780] sm:$0xff]
  %v306 = vld [vmem:[%s1 + $0x788] sm:$0xff]
  %v307 = vld [vmem:[%s1 + $0x790] sm:$0xff]
  %v308 = vld [vmem:[%s1 + $0x798] sm:$0xff]
  %v309 = vld [vmem:[%s1 + $0x7a0] sm:$0xff]
  %v310 = vld [vmem:[%s1 + $0x7a8] sm:$0xff]
  %v311 = vld [vmem:[%s1 + $0x7b0] sm:$0xff]
  %v312 = vld [vmem:[%s1 + $0x7b8] sm:$0xff]
  %v313 = vld [vmem:[%s1 + $0x7c0] sm:$0xff]
  %v314 = vld [vmem:[%s1 + $0x7c8] sm:$0xff]
  %v315 = vld [vmem:[%s1 + $0x7d0] sm:$0xff]
  %v316 = vld [vmem:[%s1 + $0x7d8] sm:$0xff]
  %v317 = vld [vmem:[%s1 + $0x7e0] sm:$0xff]
  %v318 = vld [vmem:[%s1 + $0x7e8] sm:$0xff]
  %v319 = vld [vmem:[%s1 + $0x7f0] sm:$0xff]
  %v320 = vld [vmem:[%s1 + $0x7f8] sm:$0xff]
  %v321 = vld [vmem:[%s1 + $0x800] sm:$0xff]
  %v322 = vld [vmem:[%s1 + $0x808] sm:$0xff]
  %v323 = vld [vmem:[%s1 + $0x810] sm:$0xff]
  %v324 = vld [vmem:[%s1 + $0x818] sm:$0xff]
  %v325 = vld [vmem:[%s1 + $0x820] sm:$0xff]
  %v326 = vld [vmem:[%s1 + $0x828] sm:$0xff]
  %v327 = vld [vmem:[%s1 + $0x830] sm:$0xff]
  %v328 = vld [vmem:[%s1 + $0x838] sm:$0xff]
  %v329 = vld [vmem:[%s1 + $0x840] sm:$0xff]
  %v330 = vld [vmem:[%s1 + $0x848] sm:$0xff]
  %v331 = vld [vmem:[%s1 + $0x850] sm:$0xff]
  %v332 = vld [vmem:[%s1 + $0x858] sm:$0xff]
  %v333 = vld [vmem:[%s1 + $0x860] sm:$0xff]
  %v334 = vld [vmem:[%s1 + $0x868] sm:$0xff]
  %v335 = vld [vmem:[%s1 + $0x870] sm:$0xff]
  %v336 = vld [vmem:[%s1 + $0x878] sm:$0xff]
  %v337 = vld [vmem:[%s1 + $0x880] sm:$0xff]
  %v338 = vld [vmem:[%s1 + $0x888] sm:$0xff]
  %v339 = vld [vmem:[%s1 + $0x890] sm:$0xff]
  %v340 = vld [vmem:[%s1 + $0x898] sm:$0xff]
  %v341 = vld [vmem:[%s1 + $0x8a0] sm:$0xff]
  %v342 = vld [vmem:[%s1 + $0x8a8] sm:$0xff]
  %v343 = vld [vmem:[%s1 + $0x8b0] sm:$0xff]
  %v344 = vld [vmem:[%s1 + $0x8b8] sm:$0xff]
  %v345 = vld [vmem:[%s1 + $0x8c0] sm:$0xff]
  %v346 = vld [vmem:[%s1 + $0x8c8] sm:$0xff]
  %v347 = vld [vmem:[%s1 + $0x8d0] sm:$0xff]
  %v348 = vld [vmem:[%s1 + $0x8d8] sm:$0xff]
  %v349 = vld [vmem:[%s1 + $0x8e0] sm:$0xff]
  %v350 = vld [vmem:[%s1 + $0x8e8] sm:$0xff]
  %v351 = vld [vmem:[%s1 + $0x8f0] sm:$0xff]
  %v352 = vld [vmem:[%s1 + $0x8f8] sm:$0xff]
  %v353 = vld [vmem:[%s1 + $0x900] sm:$0xff]
  %v354 = vld [vmem:[%s1 + $0x908] sm:$0xff]
  %v355 = vld [vmem:[%s1 + $0x910] sm:$0xff]
  %v356 = vld [vmem:[%s1 + $0x918] sm:$0xff]
  %v357 = vld [vmem:[%s1 + $0x920] sm:$0xff]
  %v358 = vld [vmem:[%s1 + $0x928] sm:$0xff]
  %v359 = vld [vmem:[%s1 + $0x930] sm:$0xff]
  %v360 = vld [vmem:[%s1 + $0x938] sm:$0xff]
  %v361 = vld [vmem:[%s1 + $0x940] sm:$0xff]
  %v362 = vld [vmem:[%s1 + $0x948] sm:$0xff]
  %v363 = vld [vmem:[%s1 + $0x950] sm:$0xff]
  %v364 = vld [vmem:[%s1 + $0x958] sm:$0xff]
  %v365 = vld [vmem:[%s1 + $0x960] sm:$0xff]
  %v366 = vld [vmem:[%s1 + $0x968] sm:$0xff]
  %v367 = vld [vmem:[%s1 + $0x970] sm:$0xff]
  %v368 = vld [vmem:[%s1 + $0x978] sm:$0xff]
  %v369 = vld [vmem:[%s1 + $0x980] sm:$0xff]
  %v370 = vld [vmem:[%s1 + $0x988] sm:$0xff]
  %v371 = vld [vmem:[%s1 + $0x990] sm:$0xff]
  %v372 = vld [vmem:[%s1 + $0x998] sm:$0xff]
  %v373 = vld [vmem:[%s1 + $0x9a0] sm:$0xff]
  %v374 = vld [vmem:[%s1 + $0x9a8] sm:$0xff]
  %v375 = vld [vmem:[%s1 + $0x9b0] sm:$0xff]
  %v376 = vld [vmem:[%s1 + $0x9b8] sm:$0xff]
  %v377 = vld [vmem:[%s1 + $0x9c0] sm:$0xff]
  %v378 = vld [vmem:[%s1 + $0x9c8] sm:$0xff]
  %v379 = vld [vmem:[%s1 + $0x9d0] sm:$0xff]
  %v380 = vld [vmem:[%s1 + $0x9d8] sm:$0xff]
  %v381 = vld [vmem:[%s1 + $0x9e0] sm:$0xff]
  %v382 = vld [vmem:[%s1 + $0x9e8] sm:$0xff]
  %v383 = vld [vmem:[%s1 + $0x9f0] sm:$0xff]
  %v384 = vld [vmem:[%s1 + $0x9f8] sm:$0xff]
  %v385 = vld [vmem:[%s1 + $0xa00] sm:$0xff]
  %v386 = vld [vmem:[%s1 + $0xa08] sm:$0xff]
  %v387 = vld [vmem:[%s1 + $0xa10] sm:$0xff]
  %v388 = vld [vmem:[%s1 + $0xa18] sm:$0xff]
  %v389 = vld [vmem:[%s1 + $0xa20] sm:$0xff]
  %v390 = vld [vmem:[%s1 + $0xa28] sm:$0xff]
  %v391 = vld [vmem:[%s1 + $0xa30] sm:$0xff]
  %v392 = vld [vmem:[%s1 + $0xa38] sm:$0xff]
  %v393 = vld [vmem:[%s1 + $0xa40] sm:$0xff]
  %v394 = vld [vmem:[%s1 + $0xa48] sm:$0xff]
  %v395 = vld [vmem:[%s1 + $0xa50] sm:$0xff]
  %v396 = vld [vmem:[%s1 + $0xa58] sm:$0xff]
  %v397 = vld [vmem:[%s1 + $0xa60] sm:$0xff]
  %v398 = vld [vmem:[%s1 + $0xa68] sm:$0xff]
  %v399 = vld [vmem:[%s1 + $0xa70] sm:$0xff]
  %v400 = vld [vmem:[%s1 + $0xa78] sm:$0xff]
  %v401 = vld [vmem:[%s1 + $0xa80] sm:$0xff]
  %v402 = vld [vmem:[%s1 + $0xa88] sm:$0xff]
  %v403 = vld [vmem:[%s1 + $0xa90] sm:$0xff]
  %v404 = vld [vmem:[%s1 + $0xa98] sm:$0xff]
  %v405 = vld [vmem:[%s1 + $0xaa0] sm:$0xff]
  %v406 = vld [vmem:[%s1 + $0xaa8] sm:$0xff]
  %v407 = vld [vmem:[%s1 + $0xab0] sm:$0xff]
  %v408 = vld [vmem:[%s1 + $0xab8] sm:$0xff]
  %v409 = vld [vmem:[%s1 + $0xac0] sm:$0xff]
  %v410 = vld [vmem:[%s1 + $0xac8] sm:$0xff]
  %v411 = vld [vmem:[%s1 + $0xad0] sm:$0xff]
  %v412 = vld [vmem:[%s1 + $0xad8] sm:$0xff]
  %v413 = vld [vmem:[%s1 + $0xae0] sm:$0xff]
  %v414 = vld [vmem:[%s1 + $0xae8] sm:$0xff]
  %v415 = vld [vmem:[%s1 + $0xaf0] sm:$0xff]
  %v416 = vld [vmem:[%s1 + $0xaf8] sm:$0xff]
  %v417 = vld [vmem:[%s1 + $0xb00] sm:$0xff]
  %v418 = vld [vmem:[%s1 + $0xb08] sm:$0xff]
  %v419 = vld [vmem:[%s1 + $0xb10] sm:$0xff]
  %v420 = vld [vmem:[%s1 + $0xb18] sm:$0xff]
  %v421 = vld [vmem:[%s1 + $0xb20] sm:$0xff]
  %v422 = vld [vmem:[%s1 + $0xb28] sm:$0xff]
  %v423 = vld [vmem:[%s1 + $0xb30] sm:$0xff]
  %v424 = vld [vmem:[%s1 + $0xb38] sm:$0xff]
  %v425 = vld [vmem:[%s1 + $0xb40] sm:$0xff]
  %v426 = vld [vmem:[%s1 + $0xb48] sm:$0xff]
  %v427 = vld [vmem:[%s1 + $0xb50] sm:$0xff]
  %v428 = vld [vmem:[%s1 + $0xb58] sm:$0xff]
  %v429 = vld [vmem:[%s1 + $0xb60] sm:$0xff]
  %v430 = vld [vmem:[%s1 + $0xb68] sm:$0xff]
  %v431 = vld [vmem:[%s1 + $0xb70] sm:$0xff]
  %v432 = vld [vmem:[%s1 + $0xb78] sm:$0xff]
  %v433 = vld [vmem:[%s1 + $0xb80] sm:$0xff]
  %v434 = vld [vmem:[%s1 + $0xb88] sm:$0xff]
  %v435 = vld [vmem:[%s1 + $0xb90] sm:$0xff]
  %v436 = vld [vmem:[%s1 + $0xb98] sm:$0xff]
  %v437 = vld [vmem:[%s1 + $0xba0] sm:$0xff]
  %v438 = vld [vmem:[%s1 + $0xba8] sm:$0xff]
  %v439 = vld [vmem:[%s1 + $0xbb0] sm:$0xff]
  %v440 = vld [vmem:[%s1 + $0xbb8] sm:$0xff]
  %v441 = vld [vmem:[%s1 + $0xbc0] sm:$0xff]
  %v442 = vld [vmem:[%s1 + $0xbc8] sm:$0xff]
  %v443 = vld [vmem:[%s1 + $0xbd0] sm:$0xff]
  %v444 = vld [vmem:[%s1 + $0xbd8] sm:$0xff]
  %v445 = vld [vmem:[%s1 + $0xbe0] sm:$0xff]
  %v446 = vld [vmem:[%s1 + $0xbe8] sm:$0xff]
  %v447 = vld [vmem:[%s1 + $0xbf0] sm:$0xff]
  %v448 = vld [vmem:[%s1 + $0xbf8] sm:$0xff]
  %v449 = vld [vmem:[%s1 + $0xc00] sm:$0xff]
  %v450 = vld [vmem:[%s1 + $0xc08] sm:$0xff]
  %v451 = vld [vmem:[%s1 + $0xc10] sm:$0xff]
  %v452 = vld [vmem:[%s1 + $0xc18] sm:$0xff]
  %v453 = vld [vmem:[%s1 + $0xc20] sm:$0xff]
  %v454 = vld [vmem:[%s1 + $0xc28] sm:$0xff]
  %v455 = vld [vmem:[%s1 + $0xc30] sm:$0xff]
  %v456 = vld [vmem:[%s1 + $0xc38] sm:$0xff]
  %v457 = vld [vmem:[%s1 + $0xc40] sm:$0xff]
  %v458 = vld [vmem:[%s1 + $0xc48] sm:$0xff]
  %v459 = vld [vmem:[%s1 + $0xc50] sm:$0xff]
  %v460 = vld [vmem:[%s1 + $0xc58] sm:$0xff]
  %v461 = vld [vmem:[%s1 + $0xc60] sm:$0xff]
  %v462 = vld [vmem:[%s1 + $0xc68] sm:$0xff]
  %v463 = vld [vmem:[%s1 + $0xc70] sm:$0xff]
  %v464 = vld [vmem:[%s1 + $0xc78] sm:$0xff]
  %v465 = vld [vmem:[%s1 + $0xc80] sm:$0xff]
  %v466 = vld [vmem:[%s1 + $0xc88] sm:$0xff]
  %v467 = vld [vmem:[%s1 + $0xc90] sm:$0xff]
  %v468 = vld [vmem:[%s1 + $0xc98] sm:$0xff]
  %v469 = vld [vmem:[%s1 + $0xca0] sm:$0xff]
  %v470 = vld [vmem:[%s1 + $0xca8] sm:$0xff]
  %v471 = vld [vmem:[%s1 + $0xcb0] sm:$0xff]
  %v472 = vld [vmem:[%s1 + $0xcb8] sm:$0xff]
  %v473 = vld [vmem:[%s1 + $0xcc0] sm:$0xff]
  %v474 = vld [vmem:[%s1 + $0xcc8] sm:$0xff]
  %v475 = vld [vmem:[%s1 + $0xcd0] sm:$0xff]
  %v476 = vld [vmem:[%s1 + $0xcd8] sm:$0xff]
  %v477 = vld [vmem:[%s1 + $0xce0] sm:$0xff]
  %v478 = vld [vmem:[%s1 + $0xce8] sm:$0xff]
  %v479 = vld [vmem:[%s1 + $0xcf0] sm:$0xff]
  %v480 = vld [vmem:[%s1 + $0xcf8] sm:$0xff]
  %v481 = vld [vmem:[%s1 + $0xd00] sm:$0xff]
  %v482 = vld [vmem:[%s1 + $0xd08] sm:$0xff]
  %v483 = vld [vmem:[%s1 + $0xd10] sm:$0xff]
  %v484 = vld [vmem:[%s1 + $0xd18] sm:$0xff]
  %v485 = vld [vmem:[%s1 + $0xd20] sm:$0xff]
  %v486 = vld [vmem:[%s1 + $0xd28] sm:$0xff]
  %v487 = vld [vmem:[%s1 + $0xd30] sm:$0xff]
  %v488 = vld [vmem:[%s1 + $0xd38] sm:$0xff]
  %v489 = vld [vmem:[%s1 + $0xd40] sm:$0xff]
  %v490 = vld [vmem:[%s1 + $0xd48] sm:$0xff]
  %v491 = vld [vmem:[%s1 + $0xd50] sm:$0xff]
  %v492 = vld [vmem:[%s1 + $0xd58] sm:$0xff]
  %v493 = vld [vmem:[%s1 + $0xd60] sm:$0xff]
  %v494 = vld [vmem:[%s1 + $0xd68] sm:$0xff]
  %v495 = vld [vmem:[%s1 + $0xd70] sm:$0xff]
  %v496 = vld [vmem:[%s1 + $0xd78] sm:$0xff]
  %v497 = vld [vmem:[%s1 + $0xd80] sm:$0xff]
  %v498 = vld [vmem:[%s1 + $0xd88] sm:$0xff]
  %v499 = vld [vmem:[%s1 + $0xd90] sm:$0xff]
  %v500 = vld [vmem:[%s1 + $0xd98] sm:$0xff]
  %v501 = vld [vmem:[%s1 + $0xda0] sm:$0xff]
  %v502 = vld [vmem:[%s1 + $0xda8] sm:$0xff]
  %v503 = vld [vmem:[%s1 + $0xdb0] sm:$0xff]
  %v504 = vld [vmem:[%s1 + $0xdb8] sm:$0xff]
  %v505 = vld [vmem:[%s1 + $0xdc0] sm:$0xff]
  %v506 = vld [vmem:[%s1 + $0xdc8] sm:$0xff]
  %v507 = vld [vmem:[%s1 + $0xdd0] sm:$0xff]
  %v508 = vld [vmem:[%s1 + $0xdd8] sm:$0xff]
  %v509 = vld [vmem:[%s1 + $0xde0] sm:$0xff]
  %v510 = vld [vmem:[%s1 + $0xde8] sm:$0xff]
  %v511 = vld [vmem:[%s1 + $0xdf0] sm:$0xff]
  %v512 = vld [vmem:[%s1 + $0xdf8] sm:$0xff]
  %v513 = vld [vmem:[%s1 + $0xe00] sm:$0xff]
  %v514 = vld [vmem:[%s1 + $0xe08] sm:$0xff]
  %v515 = vld [vmem:[%s1 + $0xe10] sm:$0xff]
  %v516 = vld [vmem:[%s1 + $0xe18] sm:$0xff]
  %v517 = vld [vmem:[%s1 + $0xe20] sm:$0xff]
  %v518 = vld [vmem:[%s1 + $0xe28] sm:$0xff]
  %v519 = vld [vmem:[%s1 + $0xe30] sm:$0xff]
  %v520 = vld [vmem:[%s1 + $0xe38] sm:$0xff]
  %v521 = vld [vmem:[%s1 + $0xe40] sm:$0xff]
  %v522 = vld [vmem:[%s1 + $0xe48] sm:$0xff]
  %v523 = vld [vmem:[%s1 + $0xe50] sm:$0xff]
  %v524 = vld [vmem:[%s1 + $0xe58] sm:$0xff]
  %v525 = vld [vmem:[%s1 + $0xe60] sm:$0xff]
  %v526 = vld [vmem:[%s1 + $0xe68] sm:$0xff]
  %v527 = vld [vmem:[%s1 + $0xe70] sm:$0xff]
  %v528 = vld [vmem:[%s1 + $0xe78] sm:$0xff]
  %v529 = vld [vmem:[%s1 + $0xe80] sm:$0xff]
  %v530 = vld [vmem:[%s1 + $0xe88] sm:$0xff]
  %v531 = vld [vmem:[%s1 + $0xe90] sm:$0xff]
  %v532 = vld [vmem:[%s1 + $0xe98] sm:$0xff]
  %v533 = vld [vmem:[%s1 + $0xea0] sm:$0xff]
  %v534 = vld [vmem:[%s1 + $0xea8] sm:$0xff]
  %v535 = vld [vmem:[%s1 + $0xeb0] sm:$0xff]
  %v536 = vld [vmem:[%s1 + $0xeb8] sm:$0xff]
  %v537 = vld [vmem:[%s1 + $0xec0] sm:$0xff]
  %v538 = vld [vmem:[%s1 + $0xec8] sm:$0xff]
  %v539 = vld [vmem:[%s1 + $0xed0] sm:$0xff]
  %v540 = vld [vmem:[%s1 + $0xed8] sm:$0xff]
  %v541 = vld [vmem:[%s1 + $0xee0] sm:$0xff]
  %v542 = vld [vmem:[%s1 + $0xee8] sm:$0xff]
  %v543 = vld [vmem:[%s1 + $0xef0] sm:$0xff]
  %v544 = vld [vmem:[%s1 + $0xef8] sm:$0xff]
  %v545 = vld [vmem:[%s1 + $0xf00] sm:$0xff]
  %v546 = vld [vmem:[%s1 + $0xf08] sm:$0xff]
  %v547 = vld [vmem:[%s1 + $0xf10] sm:$0xff]
  %v548 = vld [vmem:[%s1 + $0xf18] sm:$0xff]
  %v549 = vld [vmem:[%s1 + $0xf20] sm:$0xff]
  %v550 = vld [vmem:[%s1 + $0xf28] sm:$0xff]
  %v551 = vld [vmem:[%s1 + $0xf30] sm:$0xff]
  %v552 = vld [vmem:[%s1 + $0xf38] sm:$0xff]
  %v553 = vld [vmem:[%s1 + $0xf40] sm:$0xff]
  %v554 = vld [vmem:[%s1 + $0xf48] sm:$0xff]
  %v555 = vld [vmem:[%s1 + $0xf50] sm:$0xff]
  %v556 = vld [vmem:[%s1 + $0xf58] sm:$0xff]
  %v557 = vld [vmem:[%s1 + $0xf60] sm:$0xff]
  %v558 = vld [vmem:[%s1 + $0xf68] sm:$0xff]
  %v559 = vld [vmem:[%s1 + $0xf70] sm:$0xff]
  %v560 = vld [vmem:[%s1 + $0xf78] sm:$0xff]
  %v561 = vld [vmem:[%s1 + $0xf80] sm:$0xff]
  %v562 = vld [vmem:[%s1 + $0xf88] sm:$0xff]
  %v563 = vld [vmem:[%s1 + $0xf90] sm:$0xff]
  %v564 = vld [vmem:[%s1 + $0xf98] sm:$0xff]
  %v565 = vld [vmem:[%s1 + $0xfa0] sm:$0xff]
  %v566 = vld [vmem:[%s1 + $0xfa8] sm:$0xff]
  %v567 = vld [vmem:[%s1 + $0xfb0] sm:$0xff]
  %v568 = vld [vmem:[%s1 + $0xfb8] sm:$0xff]
  %v569 = vld [vmem:[%s1 + $0xfc0] sm:$0xff]
  %v570 = vld [vmem:[%s1 + $0xfc8] sm:$0xff]
  %v571 = vld [vmem:[%s1 + $0xfd0] sm:$0xff]
  %v572 = vld [vmem:[%s1 + $0xfd8] sm:$0xff]
  %v573 = vld [vmem:[%s1 + $0xfe0] sm:$0xff]
  %v574 = vld [vmem:[%s1 + $0xfe8] sm:$0xff]
  %v575 = vld [vmem:[%s1 + $0xff0] sm:$0xff]
  %v576 = vld [vmem:[%s1 + $0xff8] sm:$0xff]
  %v577 = vld [vmem:[%s1 + $0x1000] sm:$0xff]
  %v578 = vld [vmem:[%s1 + $0x1008] sm:$0xff]
  %v579 = vld [vmem:[%s1 + $0x1010] sm:$0xff]
  %v580 = vld [vmem:[%s1 + $0x1018] sm:$0xff]
  %v581 = vld [vmem:[%s1 + $0x1020] sm:$0xff]
  %v582 = vld [vmem:[%s1 + $0x1028] sm:$0xff]
  %v583 = vld [vmem:[%s1 + $0x1030] sm:$0xff]
  %v584 = vld [vmem:[%s1 + $0x1038] sm:$0xff]
  %v585 = vld [vmem:[%s1 + $0x1040] sm:$0xff]
  %v586 = vld [vmem:[%s1 + $0x1048] sm:$0xff]
  %v587 = vld [vmem:[%s1 + $0x1050] sm:$0xff]
  %v588 = vld [vmem:[%s1 + $0x1058] sm:$0xff]
  %v589 = vld [vmem:[%s1 + $0x1060] sm:$0xff]
  %v590 = vld [vmem:[%s1 + $0x1068] sm:$0xff]
  %v591 = vld [vmem:[%s1 + $0x1070] sm:$0xff]
  %v592 = vld [vmem:[%s1 + $0x1078] sm:$0xff]
  %v593 = vld [vmem:[%s1 + $0x1080] sm:$0xff]
  %v594 = vld [vmem:[%s1 + $0x1088] sm:$0xff]
  %v595 = vld [vmem:[%s1 + $0x1090] sm:$0xff]
  %v596 = vld [vmem:[%s1 + $0x1098] sm:$0xff]
  %v597 = vld [vmem:[%s1 + $0x10a0] sm:$0xff]
  %v598 = vld [vmem:[%s1 + $0x10a8] sm:$0xff]
  %v599 = vld [vmem:[%s1 + $0x10b0] sm:$0xff]
  %v600 = vld [vmem:[%s1 + $0x10b8] sm:$0xff]
  %v601 = vld [vmem:[%s1 + $0x10c0] sm:$0xff]
  %v602 = vld [vmem:[%s1 + $0x10c8] sm:$0xff]
  %v603 = vld [vmem:[%s1 + $0x10d0] sm:$0xff]
  %v604 = vld [vmem:[%s1 + $0x10d8] sm:$0xff]
  %v605 = vld [vmem:[%s1 + $0x10e0] sm:$0xff]
  %v606 = vld [vmem:[%s1 + $0x10e8] sm:$0xff]
  %v607 = vld [vmem:[%s1 + $0x10f0] sm:$0xff]
  %v608 = vld [vmem:[%s1 + $0x10f8] sm:$0xff]
  %v609 = vld [vmem:[%s1 + $0x1100] sm:$0xff]
  %v610 = vld [vmem:[%s1 + $0x1108] sm:$0xff]
  %v611 = vld [vmem:[%s1 + $0x1110] sm:$0xff]
  %v612 = vld [vmem:[%s1 + $0x1118] sm:$0xff]
  %v613 = vld [vmem:[%s1 + $0x1120] sm:$0xff]
  %v614 = vld [vmem:[%s1 + $0x1128] sm:$0xff]
  %v615 = vld [vmem:[%s1 + $0x1130] sm:$0xff]
  %v616 = vld [vmem:[%s1 + $0x1138] sm:$0xff]
  %v617 = vld [vmem:[%s1 + $0x1140] sm:$0xff]
  %v618 = vld [vmem:[%s1 + $0x1148] sm:$0xff]
  %v619 = vld [vmem:[%s1 + $0x1150] sm:$0xff]
  %v620 = vld [vmem:[%s1 + $0x1158] sm:$0xff]
  %v621 = vld [vmem:[%s1 + $0x1160] sm:$0xff]
  %v622 = vld [vmem:[%s1 + $0x1168] sm:$0xff]
  %v623 = vld [vmem:[%s1 + $0x1170] sm:$0xff]
  %v624 = vld [vmem:[%s1 + $0x1178] sm:$0xff]
  %v625 = vld [vmem:[%s1 + $0x1180] sm:$0xff]
  %v626 = vld [vmem:[%s1 + $0x1188] sm:$0xff]
  %v627 = vld [vmem:[%s1 + $0x1190] sm:$0xff]
  %v628 = vld [vmem:[%s1 + $0x1198] sm:$0xff]
  %v629 = vld [vmem:[%s1 + $0x11a0] sm:$0xff]
  %v630 = vld [vmem:[%s1 + $0x11a8] sm:$0xff]
  %v631 = vld [vmem:[%s1 + $0x11b0] sm:$0xff]
  %v632 = vld [vmem:[%s1 + $0x11b8] sm:$0xff]
  %v633 = vld [vmem:[%s1 + $0x11c0] sm:$0xff]
  %v634 = vld [vmem:[%s1 + $0x11c8] sm:$0xff]
  %v635 = vld [vmem:[%s1 + $0x11d0] sm:$0xff]
  %v636 = vld [vmem:[%s1 + $0x11d8] sm:$0xff]
  %v637 = vld [vmem:[%s1 + $0x11e0] sm:$0xff]
  %v638 = vld [vmem:[%s1 + $0x11e8] sm:$0xff]
  %v639 = vld [vmem:[%s1 + $0x11f0] sm:$0xff]
  %v640 = vld [vmem:[%s1 + $0x11f8] sm:$0xff]
  %v641 = vld [vmem:[%s1 + $0x1200] sm:$0xff]
  %v642 = vld [vmem:[%s1 + $0x1208] sm:$0xff]
  %v643 = vld [vmem:[%s1 + $0x1210] sm:$0xff]
  %v644 = vld [vmem:[%s1 + $0x1218] sm:$0xff]
  %v645 = vld [vmem:[%s1 + $0x1220] sm:$0xff]
  %v646 = vld [vmem:[%s1 + $0x1228] sm:$0xff]
  %v647 = vld [vmem:[%s1 + $0x1230] sm:$0xff]
  %v648 = vld [vmem:[%s1 + $0x1238] sm:$0xff]
  %v649 = vld [vmem:[%s1 + $0x1240] sm:$0xff]
  %v650 = vld [vmem:[%s1 + $0x1248] sm:$0xff]
  %v651 = vld [vmem:[%s1 + $0x1250] sm:$0xff]
  %v652 = vld [vmem:[%s1 + $0x1258] sm:$0xff]
  %v653 = vld [vmem:[%s1 + $0x1260] sm:$0xff]
  %v654 = vld [vmem:[%s1 + $0x1268] sm:$0xff]
  %v655 = vld [vmem:[%s1 + $0x1270] sm:$0xff]
  %v656 = vld [vmem:[%s1 + $0x1278] sm:$0xff]
  %v657 = vld [vmem:[%s1 + $0x1280] sm:$0xff]
  %v658 = vld [vmem:[%s1 + $0x1288] sm:$0xff]
  %v659 = vld [vmem:[%s1 + $0x1290] sm:$0xff]
  %v660 = vld [vmem:[%s1 + $0x1298] sm:$0xff]
  %v661 = vld [vmem:[%s1 + $0x12a0] sm:$0xff]
  %v662 = vld [vmem:[%s1 + $0x12a8] sm:$0xff]
  %v663 = vld [vmem:[%s1 + $0x12b0] sm:$0xff]
  %v664 = vld [vmem:[%s1 + $0x12b8] sm:$0xff]
  %v665 = vld [vmem:[%s1 + $0x12c0] sm:$0xff]
  %v666 = vld [vmem:[%s1 + $0x12c8] sm:$0xff]
  %v667 = vld [vmem:[%s1 + $0x12d0] sm:$0xff]
  %v668 = vld [vmem:[%s1 + $0x12d8] sm:$0xff]
  %v669 = vld [vmem:[%s1 + $0x12e0] sm:$0xff]
  %v670 = vld [vmem:[%s1 + $0x12e8] sm:$0xff]
  %v671 = vld [vmem:[%s1 + $0x12f0] sm:$0xff]
  %v672 = vld [vmem:[%s1 + $0x12f8] sm:$0xff]
  %v673 = vld [vmem:[%s1 + $0x1300] sm:$0xff]
  %v674 = vld [vmem:[%s1 + $0x1308] sm:$0xff]
  %v675 = vld [vmem:[%s1 + $0x1310] sm:$0xff]
  %v676 = vld [vmem:[%s1 + $0x1318] sm:$0xff]
  %v677 = vld [vmem:[%s1 + $0x1320] sm:$0xff]
  %v678 = vld [vmem:[%s1 + $0x1328] sm:$0xff]
  %v679 = vld [vmem:[%s1 + $0x1330] sm:$0xff]
  %v680 = vld [vmem:[%s1 + $0x1338] sm:$0xff]
  %v681 = vld [vmem:[%s1 + $0x1340] sm:$0xff]
  %v682 = vld [vmem:[%s1 + $0x1348] sm:$0xff]
  %v683 = vld [vmem:[%s1 + $0x1350] sm:$0xff]
  %v684 = vld [vmem:[%s1 + $0x1358] sm:$0xff]
  %v685 = vld [vmem:[%s1 + $0x1360] sm:$0xff]
  %v686 = vld [vmem:[%s1 + $0x1368] sm:$0xff]
  %v687 = vld [vmem:[%s1 + $0x1370] sm:$0xff]
  %v688 = vld [vmem:[%s1 + $0x1378] sm:$0xff]
  %v689 = vld [vmem:[%s1 + $0x1380] sm:$0xff]
  %v690 = vld [vmem:[%s1 + $0x1388] sm:$0xff]
  %v691 = vld [vmem:[%s1 + $0x1390] sm:$0xff]
  %v692 = vld [vmem:[%s1 + $0x1398] sm:$0xff]
  %v693 = vld [vmem:[%s1 + $0x13a0] sm:$0xff]
  %v694 = vld [vmem:[%s1 + $0x13a8] sm:$0xff]
  %v695 = vld [vmem:[%s1 + $0x13b0] sm:$0xff]
  %v696 = vld [vmem:[%s1 + $0x13b8] sm:$0xff]
  %v697 = vld [vmem:[%s1 + $0x13c0] sm:$0xff]
  %v698 = vld [vmem:[%s1 + $0x13c8] sm:$0xff]
  %v699 = vld [vmem:[%s1 + $0x13d0] sm:$0xff]
  %v700 = vld [vmem:[%s1 + $0x13d8] sm:$0xff]
  %v701 = vld [vmem:[%s1 + $0x13e0] sm:$0xff]
  %v702 = vld [vmem:[%s1 + $0x13e8] sm:$0xff]
  %v703 = vld [vmem:[%s1 + $0x13f0] sm:$0xff]
  %v704 = vld [vmem:[%s1 + $0x13f8] sm:$0xff]
  %v705 = vld [vmem:[%s1 + $0x1400] sm:$0xff]
  %v706 = vld [vmem:[%s1 + $0x1408] sm:$0xff]
  %v707 = vld [vmem:[%s1 + $0x1410] sm:$0xff]
  %v708 = vld [vmem:[%s1 + $0x1418] sm:$0xff]
  %v709 = vld [vmem:[%s1 + $0x1420] sm:$0xff]
  %v710 = vld [vmem:[%s1 + $0x1428] sm:$0xff]
  %v711 = vld [vmem:[%s1 + $0x1430] sm:$0xff]
  %v712 = vld [vmem:[%s1 + $0x1438] sm:$0xff]
  %v713 = vld [vmem:[%s1 + $0x1440] sm:$0xff]
  %v714 = vld [vmem:[%s1 + $0x1448] sm:$0xff]
  %v715 = vld [vmem:[%s1 + $0x1450] sm:$0xff]
  %v716 = vld [vmem:[%s1 + $0x1458] sm:$0xff]
  %v717 = vld [vmem:[%s1 + $0x1460] sm:$0xff]
  %v718 = vld [vmem:[%s1 + $0x1468] sm:$0xff]
  %v719 = vld [vmem:[%s1 + $0x1470] sm:$0xff]
  %v720 = vld [vmem:[%s1 + $0x1478] sm:$0xff]
  %v721 = vld [vmem:[%s1 + $0x1480] sm:$0xff]
  %v722 = vld [vmem:[%s1 + $0x1488] sm:$0xff]
  %v723 = vld [vmem:[%s1 + $0x1490] sm:$0xff]
  %v724 = vld [vmem:[%s1 + $0x1498] sm:$0xff]
  %v725 = vld [vmem:[%s1 + $0x14a0] sm:$0xff]
  %v726 = vld [vmem:[%s1 + $0x14a8] sm:$0xff]
  %v727 = vld [vmem:[%s1 + $0x14b0] sm:$0xff]
  %v728 = vld [vmem:[%s1 + $0x14b8] sm:$0xff]
  %v729 = vld [vmem:[%s1 + $0x14c0] sm:$0xff]
  %v730 = vld [vmem:[%s1 + $0x14c8] sm:$0xff]
  %v731 = vld [vmem:[%s1 + $0x14d0] sm:$0xff]
  %v732 = vld [vmem:[%s1 + $0x14d8] sm:$0xff]
  %v733 = vld [vmem:[%s1 + $0x14e0] sm:$0xff]
  %v734 = vld [vmem:[%s1 + $0x14e8] sm:$0xff]
  %v735 = vld [vmem:[%s1 + $0x14f0] sm:$0xff]
  %v736 = vld [vmem:[%s1 + $0x14f8] sm:$0xff]
  %v737 = vld [vmem:[%s1 + $0x1500] sm:$0xff]
  %v738 = vld [vmem:[%s1 + $0x1508] sm:$0xff]
  %v739 = vld [vmem:[%s1 + $0x1510] sm:$0xff]
  %v740 = vld [vmem:[%s1 + $0x1518] sm:$0xff]
  %v741 = vld [vmem:[%s1 + $0x1520] sm:$0xff]
  %v742 = vld [vmem:[%s1 + $0x1528] sm:$0xff]
  %v743 = vld [vmem:[%s1 + $0x1530] sm:$0xff]
  %v744 = vld [vmem:[%s1 + $0x1538] sm:$0xff]
  %v745 = vld [vmem:[%s1 + $0x1540] sm:$0xff]
  %v746 = vld [vmem:[%s1 + $0x1548] sm:$0xff]
  %v747 = vld [vmem:[%s1 + $0x1550] sm:$0xff]
  %v748 = vld [vmem:[%s1 + $0x1558] sm:$0xff]
  %v749 = vld [vmem:[%s1 + $0x1560] sm:$0xff]
  %v750 = vld [vmem:[%s1 + $0x1568] sm:$0xff]
  %v751 = vld [vmem:[%s1 + $0x1570] sm:$0xff]
  %v752 = vld [vmem:[%s1 + $0x1578] sm:$0xff]
  %v753 = vld [vmem:[%s1 + $0x1580] sm:$0xff]
  %v754 = vld [vmem:[%s1 + $0x1588] sm:$0xff]
  %v755 = vld [vmem:[%s1 + $0x1590] sm:$0xff]
  %v756 = vld [vmem:[%s1 + $0x1598] sm:$0xff]
  %v757 = vld [vmem:[%s1 + $0x15a0] sm:$0xff]
  %v758 = vld [vmem:[%s1 + $0x15a8] sm:$0xff]
  %v759 = vld [vmem:[%s1 + $0x15b0] sm:$0xff]
  %v760 = vld [vmem:[%s1 + $0x15b8] sm:$0xff]
  %v761 = vld [vmem:[%s1 + $0x15c0] sm:$0xff]
  %v762 = vld [vmem:[%s1 + $0x15c8] sm:$0xff]
  %v763 = vld [vmem:[%s1 + $0x15d0] sm:$0xff]
  %v764 = vld [vmem:[%s1 + $0x15d8] sm:$0xff]
  %v765 = vld [vmem:[%s1 + $0x15e0] sm:$0xff]
  %v766 = vld [vmem:[%s1 + $0x15e8] sm:$0xff]
  %v767 = vld [vmem:[%s1 + $0x15f0] sm:$0xff]
  %v768 = vld [vmem:[%s1 + $0x15f8] sm:$0xff]
  %v769 = vld [vmem:[%s1 + $0x1600] sm:$0xff]
  %v770 = vld [vmem:[%s1 + $0x1608] sm:$0xff]
  %v771 = vld [vmem:[%s1 + $0x1610] sm:$0xff]
  %v772 = vld [vmem:[%s1 + $0x1618] sm:$0xff]
  %v773 = vld [vmem:[%s1 + $0x1620] sm:$0xff]
  %v774 = vld [vmem:[%s1 + $0x1628] sm:$0xff]
  %v775 = vld [vmem:[%s1 + $0x1630] sm:$0xff]
  %v776 = vld [vmem:[%s1 + $0x1638] sm:$0xff]
  %v777 = vld [vmem:[%s1 + $0x1640] sm:$0xff]
  %v778 = vld [vmem:[%s1 + $0x1648] sm:$0xff]
  %v779 = vld [vmem:[%s1 + $0x1650] sm:$0xff]
  %v780 = vld [vmem:[%s1 + $0x1658] sm:$0xff]
  %v781 = vld [vmem:[%s1 + $0x1660] sm:$0xff]
  %v782 = vld [vmem:[%s1 + $0x1668] sm:$0xff]
  %v783 = vld [vmem:[%s1 + $0x1670] sm:$0xff]
  %v784 = vld [vmem:[%s1 + $0x1678] sm:$0xff]
  %v785 = vld [vmem:[%s1 + $0x1680] sm:$0xff]
  %v786 = vld [vmem:[%s1 + $0x1688] sm:$0xff]
  %v787 = vld [vmem:[%s1 + $0x1690] sm:$0xff]
  %v788 = vld [vmem:[%s1 + $0x1698] sm:$0xff]
  %v789 = vld [vmem:[%s1 + $0x16a0] sm:$0xff]
  %v790 = vld [vmem:[%s1 + $0x16a8] sm:$0xff]
  %v791 = vld [vmem:[%s1 + $0x16b0] sm:$0xff]
  %v792 = vld [vmem:[%s1 + $0x16b8] sm:$0xff]
  %v793 = vld [vmem:[%s1 + $0x16c0] sm:$0xff]
  %v794 = vld [vmem:[%s1 + $0x16c8] sm:$0xff]
  %v795 = vld [vmem:[%s1 + $0x16d0] sm:$0xff]
  %v796 = vld [vmem:[%s1 + $0x16d8] sm:$0xff]
  %v797 = vld [vmem:[%s1 + $0x16e0] sm:$0xff]
  %v798 = vld [vmem:[%s1 + $0x16e8] sm:$0xff]
  %v799 = vld [vmem:[%s1 + $0x16f0] sm:$0xff]
  %v800 = vld [vmem:[%s1 + $0x16f8] sm:$0xff]
  %v801 = vld [vmem:[%s1 + $0x1700] sm:$0xff]
  %v802 = vld [vmem:[%s1 + $0x1708] sm:$0xff]
  %v803 = vld [vmem:[%s1 + $0x1710] sm:$0xff]
  %v804 = vld [vmem:[%s1 + $0x1718] sm:$0xff]
  %v805 = vld [vmem:[%s1 + $0x1720] sm:$0xff]
  %v806 = vld [vmem:[%s1 + $0x1728] sm:$0xff]
  %v807 = vld [vmem:[%s1 + $0x1730] sm:$0xff]
  %v808 = vld [vmem:[%s1 + $0x1738] sm:$0xff]
  %v809 = vld [vmem:[%s1 + $0x1740] sm:$0xff]
  %v810 = vld [vmem:[%s1 + $0x1748] sm:$0xff]
  %v811 = vld [vmem:[%s1 + $0x1750] sm:$0xff]
  %v812 = vld [vmem:[%s1 + $0x1758] sm:$0xff]
  %v813 = vld [vmem:[%s1 + $0x1760] sm:$0xff]
  %v814 = vld [vmem:[%s1 + $0x1768] sm:$0xff]
  %v815 = vld [vmem:[%s1 + $0x1770] sm:$0xff]
  %v816 = vld [vmem:[%s1 + $0x1778] sm:$0xff]
  %v817 = vld [vmem:[%s1 + $0x1780] sm:$0xff]
  %v818 = vld [vmem:[%s1 + $0x1788] sm:$0xff]
  %v819 = vld [vmem:[%s1 + $0x1790] sm:$0xff]
  %v820 = vld [vmem:[%s1 + $0x1798] sm:$0xff]
  %v821 = vld [vmem:[%s1 + $0x17a0] sm:$0xff]
  %v822 = vld [vmem:[%s1 + $0x17a8] sm:$0xff]
  %v823 = vld [vmem:[%s1 + $0x17b0] sm:$0xff]
  %v824 = vld [vmem:[%s1 + $0x17b8] sm:$0xff]
  %v825 = vld [vmem:[%s1 + $0x17c0] sm:$0xff]
  %v826 = vld [vmem:[%s1 + $0x17c8] sm:$0xff]
  %v827 = vld [vmem:[%s1 + $0x17d0] sm:$0xff]
  %v828 = vld [vmem:[%s1 + $0x17d8] sm:$0xff]
  %v829 = vld [vmem:[%s1 + $0x17e0] sm:$0xff]
  %v830 = vld [vmem:[%s1 + $0x17e8] sm:$0xff]
  %v831 = vld [vmem:[%s1 + $0x17f0] sm:$0xff]
  %v832 = vld [vmem:[%s1 + $0x17f8] sm:$0xff]
  %v833 = vld [vmem:[%s1 + $0x1800] sm:$0xff]
  %v834 = vld [vmem:[%s1 + $0x1808] sm:$0xff]
  %v835 = vld [vmem:[%s1 + $0x1810] sm:$0xff]
  %v836 = vld [vmem:[%s1 + $0x1818] sm:$0xff]
  %v837 = vld [vmem:[%s1 + $0x1820] sm:$0xff]
  %v838 = vld [vmem:[%s1 + $0x1828] sm:$0xff]
  %v839 = vld [vmem:[%s1 + $0x1830] sm:$0xff]
  %v840 = vld [vmem:[%s1 + $0x1838] sm:$0xff]
  %v841 = vld [vmem:[%s1 + $0x1840] sm:$0xff]
  %v842 = vld [vmem:[%s1 + $0x1848] sm:$0xff]
  %v843 = vld [vmem:[%s1 + $0x1850] sm:$0xff]
  %v844 = vld [vmem:[%s1 + $0x1858] sm:$0xff]
  %v845 = vld [vmem:[%s1 + $0x1860] sm:$0xff]
  %v846 = vld [vmem:[%s1 + $0x1868] sm:$0xff]
  %v847 = vld [vmem:[%s1 + $0x1870] sm:$0xff]
  %v848 = vld [vmem:[%s1 + $0x1878] sm:$0xff]
  %v849 = vld [vmem:[%s1 + $0x1880] sm:$0xff]
  %v850 = vld [vmem:[%s1 + $0x1888] sm:$0xff]
  %v851 = vld [vmem:[%s1 + $0x1890] sm:$0xff]
  %v852 = vld [vmem:[%s1 + $0x1898] sm:$0xff]
  %v853 = vld [vmem:[%s1 + $0x18a0] sm:$0xff]
  %v854 = vld [vmem:[%s1 + $0x18a8] sm:$0xff]
  %v855 = vld [vmem:[%s1 + $0x18b0] sm:$0xff]
  %v856 = vld [vmem:[%s1 + $0x18b8] sm:$0xff]
  %v857 = vld [vmem:[%s1 + $0x18c0] sm:$0xff]
  %v858 = vld [vmem:[%s1 + $0x18c8] sm:$0xff]
  %v859 = vld [vmem:[%s1 + $0x18d0] sm:$0xff]
  %v860 = vld [vmem:[%s1 + $0x18d8] sm:$0xff]
  %v861 = vld [vmem:[%s1 + $0x18e0] sm:$0xff]
  %v862 = vld [vmem:[%s1 + $0x18e8] sm:$0xff]
  %v863 = vld [vmem:[%s1 + $0x18f0] sm:$0xff]
  %v864 = vld [vmem:[%s1 + $0x18f8] sm:$0xff]
  %v865 = vld [vmem:[%s1 + $0x1900] sm:$0xff]
  %v866 = vld [vmem:[%s1 + $0x1908] sm:$0xff]
  %v867 = vld [vmem:[%s1 + $0x1910] sm:$0xff]
  %v868 = vld [vmem:[%s1 + $0x1918] sm:$0xff]
  %v869 = vld [vmem:[%s1 + $0x1920] sm:$0xff]
  %v870 = vld [vmem:[%s1 + $0x1928] sm:$0xff]
  %v871 = vld [vmem:[%s1 + $0x1930] sm:$0xff]
  %v872 = vld [vmem:[%s1 + $0x1938] sm:$0xff]
  %v873 = vld [vmem:[%s1 + $0x1940] sm:$0xff]
  %v874 = vld [vmem:[%s1 + $0x1948] sm:$0xff]
  %v875 = vld [vmem:[%s1 + $0x1950] sm:$0xff]
  %v876 = vld [vmem:[%s1 + $0x1958] sm:$0xff]
  %v877 = vld [vmem:[%s1 + $0x1960] sm:$0xff]
  %v878 = vld [vmem:[%s1 + $0x1968] sm:$0xff]
  %v879 = vld [vmem:[%s1 + $0x1970] sm:$0xff]
  %v880 = vld [vmem:[%s1 + $0x1978] sm:$0xff]
  %v881 = vld [vmem:[%s1 + $0x1980] sm:$0xff]
  %v882 = vld [vmem:[%s1 + $0x1988] sm:$0xff]
  %v883 = vld [vmem:[%s1 + $0x1990] sm:$0xff]
  %v884 = vld [vmem:[%s1 + $0x1998] sm:$0xff]
  %v885 = vld [vmem:[%s1 + $0x19a0] sm:$0xff]
  %v886 = vld [vmem:[%s1 + $0x19a8] sm:$0xff]
  %v887 = vld [vmem:[%s1 + $0x19b0] sm:$0xff]
  %v888 = vld [vmem:[%s1 + $0x19b8] sm:$0xff]
  %v889 = vld [vmem:[%s1 + $0x19c0] sm:$0xff]
  %v890 = vld [vmem:[%s1 + $0x19c8] sm:$0xff]
  %v891 = vld [vmem:[%s1 + $0x19d0] sm:$0xff]
  %v892 = vld [vmem:[%s1 + $0x19d8] sm:$0xff]
  %v893 = vld [vmem:[%s1 + $0x19e0] sm:$0xff]
  %v894 = vld [vmem:[%s1 + $0x19e8] sm:$0xff]
  %v895 = vld [vmem:[%s1 + $0x19f0] sm:$0xff]
  %v896 = vld [vmem:[%s1 + $0x19f8] sm:$0xff]
  %v897 = vld [vmem:[%s1 + $0x1a00] sm:$0xff]
  %v898 = vld [vmem:[%s1 + $0x1a08] sm:$0xff]
  %v899 = vld [vmem:[%s1 + $0x1a10] sm:$0xff]
  %v900 = vld [vmem:[%s1 + $0x1a18] sm:$0xff]
  %v901 = vld [vmem:[%s1 + $0x1a20] sm:$0xff]
  %v902 = vld [vmem:[%s1 + $0x1a28] sm:$0xff]
  %v903 = vld [vmem:[%s1 + $0x1a30] sm:$0xff]
  %v904 = vld [vmem:[%s1 + $0x1a38] sm:$0xff]
  %v905 = vld [vmem:[%s1 + $0x1a40] sm:$0xff]
  %v906 = vld [vmem:[%s1 + $0x1a48] sm:$0xff]
  %v907 = vld [vmem:[%s1 + $0x1a50] sm:$0xff]
  %v908 = vld [vmem:[%s1 + $0x1a58] sm:$0xff]
  %v909 = vld [vmem:[%s1 + $0x1a60] sm:$0xff]
  %v910 = vld [vmem:[%s1 + $0x1a68] sm:$0xff]
  %v911 = vld [vmem:[%s1 + $0x1a70] sm:$0xff]
  %v912 = vld [vmem:[%s1 + $0x1a78] sm:$0xff]
  %v913 = vld [vmem:[%s1 + $0x1a80] sm:$0xff]
  %v914 = vld [vmem:[%s1 + $0x1a88] sm:$0xff]
  %v915 = vld [vmem:[%s1 + $0x1a90] sm:$0xff]
  %v916 = vld [vmem:[%s1 + $0x1a98] sm:$0xff]
  %v917 = vld [vmem:[%s1 + $0x1aa0] sm:$0xff]
  %v918 = vld [vmem:[%s1 + $0x1aa8] sm:$0xff]
  %v919 = vld [vmem:[%s1 + $0x1ab0] sm:$0xff]
  %v920 = vld [vmem:[%s1 + $0x1ab8] sm:$0xff]
  %v921 = vld [vmem:[%s1 + $0x1ac0] sm:$0xff]
  %v922 = vld [vmem:[%s1 + $0x1ac8] sm:$0xff]
  %v923 = vld [vmem:[%s1 + $0x1ad0] sm:$0xff]
  %v924 = vld [vmem:[%s1 + $0x1ad8] sm:$0xff]
  %v925 = vld [vmem:[%s1 + $0x1ae0] sm:$0xff]
  %v926 = vld [vmem:[%s1 + $0x1ae8] sm:$0xff]
  %v927 = vld [vmem:[%s1 + $0x1af0] sm:$0xff]
  %v928 = vld [vmem:[%s1 + $0x1af8] sm:$0xff]
  %v929 = vld [vmem:[%s1 + $0x1b00] sm:$0xff]
  %v930 = vld [vmem:[%s1 + $0x1b08] sm:$0xff]
  %v931 = vld [vmem:[%s1 + $0x1b10] sm:$0xff]
  %v932 = vld [vmem:[%s1 + $0x1b18] sm:$0xff]
  %v933 = vld [vmem:[%s1 + $0x1b20] sm:$0xff]
  %v934 = vld [vmem:[%s1 + $0x1b28] sm:$0xff]
  %v935 = vld [vmem:[%s1 + $0x1b30] sm:$0xff]
  %v936 = vld [vmem:[%s1 + $0x1b38] sm:$0xff]
  %v937 = vld [vmem:[%s1 + $0x1b40] sm:$0xff]
  %v938 = vld [vmem:[%s1 + $0x1b48] sm:$0xff]
  %v939 = vld [vmem:[%s1 + $0x1b50] sm:$0xff]
  %v940 = vld [vmem:[%s1 + $0x1b58] sm:$0xff]
  %v941 = vld [vmem:[%s1 + $0x1b60] sm:$0xff]
  %v942 = vld [vmem:[%s1 + $0x1b68] sm:$0xff]
  %v943 = vld [vmem:[%s1 + $0x1b70] sm:$0xff]
  %v944 = vld [vmem:[%s1 + $0x1b78] sm:$0xff]
  %v945 = vld [vmem:[%s1 + $0x1b80] sm:$0xff]
  %v946 = vld [vmem:[%s1 + $0x1b88] sm:$0xff]
  %v947 = vld [vmem:[%s1 + $0x1b90] sm:$0xff]
  %v948 = vld [vmem:[%s1 + $0x1b98] sm:$0xff]
  %v949 = vld [vmem:[%s1 + $0x1ba0] sm:$0xff]
  %v950 = vld [vmem:[%s1 + $0x1ba8] sm:$0xff]
  %v951 = vld [vmem:[%s1 + $0x1bb0] sm:$0xff]
  %v952 = vld [vmem:[%s1 + $0x1bb8] sm:$0xff]
  %v953 = vld [vmem:[%s1 + $0x1bc0] sm:$0xff]
  %v954 = vld [vmem:[%s1 + $0x1bc8] sm:$0xff]
  %v955 = vld [vmem:[%s1 + $0x1bd0] sm:$0xff]
  %v956 = vld [vmem:[%s1 + $0x1bd8] sm:$0xff]
  %v957 = vld [vmem:[%s1 + $0x1be0] sm:$0xff]
  %v958 = vld [vmem:[%s1 + $0x1be8] sm:$0xff]
  %v959 = vld [vmem:[%s1 + $0x1bf0] sm:$0xff]
  %v960 = vld [vmem:[%s1 + $0x1bf8] sm:$0xff]
  %v961 = vld [vmem:[%s1 + $0x1c00] sm:$0xff]
  %v962 = vld [vmem:[%s1 + $0x1c08] sm:$0xff]
  %v963 = vld [vmem:[%s1 + $0x1c10] sm:$0xff]
  %v964 = vld [vmem:[%s1 + $0x1c18] sm:$0xff]
  %v965 = vld [vmem:[%s1 + $0x1c20] sm:$0xff]
  %v966 = vld [vmem:[%s1 + $0x1c28] sm:$0xff]
  %v967 = vld [vmem:[%s1 + $0x1c30] sm:$0xff]
  %v968 = vld [vmem:[%s1 + $0x1c38] sm:$0xff]
  %v969 = vld [vmem:[%s1 + $0x1c40] sm:$0xff]
  %v970 = vld [vmem:[%s1 + $0x1c48] sm:$0xff]
  %v971 = vld [vmem:[%s1 + $0x1c50] sm:$0xff]
  %v972 = vld [vmem:[%s1 + $0x1c58] sm:$0xff]
  %v973 = vld [vmem:[%s1 + $0x1c60] sm:$0xff]
  %v974 = vld [vmem:[%s1 + $0x1c68] sm:$0xff]
  %v975 = vld [vmem:[%s1 + $0x1c70] sm:$0xff]
  %v976 = vld [vmem:[%s1 + $0x1c78] sm:$0xff]
  %v977 = vld [vmem:[%s1 + $0x1c80] sm:$0xff]
  %v978 = vld [vmem:[%s1 + $0x1c88] sm:$0xff]
  %v979 = vld [vmem:[%s1 + $0x1c90] sm:$0xff]
  %v980 = vld [vmem:[%s1 + $0x1c98] sm:$0xff]
  %v981 = vld [vmem:[%s1 + $0x1ca0] sm:$0xff]
  %v982 = vld [vmem:[%s1 + $0x1ca8] sm:$0xff]
  %v983 = vld [vmem:[%s1 + $0x1cb0] sm:$0xff]
  %v984 = vld [vmem:[%s1 + $0x1cb8] sm:$0xff]
  %v985 = vld [vmem:[%s1 + $0x1cc0] sm:$0xff]
  %v986 = vld [vmem:[%s1 + $0x1cc8] sm:$0xff]
  %v987 = vld [vmem:[%s1 + $0x1cd0] sm:$0xff]
  %v988 = vld [vmem:[%s1 + $0x1cd8] sm:$0xff]
  %v989 = vld [vmem:[%s1 + $0x1ce0] sm:$0xff]
  %v990 = vld [vmem:[%s1 + $0x1ce8] sm:$0xff]
  %v991 = vld [vmem:[%s1 + $0x1cf0] sm:$0xff]
  %v992 = vld [vmem:[%s1 + $0x1cf8] sm:$0xff]
  %v993 = vld [vmem:[%s1 + $0x1d00] sm:$0xff]
  %v994 = vld [vmem:[%s1 + $0x1d08] sm:$0xff]
  %v995 = vld [vmem:[%s1 + $0x1d10] sm:$0xff]
  %v996 = vld [vmem:[%s1 + $0x1d18] sm:$0xff]
  %v997 = vld [vmem:[%s1 + $0x1d20] sm:$0xff]
  %v998 = vld [vmem:[%s1 + $0x1d28] sm:$0xff]
  %v999 = vld [vmem:[%s1 + $0x1d30] sm:$0xff]
  %v1000 = vld [vmem:[%s1 + $0x1d38] sm:$0xff]
  %v1001 = vld [vmem:[%s1 + $0x1d40] sm:$0xff]
  %v1002 = vld [vmem:[%s1 + $0x1d48] sm:$0xff]
  %v1003 = vld [vmem:[%s1 + $0x1d50] sm:$0xff]
  %v1004 = vld [vmem:[%s1 + $0x1d58] sm:$0xff]
  %v1005 = vld [vmem:[%s1 + $0x1d60] sm:$0xff]
  %v1006 = vld [vmem:[%s1 + $0x1d68] sm:$0xff]
  %v1007 = vld [vmem:[%s1 + $0x1d70] sm:$0xff]
  %v1008 = vld [vmem:[%s1 + $0x1d78] sm:$0xff]
  %v1009 = vld [vmem:[%s1 + $0x1d80] sm:$0xff]
  %v1010 = vld [vmem:[%s1 + $0x1d88] sm:$0xff]
  %v1011 = vld [vmem:[%s1 + $0x1d90] sm:$0xff]
  %v1012 = vld [vmem:[%s1 + $0x1d98] sm:$0xff]
  %v1013 = vld [vmem:[%s1 + $0x1da0] sm:$0xff]
  %v1014 = vld [vmem:[%s1 + $0x1da8] sm:$0xff]
  %v1015 = vld [vmem:[%s1 + $0x1db0] sm:$0xff]
  %v1016 = vld [vmem:[%s1 + $0x1db8] sm:$0xff]
  %v1017 = vld [vmem:[%s1 + $0x1dc0] sm:$0xff]
  %v1018 = vld [vmem:[%s1 + $0x1dc8] sm:$0xff]
  %v1019 = vld [vmem:[%s1 + $0x1dd0] sm:$0xff]
  %v1020 = vld [vmem:[%s1 + $0x1dd8] sm:$0xff]
  %v1021 = vld [vmem:[%s1 + $0x1de0] sm:$0xff]
  %v1022 = vld [vmem:[%s1 + $0x1de8] sm:$0xff]
  %v1023 = vld [vmem:[%s1 + $0x1df0] sm:$0xff]
  %v1024 = vld [vmem:[%s1 + $0x1df8] sm:$0xff]
  %v1025 = vld [vmem:[%s1 + $0x1e00] sm:$0xff]
  %v1026 = vld [vmem:[%s1 + $0x1e08] sm:$0xff]
  %v1027 = vld [vmem:[%s1 + $0x1e10] sm:$0xff]
  %v1028 = vld [vmem:[%s1 + $0x1e18] sm:$0xff]
  %v1029 = vld [vmem:[%s1 + $0x1e20] sm:$0xff]
  %v1030 = vld [vmem:[%s1 + $0x1e28] sm:$0xff]
  %v1031 = vld [vmem:[%s1 + $0x1e30] sm:$0xff]
  %v1032 = vld [vmem:[%s1 + $0x1e38] sm:$0xff]
  %v1033 = vld [vmem:[%s1 + $0x1e40] sm:$0xff]
  %v1034 = vld [vmem:[%s1 + $0x1e48] sm:$0xff]
  %v1035 = vld [vmem:[%s1 + $0x1e50] sm:$0xff]
  %v1036 = vld [vmem:[%s1 + $0x1e58] sm:$0xff]
  %v1037 = vld [vmem:[%s1 + $0x1e60] sm:$0xff]
  %v1038 = vld [vmem:[%s1 + $0x1e68] sm:$0xff]
  %v1039 = vld [vmem:[%s1 + $0x1e70] sm:$0xff]
  %v1040 = vld [vmem:[%s1 + $0x1e78] sm:$0xff]
  %v1041 = vld [vmem:[%s1 + $0x1e80] sm:$0xff]
  %v1042 = vld [vmem:[%s1 + $0x1e88] sm:$0xff]
  %v1043 = vld [vmem:[%s1 + $0x1e90] sm:$0xff]
  %v1044 = vld [vmem:[%s1 + $0x1e98] sm:$0xff]
  %v1045 = vld [vmem:[%s1 + $0x1ea0] sm:$0xff]
  %v1046 = vld [vmem:[%s1 + $0x1ea8] sm:$0xff]
  %v1047 = vld [vmem:[%s1 + $0x1eb0] sm:$0xff]
  %v1048 = vld [vmem:[%s1 + $0x1eb8] sm:$0xff]
  %v1049 = vld [vmem:[%s1 + $0x1ec0] sm:$0xff]
  %v1050 = vld [vmem:[%s1 + $0x1ec8] sm:$0xff]
  %v1051 = vld [vmem:[%s1 + $0x1ed0] sm:$0xff]
  %v1052 = vld [vmem:[%s1 + $0x1ed8] sm:$0xff]
  %v1053 = vld [vmem:[%s1 + $0x1ee0] sm:$0xff]
  %v1054 = vld [vmem:[%s1 + $0x1ee8] sm:$0xff]
  %v1055 = vld [vmem:[%s1 + $0x1ef0] sm:$0xff]
  %v1056 = vld [vmem:[%s1 + $0x1ef8] sm:$0xff]
  %v1057 = vld [vmem:[%s1 + $0x1f00] sm:$0xff]
  %v1058 = vld [vmem:[%s1 + $0x1f08] sm:$0xff]
  %v1059 = vld [vmem:[%s1 + $0x1f10] sm:$0xff]
  %v1060 = vld [vmem:[%s1 + $0x1f18] sm:$0xff]
  %v1061 = vld [vmem:[%s1 + $0x1f20] sm:$0xff]
  %v1062 = vld [vmem:[%s1 + $0x1f28] sm:$0xff]
  %v1063 = vld [vmem:[%s1 + $0x1f30] sm:$0xff]
  %v1064 = vld [vmem:[%s1 + $0x1f38] sm:$0xff]
  %v1065 = vld [vmem:[%s1 + $0x1f40] sm:$0xff]
  %v1066 = vld [vmem:[%s1 + $0x1f48] sm:$0xff]
  %v1067 = vld [vmem:[%s1 + $0x1f50] sm:$0xff]
  %v1068 = vld [vmem:[%s1 + $0x1f58] sm:$0xff]
  %v1069 = vld [vmem:[%s1 + $0x1f60] sm:$0xff]
  %v1070 = vld [vmem:[%s1 + $0x1f68] sm:$0xff]
  %v1071 = vld [vmem:[%s1 + $0x1f70] sm:$0xff]
  %v1072 = vld [vmem:[%s1 + $0x1f78] sm:$0xff]
  %v1073 = vld [vmem:[%s1 + $0x1f80] sm:$0xff]
  %v1074 = vld [vmem:[%s1 + $0x1f88] sm:$0xff]
  %v1075 = vld [vmem:[%s1 + $0x1f90] sm:$0xff]
  %v1076 = vld [vmem:[%s1 + $0x1f98] sm:$0xff]
  %v1077 = vld [vmem:[%s1 + $0x1fa0] sm:$0xff]
  %v1078 = vld [vmem:[%s1 + $0x1fa8] sm:$0xff]
  %v1079 = vld [vmem:[%s1 + $0x1fb0] sm:$0xff]
  %v1080 = vld [vmem:[%s1 + $0x1fb8] sm:$0xff]
  %v1081 = vld [vmem:[%s1 + $0x1fc0] sm:$0xff]
  %v1082 = vld [vmem:[%s1 + $0x1fc8] sm:$0xff]
  %v1083 = vld [vmem:[%s1 + $0x1fd0] sm:$0xff]
  %v1084 = vld [vmem:[%s1 + $0x1fd8] sm:$0xff]
  %v1085 = vld [vmem:[%s1 + $0x1fe0] sm:$0xff]
  %v1086 = vld [vmem:[%s1 + $0x1fe8] sm:$0xff]
  %v1087 = vld [vmem:[%s1 + $0x1ff0] sm:$0xff]
  %v1088 = vld [vmem:[%s1 + $0x1ff8] sm:$0xff]
  %v1137 = vunpack.c.l.b16 %v17
  %v1138 = vunpack.c.h.b16 %v17
  %v1139 = vunpack.c.l.b16 %v18
  %v1140 = vunpack.c.h.b16 %v18
  %v1141 = vunpack.c.l.b16 %v19
  %v1142 = vunpack.c.h.b16 %v19
  %v1143 = vunpack.c.l.b16 %v20
  %v1144 = vunpack.c.h.b16 %v20
  %v1145 = vunpack.c.l.b16 %v21
  %v1146 = vunpack.c.h.b16 %v21
  %v1147 = vunpack.c.l.b16 %v22
  %v1148 = vunpack.c.h.b16 %v22
  %v1149 = vunpack.c.l.b16 %v23
  %v1150 = vunpack.c.h.b16 %v23
  %v1151 = vunpack.c.l.b16 %v24
  %v1152 = vunpack.c.h.b16 %v24
  %v1153 = vunpack.c.l.b16 %v25
  %v1154 = vunpack.c.h.b16 %v25
  %v1155 = vunpack.c.l.b16 %v26
  %v1156 = vunpack.c.h.b16 %v26
  %v1157 = vunpack.c.l.b16 %v27
  %v1158 = vunpack.c.h.b16 %v27
  %v1159 = vunpack.c.l.b16 %v28
  %v1160 = vunpack.c.h.b16 %v28
  %v1161 = vunpack.c.l.b16 %v29
  %v1162 = vunpack.c.h.b16 %v29
  %v1163 = vunpack.c.l.b16 %v30
  %v1164 = vunpack.c.h.b16 %v30
  %v1165 = vunpack.c.l.b16 %v31
  %v1166 = vunpack.c.h.b16 %v31
  %v1167 = vunpack.c.l.b16 %v32
  %v1168 = vunpack.c.h.b16 %v32
  %v1169 = vunpack.c.l.b16 %v33
  %v1170 = vunpack.c.h.b16 %v33
  %v1171 = vunpack.c.l.b16 %v34
  %v1172 = vunpack.c.h.b16 %v34
  %v1173 = vunpack.c.l.b16 %v35
  %v1174 = vunpack.c.h.b16 %v35
  %v1175 = vunpack.c.l.b16 %v36
  %v1176 = vunpack.c.h.b16 %v36
  %v1177 = vunpack.c.l.b16 %v37
  %v1178 = vunpack.c.h.b16 %v37
  %v1179 = vunpack.c.l.b16 %v38
  %v1180 = vunpack.c.h.b16 %v38
  %v1181 = vunpack.c.l.b16 %v39
  %v1182 = vunpack.c.h.b16 %v39
  %v1183 = vunpack.c.l.b16 %v40
  %v1184 = vunpack.c.h.b16 %v40
  %v1185 = vunpack.c.l.b16 %v41
  %v1186 = vunpack.c.h.b16 %v41
  %v1187 = vunpack.c.l.b16 %v42
  %v1188 = vunpack.c.h.b16 %v42
  %v1189 = vunpack.c.l.b16 %v43
  %v1190 = vunpack.c.h.b16 %v43
  %v1191 = vunpack.c.l.b16 %v44
  %v1192 = vunpack.c.h.b16 %v44
  %v1193 = vunpack.c.l.b16 %v45
  %v1194 = vunpack.c.h.b16 %v45
  %v1195 = vunpack.c.l.b16 %v46
  %v1196 = vunpack.c.h.b16 %v46
  %v1197 = vunpack.c.l.b16 %v47
  %v1198 = vunpack.c.h.b16 %v47
  %v1199 = vunpack.c.l.b16 %v48
  %v1200 = vunpack.c.h.b16 %v48
  %v1201 = vunpack.c.l.b16 %v49
  %v1202 = vunpack.c.h.b16 %v49
  %v1203 = vunpack.c.l.b16 %v50
  %v1204 = vunpack.c.h.b16 %v50
  %v1205 = vunpack.c.l.b16 %v51
  %v1206 = vunpack.c.h.b16 %v51
  %v1207 = vunpack.c.l.b16 %v52
  %v1208 = vunpack.c.h.b16 %v52
  %v1209 = vunpack.c.l.b16 %v53
  %v1210 = vunpack.c.h.b16 %v53
  %v1211 = vunpack.c.l.b16 %v54
  %v1212 = vunpack.c.h.b16 %v54
  %v1213 = vunpack.c.l.b16 %v55
  %v1214 = vunpack.c.h.b16 %v55
  %v1215 = vunpack.c.l.b16 %v56
  %v1216 = vunpack.c.h.b16 %v56
  %v1217 = vunpack.c.l.b16 %v57
  %v1218 = vunpack.c.h.b16 %v57
  %v1219 = vunpack.c.l.b16 %v58
  %v1220 = vunpack.c.h.b16 %v58
  %v1221 = vunpack.c.l.b16 %v59
  %v1222 = vunpack.c.h.b16 %v59
  %v1223 = vunpack.c.l.b16 %v60
  %v1224 = vunpack.c.h.b16 %v60
  %v1225 = vunpack.c.l.b16 %v61
  %v1226 = vunpack.c.h.b16 %v61
  %v1227 = vunpack.c.l.b16 %v62
  %v1228 = vunpack.c.h.b16 %v62
  %v1229 = vunpack.c.l.b16 %v63
  %v1230 = vunpack.c.h.b16 %v63
  %v1231 = vunpack.c.l.b16 %v64
  %v1232 = vunpack.c.h.b16 %v64
  %v1233 = vpack.c.b16 %v1169, %v1137
  %v1234 = vpack.c.b16 %v1170, %v1138
  %v1235 = vpack.c.b16 %v1171, %v1139
  %v1236 = vpack.c.b16 %v1172, %v1140
  %v1237 = vpack.c.b16 %v1173, %v1141
  %v1238 = vpack.c.b16 %v1174, %v1142
  %v1239 = vpack.c.b16 %v1175, %v1143
  %v1240 = vpack.c.b16 %v1176, %v1144
  %v1241 = vpack.c.b16 %v1177, %v1145
  %v1242 = vpack.c.b16 %v1178, %v1146
  %v1243 = vpack.c.b16 %v1179, %v1147
  %v1244 = vpack.c.b16 %v1180, %v1148
  %v1245 = vpack.c.b16 %v1181, %v1149
  %v1246 = vpack.c.b16 %v1182, %v1150
  %v1247 = vpack.c.b16 %v1183, %v1151
  %v1248 = vpack.c.b16 %v1184, %v1152
  %v1249 = vpack.c.b16 %v1185, %v1153
  %v1250 = vpack.c.b16 %v1186, %v1154
  %v1251 = vpack.c.b16 %v1187, %v1155
  %v1252 = vpack.c.b16 %v1188, %v1156
  %v1253 = vpack.c.b16 %v1189, %v1157
  %v1254 = vpack.c.b16 %v1190, %v1158
  %v1255 = vpack.c.b16 %v1191, %v1159
  %v1256 = vpack.c.b16 %v1192, %v1160
  %v1257 = vpack.c.b16 %v1193, %v1161
  %v1258 = vpack.c.b16 %v1194, %v1162
  %v1259 = vpack.c.b16 %v1195, %v1163
  %v1260 = vpack.c.b16 %v1196, %v1164
  %v1261 = vpack.c.b16 %v1197, %v1165
  %v1262 = vpack.c.b16 %v1198, %v1166
  %v1263 = vpack.c.b16 %v1199, %v1167
  %v1264 = vpack.c.b16 %v1200, %v1168
  %v1265 = vpack.c.b16 %v1201, %v1201
  %v1266 = vpack.c.b16 %v1202, %v1202
  %v1267 = vpack.c.b16 %v1203, %v1203
  %v1268 = vpack.c.b16 %v1204, %v1204
  %v1269 = vpack.c.b16 %v1205, %v1205
  %v1270 = vpack.c.b16 %v1206, %v1206
  %v1271 = vpack.c.b16 %v1207, %v1207
  %v1272 = vpack.c.b16 %v1208, %v1208
  %v1273 = vpack.c.b16 %v1209, %v1209
  %v1274 = vpack.c.b16 %v1210, %v1210
  %v1275 = vpack.c.b16 %v1211, %v1211
  %v1276 = vpack.c.b16 %v1212, %v1212
  %v1277 = vpack.c.b16 %v1213, %v1213
  %v1278 = vpack.c.b16 %v1214, %v1214
  %v1279 = vpack.c.b16 %v1215, %v1215
  %v1280 = vpack.c.b16 %v1216, %v1216
  %v1281 = vpack.c.b16 %v1217, %v1217
  %v1282 = vpack.c.b16 %v1218, %v1218
  %v1283 = vpack.c.b16 %v1219, %v1219
  %v1284 = vpack.c.b16 %v1220, %v1220
  %v1285 = vpack.c.b16 %v1221, %v1221
  %v1286 = vpack.c.b16 %v1222, %v1222
  %v1287 = vpack.c.b16 %v1223, %v1223
  %v1288 = vpack.c.b16 %v1224, %v1224
  %v1289 = vpack.c.b16 %v1225, %v1225
  %v1290 = vpack.c.b16 %v1226, %v1226
  %v1291 = vpack.c.b16 %v1227, %v1227
  %v1292 = vpack.c.b16 %v1228, %v1228
  %v1293 = vpack.c.b16 %v1229, %v1229
  %v1294 = vpack.c.b16 %v1230, %v1230
  %v1295 = vpack.c.b16 %v1231, %v1231
  %v1296 = vpack.c.b16 %v1232, %v1232
  %v2385 = vunpack.c.l.b16 %v65
  %v2386 = vunpack.c.h.b16 %v65
  %v2387 = vunpack.c.l.b16 %v66
  %v2388 = vunpack.c.h.b16 %v66
  %v2389 = vunpack.c.l.b16 %v67
  %v2390 = vunpack.c.h.b16 %v67
  %v2391 = vunpack.c.l.b16 %v68
  %v2392 = vunpack.c.h.b16 %v68
  %v2393 = vunpack.c.l.b16 %v69
  %v2394 = vunpack.c.h.b16 %v69
  %v2395 = vunpack.c.l.b16 %v70
  %v2396 = vunpack.c.h.b16 %v70
  %v2397 = vunpack.c.l.b16 %v71
  %v2398 = vunpack.c.h.b16 %v71
  %v2399 = vunpack.c.l.b16 %v72
  %v2400 = vunpack.c.h.b16 %v72
  %v2401 = vunpack.c.l.b16 %v73
  %v2402 = vunpack.c.h.b16 %v73
  %v2403 = vunpack.c.l.b16 %v74
  %v2404 = vunpack.c.h.b16 %v74
  %v2405 = vunpack.c.l.b16 %v75
  %v2406 = vunpack.c.h.b16 %v75
  %v2407 = vunpack.c.l.b16 %v76
  %v2408 = vunpack.c.h.b16 %v76
  %v2409 = vunpack.c.l.b16 %v77
  %v2410 = vunpack.c.h.b16 %v77
  %v2411 = vunpack.c.l.b16 %v78
  %v2412 = vunpack.c.h.b16 %v78
  %v2413 = vunpack.c.l.b16 %v79
  %v2414 = vunpack.c.h.b16 %v79
  %v2415 = vunpack.c.l.b16 %v80
  %v2416 = vunpack.c.h.b16 %v80
  %v2417 = vunpack.c.l.b16 %v81
  %v2418 = vunpack.c.h.b16 %v81
  %v2419 = vunpack.c.l.b16 %v82
  %v2420 = vunpack.c.h.b16 %v82
  %v2421 = vunpack.c.l.b16 %v83
  %v2422 = vunpack.c.h.b16 %v83
  %v2423 = vunpack.c.l.b16 %v84
  %v2424 = vunpack.c.h.b16 %v84
  %v2425 = vunpack.c.l.b16 %v85
  %v2426 = vunpack.c.h.b16 %v85
  %v2427 = vunpack.c.l.b16 %v86
  %v2428 = vunpack.c.h.b16 %v86
  %v2429 = vunpack.c.l.b16 %v87
  %v2430 = vunpack.c.h.b16 %v87
  %v2431 = vunpack.c.l.b16 %v88
  %v2432 = vunpack.c.h.b16 %v88
  %v2433 = vunpack.c.l.b16 %v89
  %v2434 = vunpack.c.h.b16 %v89
  %v2435 = vunpack.c.l.b16 %v90
  %v2436 = vunpack.c.h.b16 %v90
  %v2437 = vunpack.c.l.b16 %v91
  %v2438 = vunpack.c.h.b16 %v91
  %v2439 = vunpack.c.l.b16 %v92
  %v2440 = vunpack.c.h.b16 %v92
  %v2441 = vunpack.c.l.b16 %v93
  %v2442 = vunpack.c.h.b16 %v93
  %v2443 = vunpack.c.l.b16 %v94
  %v2444 = vunpack.c.h.b16 %v94
  %v2445 = vunpack.c.l.b16 %v95
  %v2446 = vunpack.c.h.b16 %v95
  %v2447 = vunpack.c.l.b16 %v96
  %v2448 = vunpack.c.h.b16 %v96
  %v2449 = vunpack.c.l.b16 %v97
  %v2450 = vunpack.c.h.b16 %v97
  %v2451 = vunpack.c.l.b16 %v98
  %v2452 = vunpack.c.h.b16 %v98
  %v2453 = vunpack.c.l.b16 %v99
  %v2454 = vunpack.c.h.b16 %v99
  %v2455 = vunpack.c.l.b16 %v100
  %v2456 = vunpack.c.h.b16 %v100
  %v2457 = vunpack.c.l.b16 %v101
  %v2458 = vunpack.c.h.b16 %v101
  %v2459 = vunpack.c.l.b16 %v102
  %v2460 = vunpack.c.h.b16 %v102
  %v2461 = vunpack.c.l.b16 %v103
  %v2462 = vunpack.c.h.b16 %v103
  %v2463 = vunpack.c.l.b16 %v104
  %v2464 = vunpack.c.h.b16 %v104
  %v2465 = vunpack.c.l.b16 %v105
  %v2466 = vunpack.c.h.b16 %v105
  %v2467 = vunpack.c.l.b16 %v106
  %v2468 = vunpack.c.h.b16 %v106
  %v2469 = vunpack.c.l.b16 %v107
  %v2470 = vunpack.c.h.b16 %v107
  %v2471 = vunpack.c.l.b16 %v108
  %v2472 = vunpack.c.h.b16 %v108
  %v2473 = vunpack.c.l.b16 %v109
  %v2474 = vunpack.c.h.b16 %v109
  %v2475 = vunpack.c.l.b16 %v110
  %v2476 = vunpack.c.h.b16 %v110
  %v2477 = vunpack.c.l.b16 %v111
  %v2478 = vunpack.c.h.b16 %v111
  %v2479 = vunpack.c.l.b16 %v112
  %v2480 = vunpack.c.h.b16 %v112
  %v2481 = vunpack.c.l.b16 %v113
  %v2482 = vunpack.c.h.b16 %v113
  %v2483 = vunpack.c.l.b16 %v114
  %v2484 = vunpack.c.h.b16 %v114
  %v2485 = vunpack.c.l.b16 %v115
  %v2486 = vunpack.c.h.b16 %v115
  %v2487 = vunpack.c.l.b16 %v116
  %v2488 = vunpack.c.h.b16 %v116
  %v2489 = vunpack.c.l.b16 %v117
  %v2490 = vunpack.c.h.b16 %v117
  %v2491 = vunpack.c.l.b16 %v118
  %v2492 = vunpack.c.h.b16 %v118
  %v2493 = vunpack.c.l.b16 %v119
  %v2494 = vunpack.c.h.b16 %v119
  %v2495 = vunpack.c.l.b16 %v120
  %v2496 = vunpack.c.h.b16 %v120
  %v2497 = vunpack.c.l.b16 %v121
  %v2498 = vunpack.c.h.b16 %v121
  %v2499 = vunpack.c.l.b16 %v122
  %v2500 = vunpack.c.h.b16 %v122
  %v2501 = vunpack.c.l.b16 %v123
  %v2502 = vunpack.c.h.b16 %v123
  %v2503 = vunpack.c.l.b16 %v124
  %v2504 = vunpack.c.h.b16 %v124
  %v2505 = vunpack.c.l.b16 %v125
  %v2506 = vunpack.c.h.b16 %v125
  %v2507 = vunpack.c.l.b16 %v126
  %v2508 = vunpack.c.h.b16 %v126
  %v2509 = vunpack.c.l.b16 %v127
  %v2510 = vunpack.c.h.b16 %v127
  %v2511 = vunpack.c.l.b16 %v128
  %v2512 = vunpack.c.h.b16 %v128
  %v2513 = vunpack.c.l.b16 %v129
  %v2514 = vunpack.c.h.b16 %v129
  %v2515 = vunpack.c.l.b16 %v130
  %v2516 = vunpack.c.h.b16 %v130
  %v2517 = vunpack.c.l.b16 %v131
  %v2518 = vunpack.c.h.b16 %v131
  %v2519 = vunpack.c.l.b16 %v132
  %v2520 = vunpack.c.h.b16 %v132
  %v2521 = vunpack.c.l.b16 %v133
  %v2522 = vunpack.c.h.b16 %v133
  %v2523 = vunpack.c.l.b16 %v134
  %v2524 = vunpack.c.h.b16 %v134
  %v2525 = vunpack.c.l.b16 %v135
  %v2526 = vunpack.c.h.b16 %v135
  %v2527 = vunpack.c.l.b16 %v136
  %v2528 = vunpack.c.h.b16 %v136
  %v2529 = vunpack.c.l.b16 %v137
  %v2530 = vunpack.c.h.b16 %v137
  %v2531 = vunpack.c.l.b16 %v138
  %v2532 = vunpack.c.h.b16 %v138
  %v2533 = vunpack.c.l.b16 %v139
  %v2534 = vunpack.c.h.b16 %v139
  %v2535 = vunpack.c.l.b16 %v140
  %v2536 = vunpack.c.h.b16 %v140
  %v2537 = vunpack.c.l.b16 %v141
  %v2538 = vunpack.c.h.b16 %v141
  %v2539 = vunpack.c.l.b16 %v142
  %v2540 = vunpack.c.h.b16 %v142
  %v2541 = vunpack.c.l.b16 %v143
  %v2542 = vunpack.c.h.b16 %v143
  %v2543 = vunpack.c.l.b16 %v144
  %v2544 = vunpack.c.h.b16 %v144
  %v2545 = vunpack.c.l.b16 %v145
  %v2546 = vunpack.c.h.b16 %v145
  %v2547 = vunpack.c.l.b16 %v146
  %v2548 = vunpack.c.h.b16 %v146
  %v2549 = vunpack.c.l.b16 %v147
  %v2550 = vunpack.c.h.b16 %v147
  %v2551 = vunpack.c.l.b16 %v148
  %v2552 = vunpack.c.h.b16 %v148
  %v2553 = vunpack.c.l.b16 %v149
  %v2554 = vunpack.c.h.b16 %v149
  %v2555 = vunpack.c.l.b16 %v150
  %v2556 = vunpack.c.h.b16 %v150
  %v2557 = vunpack.c.l.b16 %v151
  %v2558 = vunpack.c.h.b16 %v151
  %v2559 = vunpack.c.l.b16 %v152
  %v2560 = vunpack.c.h.b16 %v152
  %v2561 = vunpack.c.l.b16 %v153
  %v2562 = vunpack.c.h.b16 %v153
  %v2563 = vunpack.c.l.b16 %v154
  %v2564 = vunpack.c.h.b16 %v154
  %v2565 = vunpack.c.l.b16 %v155
  %v2566 = vunpack.c.h.b16 %v155
  %v2567 = vunpack.c.l.b16 %v156
  %v2568 = vunpack.c.h.b16 %v156
  %v2569 = vunpack.c.l.b16 %v157
  %v2570 = vunpack.c.h.b16 %v157
  %v2571 = vunpack.c.l.b16 %v158
  %v2572 = vunpack.c.h.b16 %v158
  %v2573 = vunpack.c.l.b16 %v159
  %v2574 = vunpack.c.h.b16 %v159
  %v2575 = vunpack.c.l.b16 %v160
  %v2576 = vunpack.c.h.b16 %v160
  %v2577 = vunpack.c.l.b16 %v161
  %v2578 = vunpack.c.h.b16 %v161
  %v2579 = vunpack.c.l.b16 %v162
  %v2580 = vunpack.c.h.b16 %v162
  %v2581 = vunpack.c.l.b16 %v163
  %v2582 = vunpack.c.h.b16 %v163
  %v2583 = vunpack.c.l.b16 %v164
  %v2584 = vunpack.c.h.b16 %v164
  %v2585 = vunpack.c.l.b16 %v165
  %v2586 = vunpack.c.h.b16 %v165
  %v2587 = vunpack.c.l.b16 %v166
  %v2588 = vunpack.c.h.b16 %v166
  %v2589 = vunpack.c.l.b16 %v167
  %v2590 = vunpack.c.h.b16 %v167
  %v2591 = vunpack.c.l.b16 %v168
  %v2592 = vunpack.c.h.b16 %v168
  %v2593 = vunpack.c.l.b16 %v169
  %v2594 = vunpack.c.h.b16 %v169
  %v2595 = vunpack.c.l.b16 %v170
  %v2596 = vunpack.c.h.b16 %v170
  %v2597 = vunpack.c.l.b16 %v171
  %v2598 = vunpack.c.h.b16 %v171
  %v2599 = vunpack.c.l.b16 %v172
  %v2600 = vunpack.c.h.b16 %v172
  %v2601 = vunpack.c.l.b16 %v173
  %v2602 = vunpack.c.h.b16 %v173
  %v2603 = vunpack.c.l.b16 %v174
  %v2604 = vunpack.c.h.b16 %v174
  %v2605 = vunpack.c.l.b16 %v175
  %v2606 = vunpack.c.h.b16 %v175
  %v2607 = vunpack.c.l.b16 %v176
  %v2608 = vunpack.c.h.b16 %v176
  %v2609 = vunpack.c.l.b16 %v177
  %v2610 = vunpack.c.h.b16 %v177
  %v2611 = vunpack.c.l.b16 %v178
  %v2612 = vunpack.c.h.b16 %v178
  %v2613 = vunpack.c.l.b16 %v179
  %v2614 = vunpack.c.h.b16 %v179
  %v2615 = vunpack.c.l.b16 %v180
  %v2616 = vunpack.c.h.b16 %v180
  %v2617 = vunpack.c.l.b16 %v181
  %v2618 = vunpack.c.h.b16 %v181
  %v2619 = vunpack.c.l.b16 %v182
  %v2620 = vunpack.c.h.b16 %v182
  %v2621 = vunpack.c.l.b16 %v183
  %v2622 = vunpack.c.h.b16 %v183
  %v2623 = vunpack.c.l.b16 %v184
  %v2624 = vunpack.c.h.b16 %v184
  %v2625 = vunpack.c.l.b16 %v185
  %v2626 = vunpack.c.h.b16 %v185
  %v2627 = vunpack.c.l.b16 %v186
  %v2628 = vunpack.c.h.b16 %v186
  %v2629 = vunpack.c.l.b16 %v187
  %v2630 = vunpack.c.h.b16 %v187
  %v2631 = vunpack.c.l.b16 %v188
  %v2632 = vunpack.c.h.b16 %v188
  %v2633 = vunpack.c.l.b16 %v189
  %v2634 = vunpack.c.h.b16 %v189
  %v2635 = vunpack.c.l.b16 %v190
  %v2636 = vunpack.c.h.b16 %v190
  %v2637 = vunpack.c.l.b16 %v191
  %v2638 = vunpack.c.h.b16 %v191
  %v2639 = vunpack.c.l.b16 %v192
  %v2640 = vunpack.c.h.b16 %v192
  %v2641 = vunpack.c.l.b16 %v193
  %v2642 = vunpack.c.h.b16 %v193
  %v2643 = vunpack.c.l.b16 %v194
  %v2644 = vunpack.c.h.b16 %v194
  %v2645 = vunpack.c.l.b16 %v195
  %v2646 = vunpack.c.h.b16 %v195
  %v2647 = vunpack.c.l.b16 %v196
  %v2648 = vunpack.c.h.b16 %v196
  %v2649 = vunpack.c.l.b16 %v197
  %v2650 = vunpack.c.h.b16 %v197
  %v2651 = vunpack.c.l.b16 %v198
  %v2652 = vunpack.c.h.b16 %v198
  %v2653 = vunpack.c.l.b16 %v199
  %v2654 = vunpack.c.h.b16 %v199
  %v2655 = vunpack.c.l.b16 %v200
  %v2656 = vunpack.c.h.b16 %v200
  %v2657 = vunpack.c.l.b16 %v201
  %v2658 = vunpack.c.h.b16 %v201
  %v2659 = vunpack.c.l.b16 %v202
  %v2660 = vunpack.c.h.b16 %v202
  %v2661 = vunpack.c.l.b16 %v203
  %v2662 = vunpack.c.h.b16 %v203
  %v2663 = vunpack.c.l.b16 %v204
  %v2664 = vunpack.c.h.b16 %v204
  %v2665 = vunpack.c.l.b16 %v205
  %v2666 = vunpack.c.h.b16 %v205
  %v2667 = vunpack.c.l.b16 %v206
  %v2668 = vunpack.c.h.b16 %v206
  %v2669 = vunpack.c.l.b16 %v207
  %v2670 = vunpack.c.h.b16 %v207
  %v2671 = vunpack.c.l.b16 %v208
  %v2672 = vunpack.c.h.b16 %v208
  %v2673 = vunpack.c.l.b16 %v209
  %v2674 = vunpack.c.h.b16 %v209
  %v2675 = vunpack.c.l.b16 %v210
  %v2676 = vunpack.c.h.b16 %v210
  %v2677 = vunpack.c.l.b16 %v211
  %v2678 = vunpack.c.h.b16 %v211
  %v2679 = vunpack.c.l.b16 %v212
  %v2680 = vunpack.c.h.b16 %v212
  %v2681 = vunpack.c.l.b16 %v213
  %v2682 = vunpack.c.h.b16 %v213
  %v2683 = vunpack.c.l.b16 %v214
  %v2684 = vunpack.c.h.b16 %v214
  %v2685 = vunpack.c.l.b16 %v215
  %v2686 = vunpack.c.h.b16 %v215
  %v2687 = vunpack.c.l.b16 %v216
  %v2688 = vunpack.c.h.b16 %v216
  %v2689 = vunpack.c.l.b16 %v217
  %v2690 = vunpack.c.h.b16 %v217
  %v2691 = vunpack.c.l.b16 %v218
  %v2692 = vunpack.c.h.b16 %v218
  %v2693 = vunpack.c.l.b16 %v219
  %v2694 = vunpack.c.h.b16 %v219
  %v2695 = vunpack.c.l.b16 %v220
  %v2696 = vunpack.c.h.b16 %v220
  %v2697 = vunpack.c.l.b16 %v221
  %v2698 = vunpack.c.h.b16 %v221
  %v2699 = vunpack.c.l.b16 %v222
  %v2700 = vunpack.c.h.b16 %v222
  %v2701 = vunpack.c.l.b16 %v223
  %v2702 = vunpack.c.h.b16 %v223
  %v2703 = vunpack.c.l.b16 %v224
  %v2704 = vunpack.c.h.b16 %v224
  %v2705 = vunpack.c.l.b16 %v225
  %v2706 = vunpack.c.h.b16 %v225
  %v2707 = vunpack.c.l.b16 %v226
  %v2708 = vunpack.c.h.b16 %v226
  %v2709 = vunpack.c.l.b16 %v227
  %v2710 = vunpack.c.h.b16 %v227
  %v2711 = vunpack.c.l.b16 %v228
  %v2712 = vunpack.c.h.b16 %v228
  %v2713 = vunpack.c.l.b16 %v229
  %v2714 = vunpack.c.h.b16 %v229
  %v2715 = vunpack.c.l.b16 %v230
  %v2716 = vunpack.c.h.b16 %v230
  %v2717 = vunpack.c.l.b16 %v231
  %v2718 = vunpack.c.h.b16 %v231
  %v2719 = vunpack.c.l.b16 %v232
  %v2720 = vunpack.c.h.b16 %v232
  %v2721 = vunpack.c.l.b16 %v233
  %v2722 = vunpack.c.h.b16 %v233
  %v2723 = vunpack.c.l.b16 %v234
  %v2724 = vunpack.c.h.b16 %v234
  %v2725 = vunpack.c.l.b16 %v235
  %v2726 = vunpack.c.h.b16 %v235
  %v2727 = vunpack.c.l.b16 %v236
  %v2728 = vunpack.c.h.b16 %v236
  %v2729 = vunpack.c.l.b16 %v237
  %v2730 = vunpack.c.h.b16 %v237
  %v2731 = vunpack.c.l.b16 %v238
  %v2732 = vunpack.c.h.b16 %v238
  %v2733 = vunpack.c.l.b16 %v239
  %v2734 = vunpack.c.h.b16 %v239
  %v2735 = vunpack.c.l.b16 %v240
  %v2736 = vunpack.c.h.b16 %v240
  %v2737 = vunpack.c.l.b16 %v241
  %v2738 = vunpack.c.h.b16 %v241
  %v2739 = vunpack.c.l.b16 %v242
  %v2740 = vunpack.c.h.b16 %v242
  %v2741 = vunpack.c.l.b16 %v243
  %v2742 = vunpack.c.h.b16 %v243
  %v2743 = vunpack.c.l.b16 %v244
  %v2744 = vunpack.c.h.b16 %v244
  %v2745 = vunpack.c.l.b16 %v245
  %v2746 = vunpack.c.h.b16 %v245
  %v2747 = vunpack.c.l.b16 %v246
  %v2748 = vunpack.c.h.b16 %v246
  %v2749 = vunpack.c.l.b16 %v247
  %v2750 = vunpack.c.h.b16 %v247
  %v2751 = vunpack.c.l.b16 %v248
  %v2752 = vunpack.c.h.b16 %v248
  %v2753 = vunpack.c.l.b16 %v249
  %v2754 = vunpack.c.h.b16 %v249
  %v2755 = vunpack.c.l.b16 %v250
  %v2756 = vunpack.c.h.b16 %v250
  %v2757 = vunpack.c.l.b16 %v251
  %v2758 = vunpack.c.h.b16 %v251
  %v2759 = vunpack.c.l.b16 %v252
  %v2760 = vunpack.c.h.b16 %v252
  %v2761 = vunpack.c.l.b16 %v253
  %v2762 = vunpack.c.h.b16 %v253
  %v2763 = vunpack.c.l.b16 %v254
  %v2764 = vunpack.c.h.b16 %v254
  %v2765 = vunpack.c.l.b16 %v255
  %v2766 = vunpack.c.h.b16 %v255
  %v2767 = vunpack.c.l.b16 %v256
  %v2768 = vunpack.c.h.b16 %v256
  %v2769 = vunpack.c.l.b16 %v257
  %v2770 = vunpack.c.h.b16 %v257
  %v2771 = vunpack.c.l.b16 %v258
  %v2772 = vunpack.c.h.b16 %v258
  %v2773 = vunpack.c.l.b16 %v259
  %v2774 = vunpack.c.h.b16 %v259
  %v2775 = vunpack.c.l.b16 %v260
  %v2776 = vunpack.c.h.b16 %v260
  %v2777 = vunpack.c.l.b16 %v261
  %v2778 = vunpack.c.h.b16 %v261
  %v2779 = vunpack.c.l.b16 %v262
  %v2780 = vunpack.c.h.b16 %v262
  %v2781 = vunpack.c.l.b16 %v263
  %v2782 = vunpack.c.h.b16 %v263
  %v2783 = vunpack.c.l.b16 %v264
  %v2784 = vunpack.c.h.b16 %v264
  %v2785 = vunpack.c.l.b16 %v265
  %v2786 = vunpack.c.h.b16 %v265
  %v2787 = vunpack.c.l.b16 %v266
  %v2788 = vunpack.c.h.b16 %v266
  %v2789 = vunpack.c.l.b16 %v267
  %v2790 = vunpack.c.h.b16 %v267
  %v2791 = vunpack.c.l.b16 %v268
  %v2792 = vunpack.c.h.b16 %v268
  %v2793 = vunpack.c.l.b16 %v269
  %v2794 = vunpack.c.h.b16 %v269
  %v2795 = vunpack.c.l.b16 %v270
  %v2796 = vunpack.c.h.b16 %v270
  %v2797 = vunpack.c.l.b16 %v271
  %v2798 = vunpack.c.h.b16 %v271
  %v2799 = vunpack.c.l.b16 %v272
  %v2800 = vunpack.c.h.b16 %v272
  %v2801 = vunpack.c.l.b16 %v273
  %v2802 = vunpack.c.h.b16 %v273
  %v2803 = vunpack.c.l.b16 %v274
  %v2804 = vunpack.c.h.b16 %v274
  %v2805 = vunpack.c.l.b16 %v275
  %v2806 = vunpack.c.h.b16 %v275
  %v2807 = vunpack.c.l.b16 %v276
  %v2808 = vunpack.c.h.b16 %v276
  %v2809 = vunpack.c.l.b16 %v277
  %v2810 = vunpack.c.h.b16 %v277
  %v2811 = vunpack.c.l.b16 %v278
  %v2812 = vunpack.c.h.b16 %v278
  %v2813 = vunpack.c.l.b16 %v279
  %v2814 = vunpack.c.h.b16 %v279
  %v2815 = vunpack.c.l.b16 %v280
  %v2816 = vunpack.c.h.b16 %v280
  %v2817 = vunpack.c.l.b16 %v281
  %v2818 = vunpack.c.h.b16 %v281
  %v2819 = vunpack.c.l.b16 %v282
  %v2820 = vunpack.c.h.b16 %v282
  %v2821 = vunpack.c.l.b16 %v283
  %v2822 = vunpack.c.h.b16 %v283
  %v2823 = vunpack.c.l.b16 %v284
  %v2824 = vunpack.c.h.b16 %v284
  %v2825 = vunpack.c.l.b16 %v285
  %v2826 = vunpack.c.h.b16 %v285
  %v2827 = vunpack.c.l.b16 %v286
  %v2828 = vunpack.c.h.b16 %v286
  %v2829 = vunpack.c.l.b16 %v287
  %v2830 = vunpack.c.h.b16 %v287
  %v2831 = vunpack.c.l.b16 %v288
  %v2832 = vunpack.c.h.b16 %v288
  %v2833 = vunpack.c.l.b16 %v289
  %v2834 = vunpack.c.h.b16 %v289
  %v2835 = vunpack.c.l.b16 %v290
  %v2836 = vunpack.c.h.b16 %v290
  %v2837 = vunpack.c.l.b16 %v291
  %v2838 = vunpack.c.h.b16 %v291
  %v2839 = vunpack.c.l.b16 %v292
  %v2840 = vunpack.c.h.b16 %v292
  %v2841 = vunpack.c.l.b16 %v293
  %v2842 = vunpack.c.h.b16 %v293
  %v2843 = vunpack.c.l.b16 %v294
  %v2844 = vunpack.c.h.b16 %v294
  %v2845 = vunpack.c.l.b16 %v295
  %v2846 = vunpack.c.h.b16 %v295
  %v2847 = vunpack.c.l.b16 %v296
  %v2848 = vunpack.c.h.b16 %v296
  %v2849 = vunpack.c.l.b16 %v297
  %v2850 = vunpack.c.h.b16 %v297
  %v2851 = vunpack.c.l.b16 %v298
  %v2852 = vunpack.c.h.b16 %v298
  %v2853 = vunpack.c.l.b16 %v299
  %v2854 = vunpack.c.h.b16 %v299
  %v2855 = vunpack.c.l.b16 %v300
  %v2856 = vunpack.c.h.b16 %v300
  %v2857 = vunpack.c.l.b16 %v301
  %v2858 = vunpack.c.h.b16 %v301
  %v2859 = vunpack.c.l.b16 %v302
  %v2860 = vunpack.c.h.b16 %v302
  %v2861 = vunpack.c.l.b16 %v303
  %v2862 = vunpack.c.h.b16 %v303
  %v2863 = vunpack.c.l.b16 %v304
  %v2864 = vunpack.c.h.b16 %v304
  %v2865 = vunpack.c.l.b16 %v305
  %v2866 = vunpack.c.h.b16 %v305
  %v2867 = vunpack.c.l.b16 %v306
  %v2868 = vunpack.c.h.b16 %v306
  %v2869 = vunpack.c.l.b16 %v307
  %v2870 = vunpack.c.h.b16 %v307
  %v2871 = vunpack.c.l.b16 %v308
  %v2872 = vunpack.c.h.b16 %v308
  %v2873 = vunpack.c.l.b16 %v309
  %v2874 = vunpack.c.h.b16 %v309
  %v2875 = vunpack.c.l.b16 %v310
  %v2876 = vunpack.c.h.b16 %v310
  %v2877 = vunpack.c.l.b16 %v311
  %v2878 = vunpack.c.h.b16 %v311
  %v2879 = vunpack.c.l.b16 %v312
  %v2880 = vunpack.c.h.b16 %v312
  %v2881 = vunpack.c.l.b16 %v313
  %v2882 = vunpack.c.h.b16 %v313
  %v2883 = vunpack.c.l.b16 %v314
  %v2884 = vunpack.c.h.b16 %v314
  %v2885 = vunpack.c.l.b16 %v315
  %v2886 = vunpack.c.h.b16 %v315
  %v2887 = vunpack.c.l.b16 %v316
  %v2888 = vunpack.c.h.b16 %v316
  %v2889 = vunpack.c.l.b16 %v317
  %v2890 = vunpack.c.h.b16 %v317
  %v2891 = vunpack.c.l.b16 %v318
  %v2892 = vunpack.c.h.b16 %v318
  %v2893 = vunpack.c.l.b16 %v319
  %v2894 = vunpack.c.h.b16 %v319
  %v2895 = vunpack.c.l.b16 %v320
  %v2896 = vunpack.c.h.b16 %v320
  %v2897 = vunpack.c.l.b16 %v321
  %v2898 = vunpack.c.h.b16 %v321
  %v2899 = vunpack.c.l.b16 %v322
  %v2900 = vunpack.c.h.b16 %v322
  %v2901 = vunpack.c.l.b16 %v323
  %v2902 = vunpack.c.h.b16 %v323
  %v2903 = vunpack.c.l.b16 %v324
  %v2904 = vunpack.c.h.b16 %v324
  %v2905 = vunpack.c.l.b16 %v325
  %v2906 = vunpack.c.h.b16 %v325
  %v2907 = vunpack.c.l.b16 %v326
  %v2908 = vunpack.c.h.b16 %v326
  %v2909 = vunpack.c.l.b16 %v327
  %v2910 = vunpack.c.h.b16 %v327
  %v2911 = vunpack.c.l.b16 %v328
  %v2912 = vunpack.c.h.b16 %v328
  %v2913 = vunpack.c.l.b16 %v329
  %v2914 = vunpack.c.h.b16 %v329
  %v2915 = vunpack.c.l.b16 %v330
  %v2916 = vunpack.c.h.b16 %v330
  %v2917 = vunpack.c.l.b16 %v331
  %v2918 = vunpack.c.h.b16 %v331
  %v2919 = vunpack.c.l.b16 %v332
  %v2920 = vunpack.c.h.b16 %v332
  %v2921 = vunpack.c.l.b16 %v333
  %v2922 = vunpack.c.h.b16 %v333
  %v2923 = vunpack.c.l.b16 %v334
  %v2924 = vunpack.c.h.b16 %v334
  %v2925 = vunpack.c.l.b16 %v335
  %v2926 = vunpack.c.h.b16 %v335
  %v2927 = vunpack.c.l.b16 %v336
  %v2928 = vunpack.c.h.b16 %v336
  %v2929 = vunpack.c.l.b16 %v337
  %v2930 = vunpack.c.h.b16 %v337
  %v2931 = vunpack.c.l.b16 %v338
  %v2932 = vunpack.c.h.b16 %v338
  %v2933 = vunpack.c.l.b16 %v339
  %v2934 = vunpack.c.h.b16 %v339
  %v2935 = vunpack.c.l.b16 %v340
  %v2936 = vunpack.c.h.b16 %v340
  %v2937 = vunpack.c.l.b16 %v341
  %v2938 = vunpack.c.h.b16 %v341
  %v2939 = vunpack.c.l.b16 %v342
  %v2940 = vunpack.c.h.b16 %v342
  %v2941 = vunpack.c.l.b16 %v343
  %v2942 = vunpack.c.h.b16 %v343
  %v2943 = vunpack.c.l.b16 %v344
  %v2944 = vunpack.c.h.b16 %v344
  %v2945 = vunpack.c.l.b16 %v345
  %v2946 = vunpack.c.h.b16 %v345
  %v2947 = vunpack.c.l.b16 %v346
  %v2948 = vunpack.c.h.b16 %v346
  %v2949 = vunpack.c.l.b16 %v347
  %v2950 = vunpack.c.h.b16 %v347
  %v2951 = vunpack.c.l.b16 %v348
  %v2952 = vunpack.c.h.b16 %v348
  %v2953 = vunpack.c.l.b16 %v349
  %v2954 = vunpack.c.h.b16 %v349
  %v2955 = vunpack.c.l.b16 %v350
  %v2956 = vunpack.c.h.b16 %v350
  %v2957 = vunpack.c.l.b16 %v351
  %v2958 = vunpack.c.h.b16 %v351
  %v2959 = vunpack.c.l.b16 %v352
  %v2960 = vunpack.c.h.b16 %v352
  %v2961 = vunpack.c.l.b16 %v353
  %v2962 = vunpack.c.h.b16 %v353
  %v2963 = vunpack.c.l.b16 %v354
  %v2964 = vunpack.c.h.b16 %v354
  %v2965 = vunpack.c.l.b16 %v355
  %v2966 = vunpack.c.h.b16 %v355
  %v2967 = vunpack.c.l.b16 %v356
  %v2968 = vunpack.c.h.b16 %v356
  %v2969 = vunpack.c.l.b16 %v357
  %v2970 = vunpack.c.h.b16 %v357
  %v2971 = vunpack.c.l.b16 %v358
  %v2972 = vunpack.c.h.b16 %v358
  %v2973 = vunpack.c.l.b16 %v359
  %v2974 = vunpack.c.h.b16 %v359
  %v2975 = vunpack.c.l.b16 %v360
  %v2976 = vunpack.c.h.b16 %v360
  %v2977 = vunpack.c.l.b16 %v361
  %v2978 = vunpack.c.h.b16 %v361
  %v2979 = vunpack.c.l.b16 %v362
  %v2980 = vunpack.c.h.b16 %v362
  %v2981 = vunpack.c.l.b16 %v363
  %v2982 = vunpack.c.h.b16 %v363
  %v2983 = vunpack.c.l.b16 %v364
  %v2984 = vunpack.c.h.b16 %v364
  %v2985 = vunpack.c.l.b16 %v365
  %v2986 = vunpack.c.h.b16 %v365
  %v2987 = vunpack.c.l.b16 %v366
  %v2988 = vunpack.c.h.b16 %v366
  %v2989 = vunpack.c.l.b16 %v367
  %v2990 = vunpack.c.h.b16 %v367
  %v2991 = vunpack.c.l.b16 %v368
  %v2992 = vunpack.c.h.b16 %v368
  %v2993 = vunpack.c.l.b16 %v369
  %v2994 = vunpack.c.h.b16 %v369
  %v2995 = vunpack.c.l.b16 %v370
  %v2996 = vunpack.c.h.b16 %v370
  %v2997 = vunpack.c.l.b16 %v371
  %v2998 = vunpack.c.h.b16 %v371
  %v2999 = vunpack.c.l.b16 %v372
  %v3000 = vunpack.c.h.b16 %v372
  %v3001 = vunpack.c.l.b16 %v373
  %v3002 = vunpack.c.h.b16 %v373
  %v3003 = vunpack.c.l.b16 %v374
  %v3004 = vunpack.c.h.b16 %v374
  %v3005 = vunpack.c.l.b16 %v375
  %v3006 = vunpack.c.h.b16 %v375
  %v3007 = vunpack.c.l.b16 %v376
  %v3008 = vunpack.c.h.b16 %v376
  %v3009 = vunpack.c.l.b16 %v377
  %v3010 = vunpack.c.h.b16 %v377
  %v3011 = vunpack.c.l.b16 %v378
  %v3012 = vunpack.c.h.b16 %v378
  %v3013 = vunpack.c.l.b16 %v379
  %v3014 = vunpack.c.h.b16 %v379
  %v3015 = vunpack.c.l.b16 %v380
  %v3016 = vunpack.c.h.b16 %v380
  %v3017 = vunpack.c.l.b16 %v381
  %v3018 = vunpack.c.h.b16 %v381
  %v3019 = vunpack.c.l.b16 %v382
  %v3020 = vunpack.c.h.b16 %v382
  %v3021 = vunpack.c.l.b16 %v383
  %v3022 = vunpack.c.h.b16 %v383
  %v3023 = vunpack.c.l.b16 %v384
  %v3024 = vunpack.c.h.b16 %v384
  %v3025 = vunpack.c.l.b16 %v385
  %v3026 = vunpack.c.h.b16 %v385
  %v3027 = vunpack.c.l.b16 %v386
  %v3028 = vunpack.c.h.b16 %v386
  %v3029 = vunpack.c.l.b16 %v387
  %v3030 = vunpack.c.h.b16 %v387
  %v3031 = vunpack.c.l.b16 %v388
  %v3032 = vunpack.c.h.b16 %v388
  %v3033 = vunpack.c.l.b16 %v389
  %v3034 = vunpack.c.h.b16 %v389
  %v3035 = vunpack.c.l.b16 %v390
  %v3036 = vunpack.c.h.b16 %v390
  %v3037 = vunpack.c.l.b16 %v391
  %v3038 = vunpack.c.h.b16 %v391
  %v3039 = vunpack.c.l.b16 %v392
  %v3040 = vunpack.c.h.b16 %v392
  %v3041 = vunpack.c.l.b16 %v393
  %v3042 = vunpack.c.h.b16 %v393
  %v3043 = vunpack.c.l.b16 %v394
  %v3044 = vunpack.c.h.b16 %v394
  %v3045 = vunpack.c.l.b16 %v395
  %v3046 = vunpack.c.h.b16 %v395
  %v3047 = vunpack.c.l.b16 %v396
  %v3048 = vunpack.c.h.b16 %v396
  %v3049 = vunpack.c.l.b16 %v397
  %v3050 = vunpack.c.h.b16 %v397
  %v3051 = vunpack.c.l.b16 %v398
  %v3052 = vunpack.c.h.b16 %v398
  %v3053 = vunpack.c.l.b16 %v399
  %v3054 = vunpack.c.h.b16 %v399
  %v3055 = vunpack.c.l.b16 %v400
  %v3056 = vunpack.c.h.b16 %v400
  %v3057 = vunpack.c.l.b16 %v401
  %v3058 = vunpack.c.h.b16 %v401
  %v3059 = vunpack.c.l.b16 %v402
  %v3060 = vunpack.c.h.b16 %v402
  %v3061 = vunpack.c.l.b16 %v403
  %v3062 = vunpack.c.h.b16 %v403
  %v3063 = vunpack.c.l.b16 %v404
  %v3064 = vunpack.c.h.b16 %v404
  %v3065 = vunpack.c.l.b16 %v405
  %v3066 = vunpack.c.h.b16 %v405
  %v3067 = vunpack.c.l.b16 %v406
  %v3068 = vunpack.c.h.b16 %v406
  %v3069 = vunpack.c.l.b16 %v407
  %v3070 = vunpack.c.h.b16 %v407
  %v3071 = vunpack.c.l.b16 %v408
  %v3072 = vunpack.c.h.b16 %v408
  %v3073 = vunpack.c.l.b16 %v409
  %v3074 = vunpack.c.h.b16 %v409
  %v3075 = vunpack.c.l.b16 %v410
  %v3076 = vunpack.c.h.b16 %v410
  %v3077 = vunpack.c.l.b16 %v411
  %v3078 = vunpack.c.h.b16 %v411
  %v3079 = vunpack.c.l.b16 %v412
  %v3080 = vunpack.c.h.b16 %v412
  %v3081 = vunpack.c.l.b16 %v413
  %v3082 = vunpack.c.h.b16 %v413
  %v3083 = vunpack.c.l.b16 %v414
  %v3084 = vunpack.c.h.b16 %v414
  %v3085 = vunpack.c.l.b16 %v415
  %v3086 = vunpack.c.h.b16 %v415
  %v3087 = vunpack.c.l.b16 %v416
  %v3088 = vunpack.c.h.b16 %v416
  %v3089 = vunpack.c.l.b16 %v417
  %v3090 = vunpack.c.h.b16 %v417
  %v3091 = vunpack.c.l.b16 %v418
  %v3092 = vunpack.c.h.b16 %v418
  %v3093 = vunpack.c.l.b16 %v419
  %v3094 = vunpack.c.h.b16 %v419
  %v3095 = vunpack.c.l.b16 %v420
  %v3096 = vunpack.c.h.b16 %v420
  %v3097 = vunpack.c.l.b16 %v421
  %v3098 = vunpack.c.h.b16 %v421
  %v3099 = vunpack.c.l.b16 %v422
  %v3100 = vunpack.c.h.b16 %v422
  %v3101 = vunpack.c.l.b16 %v423
  %v3102 = vunpack.c.h.b16 %v423
  %v3103 = vunpack.c.l.b16 %v424
  %v3104 = vunpack.c.h.b16 %v424
  %v3105 = vunpack.c.l.b16 %v425
  %v3106 = vunpack.c.h.b16 %v425
  %v3107 = vunpack.c.l.b16 %v426
  %v3108 = vunpack.c.h.b16 %v426
  %v3109 = vunpack.c.l.b16 %v427
  %v3110 = vunpack.c.h.b16 %v427
  %v3111 = vunpack.c.l.b16 %v428
  %v3112 = vunpack.c.h.b16 %v428
  %v3113 = vunpack.c.l.b16 %v429
  %v3114 = vunpack.c.h.b16 %v429
  %v3115 = vunpack.c.l.b16 %v430
  %v3116 = vunpack.c.h.b16 %v430
  %v3117 = vunpack.c.l.b16 %v431
  %v3118 = vunpack.c.h.b16 %v431
  %v3119 = vunpack.c.l.b16 %v432
  %v3120 = vunpack.c.h.b16 %v432
  %v3121 = vunpack.c.l.b16 %v433
  %v3122 = vunpack.c.h.b16 %v433
  %v3123 = vunpack.c.l.b16 %v434
  %v3124 = vunpack.c.h.b16 %v434
  %v3125 = vunpack.c.l.b16 %v435
  %v3126 = vunpack.c.h.b16 %v435
  %v3127 = vunpack.c.l.b16 %v436
  %v3128 = vunpack.c.h.b16 %v436
  %v3129 = vunpack.c.l.b16 %v437
  %v3130 = vunpack.c.h.b16 %v437
  %v3131 = vunpack.c.l.b16 %v438
  %v3132 = vunpack.c.h.b16 %v438
  %v3133 = vunpack.c.l.b16 %v439
  %v3134 = vunpack.c.h.b16 %v439
  %v3135 = vunpack.c.l.b16 %v440
  %v3136 = vunpack.c.h.b16 %v440
  %v3137 = vunpack.c.l.b16 %v441
  %v3138 = vunpack.c.h.b16 %v441
  %v3139 = vunpack.c.l.b16 %v442
  %v3140 = vunpack.c.h.b16 %v442
  %v3141 = vunpack.c.l.b16 %v443
  %v3142 = vunpack.c.h.b16 %v443
  %v3143 = vunpack.c.l.b16 %v444
  %v3144 = vunpack.c.h.b16 %v444
  %v3145 = vunpack.c.l.b16 %v445
  %v3146 = vunpack.c.h.b16 %v445
  %v3147 = vunpack.c.l.b16 %v446
  %v3148 = vunpack.c.h.b16 %v446
  %v3149 = vunpack.c.l.b16 %v447
  %v3150 = vunpack.c.h.b16 %v447
  %v3151 = vunpack.c.l.b16 %v448
  %v3152 = vunpack.c.h.b16 %v448
  %v3153 = vunpack.c.l.b16 %v449
  %v3154 = vunpack.c.h.b16 %v449
  %v3155 = vunpack.c.l.b16 %v450
  %v3156 = vunpack.c.h.b16 %v450
  %v3157 = vunpack.c.l.b16 %v451
  %v3158 = vunpack.c.h.b16 %v451
  %v3159 = vunpack.c.l.b16 %v452
  %v3160 = vunpack.c.h.b16 %v452
  %v3161 = vunpack.c.l.b16 %v453
  %v3162 = vunpack.c.h.b16 %v453
  %v3163 = vunpack.c.l.b16 %v454
  %v3164 = vunpack.c.h.b16 %v454
  %v3165 = vunpack.c.l.b16 %v455
  %v3166 = vunpack.c.h.b16 %v455
  %v3167 = vunpack.c.l.b16 %v456
  %v3168 = vunpack.c.h.b16 %v456
  %v3169 = vunpack.c.l.b16 %v457
  %v3170 = vunpack.c.h.b16 %v457
  %v3171 = vunpack.c.l.b16 %v458
  %v3172 = vunpack.c.h.b16 %v458
  %v3173 = vunpack.c.l.b16 %v459
  %v3174 = vunpack.c.h.b16 %v459
  %v3175 = vunpack.c.l.b16 %v460
  %v3176 = vunpack.c.h.b16 %v460
  %v3177 = vunpack.c.l.b16 %v461
  %v3178 = vunpack.c.h.b16 %v461
  %v3179 = vunpack.c.l.b16 %v462
  %v3180 = vunpack.c.h.b16 %v462
  %v3181 = vunpack.c.l.b16 %v463
  %v3182 = vunpack.c.h.b16 %v463
  %v3183 = vunpack.c.l.b16 %v464
  %v3184 = vunpack.c.h.b16 %v464
  %v3185 = vunpack.c.l.b16 %v465
  %v3186 = vunpack.c.h.b16 %v465
  %v3187 = vunpack.c.l.b16 %v466
  %v3188 = vunpack.c.h.b16 %v466
  %v3189 = vunpack.c.l.b16 %v467
  %v3190 = vunpack.c.h.b16 %v467
  %v3191 = vunpack.c.l.b16 %v468
  %v3192 = vunpack.c.h.b16 %v468
  %v3193 = vunpack.c.l.b16 %v469
  %v3194 = vunpack.c.h.b16 %v469
  %v3195 = vunpack.c.l.b16 %v470
  %v3196 = vunpack.c.h.b16 %v470
  %v3197 = vunpack.c.l.b16 %v471
  %v3198 = vunpack.c.h.b16 %v471
  %v3199 = vunpack.c.l.b16 %v472
  %v3200 = vunpack.c.h.b16 %v472
  %v3201 = vunpack.c.l.b16 %v473
  %v3202 = vunpack.c.h.b16 %v473
  %v3203 = vunpack.c.l.b16 %v474
  %v3204 = vunpack.c.h.b16 %v474
  %v3205 = vunpack.c.l.b16 %v475
  %v3206 = vunpack.c.h.b16 %v475
  %v3207 = vunpack.c.l.b16 %v476
  %v3208 = vunpack.c.h.b16 %v476
  %v3209 = vunpack.c.l.b16 %v477
  %v3210 = vunpack.c.h.b16 %v477
  %v3211 = vunpack.c.l.b16 %v478
  %v3212 = vunpack.c.h.b16 %v478
  %v3213 = vunpack.c.l.b16 %v479
  %v3214 = vunpack.c.h.b16 %v479
  %v3215 = vunpack.c.l.b16 %v480
  %v3216 = vunpack.c.h.b16 %v480
  %v3217 = vunpack.c.l.b16 %v481
  %v3218 = vunpack.c.h.b16 %v481
  %v3219 = vunpack.c.l.b16 %v482
  %v3220 = vunpack.c.h.b16 %v482
  %v3221 = vunpack.c.l.b16 %v483
  %v3222 = vunpack.c.h.b16 %v483
  %v3223 = vunpack.c.l.b16 %v484
  %v3224 = vunpack.c.h.b16 %v484
  %v3225 = vunpack.c.l.b16 %v485
  %v3226 = vunpack.c.h.b16 %v485
  %v3227 = vunpack.c.l.b16 %v486
  %v3228 = vunpack.c.h.b16 %v486
  %v3229 = vunpack.c.l.b16 %v487
  %v3230 = vunpack.c.h.b16 %v487
  %v3231 = vunpack.c.l.b16 %v488
  %v3232 = vunpack.c.h.b16 %v488
  %v3233 = vunpack.c.l.b16 %v489
  %v3234 = vunpack.c.h.b16 %v489
  %v3235 = vunpack.c.l.b16 %v490
  %v3236 = vunpack.c.h.b16 %v490
  %v3237 = vunpack.c.l.b16 %v491
  %v3238 = vunpack.c.h.b16 %v491
  %v3239 = vunpack.c.l.b16 %v492
  %v3240 = vunpack.c.h.b16 %v492
  %v3241 = vunpack.c.l.b16 %v493
  %v3242 = vunpack.c.h.b16 %v493
  %v3243 = vunpack.c.l.b16 %v494
  %v3244 = vunpack.c.h.b16 %v494
  %v3245 = vunpack.c.l.b16 %v495
  %v3246 = vunpack.c.h.b16 %v495
  %v3247 = vunpack.c.l.b16 %v496
  %v3248 = vunpack.c.h.b16 %v496
  %v3249 = vunpack.c.l.b16 %v497
  %v3250 = vunpack.c.h.b16 %v497
  %v3251 = vunpack.c.l.b16 %v498
  %v3252 = vunpack.c.h.b16 %v498
  %v3253 = vunpack.c.l.b16 %v499
  %v3254 = vunpack.c.h.b16 %v499
  %v3255 = vunpack.c.l.b16 %v500
  %v3256 = vunpack.c.h.b16 %v500
  %v3257 = vunpack.c.l.b16 %v501
  %v3258 = vunpack.c.h.b16 %v501
  %v3259 = vunpack.c.l.b16 %v502
  %v3260 = vunpack.c.h.b16 %v502
  %v3261 = vunpack.c.l.b16 %v503
  %v3262 = vunpack.c.h.b16 %v503
  %v3263 = vunpack.c.l.b16 %v504
  %v3264 = vunpack.c.h.b16 %v504
  %v3265 = vunpack.c.l.b16 %v505
  %v3266 = vunpack.c.h.b16 %v505
  %v3267 = vunpack.c.l.b16 %v506
  %v3268 = vunpack.c.h.b16 %v506
  %v3269 = vunpack.c.l.b16 %v507
  %v3270 = vunpack.c.h.b16 %v507
  %v3271 = vunpack.c.l.b16 %v508
  %v3272 = vunpack.c.h.b16 %v508
  %v3273 = vunpack.c.l.b16 %v509
  %v3274 = vunpack.c.h.b16 %v509
  %v3275 = vunpack.c.l.b16 %v510
  %v3276 = vunpack.c.h.b16 %v510
  %v3277 = vunpack.c.l.b16 %v511
  %v3278 = vunpack.c.h.b16 %v511
  %v3279 = vunpack.c.l.b16 %v512
  %v3280 = vunpack.c.h.b16 %v512
  %v3281 = vunpack.c.l.b16 %v513
  %v3282 = vunpack.c.h.b16 %v513
  %v3283 = vunpack.c.l.b16 %v514
  %v3284 = vunpack.c.h.b16 %v514
  %v3285 = vunpack.c.l.b16 %v515
  %v3286 = vunpack.c.h.b16 %v515
  %v3287 = vunpack.c.l.b16 %v516
  %v3288 = vunpack.c.h.b16 %v516
  %v3289 = vunpack.c.l.b16 %v517
  %v3290 = vunpack.c.h.b16 %v517
  %v3291 = vunpack.c.l.b16 %v518
  %v3292 = vunpack.c.h.b16 %v518
  %v3293 = vunpack.c.l.b16 %v519
  %v3294 = vunpack.c.h.b16 %v519
  %v3295 = vunpack.c.l.b16 %v520
  %v3296 = vunpack.c.h.b16 %v520
  %v3297 = vunpack.c.l.b16 %v521
  %v3298 = vunpack.c.h.b16 %v521
  %v3299 = vunpack.c.l.b16 %v522
  %v3300 = vunpack.c.h.b16 %v522
  %v3301 = vunpack.c.l.b16 %v523
  %v3302 = vunpack.c.h.b16 %v523
  %v3303 = vunpack.c.l.b16 %v524
  %v3304 = vunpack.c.h.b16 %v524
  %v3305 = vunpack.c.l.b16 %v525
  %v3306 = vunpack.c.h.b16 %v525
  %v3307 = vunpack.c.l.b16 %v526
  %v3308 = vunpack.c.h.b16 %v526
  %v3309 = vunpack.c.l.b16 %v527
  %v3310 = vunpack.c.h.b16 %v527
  %v3311 = vunpack.c.l.b16 %v528
  %v3312 = vunpack.c.h.b16 %v528
  %v3313 = vunpack.c.l.b16 %v529
  %v3314 = vunpack.c.h.b16 %v529
  %v3315 = vunpack.c.l.b16 %v530
  %v3316 = vunpack.c.h.b16 %v530
  %v3317 = vunpack.c.l.b16 %v531
  %v3318 = vunpack.c.h.b16 %v531
  %v3319 = vunpack.c.l.b16 %v532
  %v3320 = vunpack.c.h.b16 %v532
  %v3321 = vunpack.c.l.b16 %v533
  %v3322 = vunpack.c.h.b16 %v533
  %v3323 = vunpack.c.l.b16 %v534
  %v3324 = vunpack.c.h.b16 %v534
  %v3325 = vunpack.c.l.b16 %v535
  %v3326 = vunpack.c.h.b16 %v535
  %v3327 = vunpack.c.l.b16 %v536
  %v3328 = vunpack.c.h.b16 %v536
  %v3329 = vunpack.c.l.b16 %v537
  %v3330 = vunpack.c.h.b16 %v537
  %v3331 = vunpack.c.l.b16 %v538
  %v3332 = vunpack.c.h.b16 %v538
  %v3333 = vunpack.c.l.b16 %v539
  %v3334 = vunpack.c.h.b16 %v539
  %v3335 = vunpack.c.l.b16 %v540
  %v3336 = vunpack.c.h.b16 %v540
  %v3337 = vunpack.c.l.b16 %v541
  %v3338 = vunpack.c.h.b16 %v541
  %v3339 = vunpack.c.l.b16 %v542
  %v3340 = vunpack.c.h.b16 %v542
  %v3341 = vunpack.c.l.b16 %v543
  %v3342 = vunpack.c.h.b16 %v543
  %v3343 = vunpack.c.l.b16 %v544
  %v3344 = vunpack.c.h.b16 %v544
  %v3345 = vunpack.c.l.b16 %v545
  %v3346 = vunpack.c.h.b16 %v545
  %v3347 = vunpack.c.l.b16 %v546
  %v3348 = vunpack.c.h.b16 %v546
  %v3349 = vunpack.c.l.b16 %v547
  %v3350 = vunpack.c.h.b16 %v547
  %v3351 = vunpack.c.l.b16 %v548
  %v3352 = vunpack.c.h.b16 %v548
  %v3353 = vunpack.c.l.b16 %v549
  %v3354 = vunpack.c.h.b16 %v549
  %v3355 = vunpack.c.l.b16 %v550
  %v3356 = vunpack.c.h.b16 %v550
  %v3357 = vunpack.c.l.b16 %v551
  %v3358 = vunpack.c.h.b16 %v551
  %v3359 = vunpack.c.l.b16 %v552
  %v3360 = vunpack.c.h.b16 %v552
  %v3361 = vunpack.c.l.b16 %v553
  %v3362 = vunpack.c.h.b16 %v553
  %v3363 = vunpack.c.l.b16 %v554
  %v3364 = vunpack.c.h.b16 %v554
  %v3365 = vunpack.c.l.b16 %v555
  %v3366 = vunpack.c.h.b16 %v555
  %v3367 = vunpack.c.l.b16 %v556
  %v3368 = vunpack.c.h.b16 %v556
  %v3369 = vunpack.c.l.b16 %v557
  %v3370 = vunpack.c.h.b16 %v557
  %v3371 = vunpack.c.l.b16 %v558
  %v3372 = vunpack.c.h.b16 %v558
  %v3373 = vunpack.c.l.b16 %v559
  %v3374 = vunpack.c.h.b16 %v559
  %v3375 = vunpack.c.l.b16 %v560
  %v3376 = vunpack.c.h.b16 %v560
  %v3377 = vunpack.c.l.b16 %v561
  %v3378 = vunpack.c.h.b16 %v561
  %v3379 = vunpack.c.l.b16 %v562
  %v3380 = vunpack.c.h.b16 %v562
  %v3381 = vunpack.c.l.b16 %v563
  %v3382 = vunpack.c.h.b16 %v563
  %v3383 = vunpack.c.l.b16 %v564
  %v3384 = vunpack.c.h.b16 %v564
  %v3385 = vunpack.c.l.b16 %v565
  %v3386 = vunpack.c.h.b16 %v565
  %v3387 = vunpack.c.l.b16 %v566
  %v3388 = vunpack.c.h.b16 %v566
  %v3389 = vunpack.c.l.b16 %v567
  %v3390 = vunpack.c.h.b16 %v567
  %v3391 = vunpack.c.l.b16 %v568
  %v3392 = vunpack.c.h.b16 %v568
  %v3393 = vunpack.c.l.b16 %v569
  %v3394 = vunpack.c.h.b16 %v569
  %v3395 = vunpack.c.l.b16 %v570
  %v3396 = vunpack.c.h.b16 %v570
  %v3397 = vunpack.c.l.b16 %v571
  %v3398 = vunpack.c.h.b16 %v571
  %v3399 = vunpack.c.l.b16 %v572
  %v3400 = vunpack.c.h.b16 %v572
  %v3401 = vunpack.c.l.b16 %v573
  %v3402 = vunpack.c.h.b16 %v573
  %v3403 = vunpack.c.l.b16 %v574
  %v3404 = vunpack.c.h.b16 %v574
  %v3405 = vunpack.c.l.b16 %v575
  %v3406 = vunpack.c.h.b16 %v575
  %v3407 = vunpack.c.l.b16 %v576
  %v3408 = vunpack.c.h.b16 %v576
  %v3409 = vunpack.c.l.b16 %v577
  %v3410 = vunpack.c.h.b16 %v577
  %v3411 = vunpack.c.l.b16 %v578
  %v3412 = vunpack.c.h.b16 %v578
  %v3413 = vunpack.c.l.b16 %v579
  %v3414 = vunpack.c.h.b16 %v579
  %v3415 = vunpack.c.l.b16 %v580
  %v3416 = vunpack.c.h.b16 %v580
  %v3417 = vunpack.c.l.b16 %v581
  %v3418 = vunpack.c.h.b16 %v581
  %v3419 = vunpack.c.l.b16 %v582
  %v3420 = vunpack.c.h.b16 %v582
  %v3421 = vunpack.c.l.b16 %v583
  %v3422 = vunpack.c.h.b16 %v583
  %v3423 = vunpack.c.l.b16 %v584
  %v3424 = vunpack.c.h.b16 %v584
  %v3425 = vunpack.c.l.b16 %v585
  %v3426 = vunpack.c.h.b16 %v585
  %v3427 = vunpack.c.l.b16 %v586
  %v3428 = vunpack.c.h.b16 %v586
  %v3429 = vunpack.c.l.b16 %v587
  %v3430 = vunpack.c.h.b16 %v587
  %v3431 = vunpack.c.l.b16 %v588
  %v3432 = vunpack.c.h.b16 %v588
  %v3433 = vunpack.c.l.b16 %v589
  %v3434 = vunpack.c.h.b16 %v589
  %v3435 = vunpack.c.l.b16 %v590
  %v3436 = vunpack.c.h.b16 %v590
  %v3437 = vunpack.c.l.b16 %v591
  %v3438 = vunpack.c.h.b16 %v591
  %v3439 = vunpack.c.l.b16 %v592
  %v3440 = vunpack.c.h.b16 %v592
  %v3441 = vunpack.c.l.b16 %v593
  %v3442 = vunpack.c.h.b16 %v593
  %v3443 = vunpack.c.l.b16 %v594
  %v3444 = vunpack.c.h.b16 %v594
  %v3445 = vunpack.c.l.b16 %v595
  %v3446 = vunpack.c.h.b16 %v595
  %v3447 = vunpack.c.l.b16 %v596
  %v3448 = vunpack.c.h.b16 %v596
  %v3449 = vunpack.c.l.b16 %v597
  %v3450 = vunpack.c.h.b16 %v597
  %v3451 = vunpack.c.l.b16 %v598
  %v3452 = vunpack.c.h.b16 %v598
  %v3453 = vunpack.c.l.b16 %v599
  %v3454 = vunpack.c.h.b16 %v599
  %v3455 = vunpack.c.l.b16 %v600
  %v3456 = vunpack.c.h.b16 %v600
  %v3457 = vunpack.c.l.b16 %v601
  %v3458 = vunpack.c.h.b16 %v601
  %v3459 = vunpack.c.l.b16 %v602
  %v3460 = vunpack.c.h.b16 %v602
  %v3461 = vunpack.c.l.b16 %v603
  %v3462 = vunpack.c.h.b16 %v603
  %v3463 = vunpack.c.l.b16 %v604
  %v3464 = vunpack.c.h.b16 %v604
  %v3465 = vunpack.c.l.b16 %v605
  %v3466 = vunpack.c.h.b16 %v605
  %v3467 = vunpack.c.l.b16 %v606
  %v3468 = vunpack.c.h.b16 %v606
  %v3469 = vunpack.c.l.b16 %v607
  %v3470 = vunpack.c.h.b16 %v607
  %v3471 = vunpack.c.l.b16 %v608
  %v3472 = vunpack.c.h.b16 %v608
  %v3473 = vunpack.c.l.b16 %v609
  %v3474 = vunpack.c.h.b16 %v609
  %v3475 = vunpack.c.l.b16 %v610
  %v3476 = vunpack.c.h.b16 %v610
  %v3477 = vunpack.c.l.b16 %v611
  %v3478 = vunpack.c.h.b16 %v611
  %v3479 = vunpack.c.l.b16 %v612
  %v3480 = vunpack.c.h.b16 %v612
  %v3481 = vunpack.c.l.b16 %v613
  %v3482 = vunpack.c.h.b16 %v613
  %v3483 = vunpack.c.l.b16 %v614
  %v3484 = vunpack.c.h.b16 %v614
  %v3485 = vunpack.c.l.b16 %v615
  %v3486 = vunpack.c.h.b16 %v615
  %v3487 = vunpack.c.l.b16 %v616
  %v3488 = vunpack.c.h.b16 %v616
  %v3489 = vunpack.c.l.b16 %v617
  %v3490 = vunpack.c.h.b16 %v617
  %v3491 = vunpack.c.l.b16 %v618
  %v3492 = vunpack.c.h.b16 %v618
  %v3493 = vunpack.c.l.b16 %v619
  %v3494 = vunpack.c.h.b16 %v619
  %v3495 = vunpack.c.l.b16 %v620
  %v3496 = vunpack.c.h.b16 %v620
  %v3497 = vunpack.c.l.b16 %v621
  %v3498 = vunpack.c.h.b16 %v621
  %v3499 = vunpack.c.l.b16 %v622
  %v3500 = vunpack.c.h.b16 %v622
  %v3501 = vunpack.c.l.b16 %v623
  %v3502 = vunpack.c.h.b16 %v623
  %v3503 = vunpack.c.l.b16 %v624
  %v3504 = vunpack.c.h.b16 %v624
  %v3505 = vunpack.c.l.b16 %v625
  %v3506 = vunpack.c.h.b16 %v625
  %v3507 = vunpack.c.l.b16 %v626
  %v3508 = vunpack.c.h.b16 %v626
  %v3509 = vunpack.c.l.b16 %v627
  %v3510 = vunpack.c.h.b16 %v627
  %v3511 = vunpack.c.l.b16 %v628
  %v3512 = vunpack.c.h.b16 %v628
  %v3513 = vunpack.c.l.b16 %v629
  %v3514 = vunpack.c.h.b16 %v629
  %v3515 = vunpack.c.l.b16 %v630
  %v3516 = vunpack.c.h.b16 %v630
  %v3517 = vunpack.c.l.b16 %v631
  %v3518 = vunpack.c.h.b16 %v631
  %v3519 = vunpack.c.l.b16 %v632
  %v3520 = vunpack.c.h.b16 %v632
  %v3521 = vunpack.c.l.b16 %v633
  %v3522 = vunpack.c.h.b16 %v633
  %v3523 = vunpack.c.l.b16 %v634
  %v3524 = vunpack.c.h.b16 %v634
  %v3525 = vunpack.c.l.b16 %v635
  %v3526 = vunpack.c.h.b16 %v635
  %v3527 = vunpack.c.l.b16 %v636
  %v3528 = vunpack.c.h.b16 %v636
  %v3529 = vunpack.c.l.b16 %v637
  %v3530 = vunpack.c.h.b16 %v637
  %v3531 = vunpack.c.l.b16 %v638
  %v3532 = vunpack.c.h.b16 %v638
  %v3533 = vunpack.c.l.b16 %v639
  %v3534 = vunpack.c.h.b16 %v639
  %v3535 = vunpack.c.l.b16 %v640
  %v3536 = vunpack.c.h.b16 %v640
  %v3537 = vunpack.c.l.b16 %v641
  %v3538 = vunpack.c.h.b16 %v641
  %v3539 = vunpack.c.l.b16 %v642
  %v3540 = vunpack.c.h.b16 %v642
  %v3541 = vunpack.c.l.b16 %v643
  %v3542 = vunpack.c.h.b16 %v643
  %v3543 = vunpack.c.l.b16 %v644
  %v3544 = vunpack.c.h.b16 %v644
  %v3545 = vunpack.c.l.b16 %v645
  %v3546 = vunpack.c.h.b16 %v645
  %v3547 = vunpack.c.l.b16 %v646
  %v3548 = vunpack.c.h.b16 %v646
  %v3549 = vunpack.c.l.b16 %v647
  %v3550 = vunpack.c.h.b16 %v647
  %v3551 = vunpack.c.l.b16 %v648
  %v3552 = vunpack.c.h.b16 %v648
  %v3553 = vunpack.c.l.b16 %v649
  %v3554 = vunpack.c.h.b16 %v649
  %v3555 = vunpack.c.l.b16 %v650
  %v3556 = vunpack.c.h.b16 %v650
  %v3557 = vunpack.c.l.b16 %v651
  %v3558 = vunpack.c.h.b16 %v651
  %v3559 = vunpack.c.l.b16 %v652
  %v3560 = vunpack.c.h.b16 %v652
  %v3561 = vunpack.c.l.b16 %v653
  %v3562 = vunpack.c.h.b16 %v653
  %v3563 = vunpack.c.l.b16 %v654
  %v3564 = vunpack.c.h.b16 %v654
  %v3565 = vunpack.c.l.b16 %v655
  %v3566 = vunpack.c.h.b16 %v655
  %v3567 = vunpack.c.l.b16 %v656
  %v3568 = vunpack.c.h.b16 %v656
  %v3569 = vunpack.c.l.b16 %v657
  %v3570 = vunpack.c.h.b16 %v657
  %v3571 = vunpack.c.l.b16 %v658
  %v3572 = vunpack.c.h.b16 %v658
  %v3573 = vunpack.c.l.b16 %v659
  %v3574 = vunpack.c.h.b16 %v659
  %v3575 = vunpack.c.l.b16 %v660
  %v3576 = vunpack.c.h.b16 %v660
  %v3577 = vunpack.c.l.b16 %v661
  %v3578 = vunpack.c.h.b16 %v661
  %v3579 = vunpack.c.l.b16 %v662
  %v3580 = vunpack.c.h.b16 %v662
  %v3581 = vunpack.c.l.b16 %v663
  %v3582 = vunpack.c.h.b16 %v663
  %v3583 = vunpack.c.l.b16 %v664
  %v3584 = vunpack.c.h.b16 %v664
  %v3585 = vunpack.c.l.b16 %v665
  %v3586 = vunpack.c.h.b16 %v665
  %v3587 = vunpack.c.l.b16 %v666
  %v3588 = vunpack.c.h.b16 %v666
  %v3589 = vunpack.c.l.b16 %v667
  %v3590 = vunpack.c.h.b16 %v667
  %v3591 = vunpack.c.l.b16 %v668
  %v3592 = vunpack.c.h.b16 %v668
  %v3593 = vunpack.c.l.b16 %v669
  %v3594 = vunpack.c.h.b16 %v669
  %v3595 = vunpack.c.l.b16 %v670
  %v3596 = vunpack.c.h.b16 %v670
  %v3597 = vunpack.c.l.b16 %v671
  %v3598 = vunpack.c.h.b16 %v671
  %v3599 = vunpack.c.l.b16 %v672
  %v3600 = vunpack.c.h.b16 %v672
  %v3601 = vunpack.c.l.b16 %v673
  %v3602 = vunpack.c.h.b16 %v673
  %v3603 = vunpack.c.l.b16 %v674
  %v3604 = vunpack.c.h.b16 %v674
  %v3605 = vunpack.c.l.b16 %v675
  %v3606 = vunpack.c.h.b16 %v675
  %v3607 = vunpack.c.l.b16 %v676
  %v3608 = vunpack.c.h.b16 %v676
  %v3609 = vunpack.c.l.b16 %v677
  %v3610 = vunpack.c.h.b16 %v677
  %v3611 = vunpack.c.l.b16 %v678
  %v3612 = vunpack.c.h.b16 %v678
  %v3613 = vunpack.c.l.b16 %v679
  %v3614 = vunpack.c.h.b16 %v679
  %v3615 = vunpack.c.l.b16 %v680
  %v3616 = vunpack.c.h.b16 %v680
  %v3617 = vunpack.c.l.b16 %v681
  %v3618 = vunpack.c.h.b16 %v681
  %v3619 = vunpack.c.l.b16 %v682
  %v3620 = vunpack.c.h.b16 %v682
  %v3621 = vunpack.c.l.b16 %v683
  %v3622 = vunpack.c.h.b16 %v683
  %v3623 = vunpack.c.l.b16 %v684
  %v3624 = vunpack.c.h.b16 %v684
  %v3625 = vunpack.c.l.b16 %v685
  %v3626 = vunpack.c.h.b16 %v685
  %v3627 = vunpack.c.l.b16 %v686
  %v3628 = vunpack.c.h.b16 %v686
  %v3629 = vunpack.c.l.b16 %v687
  %v3630 = vunpack.c.h.b16 %v687
  %v3631 = vunpack.c.l.b16 %v688
  %v3632 = vunpack.c.h.b16 %v688
  %v3633 = vunpack.c.l.b16 %v689
  %v3634 = vunpack.c.h.b16 %v689
  %v3635 = vunpack.c.l.b16 %v690
  %v3636 = vunpack.c.h.b16 %v690
  %v3637 = vunpack.c.l.b16 %v691
  %v3638 = vunpack.c.h.b16 %v691
  %v3639 = vunpack.c.l.b16 %v692
  %v3640 = vunpack.c.h.b16 %v692
  %v3641 = vunpack.c.l.b16 %v693
  %v3642 = vunpack.c.h.b16 %v693
  %v3643 = vunpack.c.l.b16 %v694
  %v3644 = vunpack.c.h.b16 %v694
  %v3645 = vunpack.c.l.b16 %v695
  %v3646 = vunpack.c.h.b16 %v695
  %v3647 = vunpack.c.l.b16 %v696
  %v3648 = vunpack.c.h.b16 %v696
  %v3649 = vunpack.c.l.b16 %v697
  %v3650 = vunpack.c.h.b16 %v697
  %v3651 = vunpack.c.l.b16 %v698
  %v3652 = vunpack.c.h.b16 %v698
  %v3653 = vunpack.c.l.b16 %v699
  %v3654 = vunpack.c.h.b16 %v699
  %v3655 = vunpack.c.l.b16 %v700
  %v3656 = vunpack.c.h.b16 %v700
  %v3657 = vunpack.c.l.b16 %v701
  %v3658 = vunpack.c.h.b16 %v701
  %v3659 = vunpack.c.l.b16 %v702
  %v3660 = vunpack.c.h.b16 %v702
  %v3661 = vunpack.c.l.b16 %v703
  %v3662 = vunpack.c.h.b16 %v703
  %v3663 = vunpack.c.l.b16 %v704
  %v3664 = vunpack.c.h.b16 %v704
  %v3665 = vunpack.c.l.b16 %v705
  %v3666 = vunpack.c.h.b16 %v705
  %v3667 = vunpack.c.l.b16 %v706
  %v3668 = vunpack.c.h.b16 %v706
  %v3669 = vunpack.c.l.b16 %v707
  %v3670 = vunpack.c.h.b16 %v707
  %v3671 = vunpack.c.l.b16 %v708
  %v3672 = vunpack.c.h.b16 %v708
  %v3673 = vunpack.c.l.b16 %v709
  %v3674 = vunpack.c.h.b16 %v709
  %v3675 = vunpack.c.l.b16 %v710
  %v3676 = vunpack.c.h.b16 %v710
  %v3677 = vunpack.c.l.b16 %v711
  %v3678 = vunpack.c.h.b16 %v711
  %v3679 = vunpack.c.l.b16 %v712
  %v3680 = vunpack.c.h.b16 %v712
  %v3681 = vunpack.c.l.b16 %v713
  %v3682 = vunpack.c.h.b16 %v713
  %v3683 = vunpack.c.l.b16 %v714
  %v3684 = vunpack.c.h.b16 %v714
  %v3685 = vunpack.c.l.b16 %v715
  %v3686 = vunpack.c.h.b16 %v715
  %v3687 = vunpack.c.l.b16 %v716
  %v3688 = vunpack.c.h.b16 %v716
  %v3689 = vunpack.c.l.b16 %v717
  %v3690 = vunpack.c.h.b16 %v717
  %v3691 = vunpack.c.l.b16 %v718
  %v3692 = vunpack.c.h.b16 %v718
  %v3693 = vunpack.c.l.b16 %v719
  %v3694 = vunpack.c.h.b16 %v719
  %v3695 = vunpack.c.l.b16 %v720
  %v3696 = vunpack.c.h.b16 %v720
  %v3697 = vunpack.c.l.b16 %v721
  %v3698 = vunpack.c.h.b16 %v721
  %v3699 = vunpack.c.l.b16 %v722
  %v3700 = vunpack.c.h.b16 %v722
  %v3701 = vunpack.c.l.b16 %v723
  %v3702 = vunpack.c.h.b16 %v723
  %v3703 = vunpack.c.l.b16 %v724
  %v3704 = vunpack.c.h.b16 %v724
  %v3705 = vunpack.c.l.b16 %v725
  %v3706 = vunpack.c.h.b16 %v725
  %v3707 = vunpack.c.l.b16 %v726
  %v3708 = vunpack.c.h.b16 %v726
  %v3709 = vunpack.c.l.b16 %v727
  %v3710 = vunpack.c.h.b16 %v727
  %v3711 = vunpack.c.l.b16 %v728
  %v3712 = vunpack.c.h.b16 %v728
  %v3713 = vunpack.c.l.b16 %v729
  %v3714 = vunpack.c.h.b16 %v729
  %v3715 = vunpack.c.l.b16 %v730
  %v3716 = vunpack.c.h.b16 %v730
  %v3717 = vunpack.c.l.b16 %v731
  %v3718 = vunpack.c.h.b16 %v731
  %v3719 = vunpack.c.l.b16 %v732
  %v3720 = vunpack.c.h.b16 %v732
  %v3721 = vunpack.c.l.b16 %v733
  %v3722 = vunpack.c.h.b16 %v733
  %v3723 = vunpack.c.l.b16 %v734
  %v3724 = vunpack.c.h.b16 %v734
  %v3725 = vunpack.c.l.b16 %v735
  %v3726 = vunpack.c.h.b16 %v735
  %v3727 = vunpack.c.l.b16 %v736
  %v3728 = vunpack.c.h.b16 %v736
  %v3729 = vunpack.c.l.b16 %v737
  %v3730 = vunpack.c.h.b16 %v737
  %v3731 = vunpack.c.l.b16 %v738
  %v3732 = vunpack.c.h.b16 %v738
  %v3733 = vunpack.c.l.b16 %v739
  %v3734 = vunpack.c.h.b16 %v739
  %v3735 = vunpack.c.l.b16 %v740
  %v3736 = vunpack.c.h.b16 %v740
  %v3737 = vunpack.c.l.b16 %v741
  %v3738 = vunpack.c.h.b16 %v741
  %v3739 = vunpack.c.l.b16 %v742
  %v3740 = vunpack.c.h.b16 %v742
  %v3741 = vunpack.c.l.b16 %v743
  %v3742 = vunpack.c.h.b16 %v743
  %v3743 = vunpack.c.l.b16 %v744
  %v3744 = vunpack.c.h.b16 %v744
  %v3745 = vunpack.c.l.b16 %v745
  %v3746 = vunpack.c.h.b16 %v745
  %v3747 = vunpack.c.l.b16 %v746
  %v3748 = vunpack.c.h.b16 %v746
  %v3749 = vunpack.c.l.b16 %v747
  %v3750 = vunpack.c.h.b16 %v747
  %v3751 = vunpack.c.l.b16 %v748
  %v3752 = vunpack.c.h.b16 %v748
  %v3753 = vunpack.c.l.b16 %v749
  %v3754 = vunpack.c.h.b16 %v749
  %v3755 = vunpack.c.l.b16 %v750
  %v3756 = vunpack.c.h.b16 %v750
  %v3757 = vunpack.c.l.b16 %v751
  %v3758 = vunpack.c.h.b16 %v751
  %v3759 = vunpack.c.l.b16 %v752
  %v3760 = vunpack.c.h.b16 %v752
  %v3761 = vunpack.c.l.b16 %v753
  %v3762 = vunpack.c.h.b16 %v753
  %v3763 = vunpack.c.l.b16 %v754
  %v3764 = vunpack.c.h.b16 %v754
  %v3765 = vunpack.c.l.b16 %v755
  %v3766 = vunpack.c.h.b16 %v755
  %v3767 = vunpack.c.l.b16 %v756
  %v3768 = vunpack.c.h.b16 %v756
  %v3769 = vunpack.c.l.b16 %v757
  %v3770 = vunpack.c.h.b16 %v757
  %v3771 = vunpack.c.l.b16 %v758
  %v3772 = vunpack.c.h.b16 %v758
  %v3773 = vunpack.c.l.b16 %v759
  %v3774 = vunpack.c.h.b16 %v759
  %v3775 = vunpack.c.l.b16 %v760
  %v3776 = vunpack.c.h.b16 %v760
  %v3777 = vunpack.c.l.b16 %v761
  %v3778 = vunpack.c.h.b16 %v761
  %v3779 = vunpack.c.l.b16 %v762
  %v3780 = vunpack.c.h.b16 %v762
  %v3781 = vunpack.c.l.b16 %v763
  %v3782 = vunpack.c.h.b16 %v763
  %v3783 = vunpack.c.l.b16 %v764
  %v3784 = vunpack.c.h.b16 %v764
  %v3785 = vunpack.c.l.b16 %v765
  %v3786 = vunpack.c.h.b16 %v765
  %v3787 = vunpack.c.l.b16 %v766
  %v3788 = vunpack.c.h.b16 %v766
  %v3789 = vunpack.c.l.b16 %v767
  %v3790 = vunpack.c.h.b16 %v767
  %v3791 = vunpack.c.l.b16 %v768
  %v3792 = vunpack.c.h.b16 %v768
  %v3793 = vunpack.c.l.b16 %v769
  %v3794 = vunpack.c.h.b16 %v769
  %v3795 = vunpack.c.l.b16 %v770
  %v3796 = vunpack.c.h.b16 %v770
  %v3797 = vunpack.c.l.b16 %v771
  %v3798 = vunpack.c.h.b16 %v771
  %v3799 = vunpack.c.l.b16 %v772
  %v3800 = vunpack.c.h.b16 %v772
  %v3801 = vunpack.c.l.b16 %v773
  %v3802 = vunpack.c.h.b16 %v773
  %v3803 = vunpack.c.l.b16 %v774
  %v3804 = vunpack.c.h.b16 %v774
  %v3805 = vunpack.c.l.b16 %v775
  %v3806 = vunpack.c.h.b16 %v775
  %v3807 = vunpack.c.l.b16 %v776
  %v3808 = vunpack.c.h.b16 %v776
  %v3809 = vunpack.c.l.b16 %v777
  %v3810 = vunpack.c.h.b16 %v777
  %v3811 = vunpack.c.l.b16 %v778
  %v3812 = vunpack.c.h.b16 %v778
  %v3813 = vunpack.c.l.b16 %v779
  %v3814 = vunpack.c.h.b16 %v779
  %v3815 = vunpack.c.l.b16 %v780
  %v3816 = vunpack.c.h.b16 %v780
  %v3817 = vunpack.c.l.b16 %v781
  %v3818 = vunpack.c.h.b16 %v781
  %v3819 = vunpack.c.l.b16 %v782
  %v3820 = vunpack.c.h.b16 %v782
  %v3821 = vunpack.c.l.b16 %v783
  %v3822 = vunpack.c.h.b16 %v783
  %v3823 = vunpack.c.l.b16 %v784
  %v3824 = vunpack.c.h.b16 %v784
  %v3825 = vunpack.c.l.b16 %v785
  %v3826 = vunpack.c.h.b16 %v785
  %v3827 = vunpack.c.l.b16 %v786
  %v3828 = vunpack.c.h.b16 %v786
  %v3829 = vunpack.c.l.b16 %v787
  %v3830 = vunpack.c.h.b16 %v787
  %v3831 = vunpack.c.l.b16 %v788
  %v3832 = vunpack.c.h.b16 %v788
  %v3833 = vunpack.c.l.b16 %v789
  %v3834 = vunpack.c.h.b16 %v789
  %v3835 = vunpack.c.l.b16 %v790
  %v3836 = vunpack.c.h.b16 %v790
  %v3837 = vunpack.c.l.b16 %v791
  %v3838 = vunpack.c.h.b16 %v791
  %v3839 = vunpack.c.l.b16 %v792
  %v3840 = vunpack.c.h.b16 %v792
  %v3841 = vunpack.c.l.b16 %v793
  %v3842 = vunpack.c.h.b16 %v793
  %v3843 = vunpack.c.l.b16 %v794
  %v3844 = vunpack.c.h.b16 %v794
  %v3845 = vunpack.c.l.b16 %v795
  %v3846 = vunpack.c.h.b16 %v795
  %v3847 = vunpack.c.l.b16 %v796
  %v3848 = vunpack.c.h.b16 %v796
  %v3849 = vunpack.c.l.b16 %v797
  %v3850 = vunpack.c.h.b16 %v797
  %v3851 = vunpack.c.l.b16 %v798
  %v3852 = vunpack.c.h.b16 %v798
  %v3853 = vunpack.c.l.b16 %v799
  %v3854 = vunpack.c.h.b16 %v799
  %v3855 = vunpack.c.l.b16 %v800
  %v3856 = vunpack.c.h.b16 %v800
  %v3857 = vunpack.c.l.b16 %v801
  %v3858 = vunpack.c.h.b16 %v801
  %v3859 = vunpack.c.l.b16 %v802
  %v3860 = vunpack.c.h.b16 %v802
  %v3861 = vunpack.c.l.b16 %v803
  %v3862 = vunpack.c.h.b16 %v803
  %v3863 = vunpack.c.l.b16 %v804
  %v3864 = vunpack.c.h.b16 %v804
  %v3865 = vunpack.c.l.b16 %v805
  %v3866 = vunpack.c.h.b16 %v805
  %v3867 = vunpack.c.l.b16 %v806
  %v3868 = vunpack.c.h.b16 %v806
  %v3869 = vunpack.c.l.b16 %v807
  %v3870 = vunpack.c.h.b16 %v807
  %v3871 = vunpack.c.l.b16 %v808
  %v3872 = vunpack.c.h.b16 %v808
  %v3873 = vunpack.c.l.b16 %v809
  %v3874 = vunpack.c.h.b16 %v809
  %v3875 = vunpack.c.l.b16 %v810
  %v3876 = vunpack.c.h.b16 %v810
  %v3877 = vunpack.c.l.b16 %v811
  %v3878 = vunpack.c.h.b16 %v811
  %v3879 = vunpack.c.l.b16 %v812
  %v3880 = vunpack.c.h.b16 %v812
  %v3881 = vunpack.c.l.b16 %v813
  %v3882 = vunpack.c.h.b16 %v813
  %v3883 = vunpack.c.l.b16 %v814
  %v3884 = vunpack.c.h.b16 %v814
  %v3885 = vunpack.c.l.b16 %v815
  %v3886 = vunpack.c.h.b16 %v815
  %v3887 = vunpack.c.l.b16 %v816
  %v3888 = vunpack.c.h.b16 %v816
  %v3889 = vunpack.c.l.b16 %v817
  %v3890 = vunpack.c.h.b16 %v817
  %v3891 = vunpack.c.l.b16 %v818
  %v3892 = vunpack.c.h.b16 %v818
  %v3893 = vunpack.c.l.b16 %v819
  %v3894 = vunpack.c.h.b16 %v819
  %v3895 = vunpack.c.l.b16 %v820
  %v3896 = vunpack.c.h.b16 %v820
  %v3897 = vunpack.c.l.b16 %v821
  %v3898 = vunpack.c.h.b16 %v821
  %v3899 = vunpack.c.l.b16 %v822
  %v3900 = vunpack.c.h.b16 %v822
  %v3901 = vunpack.c.l.b16 %v823
  %v3902 = vunpack.c.h.b16 %v823
  %v3903 = vunpack.c.l.b16 %v824
  %v3904 = vunpack.c.h.b16 %v824
  %v3905 = vunpack.c.l.b16 %v825
  %v3906 = vunpack.c.h.b16 %v825
  %v3907 = vunpack.c.l.b16 %v826
  %v3908 = vunpack.c.h.b16 %v826
  %v3909 = vunpack.c.l.b16 %v827
  %v3910 = vunpack.c.h.b16 %v827
  %v3911 = vunpack.c.l.b16 %v828
  %v3912 = vunpack.c.h.b16 %v828
  %v3913 = vunpack.c.l.b16 %v829
  %v3914 = vunpack.c.h.b16 %v829
  %v3915 = vunpack.c.l.b16 %v830
  %v3916 = vunpack.c.h.b16 %v830
  %v3917 = vunpack.c.l.b16 %v831
  %v3918 = vunpack.c.h.b16 %v831
  %v3919 = vunpack.c.l.b16 %v832
  %v3920 = vunpack.c.h.b16 %v832
  %v3921 = vunpack.c.l.b16 %v833
  %v3922 = vunpack.c.h.b16 %v833
  %v3923 = vunpack.c.l.b16 %v834
  %v3924 = vunpack.c.h.b16 %v834
  %v3925 = vunpack.c.l.b16 %v835
  %v3926 = vunpack.c.h.b16 %v835
  %v3927 = vunpack.c.l.b16 %v836
  %v3928 = vunpack.c.h.b16 %v836
  %v3929 = vunpack.c.l.b16 %v837
  %v3930 = vunpack.c.h.b16 %v837
  %v3931 = vunpack.c.l.b16 %v838
  %v3932 = vunpack.c.h.b16 %v838
  %v3933 = vunpack.c.l.b16 %v839
  %v3934 = vunpack.c.h.b16 %v839
  %v3935 = vunpack.c.l.b16 %v840
  %v3936 = vunpack.c.h.b16 %v840
  %v3937 = vunpack.c.l.b16 %v841
  %v3938 = vunpack.c.h.b16 %v841
  %v3939 = vunpack.c.l.b16 %v842
  %v3940 = vunpack.c.h.b16 %v842
  %v3941 = vunpack.c.l.b16 %v843
  %v3942 = vunpack.c.h.b16 %v843
  %v3943 = vunpack.c.l.b16 %v844
  %v3944 = vunpack.c.h.b16 %v844
  %v3945 = vunpack.c.l.b16 %v845
  %v3946 = vunpack.c.h.b16 %v845
  %v3947 = vunpack.c.l.b16 %v846
  %v3948 = vunpack.c.h.b16 %v846
  %v3949 = vunpack.c.l.b16 %v847
  %v3950 = vunpack.c.h.b16 %v847
  %v3951 = vunpack.c.l.b16 %v848
  %v3952 = vunpack.c.h.b16 %v848
  %v3953 = vunpack.c.l.b16 %v849
  %v3954 = vunpack.c.h.b16 %v849
  %v3955 = vunpack.c.l.b16 %v850
  %v3956 = vunpack.c.h.b16 %v850
  %v3957 = vunpack.c.l.b16 %v851
  %v3958 = vunpack.c.h.b16 %v851
  %v3959 = vunpack.c.l.b16 %v852
  %v3960 = vunpack.c.h.b16 %v852
  %v3961 = vunpack.c.l.b16 %v853
  %v3962 = vunpack.c.h.b16 %v853
  %v3963 = vunpack.c.l.b16 %v854
  %v3964 = vunpack.c.h.b16 %v854
  %v3965 = vunpack.c.l.b16 %v855
  %v3966 = vunpack.c.h.b16 %v855
  %v3967 = vunpack.c.l.b16 %v856
  %v3968 = vunpack.c.h.b16 %v856
  %v3969 = vunpack.c.l.b16 %v857
  %v3970 = vunpack.c.h.b16 %v857
  %v3971 = vunpack.c.l.b16 %v858
  %v3972 = vunpack.c.h.b16 %v858
  %v3973 = vunpack.c.l.b16 %v859
  %v3974 = vunpack.c.h.b16 %v859
  %v3975 = vunpack.c.l.b16 %v860
  %v3976 = vunpack.c.h.b16 %v860
  %v3977 = vunpack.c.l.b16 %v861
  %v3978 = vunpack.c.h.b16 %v861
  %v3979 = vunpack.c.l.b16 %v862
  %v3980 = vunpack.c.h.b16 %v862
  %v3981 = vunpack.c.l.b16 %v863
  %v3982 = vunpack.c.h.b16 %v863
  %v3983 = vunpack.c.l.b16 %v864
  %v3984 = vunpack.c.h.b16 %v864
  %v3985 = vunpack.c.l.b16 %v865
  %v3986 = vunpack.c.h.b16 %v865
  %v3987 = vunpack.c.l.b16 %v866
  %v3988 = vunpack.c.h.b16 %v866
  %v3989 = vunpack.c.l.b16 %v867
  %v3990 = vunpack.c.h.b16 %v867
  %v3991 = vunpack.c.l.b16 %v868
  %v3992 = vunpack.c.h.b16 %v868
  %v3993 = vunpack.c.l.b16 %v869
  %v3994 = vunpack.c.h.b16 %v869
  %v3995 = vunpack.c.l.b16 %v870
  %v3996 = vunpack.c.h.b16 %v870
  %v3997 = vunpack.c.l.b16 %v871
  %v3998 = vunpack.c.h.b16 %v871
  %v3999 = vunpack.c.l.b16 %v872
  %v4000 = vunpack.c.h.b16 %v872
  %v4001 = vunpack.c.l.b16 %v873
  %v4002 = vunpack.c.h.b16 %v873
  %v4003 = vunpack.c.l.b16 %v874
  %v4004 = vunpack.c.h.b16 %v874
  %v4005 = vunpack.c.l.b16 %v875
  %v4006 = vunpack.c.h.b16 %v875
  %v4007 = vunpack.c.l.b16 %v876
  %v4008 = vunpack.c.h.b16 %v876
  %v4009 = vunpack.c.l.b16 %v877
  %v4010 = vunpack.c.h.b16 %v877
  %v4011 = vunpack.c.l.b16 %v878
  %v4012 = vunpack.c.h.b16 %v878
  %v4013 = vunpack.c.l.b16 %v879
  %v4014 = vunpack.c.h.b16 %v879
  %v4015 = vunpack.c.l.b16 %v880
  %v4016 = vunpack.c.h.b16 %v880
  %v4017 = vunpack.c.l.b16 %v881
  %v4018 = vunpack.c.h.b16 %v881
  %v4019 = vunpack.c.l.b16 %v882
  %v4020 = vunpack.c.h.b16 %v882
  %v4021 = vunpack.c.l.b16 %v883
  %v4022 = vunpack.c.h.b16 %v883
  %v4023 = vunpack.c.l.b16 %v884
  %v4024 = vunpack.c.h.b16 %v884
  %v4025 = vunpack.c.l.b16 %v885
  %v4026 = vunpack.c.h.b16 %v885
  %v4027 = vunpack.c.l.b16 %v886
  %v4028 = vunpack.c.h.b16 %v886
  %v4029 = vunpack.c.l.b16 %v887
  %v4030 = vunpack.c.h.b16 %v887
  %v4031 = vunpack.c.l.b16 %v888
  %v4032 = vunpack.c.h.b16 %v888
  %v4033 = vunpack.c.l.b16 %v889
  %v4034 = vunpack.c.h.b16 %v889
  %v4035 = vunpack.c.l.b16 %v890
  %v4036 = vunpack.c.h.b16 %v890
  %v4037 = vunpack.c.l.b16 %v891
  %v4038 = vunpack.c.h.b16 %v891
  %v4039 = vunpack.c.l.b16 %v892
  %v4040 = vunpack.c.h.b16 %v892
  %v4041 = vunpack.c.l.b16 %v893
  %v4042 = vunpack.c.h.b16 %v893
  %v4043 = vunpack.c.l.b16 %v894
  %v4044 = vunpack.c.h.b16 %v894
  %v4045 = vunpack.c.l.b16 %v895
  %v4046 = vunpack.c.h.b16 %v895
  %v4047 = vunpack.c.l.b16 %v896
  %v4048 = vunpack.c.h.b16 %v896
  %v4049 = vunpack.c.l.b16 %v897
  %v4050 = vunpack.c.h.b16 %v897
  %v4051 = vunpack.c.l.b16 %v898
  %v4052 = vunpack.c.h.b16 %v898
  %v4053 = vunpack.c.l.b16 %v899
  %v4054 = vunpack.c.h.b16 %v899
  %v4055 = vunpack.c.l.b16 %v900
  %v4056 = vunpack.c.h.b16 %v900
  %v4057 = vunpack.c.l.b16 %v901
  %v4058 = vunpack.c.h.b16 %v901
  %v4059 = vunpack.c.l.b16 %v902
  %v4060 = vunpack.c.h.b16 %v902
  %v4061 = vunpack.c.l.b16 %v903
  %v4062 = vunpack.c.h.b16 %v903
  %v4063 = vunpack.c.l.b16 %v904
  %v4064 = vunpack.c.h.b16 %v904
  %v4065 = vunpack.c.l.b16 %v905
  %v4066 = vunpack.c.h.b16 %v905
  %v4067 = vunpack.c.l.b16 %v906
  %v4068 = vunpack.c.h.b16 %v906
  %v4069 = vunpack.c.l.b16 %v907
  %v4070 = vunpack.c.h.b16 %v907
  %v4071 = vunpack.c.l.b16 %v908
  %v4072 = vunpack.c.h.b16 %v908
  %v4073 = vunpack.c.l.b16 %v909
  %v4074 = vunpack.c.h.b16 %v909
  %v4075 = vunpack.c.l.b16 %v910
  %v4076 = vunpack.c.h.b16 %v910
  %v4077 = vunpack.c.l.b16 %v911
  %v4078 = vunpack.c.h.b16 %v911
  %v4079 = vunpack.c.l.b16 %v912
  %v4080 = vunpack.c.h.b16 %v912
  %v4081 = vunpack.c.l.b16 %v913
  %v4082 = vunpack.c.h.b16 %v913
  %v4083 = vunpack.c.l.b16 %v914
  %v4084 = vunpack.c.h.b16 %v914
  %v4085 = vunpack.c.l.b16 %v915
  %v4086 = vunpack.c.h.b16 %v915
  %v4087 = vunpack.c.l.b16 %v916
  %v4088 = vunpack.c.h.b16 %v916
  %v4089 = vunpack.c.l.b16 %v917
  %v4090 = vunpack.c.h.b16 %v917
  %v4091 = vunpack.c.l.b16 %v918
  %v4092 = vunpack.c.h.b16 %v918
  %v4093 = vunpack.c.l.b16 %v919
  %v4094 = vunpack.c.h.b16 %v919
  %v4095 = vunpack.c.l.b16 %v920
  %v4096 = vunpack.c.h.b16 %v920
  %v4097 = vunpack.c.l.b16 %v921
  %v4098 = vunpack.c.h.b16 %v921
  %v4099 = vunpack.c.l.b16 %v922
  %v4100 = vunpack.c.h.b16 %v922
  %v4101 = vunpack.c.l.b16 %v923
  %v4102 = vunpack.c.h.b16 %v923
  %v4103 = vunpack.c.l.b16 %v924
  %v4104 = vunpack.c.h.b16 %v924
  %v4105 = vunpack.c.l.b16 %v925
  %v4106 = vunpack.c.h.b16 %v925
  %v4107 = vunpack.c.l.b16 %v926
  %v4108 = vunpack.c.h.b16 %v926
  %v4109 = vunpack.c.l.b16 %v927
  %v4110 = vunpack.c.h.b16 %v927
  %v4111 = vunpack.c.l.b16 %v928
  %v4112 = vunpack.c.h.b16 %v928
  %v4113 = vunpack.c.l.b16 %v929
  %v4114 = vunpack.c.h.b16 %v929
  %v4115 = vunpack.c.l.b16 %v930
  %v4116 = vunpack.c.h.b16 %v930
  %v4117 = vunpack.c.l.b16 %v931
  %v4118 = vunpack.c.h.b16 %v931
  %v4119 = vunpack.c.l.b16 %v932
  %v4120 = vunpack.c.h.b16 %v932
  %v4121 = vunpack.c.l.b16 %v933
  %v4122 = vunpack.c.h.b16 %v933
  %v4123 = vunpack.c.l.b16 %v934
  %v4124 = vunpack.c.h.b16 %v934
  %v4125 = vunpack.c.l.b16 %v935
  %v4126 = vunpack.c.h.b16 %v935
  %v4127 = vunpack.c.l.b16 %v936
  %v4128 = vunpack.c.h.b16 %v936
  %v4129 = vunpack.c.l.b16 %v937
  %v4130 = vunpack.c.h.b16 %v937
  %v4131 = vunpack.c.l.b16 %v938
  %v4132 = vunpack.c.h.b16 %v938
  %v4133 = vunpack.c.l.b16 %v939
  %v4134 = vunpack.c.h.b16 %v939
  %v4135 = vunpack.c.l.b16 %v940
  %v4136 = vunpack.c.h.b16 %v940
  %v4137 = vunpack.c.l.b16 %v941
  %v4138 = vunpack.c.h.b16 %v941
  %v4139 = vunpack.c.l.b16 %v942
  %v4140 = vunpack.c.h.b16 %v942
  %v4141 = vunpack.c.l.b16 %v943
  %v4142 = vunpack.c.h.b16 %v943
  %v4143 = vunpack.c.l.b16 %v944
  %v4144 = vunpack.c.h.b16 %v944
  %v4145 = vunpack.c.l.b16 %v945
  %v4146 = vunpack.c.h.b16 %v945
  %v4147 = vunpack.c.l.b16 %v946
  %v4148 = vunpack.c.h.b16 %v946
  %v4149 = vunpack.c.l.b16 %v947
  %v4150 = vunpack.c.h.b16 %v947
  %v4151 = vunpack.c.l.b16 %v948
  %v4152 = vunpack.c.h.b16 %v948
  %v4153 = vunpack.c.l.b16 %v949
  %v4154 = vunpack.c.h.b16 %v949
  %v4155 = vunpack.c.l.b16 %v950
  %v4156 = vunpack.c.h.b16 %v950
  %v4157 = vunpack.c.l.b16 %v951
  %v4158 = vunpack.c.h.b16 %v951
  %v4159 = vunpack.c.l.b16 %v952
  %v4160 = vunpack.c.h.b16 %v952
  %v4161 = vunpack.c.l.b16 %v953
  %v4162 = vunpack.c.h.b16 %v953
  %v4163 = vunpack.c.l.b16 %v954
  %v4164 = vunpack.c.h.b16 %v954
  %v4165 = vunpack.c.l.b16 %v955
  %v4166 = vunpack.c.h.b16 %v955
  %v4167 = vunpack.c.l.b16 %v956
  %v4168 = vunpack.c.h.b16 %v956
  %v4169 = vunpack.c.l.b16 %v957
  %v4170 = vunpack.c.h.b16 %v957
  %v4171 = vunpack.c.l.b16 %v958
  %v4172 = vunpack.c.h.b16 %v958
  %v4173 = vunpack.c.l.b16 %v959
  %v4174 = vunpack.c.h.b16 %v959
  %v4175 = vunpack.c.l.b16 %v960
  %v4176 = vunpack.c.h.b16 %v960
  %v4177 = vunpack.c.l.b16 %v961
  %v4178 = vunpack.c.h.b16 %v961
  %v4179 = vunpack.c.l.b16 %v962
  %v4180 = vunpack.c.h.b16 %v962
  %v4181 = vunpack.c.l.b16 %v963
  %v4182 = vunpack.c.h.b16 %v963
  %v4183 = vunpack.c.l.b16 %v964
  %v4184 = vunpack.c.h.b16 %v964
  %v4185 = vunpack.c.l.b16 %v965
  %v4186 = vunpack.c.h.b16 %v965
  %v4187 = vunpack.c.l.b16 %v966
  %v4188 = vunpack.c.h.b16 %v966
  %v4189 = vunpack.c.l.b16 %v967
  %v4190 = vunpack.c.h.b16 %v967
  %v4191 = vunpack.c.l.b16 %v968
  %v4192 = vunpack.c.h.b16 %v968
  %v4193 = vunpack.c.l.b16 %v969
  %v4194 = vunpack.c.h.b16 %v969
  %v4195 = vunpack.c.l.b16 %v970
  %v4196 = vunpack.c.h.b16 %v970
  %v4197 = vunpack.c.l.b16 %v971
  %v4198 = vunpack.c.h.b16 %v971
  %v4199 = vunpack.c.l.b16 %v972
  %v4200 = vunpack.c.h.b16 %v972
  %v4201 = vunpack.c.l.b16 %v973
  %v4202 = vunpack.c.h.b16 %v973
  %v4203 = vunpack.c.l.b16 %v974
  %v4204 = vunpack.c.h.b16 %v974
  %v4205 = vunpack.c.l.b16 %v975
  %v4206 = vunpack.c.h.b16 %v975
  %v4207 = vunpack.c.l.b16 %v976
  %v4208 = vunpack.c.h.b16 %v976
  %v4209 = vunpack.c.l.b16 %v977
  %v4210 = vunpack.c.h.b16 %v977
  %v4211 = vunpack.c.l.b16 %v978
  %v4212 = vunpack.c.h.b16 %v978
  %v4213 = vunpack.c.l.b16 %v979
  %v4214 = vunpack.c.h.b16 %v979
  %v4215 = vunpack.c.l.b16 %v980
  %v4216 = vunpack.c.h.b16 %v980
  %v4217 = vunpack.c.l.b16 %v981
  %v4218 = vunpack.c.h.b16 %v981
  %v4219 = vunpack.c.l.b16 %v982
  %v4220 = vunpack.c.h.b16 %v982
  %v4221 = vunpack.c.l.b16 %v983
  %v4222 = vunpack.c.h.b16 %v983
  %v4223 = vunpack.c.l.b16 %v984
  %v4224 = vunpack.c.h.b16 %v984
  %v4225 = vunpack.c.l.b16 %v985
  %v4226 = vunpack.c.h.b16 %v985
  %v4227 = vunpack.c.l.b16 %v986
  %v4228 = vunpack.c.h.b16 %v986
  %v4229 = vunpack.c.l.b16 %v987
  %v4230 = vunpack.c.h.b16 %v987
  %v4231 = vunpack.c.l.b16 %v988
  %v4232 = vunpack.c.h.b16 %v988
  %v4233 = vunpack.c.l.b16 %v989
  %v4234 = vunpack.c.h.b16 %v989
  %v4235 = vunpack.c.l.b16 %v990
  %v4236 = vunpack.c.h.b16 %v990
  %v4237 = vunpack.c.l.b16 %v991
  %v4238 = vunpack.c.h.b16 %v991
  %v4239 = vunpack.c.l.b16 %v992
  %v4240 = vunpack.c.h.b16 %v992
  %v4241 = vunpack.c.l.b16 %v993
  %v4242 = vunpack.c.h.b16 %v993
  %v4243 = vunpack.c.l.b16 %v994
  %v4244 = vunpack.c.h.b16 %v994
  %v4245 = vunpack.c.l.b16 %v995
  %v4246 = vunpack.c.h.b16 %v995
  %v4247 = vunpack.c.l.b16 %v996
  %v4248 = vunpack.c.h.b16 %v996
  %v4249 = vunpack.c.l.b16 %v997
  %v4250 = vunpack.c.h.b16 %v997
  %v4251 = vunpack.c.l.b16 %v998
  %v4252 = vunpack.c.h.b16 %v998
  %v4253 = vunpack.c.l.b16 %v999
  %v4254 = vunpack.c.h.b16 %v999
  %v4255 = vunpack.c.l.b16 %v1000
  %v4256 = vunpack.c.h.b16 %v1000
  %v4257 = vunpack.c.l.b16 %v1001
  %v4258 = vunpack.c.h.b16 %v1001
  %v4259 = vunpack.c.l.b16 %v1002
  %v4260 = vunpack.c.h.b16 %v1002
  %v4261 = vunpack.c.l.b16 %v1003
  %v4262 = vunpack.c.h.b16 %v1003
  %v4263 = vunpack.c.l.b16 %v1004
  %v4264 = vunpack.c.h.b16 %v1004
  %v4265 = vunpack.c.l.b16 %v1005
  %v4266 = vunpack.c.h.b16 %v1005
  %v4267 = vunpack.c.l.b16 %v1006
  %v4268 = vunpack.c.h.b16 %v1006
  %v4269 = vunpack.c.l.b16 %v1007
  %v4270 = vunpack.c.h.b16 %v1007
  %v4271 = vunpack.c.l.b16 %v1008
  %v4272 = vunpack.c.h.b16 %v1008
  %v4273 = vunpack.c.l.b16 %v1009
  %v4274 = vunpack.c.h.b16 %v1009
  %v4275 = vunpack.c.l.b16 %v1010
  %v4276 = vunpack.c.h.b16 %v1010
  %v4277 = vunpack.c.l.b16 %v1011
  %v4278 = vunpack.c.h.b16 %v1011
  %v4279 = vunpack.c.l.b16 %v1012
  %v4280 = vunpack.c.h.b16 %v1012
  %v4281 = vunpack.c.l.b16 %v1013
  %v4282 = vunpack.c.h.b16 %v1013
  %v4283 = vunpack.c.l.b16 %v1014
  %v4284 = vunpack.c.h.b16 %v1014
  %v4285 = vunpack.c.l.b16 %v1015
  %v4286 = vunpack.c.h.b16 %v1015
  %v4287 = vunpack.c.l.b16 %v1016
  %v4288 = vunpack.c.h.b16 %v1016
  %v4289 = vunpack.c.l.b16 %v1017
  %v4290 = vunpack.c.h.b16 %v1017
  %v4291 = vunpack.c.l.b16 %v1018
  %v4292 = vunpack.c.h.b16 %v1018
  %v4293 = vunpack.c.l.b16 %v1019
  %v4294 = vunpack.c.h.b16 %v1019
  %v4295 = vunpack.c.l.b16 %v1020
  %v4296 = vunpack.c.h.b16 %v1020
  %v4297 = vunpack.c.l.b16 %v1021
  %v4298 = vunpack.c.h.b16 %v1021
  %v4299 = vunpack.c.l.b16 %v1022
  %v4300 = vunpack.c.h.b16 %v1022
  %v4301 = vunpack.c.l.b16 %v1023
  %v4302 = vunpack.c.h.b16 %v1023
  %v4303 = vunpack.c.l.b16 %v1024
  %v4304 = vunpack.c.h.b16 %v1024
  %v4305 = vunpack.c.l.b16 %v1025
  %v4306 = vunpack.c.h.b16 %v1025
  %v4307 = vunpack.c.l.b16 %v1026
  %v4308 = vunpack.c.h.b16 %v1026
  %v4309 = vunpack.c.l.b16 %v1027
  %v4310 = vunpack.c.h.b16 %v1027
  %v4311 = vunpack.c.l.b16 %v1028
  %v4312 = vunpack.c.h.b16 %v1028
  %v4313 = vunpack.c.l.b16 %v1029
  %v4314 = vunpack.c.h.b16 %v1029
  %v4315 = vunpack.c.l.b16 %v1030
  %v4316 = vunpack.c.h.b16 %v1030
  %v4317 = vunpack.c.l.b16 %v1031
  %v4318 = vunpack.c.h.b16 %v1031
  %v4319 = vunpack.c.l.b16 %v1032
  %v4320 = vunpack.c.h.b16 %v1032
  %v4321 = vunpack.c.l.b16 %v1033
  %v4322 = vunpack.c.h.b16 %v1033
  %v4323 = vunpack.c.l.b16 %v1034
  %v4324 = vunpack.c.h.b16 %v1034
  %v4325 = vunpack.c.l.b16 %v1035
  %v4326 = vunpack.c.h.b16 %v1035
  %v4327 = vunpack.c.l.b16 %v1036
  %v4328 = vunpack.c.h.b16 %v1036
  %v4329 = vunpack.c.l.b16 %v1037
  %v4330 = vunpack.c.h.b16 %v1037
  %v4331 = vunpack.c.l.b16 %v1038
  %v4332 = vunpack.c.h.b16 %v1038
  %v4333 = vunpack.c.l.b16 %v1039
  %v4334 = vunpack.c.h.b16 %v1039
  %v4335 = vunpack.c.l.b16 %v1040
  %v4336 = vunpack.c.h.b16 %v1040
  %v4337 = vunpack.c.l.b16 %v1041
  %v4338 = vunpack.c.h.b16 %v1041
  %v4339 = vunpack.c.l.b16 %v1042
  %v4340 = vunpack.c.h.b16 %v1042
  %v4341 = vunpack.c.l.b16 %v1043
  %v4342 = vunpack.c.h.b16 %v1043
  %v4343 = vunpack.c.l.b16 %v1044
  %v4344 = vunpack.c.h.b16 %v1044
  %v4345 = vunpack.c.l.b16 %v1045
  %v4346 = vunpack.c.h.b16 %v1045
  %v4347 = vunpack.c.l.b16 %v1046
  %v4348 = vunpack.c.h.b16 %v1046
  %v4349 = vunpack.c.l.b16 %v1047
  %v4350 = vunpack.c.h.b16 %v1047
  %v4351 = vunpack.c.l.b16 %v1048
  %v4352 = vunpack.c.h.b16 %v1048
  %v4353 = vunpack.c.l.b16 %v1049
  %v4354 = vunpack.c.h.b16 %v1049
  %v4355 = vunpack.c.l.b16 %v1050
  %v4356 = vunpack.c.h.b16 %v1050
  %v4357 = vunpack.c.l.b16 %v1051
  %v4358 = vunpack.c.h.b16 %v1051
  %v4359 = vunpack.c.l.b16 %v1052
  %v4360 = vunpack.c.h.b16 %v1052
  %v4361 = vunpack.c.l.b16 %v1053
  %v4362 = vunpack.c.h.b16 %v1053
  %v4363 = vunpack.c.l.b16 %v1054
  %v4364 = vunpack.c.h.b16 %v1054
  %v4365 = vunpack.c.l.b16 %v1055
  %v4366 = vunpack.c.h.b16 %v1055
  %v4367 = vunpack.c.l.b16 %v1056
  %v4368 = vunpack.c.h.b16 %v1056
  %v4369 = vunpack.c.l.b16 %v1057
  %v4370 = vunpack.c.h.b16 %v1057
  %v4371 = vunpack.c.l.b16 %v1058
  %v4372 = vunpack.c.h.b16 %v1058
  %v4373 = vunpack.c.l.b16 %v1059
  %v4374 = vunpack.c.h.b16 %v1059
  %v4375 = vunpack.c.l.b16 %v1060
  %v4376 = vunpack.c.h.b16 %v1060
  %v4377 = vunpack.c.l.b16 %v1061
  %v4378 = vunpack.c.h.b16 %v1061
  %v4379 = vunpack.c.l.b16 %v1062
  %v4380 = vunpack.c.h.b16 %v1062
  %v4381 = vunpack.c.l.b16 %v1063
  %v4382 = vunpack.c.h.b16 %v1063
  %v4383 = vunpack.c.l.b16 %v1064
  %v4384 = vunpack.c.h.b16 %v1064
  %v4385 = vunpack.c.l.b16 %v1065
  %v4386 = vunpack.c.h.b16 %v1065
  %v4387 = vunpack.c.l.b16 %v1066
  %v4388 = vunpack.c.h.b16 %v1066
  %v4389 = vunpack.c.l.b16 %v1067
  %v4390 = vunpack.c.h.b16 %v1067
  %v4391 = vunpack.c.l.b16 %v1068
  %v4392 = vunpack.c.h.b16 %v1068
  %v4393 = vunpack.c.l.b16 %v1069
  %v4394 = vunpack.c.h.b16 %v1069
  %v4395 = vunpack.c.l.b16 %v1070
  %v4396 = vunpack.c.h.b16 %v1070
  %v4397 = vunpack.c.l.b16 %v1071
  %v4398 = vunpack.c.h.b16 %v1071
  %v4399 = vunpack.c.l.b16 %v1072
  %v4400 = vunpack.c.h.b16 %v1072
  %v4401 = vunpack.c.l.b16 %v1073
  %v4402 = vunpack.c.h.b16 %v1073
  %v4403 = vunpack.c.l.b16 %v1074
  %v4404 = vunpack.c.h.b16 %v1074
  %v4405 = vunpack.c.l.b16 %v1075
  %v4406 = vunpack.c.h.b16 %v1075
  %v4407 = vunpack.c.l.b16 %v1076
  %v4408 = vunpack.c.h.b16 %v1076
  %v4409 = vunpack.c.l.b16 %v1077
  %v4410 = vunpack.c.h.b16 %v1077
  %v4411 = vunpack.c.l.b16 %v1078
  %v4412 = vunpack.c.h.b16 %v1078
  %v4413 = vunpack.c.l.b16 %v1079
  %v4414 = vunpack.c.h.b16 %v1079
  %v4415 = vunpack.c.l.b16 %v1080
  %v4416 = vunpack.c.h.b16 %v1080
  %v4417 = vunpack.c.l.b16 %v1081
  %v4418 = vunpack.c.h.b16 %v1081
  %v4419 = vunpack.c.l.b16 %v1082
  %v4420 = vunpack.c.h.b16 %v1082
  %v4421 = vunpack.c.l.b16 %v1083
  %v4422 = vunpack.c.h.b16 %v1083
  %v4423 = vunpack.c.l.b16 %v1084
  %v4424 = vunpack.c.h.b16 %v1084
  %v4425 = vunpack.c.l.b16 %v1085
  %v4426 = vunpack.c.h.b16 %v1085
  %v4427 = vunpack.c.l.b16 %v1086
  %v4428 = vunpack.c.h.b16 %v1086
  %v4429 = vunpack.c.l.b16 %v1087
  %v4430 = vunpack.c.h.b16 %v1087
  %v4431 = vunpack.c.l.b16 %v1088
  %v4432 = vunpack.c.h.b16 %v1088
  %v4433 = vpack.c.b16 %v2389, %v2385
  %v4434 = vpack.c.b16 %v2390, %v2386
  %v4435 = vpack.c.b16 %v2391, %v2387
  %v4436 = vpack.c.b16 %v2392, %v2388
  %v4437 = vpack.c.b16 %v2397, %v2393
  %v4438 = vpack.c.b16 %v2398, %v2394
  %v4439 = vpack.c.b16 %v2399, %v2395
  %v4440 = vpack.c.b16 %v2400, %v2396
  %v4441 = vpack.c.b16 %v2405, %v2401
  %v4442 = vpack.c.b16 %v2406, %v2402
  %v4443 = vpack.c.b16 %v2407, %v2403
  %v4444 = vpack.c.b16 %v2408, %v2404
  %v4445 = vpack.c.b16 %v2413, %v2409
  %v4446 = vpack.c.b16 %v2414, %v2410
  %v4447 = vpack.c.b16 %v2415, %v2411
  %v4448 = vpack.c.b16 %v2416, %v2412
  %v4449 = vpack.c.b16 %v2421, %v2417
  %v4450 = vpack.c.b16 %v2422, %v2418
  %v4451 = vpack.c.b16 %v2423, %v2419
  %v4452 = vpack.c.b16 %v2424, %v2420
  %v4453 = vpack.c.b16 %v2429, %v2425
  %v4454 = vpack.c.b16 %v2430, %v2426
  %v4455 = vpack.c.b16 %v2431, %v2427
  %v4456 = vpack.c.b16 %v2432, %v2428
  %v4457 = vpack.c.b16 %v2437, %v2433
  %v4458 = vpack.c.b16 %v2438, %v2434
  %v4459 = vpack.c.b16 %v2439, %v2435
  %v4460 = vpack.c.b16 %v2440, %v2436
  %v4461 = vpack.c.b16 %v2445, %v2441
  %v4462 = vpack.c.b16 %v2446, %v2442
  %v4463 = vpack.c.b16 %v2447, %v2443
  %v4464 = vpack.c.b16 %v2448, %v2444
  %v4465 = vpack.c.b16 %v2453, %v2449
  %v4466 = vpack.c.b16 %v2454, %v2450
  %v4467 = vpack.c.b16 %v2455, %v2451
  %v4468 = vpack.c.b16 %v2456, %v2452
  %v4469 = vpack.c.b16 %v2461, %v2457
  %v4470 = vpack.c.b16 %v2462, %v2458
  %v4471 = vpack.c.b16 %v2463, %v2459
  %v4472 = vpack.c.b16 %v2464, %v2460
  %v4473 = vpack.c.b16 %v2469, %v2465
  %v4474 = vpack.c.b16 %v2470, %v2466
  %v4475 = vpack.c.b16 %v2471, %v2467
  %v4476 = vpack.c.b16 %v2472, %v2468
  %v4477 = vpack.c.b16 %v2477, %v2473
  %v4478 = vpack.c.b16 %v2478, %v2474
  %v4479 = vpack.c.b16 %v2479, %v2475
  %v4480 = vpack.c.b16 %v2480, %v2476
  %v4481 = vpack.c.b16 %v2485, %v2481
  %v4482 = vpack.c.b16 %v2486, %v2482
  %v4483 = vpack.c.b16 %v2487, %v2483
  %v4484 = vpack.c.b16 %v2488, %v2484
  %v4485 = vpack.c.b16 %v2493, %v2489
  %v4486 = vpack.c.b16 %v2494, %v2490
  %v4487 = vpack.c.b16 %v2495, %v2491
  %v4488 = vpack.c.b16 %v2496, %v2492
  %v4489 = vpack.c.b16 %v2501, %v2497
  %v4490 = vpack.c.b16 %v2502, %v2498
  %v4491 = vpack.c.b16 %v2503, %v2499
  %v4492 = vpack.c.b16 %v2504, %v2500
  %v4493 = vpack.c.b16 %v2509, %v2505
  %v4494 = vpack.c.b16 %v2510, %v2506
  %v4495 = vpack.c.b16 %v2511, %v2507
  %v4496 = vpack.c.b16 %v2512, %v2508
  %v4497 = vpack.c.b16 %v2517, %v2513
  %v4498 = vpack.c.b16 %v2518, %v2514
  %v4499 = vpack.c.b16 %v2519, %v2515
  %v4500 = vpack.c.b16 %v2520, %v2516
  %v4501 = vpack.c.b16 %v2525, %v2521
  %v4502 = vpack.c.b16 %v2526, %v2522
  %v4503 = vpack.c.b16 %v2527, %v2523
  %v4504 = vpack.c.b16 %v2528, %v2524
  %v4505 = vpack.c.b16 %v2533, %v2529
  %v4506 = vpack.c.b16 %v2534, %v2530
  %v4507 = vpack.c.b16 %v2535, %v2531
  %v4508 = vpack.c.b16 %v2536, %v2532
  %v4509 = vpack.c.b16 %v2541, %v2537
  %v4510 = vpack.c.b16 %v2542, %v2538
  %v4511 = vpack.c.b16 %v2543, %v2539
  %v4512 = vpack.c.b16 %v2544, %v2540
  %v4513 = vpack.c.b16 %v2549, %v2545
  %v4514 = vpack.c.b16 %v2550, %v2546
  %v4515 = vpack.c.b16 %v2551, %v2547
  %v4516 = vpack.c.b16 %v2552, %v2548
  %v4517 = vpack.c.b16 %v2557, %v2553
  %v4518 = vpack.c.b16 %v2558, %v2554
  %v4519 = vpack.c.b16 %v2559, %v2555
  %v4520 = vpack.c.b16 %v2560, %v2556
  %v4521 = vpack.c.b16 %v2565, %v2561
  %v4522 = vpack.c.b16 %v2566, %v2562
  %v4523 = vpack.c.b16 %v2567, %v2563
  %v4524 = vpack.c.b16 %v2568, %v2564
  %v4525 = vpack.c.b16 %v2573, %v2569
  %v4526 = vpack.c.b16 %v2574, %v2570
  %v4527 = vpack.c.b16 %v2575, %v2571
  %v4528 = vpack.c.b16 %v2576, %v2572
  %v4529 = vpack.c.b16 %v2581, %v2577
  %v4530 = vpack.c.b16 %v2582, %v2578
  %v4531 = vpack.c.b16 %v2583, %v2579
  %v4532 = vpack.c.b16 %v2584, %v2580
  %v4533 = vpack.c.b16 %v2589, %v2585
  %v4534 = vpack.c.b16 %v2590, %v2586
  %v4535 = vpack.c.b16 %v2591, %v2587
  %v4536 = vpack.c.b16 %v2592, %v2588
  %v4537 = vpack.c.b16 %v2597, %v2593
  %v4538 = vpack.c.b16 %v2598, %v2594
  %v4539 = vpack.c.b16 %v2599, %v2595
  %v4540 = vpack.c.b16 %v2600, %v2596
  %v4541 = vpack.c.b16 %v2605, %v2601
  %v4542 = vpack.c.b16 %v2606, %v2602
  %v4543 = vpack.c.b16 %v2607, %v2603
  %v4544 = vpack.c.b16 %v2608, %v2604
  %v4545 = vpack.c.b16 %v2613, %v2609
  %v4546 = vpack.c.b16 %v2614, %v2610
  %v4547 = vpack.c.b16 %v2615, %v2611
  %v4548 = vpack.c.b16 %v2616, %v2612
  %v4549 = vpack.c.b16 %v2621, %v2617
  %v4550 = vpack.c.b16 %v2622, %v2618
  %v4551 = vpack.c.b16 %v2623, %v2619
  %v4552 = vpack.c.b16 %v2624, %v2620
  %v4553 = vpack.c.b16 %v2629, %v2625
  %v4554 = vpack.c.b16 %v2630, %v2626
  %v4555 = vpack.c.b16 %v2631, %v2627
  %v4556 = vpack.c.b16 %v2632, %v2628
  %v4557 = vpack.c.b16 %v2637, %v2633
  %v4558 = vpack.c.b16 %v2638, %v2634
  %v4559 = vpack.c.b16 %v2639, %v2635
  %v4560 = vpack.c.b16 %v2640, %v2636
  %v4561 = vpack.c.b16 %v2645, %v2641
  %v4562 = vpack.c.b16 %v2646, %v2642
  %v4563 = vpack.c.b16 %v2647, %v2643
  %v4564 = vpack.c.b16 %v2648, %v2644
  %v4565 = vpack.c.b16 %v2653, %v2649
  %v4566 = vpack.c.b16 %v2654, %v2650
  %v4567 = vpack.c.b16 %v2655, %v2651
  %v4568 = vpack.c.b16 %v2656, %v2652
  %v4569 = vpack.c.b16 %v2661, %v2657
  %v4570 = vpack.c.b16 %v2662, %v2658
  %v4571 = vpack.c.b16 %v2663, %v2659
  %v4572 = vpack.c.b16 %v2664, %v2660
  %v4573 = vpack.c.b16 %v2669, %v2665
  %v4574 = vpack.c.b16 %v2670, %v2666
  %v4575 = vpack.c.b16 %v2671, %v2667
  %v4576 = vpack.c.b16 %v2672, %v2668
  %v4577 = vpack.c.b16 %v2677, %v2673
  %v4578 = vpack.c.b16 %v2678, %v2674
  %v4579 = vpack.c.b16 %v2679, %v2675
  %v4580 = vpack.c.b16 %v2680, %v2676
  %v4581 = vpack.c.b16 %v2685, %v2681
  %v4582 = vpack.c.b16 %v2686, %v2682
  %v4583 = vpack.c.b16 %v2687, %v2683
  %v4584 = vpack.c.b16 %v2688, %v2684
  %v4585 = vpack.c.b16 %v2693, %v2689
  %v4586 = vpack.c.b16 %v2694, %v2690
  %v4587 = vpack.c.b16 %v2695, %v2691
  %v4588 = vpack.c.b16 %v2696, %v2692
  %v4589 = vpack.c.b16 %v2701, %v2697
  %v4590 = vpack.c.b16 %v2702, %v2698
  %v4591 = vpack.c.b16 %v2703, %v2699
  %v4592 = vpack.c.b16 %v2704, %v2700
  %v4593 = vpack.c.b16 %v2709, %v2705
  %v4594 = vpack.c.b16 %v2710, %v2706
  %v4595 = vpack.c.b16 %v2711, %v2707
  %v4596 = vpack.c.b16 %v2712, %v2708
  %v4597 = vpack.c.b16 %v2717, %v2713
  %v4598 = vpack.c.b16 %v2718, %v2714
  %v4599 = vpack.c.b16 %v2719, %v2715
  %v4600 = vpack.c.b16 %v2720, %v2716
  %v4601 = vpack.c.b16 %v2725, %v2721
  %v4602 = vpack.c.b16 %v2726, %v2722
  %v4603 = vpack.c.b16 %v2727, %v2723
  %v4604 = vpack.c.b16 %v2728, %v2724
  %v4605 = vpack.c.b16 %v2733, %v2729
  %v4606 = vpack.c.b16 %v2734, %v2730
  %v4607 = vpack.c.b16 %v2735, %v2731
  %v4608 = vpack.c.b16 %v2736, %v2732
  %v4609 = vpack.c.b16 %v2741, %v2737
  %v4610 = vpack.c.b16 %v2742, %v2738
  %v4611 = vpack.c.b16 %v2743, %v2739
  %v4612 = vpack.c.b16 %v2744, %v2740
  %v4613 = vpack.c.b16 %v2749, %v2745
  %v4614 = vpack.c.b16 %v2750, %v2746
  %v4615 = vpack.c.b16 %v2751, %v2747
  %v4616 = vpack.c.b16 %v2752, %v2748
  %v4617 = vpack.c.b16 %v2757, %v2753
  %v4618 = vpack.c.b16 %v2758, %v2754
  %v4619 = vpack.c.b16 %v2759, %v2755
  %v4620 = vpack.c.b16 %v2760, %v2756
  %v4621 = vpack.c.b16 %v2765, %v2761
  %v4622 = vpack.c.b16 %v2766, %v2762
  %v4623 = vpack.c.b16 %v2767, %v2763
  %v4624 = vpack.c.b16 %v2768, %v2764
  %v4625 = vpack.c.b16 %v2773, %v2769
  %v4626 = vpack.c.b16 %v2774, %v2770
  %v4627 = vpack.c.b16 %v2775, %v2771
  %v4628 = vpack.c.b16 %v2776, %v2772
  %v4629 = vpack.c.b16 %v2781, %v2777
  %v4630 = vpack.c.b16 %v2782, %v2778
  %v4631 = vpack.c.b16 %v2783, %v2779
  %v4632 = vpack.c.b16 %v2784, %v2780
  %v4633 = vpack.c.b16 %v2789, %v2785
  %v4634 = vpack.c.b16 %v2790, %v2786
  %v4635 = vpack.c.b16 %v2791, %v2787
  %v4636 = vpack.c.b16 %v2792, %v2788
  %v4637 = vpack.c.b16 %v2797, %v2793
  %v4638 = vpack.c.b16 %v2798, %v2794
  %v4639 = vpack.c.b16 %v2799, %v2795
  %v4640 = vpack.c.b16 %v2800, %v2796
  %v4641 = vpack.c.b16 %v2805, %v2801
  %v4642 = vpack.c.b16 %v2806, %v2802
  %v4643 = vpack.c.b16 %v2807, %v2803
  %v4644 = vpack.c.b16 %v2808, %v2804
  %v4645 = vpack.c.b16 %v2813, %v2809
  %v4646 = vpack.c.b16 %v2814, %v2810
  %v4647 = vpack.c.b16 %v2815, %v2811
  %v4648 = vpack.c.b16 %v2816, %v2812
  %v4649 = vpack.c.b16 %v2821, %v2817
  %v4650 = vpack.c.b16 %v2822, %v2818
  %v4651 = vpack.c.b16 %v2823, %v2819
  %v4652 = vpack.c.b16 %v2824, %v2820
  %v4653 = vpack.c.b16 %v2829, %v2825
  %v4654 = vpack.c.b16 %v2830, %v2826
  %v4655 = vpack.c.b16 %v2831, %v2827
  %v4656 = vpack.c.b16 %v2832, %v2828
  %v4657 = vpack.c.b16 %v2837, %v2833
  %v4658 = vpack.c.b16 %v2838, %v2834
  %v4659 = vpack.c.b16 %v2839, %v2835
  %v4660 = vpack.c.b16 %v2840, %v2836
  %v4661 = vpack.c.b16 %v2845, %v2841
  %v4662 = vpack.c.b16 %v2846, %v2842
  %v4663 = vpack.c.b16 %v2847, %v2843
  %v4664 = vpack.c.b16 %v2848, %v2844
  %v4665 = vpack.c.b16 %v2853, %v2849
  %v4666 = vpack.c.b16 %v2854, %v2850
  %v4667 = vpack.c.b16 %v2855, %v2851
  %v4668 = vpack.c.b16 %v2856, %v2852
  %v4669 = vpack.c.b16 %v2861, %v2857
  %v4670 = vpack.c.b16 %v2862, %v2858
  %v4671 = vpack.c.b16 %v2863, %v2859
  %v4672 = vpack.c.b16 %v2864, %v2860
  %v4673 = vpack.c.b16 %v2869, %v2865
  %v4674 = vpack.c.b16 %v2870, %v2866
  %v4675 = vpack.c.b16 %v2871, %v2867
  %v4676 = vpack.c.b16 %v2872, %v2868
  %v4677 = vpack.c.b16 %v2877, %v2873
  %v4678 = vpack.c.b16 %v2878, %v2874
  %v4679 = vpack.c.b16 %v2879, %v2875
  %v4680 = vpack.c.b16 %v2880, %v2876
  %v4681 = vpack.c.b16 %v2885, %v2881
  %v4682 = vpack.c.b16 %v2886, %v2882
  %v4683 = vpack.c.b16 %v2887, %v2883
  %v4684 = vpack.c.b16 %v2888, %v2884
  %v4685 = vpack.c.b16 %v2893, %v2889
  %v4686 = vpack.c.b16 %v2894, %v2890
  %v4687 = vpack.c.b16 %v2895, %v2891
  %v4688 = vpack.c.b16 %v2896, %v2892
  %v4689 = vpack.c.b16 %v2901, %v2897
  %v4690 = vpack.c.b16 %v2902, %v2898
  %v4691 = vpack.c.b16 %v2903, %v2899
  %v4692 = vpack.c.b16 %v2904, %v2900
  %v4693 = vpack.c.b16 %v2909, %v2905
  %v4694 = vpack.c.b16 %v2910, %v2906
  %v4695 = vpack.c.b16 %v2911, %v2907
  %v4696 = vpack.c.b16 %v2912, %v2908
  %v4697 = vpack.c.b16 %v2917, %v2913
  %v4698 = vpack.c.b16 %v2918, %v2914
  %v4699 = vpack.c.b16 %v2919, %v2915
  %v4700 = vpack.c.b16 %v2920, %v2916
  %v4701 = vpack.c.b16 %v2925, %v2921
  %v4702 = vpack.c.b16 %v2926, %v2922
  %v4703 = vpack.c.b16 %v2927, %v2923
  %v4704 = vpack.c.b16 %v2928, %v2924
  %v4705 = vpack.c.b16 %v2933, %v2929
  %v4706 = vpack.c.b16 %v2934, %v2930
  %v4707 = vpack.c.b16 %v2935, %v2931
  %v4708 = vpack.c.b16 %v2936, %v2932
  %v4709 = vpack.c.b16 %v2941, %v2937
  %v4710 = vpack.c.b16 %v2942, %v2938
  %v4711 = vpack.c.b16 %v2943, %v2939
  %v4712 = vpack.c.b16 %v2944, %v2940
  %v4713 = vpack.c.b16 %v2949, %v2945
  %v4714 = vpack.c.b16 %v2950, %v2946
  %v4715 = vpack.c.b16 %v2951, %v2947
  %v4716 = vpack.c.b16 %v2952, %v2948
  %v4717 = vpack.c.b16 %v2957, %v2953
  %v4718 = vpack.c.b16 %v2958, %v2954
  %v4719 = vpack.c.b16 %v2959, %v2955
  %v4720 = vpack.c.b16 %v2960, %v2956
  %v4721 = vpack.c.b16 %v2965, %v2961
  %v4722 = vpack.c.b16 %v2966, %v2962
  %v4723 = vpack.c.b16 %v2967, %v2963
  %v4724 = vpack.c.b16 %v2968, %v2964
  %v4725 = vpack.c.b16 %v2973, %v2969
  %v4726 = vpack.c.b16 %v2974, %v2970
  %v4727 = vpack.c.b16 %v2975, %v2971
  %v4728 = vpack.c.b16 %v2976, %v2972
  %v4729 = vpack.c.b16 %v2981, %v2977
  %v4730 = vpack.c.b16 %v2982, %v2978
  %v4731 = vpack.c.b16 %v2983, %v2979
  %v4732 = vpack.c.b16 %v2984, %v2980
  %v4733 = vpack.c.b16 %v2989, %v2985
  %v4734 = vpack.c.b16 %v2990, %v2986
  %v4735 = vpack.c.b16 %v2991, %v2987
  %v4736 = vpack.c.b16 %v2992, %v2988
  %v4737 = vpack.c.b16 %v2997, %v2993
  %v4738 = vpack.c.b16 %v2998, %v2994
  %v4739 = vpack.c.b16 %v2999, %v2995
  %v4740 = vpack.c.b16 %v3000, %v2996
  %v4741 = vpack.c.b16 %v3005, %v3001
  %v4742 = vpack.c.b16 %v3006, %v3002
  %v4743 = vpack.c.b16 %v3007, %v3003
  %v4744 = vpack.c.b16 %v3008, %v3004
  %v4745 = vpack.c.b16 %v3013, %v3009
  %v4746 = vpack.c.b16 %v3014, %v3010
  %v4747 = vpack.c.b16 %v3015, %v3011
  %v4748 = vpack.c.b16 %v3016, %v3012
  %v4749 = vpack.c.b16 %v3021, %v3017
  %v4750 = vpack.c.b16 %v3022, %v3018
  %v4751 = vpack.c.b16 %v3023, %v3019
  %v4752 = vpack.c.b16 %v3024, %v3020
  %v4753 = vpack.c.b16 %v3029, %v3025
  %v4754 = vpack.c.b16 %v3030, %v3026
  %v4755 = vpack.c.b16 %v3031, %v3027
  %v4756 = vpack.c.b16 %v3032, %v3028
  %v4757 = vpack.c.b16 %v3037, %v3033
  %v4758 = vpack.c.b16 %v3038, %v3034
  %v4759 = vpack.c.b16 %v3039, %v3035
  %v4760 = vpack.c.b16 %v3040, %v3036
  %v4761 = vpack.c.b16 %v3045, %v3041
  %v4762 = vpack.c.b16 %v3046, %v3042
  %v4763 = vpack.c.b16 %v3047, %v3043
  %v4764 = vpack.c.b16 %v3048, %v3044
  %v4765 = vpack.c.b16 %v3053, %v3049
  %v4766 = vpack.c.b16 %v3054, %v3050
  %v4767 = vpack.c.b16 %v3055, %v3051
  %v4768 = vpack.c.b16 %v3056, %v3052
  %v4769 = vpack.c.b16 %v3061, %v3057
  %v4770 = vpack.c.b16 %v3062, %v3058
  %v4771 = vpack.c.b16 %v3063, %v3059
  %v4772 = vpack.c.b16 %v3064, %v3060
  %v4773 = vpack.c.b16 %v3069, %v3065
  %v4774 = vpack.c.b16 %v3070, %v3066
  %v4775 = vpack.c.b16 %v3071, %v3067
  %v4776 = vpack.c.b16 %v3072, %v3068
  %v4777 = vpack.c.b16 %v3077, %v3073
  %v4778 = vpack.c.b16 %v3078, %v3074
  %v4779 = vpack.c.b16 %v3079, %v3075
  %v4780 = vpack.c.b16 %v3080, %v3076
  %v4781 = vpack.c.b16 %v3085, %v3081
  %v4782 = vpack.c.b16 %v3086, %v3082
  %v4783 = vpack.c.b16 %v3087, %v3083
  %v4784 = vpack.c.b16 %v3088, %v3084
  %v4785 = vpack.c.b16 %v3093, %v3089
  %v4786 = vpack.c.b16 %v3094, %v3090
  %v4787 = vpack.c.b16 %v3095, %v3091
  %v4788 = vpack.c.b16 %v3096, %v3092
  %v4789 = vpack.c.b16 %v3101, %v3097
  %v4790 = vpack.c.b16 %v3102, %v3098
  %v4791 = vpack.c.b16 %v3103, %v3099
  %v4792 = vpack.c.b16 %v3104, %v3100
  %v4793 = vpack.c.b16 %v3109, %v3105
  %v4794 = vpack.c.b16 %v3110, %v3106
  %v4795 = vpack.c.b16 %v3111, %v3107
  %v4796 = vpack.c.b16 %v3112, %v3108
  %v4797 = vpack.c.b16 %v3117, %v3113
  %v4798 = vpack.c.b16 %v3118, %v3114
  %v4799 = vpack.c.b16 %v3119, %v3115
  %v4800 = vpack.c.b16 %v3120, %v3116
  %v4801 = vpack.c.b16 %v3125, %v3121
  %v4802 = vpack.c.b16 %v3126, %v3122
  %v4803 = vpack.c.b16 %v3127, %v3123
  %v4804 = vpack.c.b16 %v3128, %v3124
  %v4805 = vpack.c.b16 %v3133, %v3129
  %v4806 = vpack.c.b16 %v3134, %v3130
  %v4807 = vpack.c.b16 %v3135, %v3131
  %v4808 = vpack.c.b16 %v3136, %v3132
  %v4809 = vpack.c.b16 %v3141, %v3137
  %v4810 = vpack.c.b16 %v3142, %v3138
  %v4811 = vpack.c.b16 %v3143, %v3139
  %v4812 = vpack.c.b16 %v3144, %v3140
  %v4813 = vpack.c.b16 %v3149, %v3145
  %v4814 = vpack.c.b16 %v3150, %v3146
  %v4815 = vpack.c.b16 %v3151, %v3147
  %v4816 = vpack.c.b16 %v3152, %v3148
  %v4817 = vpack.c.b16 %v3157, %v3153
  %v4818 = vpack.c.b16 %v3158, %v3154
  %v4819 = vpack.c.b16 %v3159, %v3155
  %v4820 = vpack.c.b16 %v3160, %v3156
  %v4821 = vpack.c.b16 %v3165, %v3161
  %v4822 = vpack.c.b16 %v3166, %v3162
  %v4823 = vpack.c.b16 %v3167, %v3163
  %v4824 = vpack.c.b16 %v3168, %v3164
  %v4825 = vpack.c.b16 %v3173, %v3169
  %v4826 = vpack.c.b16 %v3174, %v3170
  %v4827 = vpack.c.b16 %v3175, %v3171
  %v4828 = vpack.c.b16 %v3176, %v3172
  %v4829 = vpack.c.b16 %v3181, %v3177
  %v4830 = vpack.c.b16 %v3182, %v3178
  %v4831 = vpack.c.b16 %v3183, %v3179
  %v4832 = vpack.c.b16 %v3184, %v3180
  %v4833 = vpack.c.b16 %v3189, %v3185
  %v4834 = vpack.c.b16 %v3190, %v3186
  %v4835 = vpack.c.b16 %v3191, %v3187
  %v4836 = vpack.c.b16 %v3192, %v3188
  %v4837 = vpack.c.b16 %v3197, %v3193
  %v4838 = vpack.c.b16 %v3198, %v3194
  %v4839 = vpack.c.b16 %v3199, %v3195
  %v4840 = vpack.c.b16 %v3200, %v3196
  %v4841 = vpack.c.b16 %v3205, %v3201
  %v4842 = vpack.c.b16 %v3206, %v3202
  %v4843 = vpack.c.b16 %v3207, %v3203
  %v4844 = vpack.c.b16 %v3208, %v3204
  %v4845 = vpack.c.b16 %v3213, %v3209
  %v4846 = vpack.c.b16 %v3214, %v3210
  %v4847 = vpack.c.b16 %v3215, %v3211
  %v4848 = vpack.c.b16 %v3216, %v3212
  %v4849 = vpack.c.b16 %v3221, %v3217
  %v4850 = vpack.c.b16 %v3222, %v3218
  %v4851 = vpack.c.b16 %v3223, %v3219
  %v4852 = vpack.c.b16 %v3224, %v3220
  %v4853 = vpack.c.b16 %v3229, %v3225
  %v4854 = vpack.c.b16 %v3230, %v3226
  %v4855 = vpack.c.b16 %v3231, %v3227
  %v4856 = vpack.c.b16 %v3232, %v3228
  %v4857 = vpack.c.b16 %v3237, %v3233
  %v4858 = vpack.c.b16 %v3238, %v3234
  %v4859 = vpack.c.b16 %v3239, %v3235
  %v4860 = vpack.c.b16 %v3240, %v3236
  %v4861 = vpack.c.b16 %v3245, %v3241
  %v4862 = vpack.c.b16 %v3246, %v3242
  %v4863 = vpack.c.b16 %v3247, %v3243
  %v4864 = vpack.c.b16 %v3248, %v3244
  %v4865 = vpack.c.b16 %v3253, %v3249
  %v4866 = vpack.c.b16 %v3254, %v3250
  %v4867 = vpack.c.b16 %v3255, %v3251
  %v4868 = vpack.c.b16 %v3256, %v3252
  %v4869 = vpack.c.b16 %v3261, %v3257
  %v4870 = vpack.c.b16 %v3262, %v3258
  %v4871 = vpack.c.b16 %v3263, %v3259
  %v4872 = vpack.c.b16 %v3264, %v3260
  %v4873 = vpack.c.b16 %v3269, %v3265
  %v4874 = vpack.c.b16 %v3270, %v3266
  %v4875 = vpack.c.b16 %v3271, %v3267
  %v4876 = vpack.c.b16 %v3272, %v3268
  %v4877 = vpack.c.b16 %v3277, %v3273
  %v4878 = vpack.c.b16 %v3278, %v3274
  %v4879 = vpack.c.b16 %v3279, %v3275
  %v4880 = vpack.c.b16 %v3280, %v3276
  %v4881 = vpack.c.b16 %v3285, %v3281
  %v4882 = vpack.c.b16 %v3286, %v3282
  %v4883 = vpack.c.b16 %v3287, %v3283
  %v4884 = vpack.c.b16 %v3288, %v3284
  %v4885 = vpack.c.b16 %v3293, %v3289
  %v4886 = vpack.c.b16 %v3294, %v3290
  %v4887 = vpack.c.b16 %v3295, %v3291
  %v4888 = vpack.c.b16 %v3296, %v3292
  %v4889 = vpack.c.b16 %v3301, %v3297
  %v4890 = vpack.c.b16 %v3302, %v3298
  %v4891 = vpack.c.b16 %v3303, %v3299
  %v4892 = vpack.c.b16 %v3304, %v3300
  %v4893 = vpack.c.b16 %v3309, %v3305
  %v4894 = vpack.c.b16 %v3310, %v3306
  %v4895 = vpack.c.b16 %v3311, %v3307
  %v4896 = vpack.c.b16 %v3312, %v3308
  %v4897 = vpack.c.b16 %v3317, %v3313
  %v4898 = vpack.c.b16 %v3318, %v3314
  %v4899 = vpack.c.b16 %v3319, %v3315
  %v4900 = vpack.c.b16 %v3320, %v3316
  %v4901 = vpack.c.b16 %v3325, %v3321
  %v4902 = vpack.c.b16 %v3326, %v3322
  %v4903 = vpack.c.b16 %v3327, %v3323
  %v4904 = vpack.c.b16 %v3328, %v3324
  %v4905 = vpack.c.b16 %v3333, %v3329
  %v4906 = vpack.c.b16 %v3334, %v3330
  %v4907 = vpack.c.b16 %v3335, %v3331
  %v4908 = vpack.c.b16 %v3336, %v3332
  %v4909 = vpack.c.b16 %v3341, %v3337
  %v4910 = vpack.c.b16 %v3342, %v3338
  %v4911 = vpack.c.b16 %v3343, %v3339
  %v4912 = vpack.c.b16 %v3344, %v3340
  %v4913 = vpack.c.b16 %v3349, %v3345
  %v4914 = vpack.c.b16 %v3350, %v3346
  %v4915 = vpack.c.b16 %v3351, %v3347
  %v4916 = vpack.c.b16 %v3352, %v3348
  %v4917 = vpack.c.b16 %v3357, %v3353
  %v4918 = vpack.c.b16 %v3358, %v3354
  %v4919 = vpack.c.b16 %v3359, %v3355
  %v4920 = vpack.c.b16 %v3360, %v3356
  %v4921 = vpack.c.b16 %v3365, %v3361
  %v4922 = vpack.c.b16 %v3366, %v3362
  %v4923 = vpack.c.b16 %v3367, %v3363
  %v4924 = vpack.c.b16 %v3368, %v3364
  %v4925 = vpack.c.b16 %v3373, %v3369
  %v4926 = vpack.c.b16 %v3374, %v3370
  %v4927 = vpack.c.b16 %v3375, %v3371
  %v4928 = vpack.c.b16 %v3376, %v3372
  %v4929 = vpack.c.b16 %v3381, %v3377
  %v4930 = vpack.c.b16 %v3382, %v3378
  %v4931 = vpack.c.b16 %v3383, %v3379
  %v4932 = vpack.c.b16 %v3384, %v3380
  %v4933 = vpack.c.b16 %v3389, %v3385
  %v4934 = vpack.c.b16 %v3390, %v3386
  %v4935 = vpack.c.b16 %v3391, %v3387
  %v4936 = vpack.c.b16 %v3392, %v3388
  %v4937 = vpack.c.b16 %v3397, %v3393
  %v4938 = vpack.c.b16 %v3398, %v3394
  %v4939 = vpack.c.b16 %v3399, %v3395
  %v4940 = vpack.c.b16 %v3400, %v3396
  %v4941 = vpack.c.b16 %v3405, %v3401
  %v4942 = vpack.c.b16 %v3406, %v3402
  %v4943 = vpack.c.b16 %v3407, %v3403
  %v4944 = vpack.c.b16 %v3408, %v3404
  %v4945 = vpack.c.b16 %v3413, %v3409
  %v4946 = vpack.c.b16 %v3414, %v3410
  %v4947 = vpack.c.b16 %v3415, %v3411
  %v4948 = vpack.c.b16 %v3416, %v3412
  %v4949 = vpack.c.b16 %v3421, %v3417
  %v4950 = vpack.c.b16 %v3422, %v3418
  %v4951 = vpack.c.b16 %v3423, %v3419
  %v4952 = vpack.c.b16 %v3424, %v3420
  %v4953 = vpack.c.b16 %v3429, %v3425
  %v4954 = vpack.c.b16 %v3430, %v3426
  %v4955 = vpack.c.b16 %v3431, %v3427
  %v4956 = vpack.c.b16 %v3432, %v3428
  %v4957 = vpack.c.b16 %v3437, %v3433
  %v4958 = vpack.c.b16 %v3438, %v3434
  %v4959 = vpack.c.b16 %v3439, %v3435
  %v4960 = vpack.c.b16 %v3440, %v3436
  %v4961 = vpack.c.b16 %v3445, %v3441
  %v4962 = vpack.c.b16 %v3446, %v3442
  %v4963 = vpack.c.b16 %v3447, %v3443
  %v4964 = vpack.c.b16 %v3448, %v3444
  %v4965 = vpack.c.b16 %v3453, %v3449
  %v4966 = vpack.c.b16 %v3454, %v3450
  %v4967 = vpack.c.b16 %v3455, %v3451
  %v4968 = vpack.c.b16 %v3456, %v3452
  %v4969 = vpack.c.b16 %v3461, %v3457
  %v4970 = vpack.c.b16 %v3462, %v3458
  %v4971 = vpack.c.b16 %v3463, %v3459
  %v4972 = vpack.c.b16 %v3464, %v3460
  %v4973 = vpack.c.b16 %v3469, %v3465
  %v4974 = vpack.c.b16 %v3470, %v3466
  %v4975 = vpack.c.b16 %v3471, %v3467
  %v4976 = vpack.c.b16 %v3472, %v3468
  %v4977 = vpack.c.b16 %v3477, %v3473
  %v4978 = vpack.c.b16 %v3478, %v3474
  %v4979 = vpack.c.b16 %v3479, %v3475
  %v4980 = vpack.c.b16 %v3480, %v3476
  %v4981 = vpack.c.b16 %v3485, %v3481
  %v4982 = vpack.c.b16 %v3486, %v3482
  %v4983 = vpack.c.b16 %v3487, %v3483
  %v4984 = vpack.c.b16 %v3488, %v3484
  %v4985 = vpack.c.b16 %v3493, %v3489
  %v4986 = vpack.c.b16 %v3494, %v3490
  %v4987 = vpack.c.b16 %v3495, %v3491
  %v4988 = vpack.c.b16 %v3496, %v3492
  %v4989 = vpack.c.b16 %v3501, %v3497
  %v4990 = vpack.c.b16 %v3502, %v3498
  %v4991 = vpack.c.b16 %v3503, %v3499
  %v4992 = vpack.c.b16 %v3504, %v3500
  %v4993 = vpack.c.b16 %v3509, %v3505
  %v4994 = vpack.c.b16 %v3510, %v3506
  %v4995 = vpack.c.b16 %v3511, %v3507
  %v4996 = vpack.c.b16 %v3512, %v3508
  %v4997 = vpack.c.b16 %v3517, %v3513
  %v4998 = vpack.c.b16 %v3518, %v3514
  %v4999 = vpack.c.b16 %v3519, %v3515
  %v5000 = vpack.c.b16 %v3520, %v3516
  %v5001 = vpack.c.b16 %v3525, %v3521
  %v5002 = vpack.c.b16 %v3526, %v3522
  %v5003 = vpack.c.b16 %v3527, %v3523
  %v5004 = vpack.c.b16 %v3528, %v3524
  %v5005 = vpack.c.b16 %v3533, %v3529
  %v5006 = vpack.c.b16 %v3534, %v3530
  %v5007 = vpack.c.b16 %v3535, %v3531
  %v5008 = vpack.c.b16 %v3536, %v3532
  %v5009 = vpack.c.b16 %v3541, %v3537
  %v5010 = vpack.c.b16 %v3542, %v3538
  %v5011 = vpack.c.b16 %v3543, %v3539
  %v5012 = vpack.c.b16 %v3544, %v3540
  %v5013 = vpack.c.b16 %v3549, %v3545
  %v5014 = vpack.c.b16 %v3550, %v3546
  %v5015 = vpack.c.b16 %v3551, %v3547
  %v5016 = vpack.c.b16 %v3552, %v3548
  %v5017 = vpack.c.b16 %v3557, %v3553
  %v5018 = vpack.c.b16 %v3558, %v3554
  %v5019 = vpack.c.b16 %v3559, %v3555
  %v5020 = vpack.c.b16 %v3560, %v3556
  %v5021 = vpack.c.b16 %v3565, %v3561
  %v5022 = vpack.c.b16 %v3566, %v3562
  %v5023 = vpack.c.b16 %v3567, %v3563
  %v5024 = vpack.c.b16 %v3568, %v3564
  %v5025 = vpack.c.b16 %v3573, %v3569
  %v5026 = vpack.c.b16 %v3574, %v3570
  %v5027 = vpack.c.b16 %v3575, %v3571
  %v5028 = vpack.c.b16 %v3576, %v3572
  %v5029 = vpack.c.b16 %v3581, %v3577
  %v5030 = vpack.c.b16 %v3582, %v3578
  %v5031 = vpack.c.b16 %v3583, %v3579
  %v5032 = vpack.c.b16 %v3584, %v3580
  %v5033 = vpack.c.b16 %v3589, %v3585
  %v5034 = vpack.c.b16 %v3590, %v3586
  %v5035 = vpack.c.b16 %v3591, %v3587
  %v5036 = vpack.c.b16 %v3592, %v3588
  %v5037 = vpack.c.b16 %v3597, %v3593
  %v5038 = vpack.c.b16 %v3598, %v3594
  %v5039 = vpack.c.b16 %v3599, %v3595
  %v5040 = vpack.c.b16 %v3600, %v3596
  %v5041 = vpack.c.b16 %v3605, %v3601
  %v5042 = vpack.c.b16 %v3606, %v3602
  %v5043 = vpack.c.b16 %v3607, %v3603
  %v5044 = vpack.c.b16 %v3608, %v3604
  %v5045 = vpack.c.b16 %v3613, %v3609
  %v5046 = vpack.c.b16 %v3614, %v3610
  %v5047 = vpack.c.b16 %v3615, %v3611
  %v5048 = vpack.c.b16 %v3616, %v3612
  %v5049 = vpack.c.b16 %v3621, %v3617
  %v5050 = vpack.c.b16 %v3622, %v3618
  %v5051 = vpack.c.b16 %v3623, %v3619
  %v5052 = vpack.c.b16 %v3624, %v3620
  %v5053 = vpack.c.b16 %v3629, %v3625
  %v5054 = vpack.c.b16 %v3630, %v3626
  %v5055 = vpack.c.b16 %v3631, %v3627
  %v5056 = vpack.c.b16 %v3632, %v3628
  %v5057 = vpack.c.b16 %v3637, %v3633
  %v5058 = vpack.c.b16 %v3638, %v3634
  %v5059 = vpack.c.b16 %v3639, %v3635
  %v5060 = vpack.c.b16 %v3640, %v3636
  %v5061 = vpack.c.b16 %v3645, %v3641
  %v5062 = vpack.c.b16 %v3646, %v3642
  %v5063 = vpack.c.b16 %v3647, %v3643
  %v5064 = vpack.c.b16 %v3648, %v3644
  %v5065 = vpack.c.b16 %v3653, %v3649
  %v5066 = vpack.c.b16 %v3654, %v3650
  %v5067 = vpack.c.b16 %v3655, %v3651
  %v5068 = vpack.c.b16 %v3656, %v3652
  %v5069 = vpack.c.b16 %v3661, %v3657
  %v5070 = vpack.c.b16 %v3662, %v3658
  %v5071 = vpack.c.b16 %v3663, %v3659
  %v5072 = vpack.c.b16 %v3664, %v3660
  %v5073 = vpack.c.b16 %v3669, %v3665
  %v5074 = vpack.c.b16 %v3670, %v3666
  %v5075 = vpack.c.b16 %v3671, %v3667
  %v5076 = vpack.c.b16 %v3672, %v3668
  %v5077 = vpack.c.b16 %v3677, %v3673
  %v5078 = vpack.c.b16 %v3678, %v3674
  %v5079 = vpack.c.b16 %v3679, %v3675
  %v5080 = vpack.c.b16 %v3680, %v3676
  %v5081 = vpack.c.b16 %v3685, %v3681
  %v5082 = vpack.c.b16 %v3686, %v3682
  %v5083 = vpack.c.b16 %v3687, %v3683
  %v5084 = vpack.c.b16 %v3688, %v3684
  %v5085 = vpack.c.b16 %v3693, %v3689
  %v5086 = vpack.c.b16 %v3694, %v3690
  %v5087 = vpack.c.b16 %v3695, %v3691
  %v5088 = vpack.c.b16 %v3696, %v3692
  %v5089 = vpack.c.b16 %v3701, %v3697
  %v5090 = vpack.c.b16 %v3702, %v3698
  %v5091 = vpack.c.b16 %v3703, %v3699
  %v5092 = vpack.c.b16 %v3704, %v3700
  %v5093 = vpack.c.b16 %v3709, %v3705
  %v5094 = vpack.c.b16 %v3710, %v3706
  %v5095 = vpack.c.b16 %v3711, %v3707
  %v5096 = vpack.c.b16 %v3712, %v3708
  %v5097 = vpack.c.b16 %v3717, %v3713
  %v5098 = vpack.c.b16 %v3718, %v3714
  %v5099 = vpack.c.b16 %v3719, %v3715
  %v5100 = vpack.c.b16 %v3720, %v3716
  %v5101 = vpack.c.b16 %v3725, %v3721
  %v5102 = vpack.c.b16 %v3726, %v3722
  %v5103 = vpack.c.b16 %v3727, %v3723
  %v5104 = vpack.c.b16 %v3728, %v3724
  %v5105 = vpack.c.b16 %v3733, %v3729
  %v5106 = vpack.c.b16 %v3734, %v3730
  %v5107 = vpack.c.b16 %v3735, %v3731
  %v5108 = vpack.c.b16 %v3736, %v3732
  %v5109 = vpack.c.b16 %v3741, %v3737
  %v5110 = vpack.c.b16 %v3742, %v3738
  %v5111 = vpack.c.b16 %v3743, %v3739
  %v5112 = vpack.c.b16 %v3744, %v3740
  %v5113 = vpack.c.b16 %v3749, %v3745
  %v5114 = vpack.c.b16 %v3750, %v3746
  %v5115 = vpack.c.b16 %v3751, %v3747
  %v5116 = vpack.c.b16 %v3752, %v3748
  %v5117 = vpack.c.b16 %v3757, %v3753
  %v5118 = vpack.c.b16 %v3758, %v3754
  %v5119 = vpack.c.b16 %v3759, %v3755
  %v5120 = vpack.c.b16 %v3760, %v3756
  %v5121 = vpack.c.b16 %v3765, %v3761
  %v5122 = vpack.c.b16 %v3766, %v3762
  %v5123 = vpack.c.b16 %v3767, %v3763
  %v5124 = vpack.c.b16 %v3768, %v3764
  %v5125 = vpack.c.b16 %v3773, %v3769
  %v5126 = vpack.c.b16 %v3774, %v3770
  %v5127 = vpack.c.b16 %v3775, %v3771
  %v5128 = vpack.c.b16 %v3776, %v3772
  %v5129 = vpack.c.b16 %v3781, %v3777
  %v5130 = vpack.c.b16 %v3782, %v3778
  %v5131 = vpack.c.b16 %v3783, %v3779
  %v5132 = vpack.c.b16 %v3784, %v3780
  %v5133 = vpack.c.b16 %v3789, %v3785
  %v5134 = vpack.c.b16 %v3790, %v3786
  %v5135 = vpack.c.b16 %v3791, %v3787
  %v5136 = vpack.c.b16 %v3792, %v3788
  %v5137 = vpack.c.b16 %v3797, %v3793
  %v5138 = vpack.c.b16 %v3798, %v3794
  %v5139 = vpack.c.b16 %v3799, %v3795
  %v5140 = vpack.c.b16 %v3800, %v3796
  %v5141 = vpack.c.b16 %v3805, %v3801
  %v5142 = vpack.c.b16 %v3806, %v3802
  %v5143 = vpack.c.b16 %v3807, %v3803
  %v5144 = vpack.c.b16 %v3808, %v3804
  %v5145 = vpack.c.b16 %v3813, %v3809
  %v5146 = vpack.c.b16 %v3814, %v3810
  %v5147 = vpack.c.b16 %v3815, %v3811
  %v5148 = vpack.c.b16 %v3816, %v3812
  %v5149 = vpack.c.b16 %v3821, %v3817
  %v5150 = vpack.c.b16 %v3822, %v3818
  %v5151 = vpack.c.b16 %v3823, %v3819
  %v5152 = vpack.c.b16 %v3824, %v3820
  %v5153 = vpack.c.b16 %v3829, %v3825
  %v5154 = vpack.c.b16 %v3830, %v3826
  %v5155 = vpack.c.b16 %v3831, %v3827
  %v5156 = vpack.c.b16 %v3832, %v3828
  %v5157 = vpack.c.b16 %v3837, %v3833
  %v5158 = vpack.c.b16 %v3838, %v3834
  %v5159 = vpack.c.b16 %v3839, %v3835
  %v5160 = vpack.c.b16 %v3840, %v3836
  %v5161 = vpack.c.b16 %v3845, %v3841
  %v5162 = vpack.c.b16 %v3846, %v3842
  %v5163 = vpack.c.b16 %v3847, %v3843
  %v5164 = vpack.c.b16 %v3848, %v3844
  %v5165 = vpack.c.b16 %v3853, %v3849
  %v5166 = vpack.c.b16 %v3854, %v3850
  %v5167 = vpack.c.b16 %v3855, %v3851
  %v5168 = vpack.c.b16 %v3856, %v3852
  %v5169 = vpack.c.b16 %v3861, %v3857
  %v5170 = vpack.c.b16 %v3862, %v3858
  %v5171 = vpack.c.b16 %v3863, %v3859
  %v5172 = vpack.c.b16 %v3864, %v3860
  %v5173 = vpack.c.b16 %v3869, %v3865
  %v5174 = vpack.c.b16 %v3870, %v3866
  %v5175 = vpack.c.b16 %v3871, %v3867
  %v5176 = vpack.c.b16 %v3872, %v3868
  %v5177 = vpack.c.b16 %v3877, %v3873
  %v5178 = vpack.c.b16 %v3878, %v3874
  %v5179 = vpack.c.b16 %v3879, %v3875
  %v5180 = vpack.c.b16 %v3880, %v3876
  %v5181 = vpack.c.b16 %v3885, %v3881
  %v5182 = vpack.c.b16 %v3886, %v3882
  %v5183 = vpack.c.b16 %v3887, %v3883
  %v5184 = vpack.c.b16 %v3888, %v3884
  %v5185 = vpack.c.b16 %v3893, %v3889
  %v5186 = vpack.c.b16 %v3894, %v3890
  %v5187 = vpack.c.b16 %v3895, %v3891
  %v5188 = vpack.c.b16 %v3896, %v3892
  %v5189 = vpack.c.b16 %v3901, %v3897
  %v5190 = vpack.c.b16 %v3902, %v3898
  %v5191 = vpack.c.b16 %v3903, %v3899
  %v5192 = vpack.c.b16 %v3904, %v3900
  %v5193 = vpack.c.b16 %v3909, %v3905
  %v5194 = vpack.c.b16 %v3910, %v3906
  %v5195 = vpack.c.b16 %v3911, %v3907
  %v5196 = vpack.c.b16 %v3912, %v3908
  %v5197 = vpack.c.b16 %v3917, %v3913
  %v5198 = vpack.c.b16 %v3918, %v3914
  %v5199 = vpack.c.b16 %v3919, %v3915
  %v5200 = vpack.c.b16 %v3920, %v3916
  %v5201 = vpack.c.b16 %v3925, %v3921
  %v5202 = vpack.c.b16 %v3926, %v3922
  %v5203 = vpack.c.b16 %v3927, %v3923
  %v5204 = vpack.c.b16 %v3928, %v3924
  %v5205 = vpack.c.b16 %v3933, %v3929
  %v5206 = vpack.c.b16 %v3934, %v3930
  %v5207 = vpack.c.b16 %v3935, %v3931
  %v5208 = vpack.c.b16 %v3936, %v3932
  %v5209 = vpack.c.b16 %v3941, %v3937
  %v5210 = vpack.c.b16 %v3942, %v3938
  %v5211 = vpack.c.b16 %v3943, %v3939
  %v5212 = vpack.c.b16 %v3944, %v3940
  %v5213 = vpack.c.b16 %v3949, %v3945
  %v5214 = vpack.c.b16 %v3950, %v3946
  %v5215 = vpack.c.b16 %v3951, %v3947
  %v5216 = vpack.c.b16 %v3952, %v3948
  %v5217 = vpack.c.b16 %v3957, %v3953
  %v5218 = vpack.c.b16 %v3958, %v3954
  %v5219 = vpack.c.b16 %v3959, %v3955
  %v5220 = vpack.c.b16 %v3960, %v3956
  %v5221 = vpack.c.b16 %v3965, %v3961
  %v5222 = vpack.c.b16 %v3966, %v3962
  %v5223 = vpack.c.b16 %v3967, %v3963
  %v5224 = vpack.c.b16 %v3968, %v3964
  %v5225 = vpack.c.b16 %v3973, %v3969
  %v5226 = vpack.c.b16 %v3974, %v3970
  %v5227 = vpack.c.b16 %v3975, %v3971
  %v5228 = vpack.c.b16 %v3976, %v3972
  %v5229 = vpack.c.b16 %v3981, %v3977
  %v5230 = vpack.c.b16 %v3982, %v3978
  %v5231 = vpack.c.b16 %v3983, %v3979
  %v5232 = vpack.c.b16 %v3984, %v3980
  %v5233 = vpack.c.b16 %v3989, %v3985
  %v5234 = vpack.c.b16 %v3990, %v3986
  %v5235 = vpack.c.b16 %v3991, %v3987
  %v5236 = vpack.c.b16 %v3992, %v3988
  %v5237 = vpack.c.b16 %v3997, %v3993
  %v5238 = vpack.c.b16 %v3998, %v3994
  %v5239 = vpack.c.b16 %v3999, %v3995
  %v5240 = vpack.c.b16 %v4000, %v3996
  %v5241 = vpack.c.b16 %v4005, %v4001
  %v5242 = vpack.c.b16 %v4006, %v4002
  %v5243 = vpack.c.b16 %v4007, %v4003
  %v5244 = vpack.c.b16 %v4008, %v4004
  %v5245 = vpack.c.b16 %v4013, %v4009
  %v5246 = vpack.c.b16 %v4014, %v4010
  %v5247 = vpack.c.b16 %v4015, %v4011
  %v5248 = vpack.c.b16 %v4016, %v4012
  %v5249 = vpack.c.b16 %v4021, %v4017
  %v5250 = vpack.c.b16 %v4022, %v4018
  %v5251 = vpack.c.b16 %v4023, %v4019
  %v5252 = vpack.c.b16 %v4024, %v4020
  %v5253 = vpack.c.b16 %v4029, %v4025
  %v5254 = vpack.c.b16 %v4030, %v4026
  %v5255 = vpack.c.b16 %v4031, %v4027
  %v5256 = vpack.c.b16 %v4032, %v4028
  %v5257 = vpack.c.b16 %v4037, %v4033
  %v5258 = vpack.c.b16 %v4038, %v4034
  %v5259 = vpack.c.b16 %v4039, %v4035
  %v5260 = vpack.c.b16 %v4040, %v4036
  %v5261 = vpack.c.b16 %v4045, %v4041
  %v5262 = vpack.c.b16 %v4046, %v4042
  %v5263 = vpack.c.b16 %v4047, %v4043
  %v5264 = vpack.c.b16 %v4048, %v4044
  %v5265 = vpack.c.b16 %v4053, %v4049
  %v5266 = vpack.c.b16 %v4054, %v4050
  %v5267 = vpack.c.b16 %v4055, %v4051
  %v5268 = vpack.c.b16 %v4056, %v4052
  %v5269 = vpack.c.b16 %v4061, %v4057
  %v5270 = vpack.c.b16 %v4062, %v4058
  %v5271 = vpack.c.b16 %v4063, %v4059
  %v5272 = vpack.c.b16 %v4064, %v4060
  %v5273 = vpack.c.b16 %v4069, %v4065
  %v5274 = vpack.c.b16 %v4070, %v4066
  %v5275 = vpack.c.b16 %v4071, %v4067
  %v5276 = vpack.c.b16 %v4072, %v4068
  %v5277 = vpack.c.b16 %v4077, %v4073
  %v5278 = vpack.c.b16 %v4078, %v4074
  %v5279 = vpack.c.b16 %v4079, %v4075
  %v5280 = vpack.c.b16 %v4080, %v4076
  %v5281 = vpack.c.b16 %v4085, %v4081
  %v5282 = vpack.c.b16 %v4086, %v4082
  %v5283 = vpack.c.b16 %v4087, %v4083
  %v5284 = vpack.c.b16 %v4088, %v4084
  %v5285 = vpack.c.b16 %v4093, %v4089
  %v5286 = vpack.c.b16 %v4094, %v4090
  %v5287 = vpack.c.b16 %v4095, %v4091
  %v5288 = vpack.c.b16 %v4096, %v4092
  %v5289 = vpack.c.b16 %v4101, %v4097
  %v5290 = vpack.c.b16 %v4102, %v4098
  %v5291 = vpack.c.b16 %v4103, %v4099
  %v5292 = vpack.c.b16 %v4104, %v4100
  %v5293 = vpack.c.b16 %v4109, %v4105
  %v5294 = vpack.c.b16 %v4110, %v4106
  %v5295 = vpack.c.b16 %v4111, %v4107
  %v5296 = vpack.c.b16 %v4112, %v4108
  %v5297 = vpack.c.b16 %v4117, %v4113
  %v5298 = vpack.c.b16 %v4118, %v4114
  %v5299 = vpack.c.b16 %v4119, %v4115
  %v5300 = vpack.c.b16 %v4120, %v4116
  %v5301 = vpack.c.b16 %v4125, %v4121
  %v5302 = vpack.c.b16 %v4126, %v4122
  %v5303 = vpack.c.b16 %v4127, %v4123
  %v5304 = vpack.c.b16 %v4128, %v4124
  %v5305 = vpack.c.b16 %v4133, %v4129
  %v5306 = vpack.c.b16 %v4134, %v4130
  %v5307 = vpack.c.b16 %v4135, %v4131
  %v5308 = vpack.c.b16 %v4136, %v4132
  %v5309 = vpack.c.b16 %v4141, %v4137
  %v5310 = vpack.c.b16 %v4142, %v4138
  %v5311 = vpack.c.b16 %v4143, %v4139
  %v5312 = vpack.c.b16 %v4144, %v4140
  %v5313 = vpack.c.b16 %v4149, %v4145
  %v5314 = vpack.c.b16 %v4150, %v4146
  %v5315 = vpack.c.b16 %v4151, %v4147
  %v5316 = vpack.c.b16 %v4152, %v4148
  %v5317 = vpack.c.b16 %v4157, %v4153
  %v5318 = vpack.c.b16 %v4158, %v4154
  %v5319 = vpack.c.b16 %v4159, %v4155
  %v5320 = vpack.c.b16 %v4160, %v4156
  %v5321 = vpack.c.b16 %v4165, %v4161
  %v5322 = vpack.c.b16 %v4166, %v4162
  %v5323 = vpack.c.b16 %v4167, %v4163
  %v5324 = vpack.c.b16 %v4168, %v4164
  %v5325 = vpack.c.b16 %v4173, %v4169
  %v5326 = vpack.c.b16 %v4174, %v4170
  %v5327 = vpack.c.b16 %v4175, %v4171
  %v5328 = vpack.c.b16 %v4176, %v4172
  %v5329 = vpack.c.b16 %v4181, %v4177
  %v5330 = vpack.c.b16 %v4182, %v4178
  %v5331 = vpack.c.b16 %v4183, %v4179
  %v5332 = vpack.c.b16 %v4184, %v4180
  %v5333 = vpack.c.b16 %v4189, %v4185
  %v5334 = vpack.c.b16 %v4190, %v4186
  %v5335 = vpack.c.b16 %v4191, %v4187
  %v5336 = vpack.c.b16 %v4192, %v4188
  %v5337 = vpack.c.b16 %v4197, %v4193
  %v5338 = vpack.c.b16 %v4198, %v4194
  %v5339 = vpack.c.b16 %v4199, %v4195
  %v5340 = vpack.c.b16 %v4200, %v4196
  %v5341 = vpack.c.b16 %v4205, %v4201
  %v5342 = vpack.c.b16 %v4206, %v4202
  %v5343 = vpack.c.b16 %v4207, %v4203
  %v5344 = vpack.c.b16 %v4208, %v4204
  %v5345 = vpack.c.b16 %v4213, %v4209
  %v5346 = vpack.c.b16 %v4214, %v4210
  %v5347 = vpack.c.b16 %v4215, %v4211
  %v5348 = vpack.c.b16 %v4216, %v4212
  %v5349 = vpack.c.b16 %v4221, %v4217
  %v5350 = vpack.c.b16 %v4222, %v4218
  %v5351 = vpack.c.b16 %v4223, %v4219
  %v5352 = vpack.c.b16 %v4224, %v4220
  %v5353 = vpack.c.b16 %v4229, %v4225
  %v5354 = vpack.c.b16 %v4230, %v4226
  %v5355 = vpack.c.b16 %v4231, %v4227
  %v5356 = vpack.c.b16 %v4232, %v4228
  %v5357 = vpack.c.b16 %v4237, %v4233
  %v5358 = vpack.c.b16 %v4238, %v4234
  %v5359 = vpack.c.b16 %v4239, %v4235
  %v5360 = vpack.c.b16 %v4240, %v4236
  %v5361 = vpack.c.b16 %v4245, %v4241
  %v5362 = vpack.c.b16 %v4246, %v4242
  %v5363 = vpack.c.b16 %v4247, %v4243
  %v5364 = vpack.c.b16 %v4248, %v4244
  %v5365 = vpack.c.b16 %v4253, %v4249
  %v5366 = vpack.c.b16 %v4254, %v4250
  %v5367 = vpack.c.b16 %v4255, %v4251
  %v5368 = vpack.c.b16 %v4256, %v4252
  %v5369 = vpack.c.b16 %v4261, %v4257
  %v5370 = vpack.c.b16 %v4262, %v4258
  %v5371 = vpack.c.b16 %v4263, %v4259
  %v5372 = vpack.c.b16 %v4264, %v4260
  %v5373 = vpack.c.b16 %v4269, %v4265
  %v5374 = vpack.c.b16 %v4270, %v4266
  %v5375 = vpack.c.b16 %v4271, %v4267
  %v5376 = vpack.c.b16 %v4272, %v4268
  %v5377 = vpack.c.b16 %v4277, %v4273
  %v5378 = vpack.c.b16 %v4278, %v4274
  %v5379 = vpack.c.b16 %v4279, %v4275
  %v5380 = vpack.c.b16 %v4280, %v4276
  %v5381 = vpack.c.b16 %v4285, %v4281
  %v5382 = vpack.c.b16 %v4286, %v4282
  %v5383 = vpack.c.b16 %v4287, %v4283
  %v5384 = vpack.c.b16 %v4288, %v4284
  %v5385 = vpack.c.b16 %v4293, %v4289
  %v5386 = vpack.c.b16 %v4294, %v4290
  %v5387 = vpack.c.b16 %v4295, %v4291
  %v5388 = vpack.c.b16 %v4296, %v4292
  %v5389 = vpack.c.b16 %v4301, %v4297
  %v5390 = vpack.c.b16 %v4302, %v4298
  %v5391 = vpack.c.b16 %v4303, %v4299
  %v5392 = vpack.c.b16 %v4304, %v4300
  %v5393 = vpack.c.b16 %v4309, %v4305
  %v5394 = vpack.c.b16 %v4310, %v4306
  %v5395 = vpack.c.b16 %v4311, %v4307
  %v5396 = vpack.c.b16 %v4312, %v4308
  %v5397 = vpack.c.b16 %v4317, %v4313
  %v5398 = vpack.c.b16 %v4318, %v4314
  %v5399 = vpack.c.b16 %v4319, %v4315
  %v5400 = vpack.c.b16 %v4320, %v4316
  %v5401 = vpack.c.b16 %v4325, %v4321
  %v5402 = vpack.c.b16 %v4326, %v4322
  %v5403 = vpack.c.b16 %v4327, %v4323
  %v5404 = vpack.c.b16 %v4328, %v4324
  %v5405 = vpack.c.b16 %v4333, %v4329
  %v5406 = vpack.c.b16 %v4334, %v4330
  %v5407 = vpack.c.b16 %v4335, %v4331
  %v5408 = vpack.c.b16 %v4336, %v4332
  %v5409 = vpack.c.b16 %v4341, %v4337
  %v5410 = vpack.c.b16 %v4342, %v4338
  %v5411 = vpack.c.b16 %v4343, %v4339
  %v5412 = vpack.c.b16 %v4344, %v4340
  %v5413 = vpack.c.b16 %v4349, %v4345
  %v5414 = vpack.c.b16 %v4350, %v4346
  %v5415 = vpack.c.b16 %v4351, %v4347
  %v5416 = vpack.c.b16 %v4352, %v4348
  %v5417 = vpack.c.b16 %v4357, %v4353
  %v5418 = vpack.c.b16 %v4358, %v4354
  %v5419 = vpack.c.b16 %v4359, %v4355
  %v5420 = vpack.c.b16 %v4360, %v4356
  %v5421 = vpack.c.b16 %v4365, %v4361
  %v5422 = vpack.c.b16 %v4366, %v4362
  %v5423 = vpack.c.b16 %v4367, %v4363
  %v5424 = vpack.c.b16 %v4368, %v4364
  %v5425 = vpack.c.b16 %v4373, %v4369
  %v5426 = vpack.c.b16 %v4374, %v4370
  %v5427 = vpack.c.b16 %v4375, %v4371
  %v5428 = vpack.c.b16 %v4376, %v4372
  %v5429 = vpack.c.b16 %v4381, %v4377
  %v5430 = vpack.c.b16 %v4382, %v4378
  %v5431 = vpack.c.b16 %v4383, %v4379
  %v5432 = vpack.c.b16 %v4384, %v4380
  %v5433 = vpack.c.b16 %v4389, %v4385
  %v5434 = vpack.c.b16 %v4390, %v4386
  %v5435 = vpack.c.b16 %v4391, %v4387
  %v5436 = vpack.c.b16 %v4392, %v4388
  %v5437 = vpack.c.b16 %v4397, %v4393
  %v5438 = vpack.c.b16 %v4398, %v4394
  %v5439 = vpack.c.b16 %v4399, %v4395
  %v5440 = vpack.c.b16 %v4400, %v4396
  %v5441 = vpack.c.b16 %v4405, %v4401
  %v5442 = vpack.c.b16 %v4406, %v4402
  %v5443 = vpack.c.b16 %v4407, %v4403
  %v5444 = vpack.c.b16 %v4408, %v4404
  %v5445 = vpack.c.b16 %v4413, %v4409
  %v5446 = vpack.c.b16 %v4414, %v4410
  %v5447 = vpack.c.b16 %v4415, %v4411
  %v5448 = vpack.c.b16 %v4416, %v4412
  %v5449 = vpack.c.b16 %v4421, %v4417
  %v5450 = vpack.c.b16 %v4422, %v4418
  %v5451 = vpack.c.b16 %v4423, %v4419
  %v5452 = vpack.c.b16 %v4424, %v4420
  %v5453 = vpack.c.b16 %v4429, %v4425
  %v5454 = vpack.c.b16 %v4430, %v4426
  %v5455 = vpack.c.b16 %v4431, %v4427
  %v5456 = vpack.c.b16 %v4432, %v4428
  %6481 = vmatprep.subr.bf16.mxu0 %v4434
  %6482 = vmatpush1.bf16.msra.mxu0 %v4433
  %6483 = vmatprep.subr.bf16.mxu0 %v4438
  %6484 = vmatpush1.bf16.msra.mxu0 %v4437
  %6485 = vmatprep.subr.bf16.mxu0 %v4442
  %6486 = vmatpush1.bf16.msra.mxu0 %v4441
  %6487 = vmatprep.subr.bf16.mxu0 %v4446
  %6488 = vmatpush1.bf16.msra.mxu0 %v4445
  %6489 = vmatprep.subr.bf16.mxu0 %v4450
  %6490 = vmatpush1.bf16.msra.mxu0 %v4449
  %6491 = vmatprep.subr.bf16.mxu0 %v4454
  %6492 = vmatpush1.bf16.msra.mxu0 %v4453
  %6493 = vmatprep.subr.bf16.mxu0 %v4458
  %6494 = vmatpush1.bf16.msra.mxu0 %v4457
  %6495 = vmatprep.subr.bf16.mxu0 %v4462
  %6496 = vmatpush1.bf16.msra.mxu0 %v4461
  %6497 = vmatprep.subr.bf16.mxu0 %v4466
  %6498 = vmatpush1.bf16.msra.mxu0 %v4465
  %6499 = vmatprep.subr.bf16.mxu0 %v4470
  %6500 = vmatpush1.bf16.msra.mxu0 %v4469
  %6501 = vmatprep.subr.bf16.mxu0 %v4474
  %6502 = vmatpush1.bf16.msra.mxu0 %v4473
  %6503 = vmatprep.subr.bf16.mxu0 %v4478
  %6504 = vmatpush1.bf16.msra.mxu0 %v4477
  %6505 = vmatprep.subr.bf16.mxu0 %v4482
  %6506 = vmatpush1.bf16.msra.mxu0 %v4481
  %6507 = vmatprep.subr.bf16.mxu0 %v4486
  %6508 = vmatpush1.bf16.msra.mxu0 %v4485
  %6509 = vmatprep.subr.bf16.mxu0 %v4490
  %6510 = vmatpush1.bf16.msra.mxu0 %v4489
  %6511 = vmatprep.subr.bf16.mxu0 %v4494
  %6512 = vmatpush1.bf16.msra.mxu0 %v4493
  %6513 = vmatprep.mubr.bf16.mxu0 %v1234
  %6514 = vmatmul.mubr.bf16.gmra.mrb[0].mxu0 %v1233
  %v6515 = vpop.f32.mrb[0].mxu0
  %v6516 = vadd.f32 0.0, %v6515
  %v6517 = vpop.f32.mrb[0].mxu0
  %v6518 = vadd.f32 0.0, %v6517
  %v6519 = vpop.f32.mrb[0].mxu0
  %v6520 = vadd.f32 0.0, %v6519
  %v6521 = vpop.f32.mrb[0].mxu0
  %v6522 = vadd.f32 0.0, %v6521
  %6523 = vmatprep.mubr.bf16.mxu0 %v1266
  %6524 = vmatmul.mubr.bf16.gmra.mrb[0].mxu0 %v1265
  %v6525 = vpop.f32.mrb[0].mxu0
  %v6526 = vadd.f32 0.0, %v6525
  %v6527 = vpop.f32.mrb[0].mxu0
  %v6528 = vadd.f32 0.0, %v6527
  %v6529 = vpop.f32.mrb[0].mxu0
  %v6530 = vpop.f32.mrb[0].mxu0
  %6531 = vdwg.mxu0
  %6532 = vmatprep.subr.bf16.mxu0 %v4498
  %6533 = vmatpush1.bf16.msra.mxu0 %v4497
  %6534 = vmatprep.subr.bf16.mxu0 %v4502
  %6535 = vmatpush1.bf16.msra.mxu0 %v4501
  %6536 = vmatprep.subr.bf16.mxu0 %v4506
  %6537 = vmatpush1.bf16.msra.mxu0 %v4505
  %6538 = vmatprep.subr.bf16.mxu0 %v4510
  %6539 = vmatpush1.bf16.msra.mxu0 %v4509
  %6540 = vmatprep.subr.bf16.mxu0 %v4514
  %6541 = vmatpush1.bf16.msra.mxu0 %v4513
  %6542 = vmatprep.subr.bf16.mxu0 %v4518
  %6543 = vmatpush1.bf16.msra.mxu0 %v4517
  %6544 = vmatprep.subr.bf16.mxu0 %v4522
  %6545 = vmatpush1.bf16.msra.mxu0 %v4521
  %6546 = vmatprep.subr.bf16.mxu0 %v4526
  %6547 = vmatpush1.bf16.msra.mxu0 %v4525
  %6548 = vmatprep.subr.bf16.mxu0 %v4530
  %6549 = vmatpush1.bf16.msra.mxu0 %v4529
  %6550 = vmatprep.subr.bf16.mxu0 %v4534
  %6551 = vmatpush1.bf16.msra.mxu0 %v4533
  %6552 = vmatprep.subr.bf16.mxu0 %v4538
  %6553 = vmatpush1.bf16.msra.mxu0 %v4537
  %6554 = vmatprep.subr.bf16.mxu0 %v4542
  %6555 = vmatpush1.bf16.msra.mxu0 %v4541
  %6556 = vmatprep.subr.bf16.mxu0 %v4546
  %6557 = vmatpush1.bf16.msra.mxu0 %v4545
  %6558 = vmatprep.subr.bf16.mxu0 %v4550
  %6559 = vmatpush1.bf16.msra.mxu0 %v4549
  %6560 = vmatprep.subr.bf16.mxu0 %v4554
  %6561 = vmatpush1.bf16.msra.mxu0 %v4553
  %6562 = vmatprep.subr.bf16.mxu0 %v4558
  %6563 = vmatpush1.bf16.msra.mxu0 %v4557
  %6564 = vmatprep.mubr.bf16.mxu0 %v1236
  %6565 = vmatmul.mubr.bf16.gmra.mrb[0].mxu0 %v1235
  %v6566 = vpop.f32.mrb[0].mxu0
  %v6567 = vadd.f32 %v6516, %v6566
  %v6568 = vpop.f32.mrb[0].mxu0
  %v6569 = vadd.f32 %v6518, %v6568
  %v6570 = vpop.f32.mrb[0].mxu0
  %v6571 = vadd.f32 %v6520, %v6570
  %v6572 = vpop.f32.mrb[0].mxu0
  %v6573 = vadd.f32 %v6522, %v6572
  %6574 = vmatprep.mubr.bf16.mxu0 %v1268
  %6575 = vmatmul.mubr.bf16.gmra.mrb[0].mxu0 %v1267
  %v6576 = vpop.f32.mrb[0].mxu0
  %v6577 = vadd.f32 %v6526, %v6576
  %v6578 = vpop.f32.mrb[0].mxu0
  %v6579 = vadd.f32 %v6528, %v6578
  %v6580 = vpop.f32.mrb[0].mxu0
  %v6581 = vpop.f32.mrb[0].mxu0
  %6582 = vdwg.mxu0
  %6583 = vmatprep.subr.bf16.mxu0 %v4562
  %6584 = vmatpush1.bf16.msra.mxu0 %v4561
  %6585 = vmatprep.subr.bf16.mxu0 %v4566
  %6586 = vmatpush1.bf16.msra.mxu0 %v4565
  %6587 = vmatprep.subr.bf16.mxu0 %v4570
  %6588 = vmatpush1.bf16.msra.mxu0 %v4569
  %6589 = vmatprep.subr.bf16.mxu0 %v4574
  %6590 = vmatpush1.bf16.msra.mxu0 %v4573
  %6591 = vmatprep.subr.bf16.mxu0 %v4578
  %6592 = vmatpush1.bf16.msra.mxu0 %v4577
  %6593 = vmatprep.subr.bf16.mxu0 %v4582
  %6594 = vmatpush1.bf16.msra.mxu0 %v4581
  %6595 = vmatprep.subr.bf16.mxu0 %v4586
  %6596 = vmatpush1.bf16.msra.mxu0 %v4585
  %6597 = vmatprep.subr.bf16.mxu0 %v4590
  %6598 = vmatpush1.bf16.msra.mxu0 %v4589
  %6599 = vmatprep.subr.bf16.mxu0 %v4594
  %6600 = vmatpush1.bf16.msra.mxu0 %v4593
  %6601 = vmatprep.subr.bf16.mxu0 %v4598
  %6602 = vmatpush1.bf16.msra.mxu0 %v4597
  %6603 = vmatprep.subr.bf16.mxu0 %v4602
  %6604 = vmatpush1.bf16.msra.mxu0 %v4601
  %6605 = vmatprep.subr.bf16.mxu0 %v4606
  %6606 = vmatpush1.bf16.msra.mxu0 %v4605
  %6607 = vmatprep.subr.bf16.mxu0 %v4610
  %6608 = vmatpush1.bf16.msra.mxu0 %v4609
  %6609 = vmatprep.subr.bf16.mxu0 %v4614
  %6610 = vmatpush1.bf16.msra.mxu0 %v4613
  %6611 = vmatprep.subr.bf16.mxu0 %v4618
  %6612 = vmatpush1.bf16.msra.mxu0 %v4617
  %6613 = vmatprep.subr.bf16.mxu0 %v4622
  %6614 = vmatpush1.bf16.msra.mxu0 %v4621
  %6615 = vmatprep.mubr.bf16.mxu0 %v1238
  %6616 = vmatmul.mubr.bf16.gmra.mrb[0].mxu0 %v1237
  %v6617 = vpop.f32.mrb[0].mxu0
  %v6618 = vadd.f32 %v6567, %v6617
  %v6619 = vpop.f32.mrb[0].mxu0
  %v6620 = vadd.f32 %v6569, %v6619
  %v6621 = vpop.f32.mrb[0].mxu0
  %v6622 = vadd.f32 %v6571, %v6621
  %v6623 = vpop.f32.mrb[0].mxu0
  %v6624 = vadd.f32 %v6573, %v6623
  %6625 = vmatprep.mubr.bf16.mxu0 %v1270
  %6626 = vmatmul.mubr.bf16.gmra.mrb[0].mxu0 %v1269
  %v6627 = vpop.f32.mrb[0].mxu0
  %v6628 = vadd.f32 %v6577, %v6627
  %v6629 = vpop.f32.mrb[0].mxu0
  %v6630 = vadd.f32 %v6579, %v6629
  %v6631 = vpop.f32.mrb[0].mxu0
  %v6632 = vpop.f32.mrb[0].mxu0
  %6633 = vdwg.mxu0
  %6634 = vmatprep.subr.bf16.mxu0 %v4626
  %6635 = vmatpush1.bf16.msra.mxu0 %v4625
  %6636 = vmatprep.subr.bf16.mxu0 %v4630
  %6637 = vmatpush1.bf16.msra.mxu0 %v4629
  %6638 = vmatprep.subr.bf16.mxu0 %v4634
  %6639 = vmatpush1.bf16.msra.mxu0 %v4633
  %6640 = vmatprep.subr.bf16.mxu0 %v4638
  %6641 = vmatpush1.bf16.msra.mxu0 %v4637
  %6642 = vmatprep.subr.bf16.mxu0 %v4642
  %6643 = vmatpush1.bf16.msra.mxu0 %v4641
  %6644 = vmatprep.subr.bf16.mxu0 %v4646
  %6645 = vmatpush1.bf16.msra.mxu0 %v4645
  %6646 = vmatprep.subr.bf16.mxu0 %v4650
  %6647 = vmatpush1.bf16.msra.mxu0 %v4649
  %6648 = vmatprep.subr.bf16.mxu0 %v4654
  %6649 = vmatpush1.bf16.msra.mxu0 %v4653
  %6650 = vmatprep.subr.bf16.mxu0 %v4658
  %6651 = vmatpush1.bf16.msra.mxu0 %v4657
  %6652 = vmatprep.subr.bf16.mxu0 %v4662
  %6653 = vmatpush1.bf16.msra.mxu0 %v4661
  %6654 = vmatprep.subr.bf16.mxu0 %v4666
  %6655 = vmatpush1.bf16.msra.mxu0 %v4665
  %6656 = vmatprep.subr.bf16.mxu0 %v4670
  %6657 = vmatpush1.bf16.msra.mxu0 %v4669
  %6658 = vmatprep.subr.bf16.mxu0 %v4674
  %6659 = vmatpush1.bf16.msra.mxu0 %v4673
  %6660 = vmatprep.subr.bf16.mxu0 %v4678
  %6661 = vmatpush1.bf16.msra.mxu0 %v4677
  %6662 = vmatprep.subr.bf16.mxu0 %v4682
  %6663 = vmatpush1.bf16.msra.mxu0 %v4681
  %6664 = vmatprep.subr.bf16.mxu0 %v4686
  %6665 = vmatpush1.bf16.msra.mxu0 %v4685
  %6666 = vmatprep.mubr.bf16.mxu0 %v1240
  %6667 = vmatmul.mubr.bf16.gmra.mrb[0].mxu0 %v1239
  %v6668 = vpop.f32.mrb[0].mxu0
  %v6669 = vadd.f32 %v6618, %v6668
  %v6670 = vpop.f32.mrb[0].mxu0
  %v6671 = vadd.f32 %v6620, %v6670
  %v6672 = vpop.f32.mrb[0].mxu0
  %v6673 = vadd.f32 %v6622, %v6672
  %v6674 = vpop.f32.mrb[0].mxu0
  %v6675 = vadd.f32 %v6624, %v6674
  %6676 = vmatprep.mubr.bf16.mxu0 %v1272
  %6677 = vmatmul.mubr.bf16.gmra.mrb[0].mxu0 %v1271
  %v6678 = vpop.f32.mrb[0].mxu0
  %v6679 = vadd.f32 %v6628, %v6678
  %v6680 = vpop.f32.mrb[0].mxu0
  %v6681 = vadd.f32 %v6630, %v6680
  %v6682 = vpop.f32.mrb[0].mxu0
  %v6683 = vpop.f32.mrb[0].mxu0
  %6684 = vdwg.mxu0
  %6685 = vmatprep.subr.bf16.mxu0 %v4690
  %6686 = vmatpush1.bf16.msra.mxu0 %v4689
  %6687 = vmatprep.subr.bf16.mxu0 %v4694
  %6688 = vmatpush1.bf16.msra.mxu0 %v4693
  %6689 = vmatprep.subr.bf16.mxu0 %v4698
  %6690 = vmatpush1.bf16.msra.mxu0 %v4697
  %6691 = vmatprep.subr.bf16.mxu0 %v4702
  %6692 = vmatpush1.bf16.msra.mxu0 %v4701
  %6693 = vmatprep.subr.bf16.mxu0 %v4706
  %6694 = vmatpush1.bf16.msra.mxu0 %v4705
  %6695 = vmatprep.subr.bf16.mxu0 %v4710
  %6696 = vmatpush1.bf16.msra.mxu0 %v4709
  %6697 = vmatprep.subr.bf16.mxu0 %v4714
  %6698 = vmatpush1.bf16.msra.mxu0 %v4713
  %6699 = vmatprep.subr.bf16.mxu0 %v4718
  %6700 = vmatpush1.bf16.msra.mxu0 %v4717
  %6701 = vmatprep.subr.bf16.mxu0 %v4722
  %6702 = vmatpush1.bf16.msra.mxu0 %v4721
  %6703 = vmatprep.subr.bf16.mxu0 %v4726
  %6704 = vmatpush1.bf16.msra.mxu0 %v4725
  %6705 = vmatprep.subr.bf16.mxu0 %v4730
  %6706 = vmatpush1.bf16.msra.mxu0 %v4729
  %6707 = vmatprep.subr.bf16.mxu0 %v4734
  %6708 = vmatpush1.bf16.msra.mxu0 %v4733
  %6709 = vmatprep.subr.bf16.mxu0 %v4738
  %6710 = vmatpush1.bf16.msra.mxu0 %v4737
  %6711 = vmatprep.subr.bf16.mxu0 %v4742
  %6712 = vmatpush1.bf16.msra.mxu0 %v4741
  %6713 = vmatprep.subr.bf16.mxu0 %v4746
  %6714 = vmatpush1.bf16.msra.mxu0 %v4745
  %6715 = vmatprep.subr.bf16.mxu0 %v4750
  %6716 = vmatpush1.bf16.msra.mxu0 %v4749
  %6717 = vmatprep.mubr.bf16.mxu0 %v1242
  %6718 = vmatmul.mubr.bf16.gmra.mrb[0].mxu0 %v1241
  %v6719 = vpop.f32.mrb[0].mxu0
  %v6720 = vadd.f32 %v6669, %v6719
  %v6721 = vpop.f32.mrb[0].mxu0
  %v6722 = vadd.f32 %v6671, %v6721
  %v6723 = vpop.f32.mrb[0].mxu0
  %v6724 = vadd.f32 %v6673, %v6723
  %v6725 = vpop.f32.mrb[0].mxu0
  %v6726 = vadd.f32 %v6675, %v6725
  %6727 = vmatprep.mubr.bf16.mxu0 %v1274
  %6728 = vmatmul.mubr.bf16.gmra.mrb[0].mxu0 %v1273
  %v6729 = vpop.f32.mrb[0].mxu0
  %v6730 = vadd.f32 %v6679, %v6729
  %v6731 = vpop.f32.mrb[0].mxu0
  %v6732 = vadd.f32 %v6681, %v6731
  %v6733 = vpop.f32.mrb[0].mxu0
  %v6734 = vpop.f32.mrb[0].mxu0
  %6735 = vdwg.mxu0
  %6736 = vmatprep.subr.bf16.mxu0 %v4754
  %6737 = vmatpush1.bf16.msra.mxu0 %v4753
  %6738 = vmatprep.subr.bf16.mxu0 %v4758
  %6739 = vmatpush1.bf16.msra.mxu0 %v4757
  %6740 = vmatprep.subr.bf16.mxu0 %v4762
  %6741 = vmatpush1.bf16.msra.mxu0 %v4761
  %6742 = vmatprep.subr.bf16.mxu0 %v4766
  %6743 = vmatpush1.bf16.msra.mxu0 %v4765
  %6744 = vmatprep.subr.bf16.mxu0 %v4770
  %6745 = vmatpush1.bf16.msra.mxu0 %v4769
  %6746 = vmatprep.subr.bf16.mxu0 %v4774
  %6747 = vmatpush1.bf16.msra.mxu0 %v4773
  %6748 = vmatprep.subr.bf16.mxu0 %v4778
  %6749 = vmatpush1.bf16.msra.mxu0 %v4777
  %6750 = vmatprep.subr.bf16.mxu0 %v4782
  %6751 = vmatpush1.bf16.msra.mxu0 %v4781
  %6752 = vmatprep.subr.bf16.mxu0 %v4786
  %6753 = vmatpush1.bf16.msra.mxu0 %v4785
  %6754 = vmatprep.subr.bf16.mxu0 %v4790
  %6755 = vmatpush1.bf16.msra.mxu0 %v4789
  %6756 = vmatprep.subr.bf16.mxu0 %v4794
  %6757 = vmatpush1.bf16.msra.mxu0 %v4793
  %6758 = vmatprep.subr.bf16.mxu0 %v4798
  %6759 = vmatpush1.bf16.msra.mxu0 %v4797
  %6760 = vmatprep.subr.bf16.mxu0 %v4802
  %6761 = vmatpush1.bf16.msra.mxu0 %v4801
  %6762 = vmatprep.subr.bf16.mxu0 %v4806
  %6763 = vmatpush1.bf16.msra.mxu0 %v4805
  %6764 = vmatprep.subr.bf16.mxu0 %v4810
  %6765 = vmatpush1.bf16.msra.mxu0 %v4809
  %6766 = vmatprep.subr.bf16.mxu0 %v4814
  %6767 = vmatpush1.bf16.msra.mxu0 %v4813
  %6768 = vmatprep.mubr.bf16.mxu0 %v1244
  %6769 = vmatmul.mubr.bf16.gmra.mrb[0].mxu0 %v1243
  %v6770 = vpop.f32.mrb[0].mxu0
  %v6771 = vadd.f32 %v6720, %v6770
  %v6772 = vpop.f32.mrb[0].mxu0
  %v6773 = vadd.f32 %v6722, %v6772
  %v6774 = vpop.f32.mrb[0].mxu0
  %v6775 = vadd.f32 %v6724, %v6774
  %v6776 = vpop.f32.mrb[0].mxu0
  %v6777 = vadd.f32 %v6726, %v6776
  %6778 = vmatprep.mubr.bf16.mxu0 %v1276
  %6779 = vmatmul.mubr.bf16.gmra.mrb[0].mxu0 %v1275
  %v6780 = vpop.f32.mrb[0].mxu0
  %v6781 = vadd.f32 %v6730, %v6780
  %v6782 = vpop.f32.mrb[0].mxu0
  %v6783 = vadd.f32 %v6732, %v6782
  %v6784 = vpop.f32.mrb[0].mxu0
  %v6785 = vpop.f32.mrb[0].mxu0
  %6786 = vdwg.mxu0
  %6787 = vmatprep.subr.bf16.mxu0 %v4818
  %6788 = vmatpush1.bf16.msra.mxu0 %v4817
  %6789 = vmatprep.subr.bf16.mxu0 %v4822
  %6790 = vmatpush1.bf16.msra.mxu0 %v4821
  %6791 = vmatprep.subr.bf16.mxu0 %v4826
  %6792 = vmatpush1.bf16.msra.mxu0 %v4825
  %6793 = vmatprep.subr.bf16.mxu0 %v4830
  %6794 = vmatpush1.bf16.msra.mxu0 %v4829
  %6795 = vmatprep.subr.bf16.mxu0 %v4834
  %6796 = vmatpush1.bf16.msra.mxu0 %v4833
  %6797 = vmatprep.subr.bf16.mxu0 %v4838
  %6798 = vmatpush1.bf16.msra.mxu0 %v4837
  %6799 = vmatprep.subr.bf16.mxu0 %v4842
  %6800 = vmatpush1.bf16.msra.mxu0 %v4841
  %6801 = vmatprep.subr.bf16.mxu0 %v4846
  %6802 = vmatpush1.bf16.msra.mxu0 %v4845
  %6803 = vmatprep.subr.bf16.mxu0 %v4850
  %6804 = vmatpush1.bf16.msra.mxu0 %v4849
  %6805 = vmatprep.subr.bf16.mxu0 %v4854
  %6806 = vmatpush1.bf16.msra.mxu0 %v4853
  %6807 = vmatprep.subr.bf16.mxu0 %v4858
  %6808 = vmatpush1.bf16.msra.mxu0 %v4857
  %6809 = vmatprep.subr.bf16.mxu0 %v4862
  %6810 = vmatpush1.bf16.msra.mxu0 %v4861
  %6811 = vmatprep.subr.bf16.mxu0 %v4866
  %6812 = vmatpush1.bf16.msra.mxu0 %v4865
  %6813 = vmatprep.subr.bf16.mxu0 %v4870
  %6814 = vmatpush1.bf16.msra.mxu0 %v4869
  %6815 = vmatprep.subr.bf16.mxu0 %v4874
  %6816 = vmatpush1.bf16.msra.mxu0 %v4873
  %6817 = vmatprep.subr.bf16.mxu0 %v4878
  %6818 = vmatpush1.bf16.msra.mxu0 %v4877
  %6819 = vmatprep.mubr.bf16.mxu0 %v1246
  %6820 = vmatmul.mubr.bf16.gmra.mrb[0].mxu0 %v1245
  %v6821 = vpop.f32.mrb[0].mxu0
  %v6822 = vadd.f32 %v6771, %v6821
  %v6823 = vpop.f32.mrb[0].mxu0
  %v6824 = vadd.f32 %v6773, %v6823
  %v6825 = vpop.f32.mrb[0].mxu0
  %v6826 = vadd.f32 %v6775, %v6825
  %v6827 = vpop.f32.mrb[0].mxu0
  %v6828 = vadd.f32 %v6777, %v6827
  %6829 = vmatprep.mubr.bf16.mxu0 %v1278
  %6830 = vmatmul.mubr.bf16.gmra.mrb[0].mxu0 %v1277
  %v6831 = vpop.f32.mrb[0].mxu0
  %v6832 = vadd.f32 %v6781, %v6831
  %v6833 = vpop.f32.mrb[0].mxu0
  %v6834 = vadd.f32 %v6783, %v6833
  %v6835 = vpop.f32.mrb[0].mxu0
  %v6836 = vpop.f32.mrb[0].mxu0
  %6837 = vdwg.mxu0
  %6838 = vmatprep.subr.bf16.mxu0 %v4882
  %6839 = vmatpush1.bf16.msra.mxu0 %v4881
  %6840 = vmatprep.subr.bf16.mxu0 %v4886
  %6841 = vmatpush1.bf16.msra.mxu0 %v4885
  %6842 = vmatprep.subr.bf16.mxu0 %v4890
  %6843 = vmatpush1.bf16.msra.mxu0 %v4889
  %6844 = vmatprep.subr.bf16.mxu0 %v4894
  %6845 = vmatpush1.bf16.msra.mxu0 %v4893
  %6846 = vmatprep.subr.bf16.mxu0 %v4898
  %6847 = vmatpush1.bf16.msra.mxu0 %v4897
  %6848 = vmatprep.subr.bf16.mxu0 %v4902
  %6849 = vmatpush1.bf16.msra.mxu0 %v4901
  %6850 = vmatprep.subr.bf16.mxu0 %v4906
  %6851 = vmatpush1.bf16.msra.mxu0 %v4905
  %6852 = vmatprep.subr.bf16.mxu0 %v4910
  %6853 = vmatpush1.bf16.msra.mxu0 %v4909
  %6854 = vmatprep.subr.bf16.mxu0 %v4914
  %6855 = vmatpush1.bf16.msra.mxu0 %v4913
  %6856 = vmatprep.subr.bf16.mxu0 %v4918
  %6857 = vmatpush1.bf16.msra.mxu0 %v4917
  %6858 = vmatprep.subr.bf16.mxu0 %v4922
  %6859 = vmatpush1.bf16.msra.mxu0 %v4921
  %6860 = vmatprep.subr.bf16.mxu0 %v4926
  %6861 = vmatpush1.bf16.msra.mxu0 %v4925
  %6862 = vmatprep.subr.bf16.mxu0 %v4930
  %6863 = vmatpush1.bf16.msra.mxu0 %v4929
  %6864 = vmatprep.subr.bf16.mxu0 %v4934
  %6865 = vmatpush1.bf16.msra.mxu0 %v4933
  %6866 = vmatprep.subr.bf16.mxu0 %v4938
  %6867 = vmatpush1.bf16.msra.mxu0 %v4937
  %6868 = vmatprep.subr.bf16.mxu0 %v4942
  %6869 = vmatpush1.bf16.msra.mxu0 %v4941
  %6870 = vmatprep.mubr.bf16.mxu0 %v1248
  %6871 = vmatmul.mubr.bf16.gmra.mrb[0].mxu0 %v1247
  %v6872 = vpop.f32.mrb[0].mxu0
  %v6873 = vadd.f32 %v6822, %v6872
  %v6874 = vpop.f32.mrb[0].mxu0
  %v6875 = vadd.f32 %v6824, %v6874
  %v6876 = vpop.f32.mrb[0].mxu0
  %v6877 = vadd.f32 %v6826, %v6876
  %v6878 = vpop.f32.mrb[0].mxu0
  %v6879 = vadd.f32 %v6828, %v6878
  %6880 = vmatprep.mubr.bf16.mxu0 %v1280
  %6881 = vmatmul.mubr.bf16.gmra.mrb[0].mxu0 %v1279
  %v6882 = vpop.f32.mrb[0].mxu0
  %v6883 = vadd.f32 %v6832, %v6882
  %v6884 = vpop.f32.mrb[0].mxu0
  %v6885 = vadd.f32 %v6834, %v6884
  %v6886 = vpop.f32.mrb[0].mxu0
  %v6887 = vpop.f32.mrb[0].mxu0
  %6888 = vdwg.mxu0
  %6889 = vmatprep.subr.bf16.mxu0 %v4946
  %6890 = vmatpush1.bf16.msra.mxu0 %v4945
  %6891 = vmatprep.subr.bf16.mxu0 %v4950
  %6892 = vmatpush1.bf16.msra.mxu0 %v4949
  %6893 = vmatprep.subr.bf16.mxu0 %v4954
  %6894 = vmatpush1.bf16.msra.mxu0 %v4953
  %6895 = vmatprep.subr.bf16.mxu0 %v4958
  %6896 = vmatpush1.bf16.msra.mxu0 %v4957
  %6897 = vmatprep.subr.bf16.mxu0 %v4962
  %6898 = vmatpush1.bf16.msra.mxu0 %v4961
  %6899 = vmatprep.subr.bf16.mxu0 %v4966
  %6900 = vmatpush1.bf16.msra.mxu0 %v4965
  %6901 = vmatprep.subr.bf16.mxu0 %v4970
  %6902 = vmatpush1.bf16.msra.mxu0 %v4969
  %6903 = vmatprep.subr.bf16.mxu0 %v4974
  %6904 = vmatpush1.bf16.msra.mxu0 %v4973
  %6905 = vmatprep.subr.bf16.mxu0 %v4978
  %6906 = vmatpush1.bf16.msra.mxu0 %v4977
  %6907 = vmatprep.subr.bf16.mxu0 %v4982
  %6908 = vmatpush1.bf16.msra.mxu0 %v4981
  %6909 = vmatprep.subr.bf16.mxu0 %v4986
  %6910 = vmatpush1.bf16.msra.mxu0 %v4985
  %6911 = vmatprep.subr.bf16.mxu0 %v4990
  %6912 = vmatpush1.bf16.msra.mxu0 %v4989
  %6913 = vmatprep.subr.bf16.mxu0 %v4994
  %6914 = vmatpush1.bf16.msra.mxu0 %v4993
  %6915 = vmatprep.subr.bf16.mxu0 %v4998
  %6916 = vmatpush1.bf16.msra.mxu0 %v4997
  %6917 = vmatprep.subr.bf16.mxu0 %v5002
  %6918 = vmatpush1.bf16.msra.mxu0 %v5001
  %6919 = vmatprep.subr.bf16.mxu0 %v5006
  %6920 = vmatpush1.bf16.msra.mxu0 %v5005
  %6921 = vmatprep.mubr.bf16.mxu0 %v1250
  %6922 = vmatmul.mubr.bf16.gmra.mrb[0].mxu0 %v1249
  %v6923 = vpop.f32.mrb[0].mxu0
  %v6924 = vadd.f32 %v6873, %v6923
  %v6925 = vpop.f32.mrb[0].mxu0
  %v6926 = vadd.f32 %v6875, %v6925
  %v6927 = vpop.f32.mrb[0].mxu0
  %v6928 = vadd.f32 %v6877, %v6927
  %v6929 = vpop.f32.mrb[0].mxu0
  %v6930 = vadd.f32 %v6879, %v6929
  %6931 = vmatprep.mubr.bf16.mxu0 %v1282
  %6932 = vmatmul.mubr.bf16.gmra.mrb[0].mxu0 %v1281
  %v6933 = vpop.f32.mrb[0].mxu0
  %v6934 = vadd.f32 %v6883, %v6933
  %v6935 = vpop.f32.mrb[0].mxu0
  %v6936 = vadd.f32 %v6885, %v6935
  %v6937 = vpop.f32.mrb[0].mxu0
  %v6938 = vpop.f32.mrb[0].mxu0
  %6939 = vdwg.mxu0
  %6940 = vmatprep.subr.bf16.mxu0 %v5010
  %6941 = vmatpush1.bf16.msra.mxu0 %v5009
  %6942 = vmatprep.subr.bf16.mxu0 %v5014
  %6943 = vmatpush1.bf16.msra.mxu0 %v5013
  %6944 = vmatprep.subr.bf16.mxu0 %v5018
  %6945 = vmatpush1.bf16.msra.mxu0 %v5017
  %6946 = vmatprep.subr.bf16.mxu0 %v5022
  %6947 = vmatpush1.bf16.msra.mxu0 %v5021
  %6948 = vmatprep.subr.bf16.mxu0 %v5026
  %6949 = vmatpush1.bf16.msra.mxu0 %v5025
  %6950 = vmatprep.subr.bf16.mxu0 %v5030
  %6951 = vmatpush1.bf16.msra.mxu0 %v5029
  %6952 = vmatprep.subr.bf16.mxu0 %v5034
  %6953 = vmatpush1.bf16.msra.mxu0 %v5033
  %6954 = vmatprep.subr.bf16.mxu0 %v5038
  %6955 = vmatpush1.bf16.msra.mxu0 %v5037
  %6956 = vmatprep.subr.bf16.mxu0 %v5042
  %6957 = vmatpush1.bf16.msra.mxu0 %v5041
  %6958 = vmatprep.subr.bf16.mxu0 %v5046
  %6959 = vmatpush1.bf16.msra.mxu0 %v5045
  %6960 = vmatprep.subr.bf16.mxu0 %v5050
  %6961 = vmatpush1.bf16.msra.mxu0 %v5049
  %6962 = vmatprep.subr.bf16.mxu0 %v5054
  %6963 = vmatpush1.bf16.msra.mxu0 %v5053
  %6964 = vmatprep.subr.bf16.mxu0 %v5058
  %6965 = vmatpush1.bf16.msra.mxu0 %v5057
  %6966 = vmatprep.subr.bf16.mxu0 %v5062
  %6967 = vmatpush1.bf16.msra.mxu0 %v5061
  %6968 = vmatprep.subr.bf16.mxu0 %v5066
  %6969 = vmatpush1.bf16.msra.mxu0 %v5065
  %6970 = vmatprep.subr.bf16.mxu0 %v5070
  %6971 = vmatpush1.bf16.msra.mxu0 %v5069
  %6972 = vmatprep.mubr.bf16.mxu0 %v1252
  %6973 = vmatmul.mubr.bf16.gmra.mrb[0].mxu0 %v1251
  %v6974 = vpop.f32.mrb[0].mxu0
  %v6975 = vadd.f32 %v6924, %v6974
  %v6976 = vpop.f32.mrb[0].mxu0
  %v6977 = vadd.f32 %v6926, %v6976
  %v6978 = vpop.f32.mrb[0].mxu0
  %v6979 = vadd.f32 %v6928, %v6978
  %v6980 = vpop.f32.mrb[0].mxu0
  %v6981 = vadd.f32 %v6930, %v6980
  %6982 = vmatprep.mubr.bf16.mxu0 %v1284
  %6983 = vmatmul.mubr.bf16.gmra.mrb[0].mxu0 %v1283
  %v6984 = vpop.f32.mrb[0].mxu0
  %v6985 = vadd.f32 %v6934, %v6984
  %v6986 = vpop.f32.mrb[0].mxu0
  %v6987 = vadd.f32 %v6936, %v6986
  %v6988 = vpop.f32.mrb[0].mxu0
  %v6989 = vpop.f32.mrb[0].mxu0
  %6990 = vdwg.mxu0
  %6991 = vmatprep.subr.bf16.mxu0 %v5074
  %6992 = vmatpush1.bf16.msra.mxu0 %v5073
  %6993 = vmatprep.subr.bf16.mxu0 %v5078
  %6994 = vmatpush1.bf16.msra.mxu0 %v5077
  %6995 = vmatprep.subr.bf16.mxu0 %v5082
  %6996 = vmatpush1.bf16.msra.mxu0 %v5081
  %6997 = vmatprep.subr.bf16.mxu0 %v5086
  %6998 = vmatpush1.bf16.msra.mxu0 %v5085
  %6999 = vmatprep.subr.bf16.mxu0 %v5090
  %7000 = vmatpush1.bf16.msra.mxu0 %v5089
  %7001 = vmatprep.subr.bf16.mxu0 %v5094
  %7002 = vmatpush1.bf16.msra.mxu0 %v5093
  %7003 = vmatprep.subr.bf16.mxu0 %v5098
  %7004 = vmatpush1.bf16.msra.mxu0 %v5097
  %7005 = vmatprep.subr.bf16.mxu0 %v5102
  %7006 = vmatpush1.bf16.msra.mxu0 %v5101
  %7007 = vmatprep.subr.bf16.mxu0 %v5106
  %7008 = vmatpush1.bf16.msra.mxu0 %v5105
  %7009 = vmatprep.subr.bf16.mxu0 %v5110
  %7010 = vmatpush1.bf16.msra.mxu0 %v5109
  %7011 = vmatprep.subr.bf16.mxu0 %v5114
  %7012 = vmatpush1.bf16.msra.mxu0 %v5113
  %7013 = vmatprep.subr.bf16.mxu0 %v5118
  %7014 = vmatpush1.bf16.msra.mxu0 %v5117
  %7015 = vmatprep.subr.bf16.mxu0 %v5122
  %7016 = vmatpush1.bf16.msra.mxu0 %v5121
  %7017 = vmatprep.subr.bf16.mxu0 %v5126
  %7018 = vmatpush1.bf16.msra.mxu0 %v5125
  %7019 = vmatprep.subr.bf16.mxu0 %v5130
  %7020 = vmatpush1.bf16.msra.mxu0 %v5129
  %7021 = vmatprep.subr.bf16.mxu0 %v5134
  %7022 = vmatpush1.bf16.msra.mxu0 %v5133
  %7023 = vmatprep.mubr.bf16.mxu0 %v1254
  %7024 = vmatmul.mubr.bf16.gmra.mrb[0].mxu0 %v1253
  %v7025 = vpop.f32.mrb[0].mxu0
  %v7026 = vadd.f32 %v6975, %v7025
  %v7027 = vpop.f32.mrb[0].mxu0
  %v7028 = vadd.f32 %v6977, %v7027
  %v7029 = vpop.f32.mrb[0].mxu0
  %v7030 = vadd.f32 %v6979, %v7029
  %v7031 = vpop.f32.mrb[0].mxu0
  %v7032 = vadd.f32 %v6981, %v7031
  %7033 = vmatprep.mubr.bf16.mxu0 %v1286
  %7034 = vmatmul.mubr.bf16.gmra.mrb[0].mxu0 %v1285
  %v7035 = vpop.f32.mrb[0].mxu0
  %v7036 = vadd.f32 %v6985, %v7035
  %v7037 = vpop.f32.mrb[0].mxu0
  %v7038 = vadd.f32 %v6987, %v7037
  %v7039 = vpop.f32.mrb[0].mxu0
  %v7040 = vpop.f32.mrb[0].mxu0
  %7041 = vdwg.mxu0
  %7042 = vmatprep.subr.bf16.mxu0 %v5138
  %7043 = vmatpush1.bf16.msra.mxu0 %v5137
  %7044 = vmatprep.subr.bf16.mxu0 %v5142
  %7045 = vmatpush1.bf16.msra.mxu0 %v5141
  %7046 = vmatprep.subr.bf16.mxu0 %v5146
  %7047 = vmatpush1.bf16.msra.mxu0 %v5145
  %7048 = vmatprep.subr.bf16.mxu0 %v5150
  %7049 = vmatpush1.bf16.msra.mxu0 %v5149
  %7050 = vmatprep.subr.bf16.mxu0 %v5154
  %7051 = vmatpush1.bf16.msra.mxu0 %v5153
  %7052 = vmatprep.subr.bf16.mxu0 %v5158
  %7053 = vmatpush1.bf16.msra.mxu0 %v5157
  %7054 = vmatprep.subr.bf16.mxu0 %v5162
  %7055 = vmatpush1.bf16.msra.mxu0 %v5161
  %7056 = vmatprep.subr.bf16.mxu0 %v5166
  %7057 = vmatpush1.bf16.msra.mxu0 %v5165
  %7058 = vmatprep.subr.bf16.mxu0 %v5170
  %7059 = vmatpush1.bf16.msra.mxu0 %v5169
  %7060 = vmatprep.subr.bf16.mxu0 %v5174
  %7061 = vmatpush1.bf16.msra.mxu0 %v5173
  %7062 = vmatprep.subr.bf16.mxu0 %v5178
  %7063 = vmatpush1.bf16.msra.mxu0 %v5177
  %7064 = vmatprep.subr.bf16.mxu0 %v5182
  %7065 = vmatpush1.bf16.msra.mxu0 %v5181
  %7066 = vmatprep.subr.bf16.mxu0 %v5186
  %7067 = vmatpush1.bf16.msra.mxu0 %v5185
  %7068 = vmatprep.subr.bf16.mxu0 %v5190
  %7069 = vmatpush1.bf16.msra.mxu0 %v5189
  %7070 = vmatprep.subr.bf16.mxu0 %v5194
  %7071 = vmatpush1.bf16.msra.mxu0 %v5193
  %7072 = vmatprep.subr.bf16.mxu0 %v5198
  %7073 = vmatpush1.bf16.msra.mxu0 %v5197
  %7074 = vmatprep.mubr.bf16.mxu0 %v1256
  %7075 = vmatmul.mubr.bf16.gmra.mrb[0].mxu0 %v1255
  %v7076 = vpop.f32.mrb[0].mxu0
  %v7077 = vadd.f32 %v7026, %v7076
  %v7078 = vpop.f32.mrb[0].mxu0
  %v7079 = vadd.f32 %v7028, %v7078
  %v7080 = vpop.f32.mrb[0].mxu0
  %v7081 = vadd.f32 %v7030, %v7080
  %v7082 = vpop.f32.mrb[0].mxu0
  %v7083 = vadd.f32 %v7032, %v7082
  %7084 = vmatprep.mubr.bf16.mxu0 %v1288
  %7085 = vmatmul.mubr.bf16.gmra.mrb[0].mxu0 %v1287
  %v7086 = vpop.f32.mrb[0].mxu0
  %v7087 = vadd.f32 %v7036, %v7086
  %v7088 = vpop.f32.mrb[0].mxu0
  %v7089 = vadd.f32 %v7038, %v7088
  %v7090 = vpop.f32.mrb[0].mxu0
  %v7091 = vpop.f32.mrb[0].mxu0
  %7092 = vdwg.mxu0
  %7093 = vmatprep.subr.bf16.mxu0 %v5202
  %7094 = vmatpush1.bf16.msra.mxu0 %v5201
  %7095 = vmatprep.subr.bf16.mxu0 %v5206
  %7096 = vmatpush1.bf16.msra.mxu0 %v5205
  %7097 = vmatprep.subr.bf16.mxu0 %v5210
  %7098 = vmatpush1.bf16.msra.mxu0 %v5209
  %7099 = vmatprep.subr.bf16.mxu0 %v5214
  %7100 = vmatpush1.bf16.msra.mxu0 %v5213
  %7101 = vmatprep.subr.bf16.mxu0 %v5218
  %7102 = vmatpush1.bf16.msra.mxu0 %v5217
  %7103 = vmatprep.subr.bf16.mxu0 %v5222
  %7104 = vmatpush1.bf16.msra.mxu0 %v5221
  %7105 = vmatprep.subr.bf16.mxu0 %v5226
  %7106 = vmatpush1.bf16.msra.mxu0 %v5225
  %7107 = vmatprep.subr.bf16.mxu0 %v5230
  %7108 = vmatpush1.bf16.msra.mxu0 %v5229
  %7109 = vmatprep.subr.bf16.mxu0 %v5234
  %7110 = vmatpush1.bf16.msra.mxu0 %v5233
  %7111 = vmatprep.subr.bf16.mxu0 %v5238
  %7112 = vmatpush1.bf16.msra.mxu0 %v5237
  %7113 = vmatprep.subr.bf16.mxu0 %v5242
  %7114 = vmatpush1.bf16.msra.mxu0 %v5241
  %7115 = vmatprep.subr.bf16.mxu0 %v5246
  %7116 = vmatpush1.bf16.msra.mxu0 %v5245
  %7117 = vmatprep.subr.bf16.mxu0 %v5250
  %7118 = vmatpush1.bf16.msra.mxu0 %v5249
  %7119 = vmatprep.subr.bf16.mxu0 %v5254
  %7120 = vmatpush1.bf16.msra.mxu0 %v5253
  %7121 = vmatprep.subr.bf16.mxu0 %v5258
  %7122 = vmatpush1.bf16.msra.mxu0 %v5257
  %7123 = vmatprep.subr.bf16.mxu0 %v5262
  %7124 = vmatpush1.bf16.msra.mxu0 %v5261
  %7125 = vmatprep.mubr.bf16.mxu0 %v1258
  %7126 = vmatmul.mubr.bf16.gmra.mrb[0].mxu0 %v1257
  %v7127 = vpop.f32.mrb[0].mxu0
  %v7128 = vadd.f32 %v7077, %v7127
  %v7129 = vpop.f32.mrb[0].mxu0
  %v7130 = vadd.f32 %v7079, %v7129
  %v7131 = vpop.f32.mrb[0].mxu0
  %v7132 = vadd.f32 %v7081, %v7131
  %v7133 = vpop.f32.mrb[0].mxu0
  %v7134 = vadd.f32 %v7083, %v7133
  %7135 = vmatprep.mubr.bf16.mxu0 %v1290
  %7136 = vmatmul.mubr.bf16.gmra.mrb[0].mxu0 %v1289
  %v7137 = vpop.f32.mrb[0].mxu0
  %v7138 = vadd.f32 %v7087, %v7137
  %v7139 = vpop.f32.mrb[0].mxu0
  %v7140 = vadd.f32 %v7089, %v7139
  %v7141 = vpop.f32.mrb[0].mxu0
  %v7142 = vpop.f32.mrb[0].mxu0
  %7143 = vdwg.mxu0
  %7144 = vmatprep.subr.bf16.mxu0 %v5266
  %7145 = vmatpush1.bf16.msra.mxu0 %v5265
  %7146 = vmatprep.subr.bf16.mxu0 %v5270
  %7147 = vmatpush1.bf16.msra.mxu0 %v5269
  %7148 = vmatprep.subr.bf16.mxu0 %v5274
  %7149 = vmatpush1.bf16.msra.mxu0 %v5273
  %7150 = vmatprep.subr.bf16.mxu0 %v5278
  %7151 = vmatpush1.bf16.msra.mxu0 %v5277
  %7152 = vmatprep.subr.bf16.mxu0 %v5282
  %7153 = vmatpush1.bf16.msra.mxu0 %v5281
  %7154 = vmatprep.subr.bf16.mxu0 %v5286
  %7155 = vmatpush1.bf16.msra.mxu0 %v5285
  %7156 = vmatprep.subr.bf16.mxu0 %v5290
  %7157 = vmatpush1.bf16.msra.mxu0 %v5289
  %7158 = vmatprep.subr.bf16.mxu0 %v5294
  %7159 = vmatpush1.bf16.msra.mxu0 %v5293
  %7160 = vmatprep.subr.bf16.mxu0 %v5298
  %7161 = vmatpush1.bf16.msra.mxu0 %v5297
  %7162 = vmatprep.subr.bf16.mxu0 %v5302
  %7163 = vmatpush1.bf16.msra.mxu0 %v5301
  %7164 = vmatprep.subr.bf16.mxu0 %v5306
  %7165 = vmatpush1.bf16.msra.mxu0 %v5305
  %7166 = vmatprep.subr.bf16.mxu0 %v5310
  %7167 = vmatpush1.bf16.msra.mxu0 %v5309
  %7168 = vmatprep.subr.bf16.mxu0 %v5314
  %7169 = vmatpush1.bf16.msra.mxu0 %v5313
  %7170 = vmatprep.subr.bf16.mxu0 %v5318
  %7171 = vmatpush1.bf16.msra.mxu0 %v5317
  %7172 = vmatprep.subr.bf16.mxu0 %v5322
  %7173 = vmatpush1.bf16.msra.mxu0 %v5321
  %7174 = vmatprep.subr.bf16.mxu0 %v5326
  %7175 = vmatpush1.bf16.msra.mxu0 %v5325
  %7176 = vmatprep.mubr.bf16.mxu0 %v1260
  %7177 = vmatmul.mubr.bf16.gmra.mrb[0].mxu0 %v1259
  %v7178 = vpop.f32.mrb[0].mxu0
  %v7179 = vadd.f32 %v7128, %v7178
  %v7180 = vpop.f32.mrb[0].mxu0
  %v7181 = vadd.f32 %v7130, %v7180
  %v7182 = vpop.f32.mrb[0].mxu0
  %v7183 = vadd.f32 %v7132, %v7182
  %v7184 = vpop.f32.mrb[0].mxu0
  %v7185 = vadd.f32 %v7134, %v7184
  %7186 = vmatprep.mubr.bf16.mxu0 %v1292
  %7187 = vmatmul.mubr.bf16.gmra.mrb[0].mxu0 %v1291
  %v7188 = vpop.f32.mrb[0].mxu0
  %v7189 = vadd.f32 %v7138, %v7188
  %v7190 = vpop.f32.mrb[0].mxu0
  %v7191 = vadd.f32 %v7140, %v7190
  %v7192 = vpop.f32.mrb[0].mxu0
  %v7193 = vpop.f32.mrb[0].mxu0
  %7194 = vdwg.mxu0
  %7195 = vmatprep.subr.bf16.mxu0 %v5330
  %7196 = vmatpush1.bf16.msra.mxu0 %v5329
  %7197 = vmatprep.subr.bf16.mxu0 %v5334
  %7198 = vmatpush1.bf16.msra.mxu0 %v5333
  %7199 = vmatprep.subr.bf16.mxu0 %v5338
  %7200 = vmatpush1.bf16.msra.mxu0 %v5337
  %7201 = vmatprep.subr.bf16.mxu0 %v5342
  %7202 = vmatpush1.bf16.msra.mxu0 %v5341
  %7203 = vmatprep.subr.bf16.mxu0 %v5346
  %7204 = vmatpush1.bf16.msra.mxu0 %v5345
  %7205 = vmatprep.subr.bf16.mxu0 %v5350
  %7206 = vmatpush1.bf16.msra.mxu0 %v5349
  %7207 = vmatprep.subr.bf16.mxu0 %v5354
  %7208 = vmatpush1.bf16.msra.mxu0 %v5353
  %7209 = vmatprep.subr.bf16.mxu0 %v5358
  %7210 = vmatpush1.bf16.msra.mxu0 %v5357
  %7211 = vmatprep.subr.bf16.mxu0 %v5362
  %7212 = vmatpush1.bf16.msra.mxu0 %v5361
  %7213 = vmatprep.subr.bf16.mxu0 %v5366
  %7214 = vmatpush1.bf16.msra.mxu0 %v5365
  %7215 = vmatprep.subr.bf16.mxu0 %v5370
  %7216 = vmatpush1.bf16.msra.mxu0 %v5369
  %7217 = vmatprep.subr.bf16.mxu0 %v5374
  %7218 = vmatpush1.bf16.msra.mxu0 %v5373
  %7219 = vmatprep.subr.bf16.mxu0 %v5378
  %7220 = vmatpush1.bf16.msra.mxu0 %v5377
  %7221 = vmatprep.subr.bf16.mxu0 %v5382
  %7222 = vmatpush1.bf16.msra.mxu0 %v5381
  %7223 = vmatprep.subr.bf16.mxu0 %v5386
  %7224 = vmatpush1.bf16.msra.mxu0 %v5385
  %7225 = vmatprep.subr.bf16.mxu0 %v5390
  %7226 = vmatpush1.bf16.msra.mxu0 %v5389
  %7227 = vmatprep.mubr.bf16.mxu0 %v1262
  %7228 = vmatmul.mubr.bf16.gmra.mrb[0].mxu0 %v1261
  %v7229 = vpop.f32.mrb[0].mxu0
  %v7230 = vadd.f32 %v7179, %v7229
  %v7231 = vpop.f32.mrb[0].mxu0
  %v7232 = vadd.f32 %v7181, %v7231
  %v7233 = vpop.f32.mrb[0].mxu0
  %v7234 = vadd.f32 %v7183, %v7233
  %v7235 = vpop.f32.mrb[0].mxu0
  %v7236 = vadd.f32 %v7185, %v7235
  %7237 = vmatprep.mubr.bf16.mxu0 %v1294
  %7238 = vmatmul.mubr.bf16.gmra.mrb[0].mxu0 %v1293
  %v7239 = vpop.f32.mrb[0].mxu0
  %v7240 = vadd.f32 %v7189, %v7239
  %v7241 = vpop.f32.mrb[0].mxu0
  %v7242 = vadd.f32 %v7191, %v7241
  %v7243 = vpop.f32.mrb[0].mxu0
  %v7244 = vpop.f32.mrb[0].mxu0
  %7245 = vdwg.mxu0
  %7246 = vmatprep.subr.bf16.mxu0 %v5394
  %7247 = vmatpush1.bf16.msra.mxu0 %v5393
  %7248 = vmatprep.subr.bf16.mxu0 %v5398
  %7249 = vmatpush1.bf16.msra.mxu0 %v5397
  %7250 = vmatprep.subr.bf16.mxu0 %v5402
  %7251 = vmatpush1.bf16.msra.mxu0 %v5401
  %7252 = vmatprep.subr.bf16.mxu0 %v5406
  %7253 = vmatpush1.bf16.msra.mxu0 %v5405
  %7254 = vmatprep.subr.bf16.mxu0 %v5410
  %7255 = vmatpush1.bf16.msra.mxu0 %v5409
  %7256 = vmatprep.subr.bf16.mxu0 %v5414
  %7257 = vmatpush1.bf16.msra.mxu0 %v5413
  %7258 = vmatprep.subr.bf16.mxu0 %v5418
  %7259 = vmatpush1.bf16.msra.mxu0 %v5417
  %7260 = vmatprep.subr.bf16.mxu0 %v5422
  %7261 = vmatpush1.bf16.msra.mxu0 %v5421
  %7262 = vmatprep.subr.bf16.mxu0 %v5426
  %7263 = vmatpush1.bf16.msra.mxu0 %v5425
  %7264 = vmatprep.subr.bf16.mxu0 %v5430
  %7265 = vmatpush1.bf16.msra.mxu0 %v5429
  %7266 = vmatprep.subr.bf16.mxu0 %v5434
  %7267 = vmatpush1.bf16.msra.mxu0 %v5433
  %7268 = vmatprep.subr.bf16.mxu0 %v5438
  %7269 = vmatpush1.bf16.msra.mxu0 %v5437
  %7270 = vmatprep.subr.bf16.mxu0 %v5442
  %7271 = vmatpush1.bf16.msra.mxu0 %v5441
  %7272 = vmatprep.subr.bf16.mxu0 %v5446
  %7273 = vmatpush1.bf16.msra.mxu0 %v5445
  %7274 = vmatprep.subr.bf16.mxu0 %v5450
  %7275 = vmatpush1.bf16.msra.mxu0 %v5449
  %7276 = vmatprep.subr.bf16.mxu0 %v5454
  %7277 = vmatpush1.bf16.msra.mxu0 %v5453
  %7278 = vmatprep.mubr.bf16.mxu0 %v1264
  %7279 = vmatmul.mubr.bf16.gmra.mrb[0].mxu0 %v1263
  %v7280 = vpop.f32.mrb[0].mxu0
  %v7281 = vadd.f32 %v7230, %v7280
  %v7282 = vpop.f32.mrb[0].mxu0
  %v7283 = vadd.f32 %v7232, %v7282
  %v7284 = vpop.f32.mrb[0].mxu0
  %v7285 = vadd.f32 %v7234, %v7284
  %v7286 = vpop.f32.mrb[0].mxu0
  %v7287 = vadd.f32 %v7236, %v7286
  %7288 = vmatprep.mubr.bf16.mxu0 %v1296
  %7289 = vmatmul.mubr.bf16.gmra.mrb[0].mxu0 %v1295
  %v7290 = vpop.f32.mrb[0].mxu0
  %v7291 = vadd.f32 %v7240, %v7290
  %v7292 = vpop.f32.mrb[0].mxu0
  %v7293 = vadd.f32 %v7242, %v7292
  %v7294 = vpop.f32.mrb[0].mxu0
  %v7295 = vpop.f32.mrb[0].mxu0
  %7296 = vdwg.mxu0
  %7297 = vmatprep.subr.bf16.mxu0 %v4436
  %7298 = vmatpush1.bf16.msra.mxu0 %v4435
  %7299 = vmatprep.subr.bf16.mxu0 %v4440
  %7300 = vmatpush1.bf16.msra.mxu0 %v4439
  %7301 = vmatprep.subr.bf16.mxu0 %v4444
  %7302 = vmatpush1.bf16.msra.mxu0 %v4443
  %7303 = vmatprep.subr.bf16.mxu0 %v4448
  %7304 = vmatpush1.bf16.msra.mxu0 %v4447
  %7305 = vmatprep.subr.bf16.mxu0 %v4452
  %7306 = vmatpush1.bf16.msra.mxu0 %v4451
  %7307 = vmatprep.subr.bf16.mxu0 %v4456
  %7308 = vmatpush1.bf16.msra.mxu0 %v4455
  %7309 = vmatprep.subr.bf16.mxu0 %v4460
  %7310 = vmatpush1.bf16.msra.mxu0 %v4459
  %7311 = vmatprep.subr.bf16.mxu0 %v4464
  %7312 = vmatpush1.bf16.msra.mxu0 %v4463
  %7313 = vmatprep.subr.bf16.mxu0 %v4468
  %7314 = vmatpush1.bf16.msra.mxu0 %v4467
  %7315 = vmatprep.subr.bf16.mxu0 %v4472
  %7316 = vmatpush1.bf16.msra.mxu0 %v4471
  %7317 = vmatprep.subr.bf16.mxu0 %v4476
  %7318 = vmatpush1.bf16.msra.mxu0 %v4475
  %7319 = vmatprep.subr.bf16.mxu0 %v4480
  %7320 = vmatpush1.bf16.msra.mxu0 %v4479
  %7321 = vmatprep.subr.bf16.mxu0 %v4484
  %7322 = vmatpush1.bf16.msra.mxu0 %v4483
  %7323 = vmatprep.subr.bf16.mxu0 %v4488
  %7324 = vmatpush1.bf16.msra.mxu0 %v4487
  %7325 = vmatprep.subr.bf16.mxu0 %v4492
  %7326 = vmatpush1.bf16.msra.mxu0 %v4491
  %7327 = vmatprep.subr.bf16.mxu0 %v4496
  %7328 = vmatpush1.bf16.msra.mxu0 %v4495
  %7329 = vmatprep.mubr.bf16.mxu0 %v1234
  %7330 = vmatmul.mubr.bf16.gmra.mrb[0].mxu0 %v1233
  %v7331 = vpop.f32.mrb[0].mxu0
  %v7332 = vadd.f32 0.0, %v7331
  %v7333 = vpop.f32.mrb[0].mxu0
  %v7334 = vadd.f32 0.0, %v7333
  %v7335 = vpop.f32.mrb[0].mxu0
  %v7336 = vadd.f32 0.0, %v7335
  %v7337 = vpop.f32.mrb[0].mxu0
  %v7338 = vadd.f32 0.0, %v7337
  %7339 = vmatprep.mubr.bf16.mxu0 %v1266
  %7340 = vmatmul.mubr.bf16.gmra.mrb[0].mxu0 %v1265
  %v7341 = vpop.f32.mrb[0].mxu0
  %v7342 = vadd.f32 0.0, %v7341
  %v7343 = vpop.f32.mrb[0].mxu0
  %v7344 = vadd.f32 0.0, %v7343
  %v7345 = vpop.f32.mrb[0].mxu0
  %v7346 = vpop.f32.mrb[0].mxu0
  %7347 = vdwg.mxu0
  %7348 = vmatprep.subr.bf16.mxu0 %v4500
  %7349 = vmatpush1.bf16.msra.mxu0 %v4499
  %7350 = vmatprep.subr.bf16.mxu0 %v4504
  %7351 = vmatpush1.bf16.msra.mxu0 %v4503
  %7352 = vmatprep.subr.bf16.mxu0 %v4508
  %7353 = vmatpush1.bf16.msra.mxu0 %v4507
  %7354 = vmatprep.subr.bf16.mxu0 %v4512
  %7355 = vmatpush1.bf16.msra.mxu0 %v4511
  %7356 = vmatprep.subr.bf16.mxu0 %v4516
  %7357 = vmatpush1.bf16.msra.mxu0 %v4515
  %7358 = vmatprep.subr.bf16.mxu0 %v4520
  %7359 = vmatpush1.bf16.msra.mxu0 %v4519
  %7360 = vmatprep.subr.bf16.mxu0 %v4524
  %7361 = vmatpush1.bf16.msra.mxu0 %v4523
  %7362 = vmatprep.subr.bf16.mxu0 %v4528
  %7363 = vmatpush1.bf16.msra.mxu0 %v4527
  %7364 = vmatprep.subr.bf16.mxu0 %v4532
  %7365 = vmatpush1.bf16.msra.mxu0 %v4531
  %7366 = vmatprep.subr.bf16.mxu0 %v4536
  %7367 = vmatpush1.bf16.msra.mxu0 %v4535
  %7368 = vmatprep.subr.bf16.mxu0 %v4540
  %7369 = vmatpush1.bf16.msra.mxu0 %v4539
  %7370 = vmatprep.subr.bf16.mxu0 %v4544
  %7371 = vmatpush1.bf16.msra.mxu0 %v4543
  %7372 = vmatprep.subr.bf16.mxu0 %v4548
  %7373 = vmatpush1.bf16.msra.mxu0 %v4547
  %7374 = vmatprep.subr.bf16.mxu0 %v4552
  %7375 = vmatpush1.bf16.msra.mxu0 %v4551
  %7376 = vmatprep.subr.bf16.mxu0 %v4556
  %7377 = vmatpush1.bf16.msra.mxu0 %v4555
  %7378 = vmatprep.subr.bf16.mxu0 %v4560
  %7379 = vmatpush1.bf16.msra.mxu0 %v4559
  %7380 = vmatprep.mubr.bf16.mxu0 %v1236
  %7381 = vmatmul.mubr.bf16.gmra.mrb[0].mxu0 %v1235
  %v7382 = vpop.f32.mrb[0].mxu0
  %v7383 = vadd.f32 %v7332, %v7382
  %v7384 = vpop.f32.mrb[0].mxu0
  %v7385 = vadd.f32 %v7334, %v7384
  %v7386 = vpop.f32.mrb[0].mxu0
  %v7387 = vadd.f32 %v7336, %v7386
  %v7388 = vpop.f32.mrb[0].mxu0
  %v7389 = vadd.f32 %v7338, %v7388
  %7390 = vmatprep.mubr.bf16.mxu0 %v1268
  %7391 = vmatmul.mubr.bf16.gmra.mrb[0].mxu0 %v1267
  %v7392 = vpop.f32.mrb[0].mxu0
  %v7393 = vadd.f32 %v7342, %v7392
  %v7394 = vpop.f32.mrb[0].mxu0
  %v7395 = vadd.f32 %v7344, %v7394
  %v7396 = vpop.f32.mrb[0].mxu0
  %v7397 = vpop.f32.mrb[0].mxu0
  %7398 = vdwg.mxu0
  %7399 = vmatprep.subr.bf16.mxu0 %v4564
  %7400 = vmatpush1.bf16.msra.mxu0 %v4563
  %7401 = vmatprep.subr.bf16.mxu0 %v4568
  %7402 = vmatpush1.bf16.msra.mxu0 %v4567
  %7403 = vmatprep.subr.bf16.mxu0 %v4572
  %7404 = vmatpush1.bf16.msra.mxu0 %v4571
  %7405 = vmatprep.subr.bf16.mxu0 %v4576
  %7406 = vmatpush1.bf16.msra.mxu0 %v4575
  %7407 = vmatprep.subr.bf16.mxu0 %v4580
  %7408 = vmatpush1.bf16.msra.mxu0 %v4579
  %7409 = vmatprep.subr.bf16.mxu0 %v4584
  %7410 = vmatpush1.bf16.msra.mxu0 %v4583
  %7411 = vmatprep.subr.bf16.mxu0 %v4588
  %7412 = vmatpush1.bf16.msra.mxu0 %v4587
  %7413 = vmatprep.subr.bf16.mxu0 %v4592
  %7414 = vmatpush1.bf16.msra.mxu0 %v4591
  %7415 = vmatprep.subr.bf16.mxu0 %v4596
  %7416 = vmatpush1.bf16.msra.mxu0 %v4595
  %7417 = vmatprep.subr.bf16.mxu0 %v4600
  %7418 = vmatpush1.bf16.msra.mxu0 %v4599
  %7419 = vmatprep.subr.bf16.mxu0 %v4604
  %7420 = vmatpush1.bf16.msra.mxu0 %v4603
  %7421 = vmatprep.subr.bf16.mxu0 %v4608
  %7422 = vmatpush1.bf16.msra.mxu0 %v4607
  %7423 = vmatprep.subr.bf16.mxu0 %v4612
  %7424 = vmatpush1.bf16.msra.mxu0 %v4611
  %7425 = vmatprep.subr.bf16.mxu0 %v4616
  %7426 = vmatpush1.bf16.msra.mxu0 %v4615
  %7427 = vmatprep.subr.bf16.mxu0 %v4620
  %7428 = vmatpush1.bf16.msra.mxu0 %v4619
  %7429 = vmatprep.subr.bf16.mxu0 %v4624
  %7430 = vmatpush1.bf16.msra.mxu0 %v4623
  %7431 = vmatprep.mubr.bf16.mxu0 %v1238
  %7432 = vmatmul.mubr.bf16.gmra.mrb[0].mxu0 %v1237
  %v7433 = vpop.f32.mrb[0].mxu0
  %v7434 = vadd.f32 %v7383, %v7433
  %v7435 = vpop.f32.mrb[0].mxu0
  %v7436 = vadd.f32 %v7385, %v7435
  %v7437 = vpop.f32.mrb[0].mxu0
  %v7438 = vadd.f32 %v7387, %v7437
  %v7439 = vpop.f32.mrb[0].mxu0
  %v7440 = vadd.f32 %v7389, %v7439
  %7441 = vmatprep.mubr.bf16.mxu0 %v1270
  %7442 = vmatmul.mubr.bf16.gmra.mrb[0].mxu0 %v1269
  %v7443 = vpop.f32.mrb[0].mxu0
  %v7444 = vadd.f32 %v7393, %v7443
  %v7445 = vpop.f32.mrb[0].mxu0
  %v7446 = vadd.f32 %v7395, %v7445
  %v7447 = vpop.f32.mrb[0].mxu0
  %v7448 = vpop.f32.mrb[0].mxu0
  %7449 = vdwg.mxu0
  %7450 = vmatprep.subr.bf16.mxu0 %v4628
  %7451 = vmatpush1.bf16.msra.mxu0 %v4627
  %7452 = vmatprep.subr.bf16.mxu0 %v4632
  %7453 = vmatpush1.bf16.msra.mxu0 %v4631
  %7454 = vmatprep.subr.bf16.mxu0 %v4636
  %7455 = vmatpush1.bf16.msra.mxu0 %v4635
  %7456 = vmatprep.subr.bf16.mxu0 %v4640
  %7457 = vmatpush1.bf16.msra.mxu0 %v4639
  %7458 = vmatprep.subr.bf16.mxu0 %v4644
  %7459 = vmatpush1.bf16.msra.mxu0 %v4643
  %7460 = vmatprep.subr.bf16.mxu0 %v4648
  %7461 = vmatpush1.bf16.msra.mxu0 %v4647
  %7462 = vmatprep.subr.bf16.mxu0 %v4652
  %7463 = vmatpush1.bf16.msra.mxu0 %v4651
  %7464 = vmatprep.subr.bf16.mxu0 %v4656
  %7465 = vmatpush1.bf16.msra.mxu0 %v4655
  %7466 = vmatprep.subr.bf16.mxu0 %v4660
  %7467 = vmatpush1.bf16.msra.mxu0 %v4659
  %7468 = vmatprep.subr.bf16.mxu0 %v4664
  %7469 = vmatpush1.bf16.msra.mxu0 %v4663
  %7470 = vmatprep.subr.bf16.mxu0 %v4668
  %7471 = vmatpush1.bf16.msra.mxu0 %v4667
  %7472 = vmatprep.subr.bf16.mxu0 %v4672
  %7473 = vmatpush1.bf16.msra.mxu0 %v4671
  %7474 = vmatprep.subr.bf16.mxu0 %v4676
  %7475 = vmatpush1.bf16.msra.mxu0 %v4675
  %7476 = vmatprep.subr.bf16.mxu0 %v4680
  %7477 = vmatpush1.bf16.msra.mxu0 %v4679
  %7478 = vmatprep.subr.bf16.mxu0 %v4684
  %7479 = vmatpush1.bf16.msra.mxu0 %v4683
  %7480 = vmatprep.subr.bf16.mxu0 %v4688
  %7481 = vmatpush1.bf16.msra.mxu0 %v4687
  %7482 = vmatprep.mubr.bf16.mxu0 %v1240
  %7483 = vmatmul.mubr.bf16.gmra.mrb[0].mxu0 %v1239
  %v7484 = vpop.f32.mrb[0].mxu0
  %v7485 = vadd.f32 %v7434, %v7484
  %v7486 = vpop.f32.mrb[0].mxu0
  %v7487 = vadd.f32 %v7436, %v7486
  %v7488 = vpop.f32.mrb[0].mxu0
  %v7489 = vadd.f32 %v7438, %v7488
  %v7490 = vpop.f32.mrb[0].mxu0
  %v7491 = vadd.f32 %v7440, %v7490
  %7492 = vmatprep.mubr.bf16.mxu0 %v1272
  %7493 = vmatmul.mubr.bf16.gmra.mrb[0].mxu0 %v1271
  %v7494 = vpop.f32.mrb[0].mxu0
  %v7495 = vadd.f32 %v7444, %v7494
  %v7496 = vpop.f32.mrb[0].mxu0
  %v7497 = vadd.f32 %v7446, %v7496
  %v7498 = vpop.f32.mrb[0].mxu0
  %v7499 = vpop.f32.mrb[0].mxu0
  %7500 = vdwg.mxu0
  %7501 = vmatprep.subr.bf16.mxu0 %v4692
  %7502 = vmatpush1.bf16.msra.mxu0 %v4691
  %7503 = vmatprep.subr.bf16.mxu0 %v4696
  %7504 = vmatpush1.bf16.msra.mxu0 %v4695
  %7505 = vmatprep.subr.bf16.mxu0 %v4700
  %7506 = vmatpush1.bf16.msra.mxu0 %v4699
  %7507 = vmatprep.subr.bf16.mxu0 %v4704
  %7508 = vmatpush1.bf16.msra.mxu0 %v4703
  %7509 = vmatprep.subr.bf16.mxu0 %v4708
  %7510 = vmatpush1.bf16.msra.mxu0 %v4707
  %7511 = vmatprep.subr.bf16.mxu0 %v4712
  %7512 = vmatpush1.bf16.msra.mxu0 %v4711
  %7513 = vmatprep.subr.bf16.mxu0 %v4716
  %7514 = vmatpush1.bf16.msra.mxu0 %v4715
  %7515 = vmatprep.subr.bf16.mxu0 %v4720
  %7516 = vmatpush1.bf16.msra.mxu0 %v4719
  %7517 = vmatprep.subr.bf16.mxu0 %v4724
  %7518 = vmatpush1.bf16.msra.mxu0 %v4723
  %7519 = vmatprep.subr.bf16.mxu0 %v4728
  %7520 = vmatpush1.bf16.msra.mxu0 %v4727
  %7521 = vmatprep.subr.bf16.mxu0 %v4732
  %7522 = vmatpush1.bf16.msra.mxu0 %v4731
  %7523 = vmatprep.subr.bf16.mxu0 %v4736
  %7524 = vmatpush1.bf16.msra.mxu0 %v4735
  %7525 = vmatprep.subr.bf16.mxu0 %v4740
  %7526 = vmatpush1.bf16.msra.mxu0 %v4739
  %7527 = vmatprep.subr.bf16.mxu0 %v4744
  %7528 = vmatpush1.bf16.msra.mxu0 %v4743
  %7529 = vmatprep.subr.bf16.mxu0 %v4748
  %7530 = vmatpush1.bf16.msra.mxu0 %v4747
  %7531 = vmatprep.subr.bf16.mxu0 %v4752
  %7532 = vmatpush1.bf16.msra.mxu0 %v4751
  %7533 = vmatprep.mubr.bf16.mxu0 %v1242
  %7534 = vmatmul.mubr.bf16.gmra.mrb[0].mxu0 %v1241
  %v7535 = vpop.f32.mrb[0].mxu0
  %v7536 = vadd.f32 %v7485, %v7535
  %v7537 = vpop.f32.mrb[0].mxu0
  %v7538 = vadd.f32 %v7487, %v7537
  %v7539 = vpop.f32.mrb[0].mxu0
  %v7540 = vadd.f32 %v7489, %v7539
  %v7541 = vpop.f32.mrb[0].mxu0
  %v7542 = vadd.f32 %v7491, %v7541
  %7543 = vmatprep.mubr.bf16.mxu0 %v1274
  %7544 = vmatmul.mubr.bf16.gmra.mrb[0].mxu0 %v1273
  %v7545 = vpop.f32.mrb[0].mxu0
  %v7546 = vadd.f32 %v7495, %v7545
  %v7547 = vpop.f32.mrb[0].mxu0
  %v7548 = vadd.f32 %v7497, %v7547
  %v7549 = vpop.f32.mrb[0].mxu0
  %v7550 = vpop.f32.mrb[0].mxu0
  %7551 = vdwg.mxu0
  %7552 = vmatprep.subr.bf16.mxu0 %v4756
  %7553 = vmatpush1.bf16.msra.mxu0 %v4755
  %7554 = vmatprep.subr.bf16.mxu0 %v4760
  %7555 = vmatpush1.bf16.msra.mxu0 %v4759
  %7556 = vmatprep.subr.bf16.mxu0 %v4764
  %7557 = vmatpush1.bf16.msra.mxu0 %v4763
  %7558 = vmatprep.subr.bf16.mxu0 %v4768
  %7559 = vmatpush1.bf16.msra.mxu0 %v4767
  %7560 = vmatprep.subr.bf16.mxu0 %v4772
  %7561 = vmatpush1.bf16.msra.mxu0 %v4771
  %7562 = vmatprep.subr.bf16.mxu0 %v4776
  %7563 = vmatpush1.bf16.msra.mxu0 %v4775
  %7564 = vmatprep.subr.bf16.mxu0 %v4780
  %7565 = vmatpush1.bf16.msra.mxu0 %v4779
  %7566 = vmatprep.subr.bf16.mxu0 %v4784
  %7567 = vmatpush1.bf16.msra.mxu0 %v4783
  %7568 = vmatprep.subr.bf16.mxu0 %v4788
  %7569 = vmatpush1.bf16.msra.mxu0 %v4787
  %7570 = vmatprep.subr.bf16.mxu0 %v4792
  %7571 = vmatpush1.bf16.msra.mxu0 %v4791
  %7572 = vmatprep.subr.bf16.mxu0 %v4796
  %7573 = vmatpush1.bf16.msra.mxu0 %v4795
  %7574 = vmatprep.subr.bf16.mxu0 %v4800
  %7575 = vmatpush1.bf16.msra.mxu0 %v4799
  %7576 = vmatprep.subr.bf16.mxu0 %v4804
  %7577 = vmatpush1.bf16.msra.mxu0 %v4803
  %7578 = vmatprep.subr.bf16.mxu0 %v4808
  %7579 = vmatpush1.bf16.msra.mxu0 %v4807
  %7580 = vmatprep.subr.bf16.mxu0 %v4812
  %7581 = vmatpush1.bf16.msra.mxu0 %v4811
  %7582 = vmatprep.subr.bf16.mxu0 %v4816
  %7583 = vmatpush1.bf16.msra.mxu0 %v4815
  %7584 = vmatprep.mubr.bf16.mxu0 %v1244
  %7585 = vmatmul.mubr.bf16.gmra.mrb[0].mxu0 %v1243
  %v7586 = vpop.f32.mrb[0].mxu0
  %v7587 = vadd.f32 %v7536, %v7586
  %v7588 = vpop.f32.mrb[0].mxu0
  %v7589 = vadd.f32 %v7538, %v7588
  %v7590 = vpop.f32.mrb[0].mxu0
  %v7591 = vadd.f32 %v7540, %v7590
  %v7592 = vpop.f32.mrb[0].mxu0
  %v7593 = vadd.f32 %v7542, %v7592
  %7594 = vmatprep.mubr.bf16.mxu0 %v1276
  %7595 = vmatmul.mubr.bf16.gmra.mrb[0].mxu0 %v1275
  %v7596 = vpop.f32.mrb[0].mxu0
  %v7597 = vadd.f32 %v7546, %v7596
  %v7598 = vpop.f32.mrb[0].mxu0
  %v7599 = vadd.f32 %v7548, %v7598
  %v7600 = vpop.f32.mrb[0].mxu0
  %v7601 = vpop.f32.mrb[0].mxu0
  %7602 = vdwg.mxu0
  %7603 = vmatprep.subr.bf16.mxu0 %v4820
  %7604 = vmatpush1.bf16.msra.mxu0 %v4819
  %7605 = vmatprep.subr.bf16.mxu0 %v4824
  %7606 = vmatpush1.bf16.msra.mxu0 %v4823
  %7607 = vmatprep.subr.bf16.mxu0 %v4828
  %7608 = vmatpush1.bf16.msra.mxu0 %v4827
  %7609 = vmatprep.subr.bf16.mxu0 %v4832
  %7610 = vmatpush1.bf16.msra.mxu0 %v4831
  %7611 = vmatprep.subr.bf16.mxu0 %v4836
  %7612 = vmatpush1.bf16.msra.mxu0 %v4835
  %7613 = vmatprep.subr.bf16.mxu0 %v4840
  %7614 = vmatpush1.bf16.msra.mxu0 %v4839
  %7615 = vmatprep.subr.bf16.mxu0 %v4844
  %7616 = vmatpush1.bf16.msra.mxu0 %v4843
  %7617 = vmatprep.subr.bf16.mxu0 %v4848
  %7618 = vmatpush1.bf16.msra.mxu0 %v4847
  %7619 = vmatprep.subr.bf16.mxu0 %v4852
  %7620 = vmatpush1.bf16.msra.mxu0 %v4851
  %7621 = vmatprep.subr.bf16.mxu0 %v4856
  %7622 = vmatpush1.bf16.msra.mxu0 %v4855
  %7623 = vmatprep.subr.bf16.mxu0 %v4860
  %7624 = vmatpush1.bf16.msra.mxu0 %v4859
  %7625 = vmatprep.subr.bf16.mxu0 %v4864
  %7626 = vmatpush1.bf16.msra.mxu0 %v4863
  %7627 = vmatprep.subr.bf16.mxu0 %v4868
  %7628 = vmatpush1.bf16.msra.mxu0 %v4867
  %7629 = vmatprep.subr.bf16.mxu0 %v4872
  %7630 = vmatpush1.bf16.msra.mxu0 %v4871
  %7631 = vmatprep.subr.bf16.mxu0 %v4876
  %7632 = vmatpush1.bf16.msra.mxu0 %v4875
  %7633 = vmatprep.subr.bf16.mxu0 %v4880
  %7634 = vmatpush1.bf16.msra.mxu0 %v4879
  %7635 = vmatprep.mubr.bf16.mxu0 %v1246
  %7636 = vmatmul.mubr.bf16.gmra.mrb[0].mxu0 %v1245
  %v7637 = vpop.f32.mrb[0].mxu0
  %v7638 = vadd.f32 %v7587, %v7637
  %v7639 = vpop.f32.mrb[0].mxu0
  %v7640 = vadd.f32 %v7589, %v7639
  %v7641 = vpop.f32.mrb[0].mxu0
  %v7642 = vadd.f32 %v7591, %v7641
  %v7643 = vpop.f32.mrb[0].mxu0
  %v7644 = vadd.f32 %v7593, %v7643
  %7645 = vmatprep.mubr.bf16.mxu0 %v1278
  %7646 = vmatmul.mubr.bf16.gmra.mrb[0].mxu0 %v1277
  %v7647 = vpop.f32.mrb[0].mxu0
  %v7648 = vadd.f32 %v7597, %v7647
  %v7649 = vpop.f32.mrb[0].mxu0
  %v7650 = vadd.f32 %v7599, %v7649
  %v7651 = vpop.f32.mrb[0].mxu0
  %v7652 = vpop.f32.mrb[0].mxu0
  %7653 = vdwg.mxu0
  %7654 = vmatprep.subr.bf16.mxu0 %v4884
  %7655 = vmatpush1.bf16.msra.mxu0 %v4883
  %7656 = vmatprep.subr.bf16.mxu0 %v4888
  %7657 = vmatpush1.bf16.msra.mxu0 %v4887
  %7658 = vmatprep.subr.bf16.mxu0 %v4892
  %7659 = vmatpush1.bf16.msra.mxu0 %v4891
  %7660 = vmatprep.subr.bf16.mxu0 %v4896
  %7661 = vmatpush1.bf16.msra.mxu0 %v4895
  %7662 = vmatprep.subr.bf16.mxu0 %v4900
  %7663 = vmatpush1.bf16.msra.mxu0 %v4899
  %7664 = vmatprep.subr.bf16.mxu0 %v4904
  %7665 = vmatpush1.bf16.msra.mxu0 %v4903
  %7666 = vmatprep.subr.bf16.mxu0 %v4908
  %7667 = vmatpush1.bf16.msra.mxu0 %v4907
  %7668 = vmatprep.subr.bf16.mxu0 %v4912
  %7669 = vmatpush1.bf16.msra.mxu0 %v4911
  %7670 = vmatprep.subr.bf16.mxu0 %v4916
  %7671 = vmatpush1.bf16.msra.mxu0 %v4915
  %7672 = vmatprep.subr.bf16.mxu0 %v4920
  %7673 = vmatpush1.bf16.msra.mxu0 %v4919
  %7674 = vmatprep.subr.bf16.mxu0 %v4924
  %7675 = vmatpush1.bf16.msra.mxu0 %v4923
  %7676 = vmatprep.subr.bf16.mxu0 %v4928
  %7677 = vmatpush1.bf16.msra.mxu0 %v4927
  %7678 = vmatprep.subr.bf16.mxu0 %v4932
  %7679 = vmatpush1.bf16.msra.mxu0 %v4931
  %7680 = vmatprep.subr.bf16.mxu0 %v4936
  %7681 = vmatpush1.bf16.msra.mxu0 %v4935
  %7682 = vmatprep.subr.bf16.mxu0 %v4940
  %7683 = vmatpush1.bf16.msra.mxu0 %v4939
  %7684 = vmatprep.subr.bf16.mxu0 %v4944
  %7685 = vmatpush1.bf16.msra.mxu0 %v4943
  %7686 = vmatprep.mubr.bf16.mxu0 %v1248
  %7687 = vmatmul.mubr.bf16.gmra.mrb[0].mxu0 %v1247
  %v7688 = vpop.f32.mrb[0].mxu0
  %v7689 = vadd.f32 %v7638, %v7688
  %v7690 = vpop.f32.mrb[0].mxu0
  %v7691 = vadd.f32 %v7640, %v7690
  %v7692 = vpop.f32.mrb[0].mxu0
  %v7693 = vadd.f32 %v7642, %v7692
  %v7694 = vpop.f32.mrb[0].mxu0
  %v7695 = vadd.f32 %v7644, %v7694
  %7696 = vmatprep.mubr.bf16.mxu0 %v1280
  %7697 = vmatmul.mubr.bf16.gmra.mrb[0].mxu0 %v1279
  %v7698 = vpop.f32.mrb[0].mxu0
  %v7699 = vadd.f32 %v7648, %v7698
  %v7700 = vpop.f32.mrb[0].mxu0
  %v7701 = vadd.f32 %v7650, %v7700
  %v7702 = vpop.f32.mrb[0].mxu0
  %v7703 = vpop.f32.mrb[0].mxu0
  %7704 = vdwg.mxu0
  %7705 = vmatprep.subr.bf16.mxu0 %v4948
  %7706 = vmatpush1.bf16.msra.mxu0 %v4947
  %7707 = vmatprep.subr.bf16.mxu0 %v4952
  %7708 = vmatpush1.bf16.msra.mxu0 %v4951
  %7709 = vmatprep.subr.bf16.mxu0 %v4956
  %7710 = vmatpush1.bf16.msra.mxu0 %v4955
  %7711 = vmatprep.subr.bf16.mxu0 %v4960
  %7712 = vmatpush1.bf16.msra.mxu0 %v4959
  %7713 = vmatprep.subr.bf16.mxu0 %v4964
  %7714 = vmatpush1.bf16.msra.mxu0 %v4963
  %7715 = vmatprep.subr.bf16.mxu0 %v4968
  %7716 = vmatpush1.bf16.msra.mxu0 %v4967
  %7717 = vmatprep.subr.bf16.mxu0 %v4972
  %7718 = vmatpush1.bf16.msra.mxu0 %v4971
  %7719 = vmatprep.subr.bf16.mxu0 %v4976
  %7720 = vmatpush1.bf16.msra.mxu0 %v4975
  %7721 = vmatprep.subr.bf16.mxu0 %v4980
  %7722 = vmatpush1.bf16.msra.mxu0 %v4979
  %7723 = vmatprep.subr.bf16.mxu0 %v4984
  %7724 = vmatpush1.bf16.msra.mxu0 %v4983
  %7725 = vmatprep.subr.bf16.mxu0 %v4988
  %7726 = vmatpush1.bf16.msra.mxu0 %v4987
  %7727 = vmatprep.subr.bf16.mxu0 %v4992
  %7728 = vmatpush1.bf16.msra.mxu0 %v4991
  %7729 = vmatprep.subr.bf16.mxu0 %v4996
  %7730 = vmatpush1.bf16.msra.mxu0 %v4995
  %7731 = vmatprep.subr.bf16.mxu0 %v5000
  %7732 = vmatpush1.bf16.msra.mxu0 %v4999
  %7733 = vmatprep.subr.bf16.mxu0 %v5004
  %7734 = vmatpush1.bf16.msra.mxu0 %v5003
  %7735 = vmatprep.subr.bf16.mxu0 %v5008
  %7736 = vmatpush1.bf16.msra.mxu0 %v5007
  %7737 = vmatprep.mubr.bf16.mxu0 %v1250
  %7738 = vmatmul.mubr.bf16.gmra.mrb[0].mxu0 %v1249
  %v7739 = vpop.f32.mrb[0].mxu0
  %v7740 = vadd.f32 %v7689, %v7739
  %v7741 = vpop.f32.mrb[0].mxu0
  %v7742 = vadd.f32 %v7691, %v7741
  %v7743 = vpop.f32.mrb[0].mxu0
  %v7744 = vadd.f32 %v7693, %v7743
  %v7745 = vpop.f32.mrb[0].mxu0
  %v7746 = vadd.f32 %v7695, %v7745
  %7747 = vmatprep.mubr.bf16.mxu0 %v1282
  %7748 = vmatmul.mubr.bf16.gmra.mrb[0].mxu0 %v1281
  %v7749 = vpop.f32.mrb[0].mxu0
  %v7750 = vadd.f32 %v7699, %v7749
  %v7751 = vpop.f32.mrb[0].mxu0
  %v7752 = vadd.f32 %v7701, %v7751
  %v7753 = vpop.f32.mrb[0].mxu0
  %v7754 = vpop.f32.mrb[0].mxu0
  %7755 = vdwg.mxu0
  %7756 = vmatprep.subr.bf16.mxu0 %v5012
  %7757 = vmatpush1.bf16.msra.mxu0 %v5011
  %7758 = vmatprep.subr.bf16.mxu0 %v5016
  %7759 = vmatpush1.bf16.msra.mxu0 %v5015
  %7760 = vmatprep.subr.bf16.mxu0 %v5020
  %7761 = vmatpush1.bf16.msra.mxu0 %v5019
  %7762 = vmatprep.subr.bf16.mxu0 %v5024
  %7763 = vmatpush1.bf16.msra.mxu0 %v5023
  %7764 = vmatprep.subr.bf16.mxu0 %v5028
  %7765 = vmatpush1.bf16.msra.mxu0 %v5027
  %7766 = vmatprep.subr.bf16.mxu0 %v5032
  %7767 = vmatpush1.bf16.msra.mxu0 %v5031
  %7768 = vmatprep.subr.bf16.mxu0 %v5036
  %7769 = vmatpush1.bf16.msra.mxu0 %v5035
  %7770 = vmatprep.subr.bf16.mxu0 %v5040
  %7771 = vmatpush1.bf16.msra.mxu0 %v5039
  %7772 = vmatprep.subr.bf16.mxu0 %v5044
  %7773 = vmatpush1.bf16.msra.mxu0 %v5043
  %7774 = vmatprep.subr.bf16.mxu0 %v5048
  %7775 = vmatpush1.bf16.msra.mxu0 %v5047
  %7776 = vmatprep.subr.bf16.mxu0 %v5052
  %7777 = vmatpush1.bf16.msra.mxu0 %v5051
  %7778 = vmatprep.subr.bf16.mxu0 %v5056
  %7779 = vmatpush1.bf16.msra.mxu0 %v5055
  %7780 = vmatprep.subr.bf16.mxu0 %v5060
  %7781 = vmatpush1.bf16.msra.mxu0 %v5059
  %7782 = vmatprep.subr.bf16.mxu0 %v5064
  %7783 = vmatpush1.bf16.msra.mxu0 %v5063
  %7784 = vmatprep.subr.bf16.mxu0 %v5068
  %7785 = vmatpush1.bf16.msra.mxu0 %v5067
  %7786 = vmatprep.subr.bf16.mxu0 %v5072
  %7787 = vmatpush1.bf16.msra.mxu0 %v5071
  %7788 = vmatprep.mubr.bf16.mxu0 %v1252
  %7789 = vmatmul.mubr.bf16.gmra.mrb[0].mxu0 %v1251
  %v7790 = vpop.f32.mrb[0].mxu0
  %v7791 = vadd.f32 %v7740, %v7790
  %v7792 = vpop.f32.mrb[0].mxu0
  %v7793 = vadd.f32 %v7742, %v7792
  %v7794 = vpop.f32.mrb[0].mxu0
  %v7795 = vadd.f32 %v7744, %v7794
  %v7796 = vpop.f32.mrb[0].mxu0
  %v7797 = vadd.f32 %v7746, %v7796
  %7798 = vmatprep.mubr.bf16.mxu0 %v1284
  %7799 = vmatmul.mubr.bf16.gmra.mrb[0].mxu0 %v1283
  %v7800 = vpop.f32.mrb[0].mxu0
  %v7801 = vadd.f32 %v7750, %v7800
  %v7802 = vpop.f32.mrb[0].mxu0
  %v7803 = vadd.f32 %v7752, %v7802
  %v7804 = vpop.f32.mrb[0].mxu0
  %v7805 = vpop.f32.mrb[0].mxu0
  %7806 = vdwg.mxu0
  %7807 = vmatprep.subr.bf16.mxu0 %v5076
  %7808 = vmatpush1.bf16.msra.mxu0 %v5075
  %7809 = vmatprep.subr.bf16.mxu0 %v5080
  %7810 = vmatpush1.bf16.msra.mxu0 %v5079
  %7811 = vmatprep.subr.bf16.mxu0 %v5084
  %7812 = vmatpush1.bf16.msra.mxu0 %v5083
  %7813 = vmatprep.subr.bf16.mxu0 %v5088
  %7814 = vmatpush1.bf16.msra.mxu0 %v5087
  %7815 = vmatprep.subr.bf16.mxu0 %v5092
  %7816 = vmatpush1.bf16.msra.mxu0 %v5091
  %7817 = vmatprep.subr.bf16.mxu0 %v5096
  %7818 = vmatpush1.bf16.msra.mxu0 %v5095
  %7819 = vmatprep.subr.bf16.mxu0 %v5100
  %7820 = vmatpush1.bf16.msra.mxu0 %v5099
  %7821 = vmatprep.subr.bf16.mxu0 %v5104
  %7822 = vmatpush1.bf16.msra.mxu0 %v5103
  %7823 = vmatprep.subr.bf16.mxu0 %v5108
  %7824 = vmatpush1.bf16.msra.mxu0 %v5107
  %7825 = vmatprep.subr.bf16.mxu0 %v5112
  %7826 = vmatpush1.bf16.msra.mxu0 %v5111
  %7827 = vmatprep.subr.bf16.mxu0 %v5116
  %7828 = vmatpush1.bf16.msra.mxu0 %v5115
  %7829 = vmatprep.subr.bf16.mxu0 %v5120
  %7830 = vmatpush1.bf16.msra.mxu0 %v5119
  %7831 = vmatprep.subr.bf16.mxu0 %v5124
  %7832 = vmatpush1.bf16.msra.mxu0 %v5123
  %7833 = vmatprep.subr.bf16.mxu0 %v5128
  %7834 = vmatpush1.bf16.msra.mxu0 %v5127
  %7835 = vmatprep.subr.bf16.mxu0 %v5132
  %7836 = vmatpush1.bf16.msra.mxu0 %v5131
  %7837 = vmatprep.subr.bf16.mxu0 %v5136
  %7838 = vmatpush1.bf16.msra.mxu0 %v5135
  %7839 = vmatprep.mubr.bf16.mxu0 %v1254
  %7840 = vmatmul.mubr.bf16.gmra.mrb[0].mxu0 %v1253
  %v7841 = vpop.f32.mrb[0].mxu0
  %v7842 = vadd.f32 %v7791, %v7841
  %v7843 = vpop.f32.mrb[0].mxu0
  %v7844 = vadd.f32 %v7793, %v7843
  %v7845 = vpop.f32.mrb[0].mxu0
  %v7846 = vadd.f32 %v7795, %v7845
  %v7847 = vpop.f32.mrb[0].mxu0
  %v7848 = vadd.f32 %v7797, %v7847
  %7849 = vmatprep.mubr.bf16.mxu0 %v1286
  %7850 = vmatmul.mubr.bf16.gmra.mrb[0].mxu0 %v1285
  %v7851 = vpop.f32.mrb[0].mxu0
  %v7852 = vadd.f32 %v7801, %v7851
  %v7853 = vpop.f32.mrb[0].mxu0
  %v7854 = vadd.f32 %v7803, %v7853
  %v7855 = vpop.f32.mrb[0].mxu0
  %v7856 = vpop.f32.mrb[0].mxu0
  %7857 = vdwg.mxu0
  %7858 = vmatprep.subr.bf16.mxu0 %v5140
  %7859 = vmatpush1.bf16.msra.mxu0 %v5139
  %7860 = vmatprep.subr.bf16.mxu0 %v5144
  %7861 = vmatpush1.bf16.msra.mxu0 %v5143
  %7862 = vmatprep.subr.bf16.mxu0 %v5148
  %7863 = vmatpush1.bf16.msra.mxu0 %v5147
  %7864 = vmatprep.subr.bf16.mxu0 %v5152
  %7865 = vmatpush1.bf16.msra.mxu0 %v5151
  %7866 = vmatprep.subr.bf16.mxu0 %v5156
  %7867 = vmatpush1.bf16.msra.mxu0 %v5155
  %7868 = vmatprep.subr.bf16.mxu0 %v5160
  %7869 = vmatpush1.bf16.msra.mxu0 %v5159
  %7870 = vmatprep.subr.bf16.mxu0 %v5164
  %7871 = vmatpush1.bf16.msra.mxu0 %v5163
  %7872 = vmatprep.subr.bf16.mxu0 %v5168
  %7873 = vmatpush1.bf16.msra.mxu0 %v5167
  %7874 = vmatprep.subr.bf16.mxu0 %v5172
  %7875 = vmatpush1.bf16.msra.mxu0 %v5171
  %7876 = vmatprep.subr.bf16.mxu0 %v5176
  %7877 = vmatpush1.bf16.msra.mxu0 %v5175
  %7878 = vmatprep.subr.bf16.mxu0 %v5180
  %7879 = vmatpush1.bf16.msra.mxu0 %v5179
  %7880 = vmatprep.subr.bf16.mxu0 %v5184
  %7881 = vmatpush1.bf16.msra.mxu0 %v5183
  %7882 = vmatprep.subr.bf16.mxu0 %v5188
  %7883 = vmatpush1.bf16.msra.mxu0 %v5187
  %7884 = vmatprep.subr.bf16.mxu0 %v5192
  %7885 = vmatpush1.bf16.msra.mxu0 %v5191
  %7886 = vmatprep.subr.bf16.mxu0 %v5196
  %7887 = vmatpush1.bf16.msra.mxu0 %v5195
  %7888 = vmatprep.subr.bf16.mxu0 %v5200
  %7889 = vmatpush1.bf16.msra.mxu0 %v5199
  %7890 = vmatprep.mubr.bf16.mxu0 %v1256
  %7891 = vmatmul.mubr.bf16.gmra.mrb[0].mxu0 %v1255
  %v7892 = vpop.f32.mrb[0].mxu0
  %v7893 = vadd.f32 %v7842, %v7892
  %v7894 = vpop.f32.mrb[0].mxu0
  %v7895 = vadd.f32 %v7844, %v7894
  %v7896 = vpop.f32.mrb[0].mxu0
  %v7897 = vadd.f32 %v7846, %v7896
  %v7898 = vpop.f32.mrb[0].mxu0
  %v7899 = vadd.f32 %v7848, %v7898
  %7900 = vmatprep.mubr.bf16.mxu0 %v1288
  %7901 = vmatmul.mubr.bf16.gmra.mrb[0].mxu0 %v1287
  %v7902 = vpop.f32.mrb[0].mxu0
  %v7903 = vadd.f32 %v7852, %v7902
  %v7904 = vpop.f32.mrb[0].mxu0
  %v7905 = vadd.f32 %v7854, %v7904
  %v7906 = vpop.f32.mrb[0].mxu0
  %v7907 = vpop.f32.mrb[0].mxu0
  %7908 = vdwg.mxu0
  %7909 = vmatprep.subr.bf16.mxu0 %v5204
  %7910 = vmatpush1.bf16.msra.mxu0 %v5203
  %7911 = vmatprep.subr.bf16.mxu0 %v5208
  %7912 = vmatpush1.bf16.msra.mxu0 %v5207
  %7913 = vmatprep.subr.bf16.mxu0 %v5212
  %7914 = vmatpush1.bf16.msra.mxu0 %v5211
  %7915 = vmatprep.subr.bf16.mxu0 %v5216
  %7916 = vmatpush1.bf16.msra.mxu0 %v5215
  %7917 = vmatprep.subr.bf16.mxu0 %v5220
  %7918 = vmatpush1.bf16.msra.mxu0 %v5219
  %7919 = vmatprep.subr.bf16.mxu0 %v5224
  %7920 = vmatpush1.bf16.msra.mxu0 %v5223
  %7921 = vmatprep.subr.bf16.mxu0 %v5228
  %7922 = vmatpush1.bf16.msra.mxu0 %v5227
  %7923 = vmatprep.subr.bf16.mxu0 %v5232
  %7924 = vmatpush1.bf16.msra.mxu0 %v5231
  %7925 = vmatprep.subr.bf16.mxu0 %v5236
  %7926 = vmatpush1.bf16.msra.mxu0 %v5235
  %7927 = vmatprep.subr.bf16.mxu0 %v5240
  %7928 = vmatpush1.bf16.msra.mxu0 %v5239
  %7929 = vmatprep.subr.bf16.mxu0 %v5244
  %7930 = vmatpush1.bf16.msra.mxu0 %v5243
  %7931 = vmatprep.subr.bf16.mxu0 %v5248
  %7932 = vmatpush1.bf16.msra.mxu0 %v5247
  %7933 = vmatprep.subr.bf16.mxu0 %v5252
  %7934 = vmatpush1.bf16.msra.mxu0 %v5251
  %7935 = vmatprep.subr.bf16.mxu0 %v5256
  %7936 = vmatpush1.bf16.msra.mxu0 %v5255
  %7937 = vmatprep.subr.bf16.mxu0 %v5260
  %7938 = vmatpush1.bf16.msra.mxu0 %v5259
  %7939 = vmatprep.subr.bf16.mxu0 %v5264
  %7940 = vmatpush1.bf16.msra.mxu0 %v5263
  %7941 = vmatprep.mubr.bf16.mxu0 %v1258
  %7942 = vmatmul.mubr.bf16.gmra.mrb[0].mxu0 %v1257
  %v7943 = vpop.f32.mrb[0].mxu0
  %v7944 = vadd.f32 %v7893, %v7943
  %v7945 = vpop.f32.mrb[0].mxu0
  %v7946 = vadd.f32 %v7895, %v7945
  %v7947 = vpop.f32.mrb[0].mxu0
  %v7948 = vadd.f32 %v7897, %v7947
  %v7949 = vpop.f32.mrb[0].mxu0
  %v7950 = vadd.f32 %v7899, %v7949
  %7951 = vmatprep.mubr.bf16.mxu0 %v1290
  %7952 = vmatmul.mubr.bf16.gmra.mrb[0].mxu0 %v1289
  %v7953 = vpop.f32.mrb[0].mxu0
  %v7954 = vadd.f32 %v7903, %v7953
  %v7955 = vpop.f32.mrb[0].mxu0
  %v7956 = vadd.f32 %v7905, %v7955
  %v7957 = vpop.f32.mrb[0].mxu0
  %v7958 = vpop.f32.mrb[0].mxu0
  %7959 = vdwg.mxu0
  %7960 = vmatprep.subr.bf16.mxu0 %v5268
  %7961 = vmatpush1.bf16.msra.mxu0 %v5267
  %7962 = vmatprep.subr.bf16.mxu0 %v5272
  %7963 = vmatpush1.bf16.msra.mxu0 %v5271
  %7964 = vmatprep.subr.bf16.mxu0 %v5276
  %7965 = vmatpush1.bf16.msra.mxu0 %v5275
  %7966 = vmatprep.subr.bf16.mxu0 %v5280
  %7967 = vmatpush1.bf16.msra.mxu0 %v5279
  %7968 = vmatprep.subr.bf16.mxu0 %v5284
  %7969 = vmatpush1.bf16.msra.mxu0 %v5283
  %7970 = vmatprep.subr.bf16.mxu0 %v5288
  %7971 = vmatpush1.bf16.msra.mxu0 %v5287
  %7972 = vmatprep.subr.bf16.mxu0 %v5292
  %7973 = vmatpush1.bf16.msra.mxu0 %v5291
  %7974 = vmatprep.subr.bf16.mxu0 %v5296
  %7975 = vmatpush1.bf16.msra.mxu0 %v5295
  %7976 = vmatprep.subr.bf16.mxu0 %v5300
  %7977 = vmatpush1.bf16.msra.mxu0 %v5299
  %7978 = vmatprep.subr.bf16.mxu0 %v5304
  %7979 = vmatpush1.bf16.msra.mxu0 %v5303
  %7980 = vmatprep.subr.bf16.mxu0 %v5308
  %7981 = vmatpush1.bf16.msra.mxu0 %v5307
  %7982 = vmatprep.subr.bf16.mxu0 %v5312
  %7983 = vmatpush1.bf16.msra.mxu0 %v5311
  %7984 = vmatprep.subr.bf16.mxu0 %v5316
  %7985 = vmatpush1.bf16.msra.mxu0 %v5315
  %7986 = vmatprep.subr.bf16.mxu0 %v5320
  %7987 = vmatpush1.bf16.msra.mxu0 %v5319
  %7988 = vmatprep.subr.bf16.mxu0 %v5324
  %7989 = vmatpush1.bf16.msra.mxu0 %v5323
  %7990 = vmatprep.subr.bf16.mxu0 %v5328
  %7991 = vmatpush1.bf16.msra.mxu0 %v5327
  %7992 = vmatprep.mubr.bf16.mxu0 %v1260
  %7993 = vmatmul.mubr.bf16.gmra.mrb[0].mxu0 %v1259
  %v7994 = vpop.f32.mrb[0].mxu0
  %v7995 = vadd.f32 %v7944, %v7994
  %v7996 = vpop.f32.mrb[0].mxu0
  %v7997 = vadd.f32 %v7946, %v7996
  %v7998 = vpop.f32.mrb[0].mxu0
  %v7999 = vadd.f32 %v7948, %v7998
  %v8000 = vpop.f32.mrb[0].mxu0
  %v8001 = vadd.f32 %v7950, %v8000
  %8002 = vmatprep.mubr.bf16.mxu0 %v1292
  %8003 = vmatmul.mubr.bf16.gmra.mrb[0].mxu0 %v1291
  %v8004 = vpop.f32.mrb[0].mxu0
  %v8005 = vadd.f32 %v7954, %v8004
  %v8006 = vpop.f32.mrb[0].mxu0
  %v8007 = vadd.f32 %v7956, %v8006
  %v8008 = vpop.f32.mrb[0].mxu0
  %v8009 = vpop.f32.mrb[0].mxu0
  %8010 = vdwg.mxu0
  %8011 = vmatprep.subr.bf16.mxu0 %v5332
  %8012 = vmatpush1.bf16.msra.mxu0 %v5331
  %8013 = vmatprep.subr.bf16.mxu0 %v5336
  %8014 = vmatpush1.bf16.msra.mxu0 %v5335
  %8015 = vmatprep.subr.bf16.mxu0 %v5340
  %8016 = vmatpush1.bf16.msra.mxu0 %v5339
  %8017 = vmatprep.subr.bf16.mxu0 %v5344
  %8018 = vmatpush1.bf16.msra.mxu0 %v5343
  %8019 = vmatprep.subr.bf16.mxu0 %v5348
  %8020 = vmatpush1.bf16.msra.mxu0 %v5347
  %8021 = vmatprep.subr.bf16.mxu0 %v5352
  %8022 = vmatpush1.bf16.msra.mxu0 %v5351
  %8023 = vmatprep.subr.bf16.mxu0 %v5356
  %8024 = vmatpush1.bf16.msra.mxu0 %v5355
  %8025 = vmatprep.subr.bf16.mxu0 %v5360
  %8026 = vmatpush1.bf16.msra.mxu0 %v5359
  %8027 = vmatprep.subr.bf16.mxu0 %v5364
  %8028 = vmatpush1.bf16.msra.mxu0 %v5363
  %8029 = vmatprep.subr.bf16.mxu0 %v5368
  %8030 = vmatpush1.bf16.msra.mxu0 %v5367
  %8031 = vmatprep.subr.bf16.mxu0 %v5372
  %8032 = vmatpush1.bf16.msra.mxu0 %v5371
  %8033 = vmatprep.subr.bf16.mxu0 %v5376
  %8034 = vmatpush1.bf16.msra.mxu0 %v5375
  %8035 = vmatprep.subr.bf16.mxu0 %v5380
  %8036 = vmatpush1.bf16.msra.mxu0 %v5379
  %8037 = vmatprep.subr.bf16.mxu0 %v5384
  %8038 = vmatpush1.bf16.msra.mxu0 %v5383
  %8039 = vmatprep.subr.bf16.mxu0 %v5388
  %8040 = vmatpush1.bf16.msra.mxu0 %v5387
  %8041 = vmatprep.subr.bf16.mxu0 %v5392
  %8042 = vmatpush1.bf16.msra.mxu0 %v5391
  %8043 = vmatprep.mubr.bf16.mxu0 %v1262
  %8044 = vmatmul.mubr.bf16.gmra.mrb[0].mxu0 %v1261
  %v8045 = vpop.f32.mrb[0].mxu0
  %v8046 = vadd.f32 %v7995, %v8045
  %v8047 = vpop.f32.mrb[0].mxu0
  %v8048 = vadd.f32 %v7997, %v8047
  %v8049 = vpop.f32.mrb[0].mxu0
  %v8050 = vadd.f32 %v7999, %v8049
  %v8051 = vpop.f32.mrb[0].mxu0
  %v8052 = vadd.f32 %v8001, %v8051
  %8053 = vmatprep.mubr.bf16.mxu0 %v1294
  %8054 = vmatmul.mubr.bf16.gmra.mrb[0].mxu0 %v1293
  %v8055 = vpop.f32.mrb[0].mxu0
  %v8056 = vadd.f32 %v8005, %v8055
  %v8057 = vpop.f32.mrb[0].mxu0
  %v8058 = vadd.f32 %v8007, %v8057
  %v8059 = vpop.f32.mrb[0].mxu0
  %v8060 = vpop.f32.mrb[0].mxu0
  %8061 = vdwg.mxu0
  %8062 = vmatprep.subr.bf16.mxu0 %v5396
  %8063 = vmatpush1.bf16.msra.mxu0 %v5395
  %8064 = vmatprep.subr.bf16.mxu0 %v5400
  %8065 = vmatpush1.bf16.msra.mxu0 %v5399
  %8066 = vmatprep.subr.bf16.mxu0 %v5404
  %8067 = vmatpush1.bf16.msra.mxu0 %v5403
  %8068 = vmatprep.subr.bf16.mxu0 %v5408
  %8069 = vmatpush1.bf16.msra.mxu0 %v5407
  %8070 = vmatprep.subr.bf16.mxu0 %v5412
  %8071 = vmatpush1.bf16.msra.mxu0 %v5411
  %8072 = vmatprep.subr.bf16.mxu0 %v5416
  %8073 = vmatpush1.bf16.msra.mxu0 %v5415
  %8074 = vmatprep.subr.bf16.mxu0 %v5420
  %8075 = vmatpush1.bf16.msra.mxu0 %v5419
  %8076 = vmatprep.subr.bf16.mxu0 %v5424
  %8077 = vmatpush1.bf16.msra.mxu0 %v5423
  %8078 = vmatprep.subr.bf16.mxu0 %v5428
  %8079 = vmatpush1.bf16.msra.mxu0 %v5427
  %8080 = vmatprep.subr.bf16.mxu0 %v5432
  %8081 = vmatpush1.bf16.msra.mxu0 %v5431
  %8082 = vmatprep.subr.bf16.mxu0 %v5436
  %8083 = vmatpush1.bf16.msra.mxu0 %v5435
  %8084 = vmatprep.subr.bf16.mxu0 %v5440
  %8085 = vmatpush1.bf16.msra.mxu0 %v5439
  %8086 = vmatprep.subr.bf16.mxu0 %v5444
  %8087 = vmatpush1.bf16.msra.mxu0 %v5443
  %8088 = vmatprep.subr.bf16.mxu0 %v5448
  %8089 = vmatpush1.bf16.msra.mxu0 %v5447
  %8090 = vmatprep.subr.bf16.mxu0 %v5452
  %8091 = vmatpush1.bf16.msra.mxu0 %v5451
  %8092 = vmatprep.subr.bf16.mxu0 %v5456
  %8093 = vmatpush1.bf16.msra.mxu0 %v5455
  %8094 = vmatprep.mubr.bf16.mxu0 %v1264
  %8095 = vmatmul.mubr.bf16.gmra.mrb[0].mxu0 %v1263
  %v8096 = vpop.f32.mrb[0].mxu0
  %v8097 = vadd.f32 %v8046, %v8096
  %v8098 = vpop.f32.mrb[0].mxu0
  %v8099 = vadd.f32 %v8048, %v8098
  %v8100 = vpop.f32.mrb[0].mxu0
  %v8101 = vadd.f32 %v8050, %v8100
  %v8102 = vpop.f32.mrb[0].mxu0
  %v8103 = vadd.f32 %v8052, %v8102
  %8104 = vmatprep.mubr.bf16.mxu0 %v1296
  %8105 = vmatmul.mubr.bf16.gmra.mrb[0].mxu0 %v1295
  %v8106 = vpop.f32.mrb[0].mxu0
  %v8107 = vadd.f32 %v8056, %v8106
  %v8108 = vpop.f32.mrb[0].mxu0
  %v8109 = vadd.f32 %v8058, %v8108
  %v8110 = vpop.f32.mrb[0].mxu0
  %v8111 = vpop.f32.mrb[0].mxu0
  %8112 = vdwg.mxu0
  %v8113 = vlaneseq
  %v8114 = vshrl.u32 %v8113, 7
  %v8115 = vlaneseq
  %v8116 = vand.u32 %v8115, 127
  %v8117 = vmul.u32 %v8114, 9
  %vm8118 = vcmp.ge.s32.totalorder %v8116, %v8117
  %v8119 = vadd.s32 %v8117, 9
  %vm8120 = vcmp.lt.s32.totalorder %v8116, %v8119
  %vm8121 = vmand %vm8118, %vm8120
  %v8122 = vsel %vm8121, 1, 0
  %v8123 = vcvt.s32.f32 %v8122
  %v8124 = vadd.s32 %v8114, 8
  %v8125 = vadd.s32 %v8114, 16
  %v8126 = vmul.u32 %v8116, 9
  %vm8127 = vcmp.ge.s32.totalorder %v8114, %v8126
  %vm8128 = vcmp.ge.s32.totalorder %v8124, %v8126
  %vm8129 = vcmp.ge.s32.totalorder %v8125, %v8126
  %v8130 = vadd.s32 %v8126, 9
  %vm8131 = vcmp.lt.s32.totalorder %v8114, %v8130
  %vm8132 = vcmp.lt.s32.totalorder %v8124, %v8130
  %vm8133 = vcmp.lt.s32.totalorder %v8125, %v8130
  %vm8134 = vmand %vm8127, %vm8131
  %vm8135 = vmand %vm8128, %vm8132
  %vm8136 = vmand %vm8129, %vm8133
  %v8137 = vsel %vm8134, 1, 0
  %v8138 = vsel %vm8135, 1, 0
  %v8139 = vsel %vm8136, 1, 0
  %v8140 = vcvt.s32.f32 %v8137
  %v8141 = vcvt.s32.f32 %v8138
  %v8142 = vcvt.s32.f32 %v8139
  %vm8143 = vcmask 146432
  %v8145 = vsel %vm8143, %v8123, 0
  %vm8147 = vcmask 1041408
  %v8149 = vsel %vm8147, %v7291, 0
  %v8152 = vsel %vm8147, %v7293, 0
  %v8155 = vsel %vm8147, %v8107, 0
  %v8158 = vsel %vm8147, %v8109, 0
  %8160 = vmatprep.subr.mxu0 %v7283
  %8161 = vmatpush1.msra.mxu0 %v7281
  %8162 = vmatprep.subr.mxu0 %v7287
  %8163 = vmatpush1.msra.mxu0 %v7285
  %8164 = vmatprep.subr.mxu0 %v8152
  %8165 = vmatpush1.msra.mxu0 %v8149
  %8166 = vmatprep.subr.mxu0 0.0
  %8167 = vmatpush1.msra.mxu0 0.0
  %8168 = vmatprep.subr.mxu0 0.0
  %8169 = vmatpush1.msra.mxu0 0.0
  %8170 = vmatprep.subr.mxu0 0.0
  %8171 = vmatpush1.msra.mxu0 0.0
  %8172 = vmatprep.subr.mxu0 0.0
  %8173 = vmatpush1.msra.mxu0 0.0
  %8174 = vmatprep.subr.mxu0 0.0
  %8175 = vmatpush1.msra.mxu0 0.0
  %8176 = vmatprep.subr.mxu0 0.0
  %8177 = vmatpush1.msra.mxu0 0.0
  %8178 = vmatprep.subr.mxu0 0.0
  %8179 = vmatpush1.msra.mxu0 0.0
  %8180 = vmatprep.subr.mxu0 0.0
  %8181 = vmatpush1.msra.mxu0 0.0
  %8182 = vmatprep.subr.mxu0 0.0
  %8183 = vmatpush1.msra.mxu0 0.0
  %8184 = vmatprep.subr.mxu0 0.0
  %8185 = vmatpush1.msra.mxu0 0.0
  %8186 = vmatprep.subr.mxu0 0.0
  %8187 = vmatpush1.msra.mxu0 0.0
  %8188 = vmatprep.subr.mxu0 0.0
  %8189 = vmatpush1.msra.mxu0 0.0
  %8190 = vmatprep.subr.mxu0 0.0
  %8191 = vmatpush1.msra.mxu0 0.0
  %8192 = vmatprep.subr.mxu0 0.0
  %8193 = vmatpush1.msra.mxu0 0.0
  %8194 = vmatprep.subr.mxu0 0.0
  %8195 = vmatpush1.msra.mxu0 0.0
  %8196 = vmatprep.subr.mxu0 0.0
  %8197 = vmatpush1.msra.mxu0 0.0
  %8198 = vmatprep.subr.mxu0 0.0
  %8199 = vmatpush1.msra.mxu0 0.0
  %8200 = vmatprep.subr.mxu0 0.0
  %8201 = vmatpush1.msra.mxu0 0.0
  %8202 = vmatprep.subr.mxu0 0.0
  %8203 = vmatpush1.msra.mxu0 0.0
  %8204 = vmatprep.subr.mxu0 0.0
  %8205 = vmatpush1.msra.mxu0 0.0
  %8206 = vmatprep.subr.mxu0 0.0
  %8207 = vmatpush1.msra.mxu0 0.0
  %8208 = vmatprep.subr.mxu0 0.0
  %8209 = vmatpush1.msra.mxu0 0.0
  %8210 = vmatprep.subr.mxu0 0.0
  %8211 = vmatpush1.msra.mxu0 0.0
  %8212 = vmatprep.subr.mxu0 0.0
  %8213 = vmatpush1.msra.mxu0 0.0
  %8214 = vmatprep.subr.mxu0 0.0
  %8215 = vmatpush1.msra.mxu0 0.0
  %8216 = vmatprep.subr.mxu0 0.0
  %8217 = vmatpush1.msra.mxu0 0.0
  %8218 = vmatprep.subr.mxu0 0.0
  %8219 = vmatpush1.msra.mxu0 0.0
  %8220 = vmatprep.subr.mxu0 0.0
  %8221 = vmatpush1.msra.mxu0 0.0
  %8222 = vmatprep.subr.mxu0 0.0
  %8223 = vmatpush1.msra.mxu0 0.0
  %8224 = vmatprep.mubr.f32.mxu0 0.0
  %8225 = vmatmul.mubr.f32.gmra.mrb[0].mxu0 %v8145
  %v8226 = vpop.f32.mrb[0].mxu0
  %v8227 = vadd.f32 0.0, %v8226
  %v8228 = vpop.f32.mrb[0].mxu0
  %v8229 = vadd.f32 0.0, %v8228
  %8230 = vdwg.mxu0
  %8231 = vmatprep.subr.mxu0 %v8099
  %8232 = vmatpush1.msra.mxu0 %v8097
  %8233 = vmatprep.subr.mxu0 %v8103
  %8234 = vmatpush1.msra.mxu0 %v8101
  %8235 = vmatprep.subr.mxu0 %v8158
  %8236 = vmatpush1.msra.mxu0 %v8155
  %8237 = vmatprep.subr.mxu0 0.0
  %8238 = vmatpush1.msra.mxu0 0.0
  %8239 = vmatprep.subr.mxu0 0.0
  %8240 = vmatpush1.msra.mxu0 0.0
  %8241 = vmatprep.subr.mxu0 0.0
  %8242 = vmatpush1.msra.mxu0 0.0
  %8243 = vmatprep.subr.mxu0 0.0
  %8244 = vmatpush1.msra.mxu0 0.0
  %8245 = vmatprep.subr.mxu0 0.0
  %8246 = vmatpush1.msra.mxu0 0.0
  %8247 = vmatprep.subr.mxu0 0.0
  %8248 = vmatpush1.msra.mxu0 0.0
  %8249 = vmatprep.subr.mxu0 0.0
  %8250 = vmatpush1.msra.mxu0 0.0
  %8251 = vmatprep.subr.mxu0 0.0
  %8252 = vmatpush1.msra.mxu0 0.0
  %8253 = vmatprep.subr.mxu0 0.0
  %8254 = vmatpush1.msra.mxu0 0.0
  %8255 = vmatprep.subr.mxu0 0.0
  %8256 = vmatpush1.msra.mxu0 0.0
  %8257 = vmatprep.subr.mxu0 0.0
  %8258 = vmatpush1.msra.mxu0 0.0
  %8259 = vmatprep.subr.mxu0 0.0
  %8260 = vmatpush1.msra.mxu0 0.0
  %8261 = vmatprep.subr.mxu0 0.0
  %8262 = vmatpush1.msra.mxu0 0.0
  %8263 = vmatprep.subr.mxu0 0.0
  %8264 = vmatpush1.msra.mxu0 0.0
  %8265 = vmatprep.subr.mxu0 0.0
  %8266 = vmatpush1.msra.mxu0 0.0
  %8267 = vmatprep.subr.mxu0 0.0
  %8268 = vmatpush1.msra.mxu0 0.0
  %8269 = vmatprep.subr.mxu0 0.0
  %8270 = vmatpush1.msra.mxu0 0.0
  %8271 = vmatprep.subr.mxu0 0.0
  %8272 = vmatpush1.msra.mxu0 0.0
  %8273 = vmatprep.subr.mxu0 0.0
  %8274 = vmatpush1.msra.mxu0 0.0
  %8275 = vmatprep.subr.mxu0 0.0
  %8276 = vmatpush1.msra.mxu0 0.0
  %8277 = vmatprep.subr.mxu0 0.0
  %8278 = vmatpush1.msra.mxu0 0.0
  %8279 = vmatprep.subr.mxu0 0.0
  %8280 = vmatpush1.msra.mxu0 0.0
  %8281 = vmatprep.subr.mxu0 0.0
  %8282 = vmatpush1.msra.mxu0 0.0
  %8283 = vmatprep.subr.mxu0 0.0
  %8284 = vmatpush1.msra.mxu0 0.0
  %8285 = vmatprep.subr.mxu0 0.0
  %8286 = vmatpush1.msra.mxu0 0.0
  %8287 = vmatprep.subr.mxu0 0.0
  %8288 = vmatpush1.msra.mxu0 0.0
  %8289 = vmatprep.subr.mxu0 0.0
  %8290 = vmatpush1.msra.mxu0 0.0
  %8291 = vmatprep.subr.mxu0 0.0
  %8292 = vmatpush1.msra.mxu0 0.0
  %8293 = vmatprep.subr.mxu0 0.0
  %8294 = vmatpush1.msra.mxu0 0.0
  %8295 = vmatprep.mubr.f32.mxu0 0.0
  %8296 = vmatmul.mubr.f32.gmra.mrb[0].mxu0 %v8145
  %v8297 = vpop.f32.mrb[0].mxu0
  %v8298 = vadd.f32 0.0, %v8297
  %v8299 = vpop.f32.mrb[0].mxu0
  %v8300 = vadd.f32 0.0, %v8299
  %8301 = vdwg.mxu0
  %v8302 = vmul.f32 %v7281, %v7281
  %v8303 = vmul.f32 %v7283, %v7283
  %v8304 = vmul.f32 %v8097, %v8097
  %v8305 = vmul.f32 %v8099, %v8099
  %v8306 = vmul.f32 %v7285, %v7285
  %v8307 = vmul.f32 %v7287, %v7287
  %v8308 = vmul.f32 %v8101, %v8101
  %v8309 = vmul.f32 %v8103, %v8103
  %v8310 = vmul.f32 %v7291, %v7291
  %v8311 = vmul.f32 %v7293, %v7293
  %v8312 = vmul.f32 %v8107, %v8107
  %v8313 = vmul.f32 %v8109, %v8109
  %v8315 = vsel %vm8147, %v8310, 0
  %v8318 = vsel %vm8147, %v8311, 0
  %v8321 = vsel %vm8147, %v8312, 0
  %v8324 = vsel %vm8147, %v8313, 0
  %8326 = vmatprep.subr.mxu0 %v8303
  %8327 = vmatpush1.msra.mxu0 %v8302
  %8328 = vmatprep.subr.mxu0 %v8307
  %8329 = vmatpush1.msra.mxu0 %v8306
  %8330 = vmatprep.subr.mxu0 %v8318
  %8331 = vmatpush1.msra.mxu0 %v8315
  %8332 = vmatprep.subr.mxu0 0.0
  %8333 = vmatpush1.msra.mxu0 0.0
  %8334 = vmatprep.subr.mxu0 0.0
  %8335 = vmatpush1.msra.mxu0 0.0
  %8336 = vmatprep.subr.mxu0 0.0
  %8337 = vmatpush1.msra.mxu0 0.0
  %8338 = vmatprep.subr.mxu0 0.0
  %8339 = vmatpush1.msra.mxu0 0.0
  %8340 = vmatprep.subr.mxu0 0.0
  %8341 = vmatpush1.msra.mxu0 0.0
  %8342 = vmatprep.subr.mxu0 0.0
  %8343 = vmatpush1.msra.mxu0 0.0
  %8344 = vmatprep.subr.mxu0 0.0
  %8345 = vmatpush1.msra.mxu0 0.0
  %8346 = vmatprep.subr.mxu0 0.0
  %8347 = vmatpush1.msra.mxu0 0.0
  %8348 = vmatprep.subr.mxu0 0.0
  %8349 = vmatpush1.msra.mxu0 0.0
  %8350 = vmatprep.subr.mxu0 0.0
  %8351 = vmatpush1.msra.mxu0 0.0
  %8352 = vmatprep.subr.mxu0 0.0
  %8353 = vmatpush1.msra.mxu0 0.0
  %8354 = vmatprep.subr.mxu0 0.0
  %8355 = vmatpush1.msra.mxu0 0.0
  %8356 = vmatprep.subr.mxu0 0.0
  %8357 = vmatpush1.msra.mxu0 0.0
  %8358 = vmatprep.subr.mxu0 0.0
  %8359 = vmatpush1.msra.mxu0 0.0
  %8360 = vmatprep.subr.mxu0 0.0
  %8361 = vmatpush1.msra.mxu0 0.0
  %8362 = vmatprep.subr.mxu0 0.0
  %8363 = vmatpush1.msra.mxu0 0.0
  %8364 = vmatprep.subr.mxu0 0.0
  %8365 = vmatpush1.msra.mxu0 0.0
  %8366 = vmatprep.subr.mxu0 0.0
  %8367 = vmatpush1.msra.mxu0 0.0
  %8368 = vmatprep.subr.mxu0 0.0
  %8369 = vmatpush1.msra.mxu0 0.0
  %8370 = vmatprep.subr.mxu0 0.0
  %8371 = vmatpush1.msra.mxu0 0.0
  %8372 = vmatprep.subr.mxu0 0.0
  %8373 = vmatpush1.msra.mxu0 0.0
  %8374 = vmatprep.subr.mxu0 0.0
  %8375 = vmatpush1.msra.mxu0 0.0
  %8376 = vmatprep.subr.mxu0 0.0
  %8377 = vmatpush1.msra.mxu0 0.0
  %8378 = vmatprep.subr.mxu0 0.0
  %8379 = vmatpush1.msra.mxu0 0.0
  %8380 = vmatprep.subr.mxu0 0.0
  %8381 = vmatpush1.msra.mxu0 0.0
  %8382 = vmatprep.subr.mxu0 0.0
  %8383 = vmatpush1.msra.mxu0 0.0
  %8384 = vmatprep.subr.mxu0 0.0
  %8385 = vmatpush1.msra.mxu0 0.0
  %8386 = vmatprep.subr.mxu0 0.0
  %8387 = vmatpush1.msra.mxu0 0.0
  %8388 = vmatprep.subr.mxu0 0.0
  %8389 = vmatpush1.msra.mxu0 0.0
  %8390 = vmatprep.mubr.f32.mxu0 0.0
  %8391 = vmatmul.mubr.f32.gmra.mrb[0].mxu0 %v8145
  %v8392 = vpop.f32.mrb[0].mxu0
  %v8393 = vadd.f32 0.0, %v8392
  %v8394 = vpop.f32.mrb[0].mxu0
  %v8395 = vadd.f32 0.0, %v8394
  %8396 = vdwg.mxu0
  %8397 = vmatprep.subr.mxu0 %v8305
  %8398 = vmatpush1.msra.mxu0 %v8304
  %8399 = vmatprep.subr.mxu0 %v8309
  %8400 = vmatpush1.msra.mxu0 %v8308
  %8401 = vmatprep.subr.mxu0 %v8324
  %8402 = vmatpush1.msra.mxu0 %v8321
  %8403 = vmatprep.subr.mxu0 0.0
  %8404 = vmatpush1.msra.mxu0 0.0
  %8405 = vmatprep.subr.mxu0 0.0
  %8406 = vmatpush1.msra.mxu0 0.0
  %8407 = vmatprep.subr.mxu0 0.0
  %8408 = vmatpush1.msra.mxu0 0.0
  %8409 = vmatprep.subr.mxu0 0.0
  %8410 = vmatpush1.msra.mxu0 0.0
  %8411 = vmatprep.subr.mxu0 0.0
  %8412 = vmatpush1.msra.mxu0 0.0
  %8413 = vmatprep.subr.mxu0 0.0
  %8414 = vmatpush1.msra.mxu0 0.0
  %8415 = vmatprep.subr.mxu0 0.0
  %8416 = vmatpush1.msra.mxu0 0.0
  %8417 = vmatprep.subr.mxu0 0.0
  %8418 = vmatpush1.msra.mxu0 0.0
  %8419 = vmatprep.subr.mxu0 0.0
  %8420 = vmatpush1.msra.mxu0 0.0
  %8421 = vmatprep.subr.mxu0 0.0
  %8422 = vmatpush1.msra.mxu0 0.0
  %8423 = vmatprep.subr.mxu0 0.0
  %8424 = vmatpush1.msra.mxu0 0.0
  %8425 = vmatprep.subr.mxu0 0.0
  %8426 = vmatpush1.msra.mxu0 0.0
  %8427 = vmatprep.subr.mxu0 0.0
  %8428 = vmatpush1.msra.mxu0 0.0
  %8429 = vmatprep.subr.mxu0 0.0
  %8430 = vmatpush1.msra.mxu0 0.0
  %8431 = vmatprep.subr.mxu0 0.0
  %8432 = vmatpush1.msra.mxu0 0.0
  %8433 = vmatprep.subr.mxu0 0.0
  %8434 = vmatpush1.msra.mxu0 0.0
  %8435 = vmatprep.subr.mxu0 0.0
  %8436 = vmatpush1.msra.mxu0 0.0
  %8437 = vmatprep.subr.mxu0 0.0
  %8438 = vmatpush1.msra.mxu0 0.0
  %8439 = vmatprep.subr.mxu0 0.0
  %8440 = vmatpush1.msra.mxu0 0.0
  %8441 = vmatprep.subr.mxu0 0.0
  %8442 = vmatpush1.msra.mxu0 0.0
  %8443 = vmatprep.subr.mxu0 0.0
  %8444 = vmatpush1.msra.mxu0 0.0
  %8445 = vmatprep.subr.mxu0 0.0
  %8446 = vmatpush1.msra.mxu0 0.0
  %8447 = vmatprep.subr.mxu0 0.0
  %8448 = vmatpush1.msra.mxu0 0.0
  %8449 = vmatprep.subr.mxu0 0.0
  %8450 = vmatpush1.msra.mxu0 0.0
  %8451 = vmatprep.subr.mxu0 0.0
  %8452 = vmatpush1.msra.mxu0 0.0
  %8453 = vmatprep.subr.mxu0 0.0
  %8454 = vmatpush1.msra.mxu0 0.0
  %8455 = vmatprep.subr.mxu0 0.0
  %8456 = vmatpush1.msra.mxu0 0.0
  %8457 = vmatprep.subr.mxu0 0.0
  %8458 = vmatpush1.msra.mxu0 0.0
  %8459 = vmatprep.subr.mxu0 0.0
  %8460 = vmatpush1.msra.mxu0 0.0
  %8461 = vmatprep.mubr.f32.mxu0 0.0
  %8462 = vmatmul.mubr.f32.gmra.mrb[0].mxu0 %v8145
  %v8463 = vpop.f32.mrb[0].mxu0
  %v8464 = vadd.f32 0.0, %v8463
  %v8465 = vpop.f32.mrb[0].mxu0
  %v8466 = vadd.f32 0.0, %v8465
  %8467 = vdwg.mxu0
  %v8468 = vmul.f32 %v8227, 0.11111111
  %v8469 = vmul.f32 %v8229, 0.11111111
  %v8470 = vmul.f32 %v8298, 0.11111111
  %v8471 = vmul.f32 %v8300, 0.11111111
  %v8472 = vmul.f32 %v8393, 0.11111111
  %v8473 = vmul.f32 %v8395, 0.11111111
  %v8474 = vmul.f32 %v8464, 0.11111111
  %v8475 = vmul.f32 %v8466, 0.11111111
  %v8476 = vmul.f32 %v8468, %v8468
  %v8477 = vmul.f32 %v8469, %v8469
  %v8478 = vmul.f32 %v8470, %v8470
  %v8479 = vmul.f32 %v8471, %v8471
  %v8480 = vsub.f32 %v8472, %v8476
  %v8481 = vsub.f32 %v8473, %v8477
  %v8482 = vsub.f32 %v8474, %v8478
  %v8483 = vsub.f32 %v8475, %v8479
  %v8484 = vmax.f32 %v8480, 0.0
  %v8485 = vmax.f32 %v8481, 0.0
  %v8486 = vmax.f32 %v8482, 0.0
  %v8487 = vmax.f32 %v8483, 0.0
  %v8488 = vadd.f32 %v8484, 1e-05
  %v8489 = vadd.f32 %v8485, 1e-05
  %v8490 = vadd.f32 %v8486, 1e-05
  %v8491 = vadd.f32 %v8487, 1e-05
  %v8492 = vrsqrt.pop %v8488
  %v8493 = vrsqrt.pop %v8489
  %v8494 = vrsqrt.pop %v8490
  %v8495 = vrsqrt.pop %v8491
  %vm8496 = vcmask 15360
  %v8498 = vsel %vm8496, %v8140, 0
  %v8501 = vsel %vm8496, %v8141, 0
  %v8504 = vsel %vm8496, %v8142, 0
  %v8507 = vsel %vm8147, %v8468, 0
  %v8510 = vsel %vm8147, %v8469, 0
  %v8513 = vsel %vm8147, %v8470, 0
  %v8516 = vsel %vm8147, %v8471, 0
  %8518 = vmatprep.subr.mxu0 %v8510
  %8519 = vmatpush1.msra.mxu0 %v8507
  %8520 = vmatprep.subr.mxu0 0.0
  %8521 = vmatpush1.msra.mxu0 0.0
  %8522 = vmatprep.subr.mxu0 0.0
  %8523 = vmatpush1.msra.mxu0 0.0
  %8524 = vmatprep.subr.mxu0 0.0
  %8525 = vmatpush1.msra.mxu0 0.0
  %8526 = vmatprep.subr.mxu0 0.0
  %8527 = vmatpush1.msra.mxu0 0.0
  %8528 = vmatprep.subr.mxu0 0.0
  %8529 = vmatpush1.msra.mxu0 0.0
  %8530 = vmatprep.subr.mxu0 0.0
  %8531 = vmatpush1.msra.mxu0 0.0
  %8532 = vmatprep.subr.mxu0 0.0
  %8533 = vmatpush1.msra.mxu0 0.0
  %8534 = vmatprep.subr.mxu0 0.0
  %8535 = vmatpush1.msra.mxu0 0.0
  %8536 = vmatprep.subr.mxu0 0.0
  %8537 = vmatpush1.msra.mxu0 0.0
  %8538 = vmatprep.subr.mxu0 0.0
  %8539 = vmatpush1.msra.mxu0 0.0
  %8540 = vmatprep.subr.mxu0 0.0
  %8541 = vmatpush1.msra.mxu0 0.0
  %8542 = vmatprep.subr.mxu0 0.0
  %8543 = vmatpush1.msra.mxu0 0.0
  %8544 = vmatprep.subr.mxu0 0.0
  %8545 = vmatpush1.msra.mxu0 0.0
  %8546 = vmatprep.subr.mxu0 0.0
  %8547 = vmatpush1.msra.mxu0 0.0
  %8548 = vmatprep.subr.mxu0 0.0
  %8549 = vmatpush1.msra.mxu0 0.0
  %8550 = vmatprep.subr.mxu0 0.0
  %8551 = vmatpush1.msra.mxu0 0.0
  %8552 = vmatprep.subr.mxu0 0.0
  %8553 = vmatpush1.msra.mxu0 0.0
  %8554 = vmatprep.subr.mxu0 0.0
  %8555 = vmatpush1.msra.mxu0 0.0
  %8556 = vmatprep.subr.mxu0 0.0
  %8557 = vmatpush1.msra.mxu0 0.0
  %8558 = vmatprep.subr.mxu0 0.0
  %8559 = vmatpush1.msra.mxu0 0.0
  %8560 = vmatprep.subr.mxu0 0.0
  %8561 = vmatpush1.msra.mxu0 0.0
  %8562 = vmatprep.subr.mxu0 0.0
  %8563 = vmatpush1.msra.mxu0 0.0
  %8564 = vmatprep.subr.mxu0 0.0
  %8565 = vmatpush1.msra.mxu0 0.0
  %8566 = vmatprep.subr.mxu0 0.0
  %8567 = vmatpush1.msra.mxu0 0.0
  %8568 = vmatprep.subr.mxu0 0.0
  %8569 = vmatpush1.msra.mxu0 0.0
  %8570 = vmatprep.subr.mxu0 0.0
  %8571 = vmatpush1.msra.mxu0 0.0
  %8572 = vmatprep.subr.mxu0 0.0
  %8573 = vmatpush1.msra.mxu0 0.0
  %8574 = vmatprep.subr.mxu0 0.0
  %8575 = vmatpush1.msra.mxu0 0.0
  %8576 = vmatprep.subr.mxu0 0.0
  %8577 = vmatpush1.msra.mxu0 0.0
  %8578 = vmatprep.subr.mxu0 0.0
  %8579 = vmatpush1.msra.mxu0 0.0
  %8580 = vmatprep.subr.mxu0 0.0
  %8581 = vmatpush1.msra.mxu0 0.0
  %8582 = vmatprep.mubr.f32.mxu0 0.0
  %8583 = vmatmul.mubr.f32.gmra.mrb[0].mxu0 %v8498
  %v8584 = vpop.f32.mrb[0].mxu0
  %v8585 = vadd.f32 0.0, %v8584
  %v8586 = vpop.f32.mrb[0].mxu0
  %v8587 = vadd.f32 0.0, %v8586
  %8588 = vmatprep.mubr.f32.mxu0 0.0
  %8589 = vmatmul.mubr.f32.gmra.mrb[0].mxu0 %v8501
  %v8590 = vpop.f32.mrb[0].mxu0
  %v8591 = vadd.f32 0.0, %v8590
  %v8592 = vpop.f32.mrb[0].mxu0
  %v8593 = vadd.f32 0.0, %v8592
  %8594 = vmatprep.mubr.f32.mxu0 0.0
  %8595 = vmatmul.mubr.f32.gmra.mrb[0].mxu0 %v8504
  %v8596 = vpop.f32.mrb[0].mxu0
  %v8597 = vadd.f32 0.0, %v8596
  %v8598 = vpop.f32.mrb[0].mxu0
  %v8599 = vadd.f32 0.0, %v8598
  %8600 = vdwg.mxu0
  %8601 = vmatprep.subr.mxu0 %v8516
  %8602 = vmatpush1.msra.mxu0 %v8513
  %8603 = vmatprep.subr.mxu0 0.0
  %8604 = vmatpush1.msra.mxu0 0.0
  %8605 = vmatprep.subr.mxu0 0.0
  %8606 = vmatpush1.msra.mxu0 0.0
  %8607 = vmatprep.subr.mxu0 0.0
  %8608 = vmatpush1.msra.mxu0 0.0
  %8609 = vmatprep.subr.mxu0 0.0
  %8610 = vmatpush1.msra.mxu0 0.0
  %8611 = vmatprep.subr.mxu0 0.0
  %8612 = vmatpush1.msra.mxu0 0.0
  %8613 = vmatprep.subr.mxu0 0.0
  %8614 = vmatpush1.msra.mxu0 0.0
  %8615 = vmatprep.subr.mxu0 0.0
  %8616 = vmatpush1.msra.mxu0 0.0
  %8617 = vmatprep.subr.mxu0 0.0
  %8618 = vmatpush1.msra.mxu0 0.0
  %8619 = vmatprep.subr.mxu0 0.0
  %8620 = vmatpush1.msra.mxu0 0.0
  %8621 = vmatprep.subr.mxu0 0.0
  %8622 = vmatpush1.msra.mxu0 0.0
  %8623 = vmatprep.subr.mxu0 0.0
  %8624 = vmatpush1.msra.mxu0 0.0
  %8625 = vmatprep.subr.mxu0 0.0
  %8626 = vmatpush1.msra.mxu0 0.0
  %8627 = vmatprep.subr.mxu0 0.0
  %8628 = vmatpush1.msra.mxu0 0.0
  %8629 = vmatprep.subr.mxu0 0.0
  %8630 = vmatpush1.msra.mxu0 0.0
  %8631 = vmatprep.subr.mxu0 0.0
  %8632 = vmatpush1.msra.mxu0 0.0
  %8633 = vmatprep.subr.mxu0 0.0
  %8634 = vmatpush1.msra.mxu0 0.0
  %8635 = vmatprep.subr.mxu0 0.0
  %8636 = vmatpush1.msra.mxu0 0.0
  %8637 = vmatprep.subr.mxu0 0.0
  %8638 = vmatpush1.msra.mxu0 0.0
  %8639 = vmatprep.subr.mxu0 0.0
  %8640 = vmatpush1.msra.mxu0 0.0
  %8641 = vmatprep.subr.mxu0 0.0
  %8642 = vmatpush1.msra.mxu0 0.0
  %8643 = vmatprep.subr.mxu0 0.0
  %8644 = vmatpush1.msra.mxu0 0.0
  %8645 = vmatprep.subr.mxu0 0.0
  %8646 = vmatpush1.msra.mxu0 0.0
  %8647 = vmatprep.subr.mxu0 0.0
  %8648 = vmatpush1.msra.mxu0 0.0
  %8649 = vmatprep.subr.mxu0 0.0
  %8650 = vmatpush1.msra.mxu0 0.0
  %8651 = vmatprep.subr.mxu0 0.0
  %8652 = vmatpush1.msra.mxu0 0.0
  %8653 = vmatprep.subr.mxu0 0.0
  %8654 = vmatpush1.msra.mxu0 0.0
  %8655 = vmatprep.subr.mxu0 0.0
  %8656 = vmatpush1.msra.mxu0 0.0
  %8657 = vmatprep.subr.mxu0 0.0
  %8658 = vmatpush1.msra.mxu0 0.0
  %8659 = vmatprep.subr.mxu0 0.0
  %8660 = vmatpush1.msra.mxu0 0.0
  %8661 = vmatprep.subr.mxu0 0.0
  %8662 = vmatpush1.msra.mxu0 0.0
  %8663 = vmatprep.subr.mxu0 0.0
  %8664 = vmatpush1.msra.mxu0 0.0
  %8665 = vmatprep.mubr.f32.mxu0 0.0
  %8666 = vmatmul.mubr.f32.gmra.mrb[0].mxu0 %v8498
  %v8667 = vpop.f32.mrb[0].mxu0
  %v8668 = vadd.f32 0.0, %v8667
  %v8669 = vpop.f32.mrb[0].mxu0
  %v8670 = vadd.f32 0.0, %v8669
  %8671 = vmatprep.mubr.f32.mxu0 0.0
  %8672 = vmatmul.mubr.f32.gmra.mrb[0].mxu0 %v8501
  %v8673 = vpop.f32.mrb[0].mxu0
  %v8674 = vadd.f32 0.0, %v8673
  %v8675 = vpop.f32.mrb[0].mxu0
  %v8676 = vadd.f32 0.0, %v8675
  %8677 = vmatprep.mubr.f32.mxu0 0.0
  %8678 = vmatmul.mubr.f32.gmra.mrb[0].mxu0 %v8504
  %v8679 = vpop.f32.mrb[0].mxu0
  %v8680 = vadd.f32 0.0, %v8679
  %v8681 = vpop.f32.mrb[0].mxu0
  %v8682 = vadd.f32 0.0, %v8681
  %8683 = vdwg.mxu0
  %v8685 = vsel %vm8147, %v8492, 0
  %v8688 = vsel %vm8147, %v8493, 0
  %v8691 = vsel %vm8147, %v8494, 0
  %v8694 = vsel %vm8147, %v8495, 0
  %8696 = vmatprep.subr.mxu0 %v8688
  %8697 = vmatpush1.msra.mxu0 %v8685
  %8698 = vmatprep.subr.mxu0 0.0
  %8699 = vmatpush1.msra.mxu0 0.0
  %8700 = vmatprep.subr.mxu0 0.0
  %8701 = vmatpush1.msra.mxu0 0.0
  %8702 = vmatprep.subr.mxu0 0.0
  %8703 = vmatpush1.msra.mxu0 0.0
  %8704 = vmatprep.subr.mxu0 0.0
  %8705 = vmatpush1.msra.mxu0 0.0
  %8706 = vmatprep.subr.mxu0 0.0
  %8707 = vmatpush1.msra.mxu0 0.0
  %8708 = vmatprep.subr.mxu0 0.0
  %8709 = vmatpush1.msra.mxu0 0.0
  %8710 = vmatprep.subr.mxu0 0.0
  %8711 = vmatpush1.msra.mxu0 0.0
  %8712 = vmatprep.subr.mxu0 0.0
  %8713 = vmatpush1.msra.mxu0 0.0
  %8714 = vmatprep.subr.mxu0 0.0
  %8715 = vmatpush1.msra.mxu0 0.0
  %8716 = vmatprep.subr.mxu0 0.0
  %8717 = vmatpush1.msra.mxu0 0.0
  %8718 = vmatprep.subr.mxu0 0.0
  %8719 = vmatpush1.msra.mxu0 0.0
  %8720 = vmatprep.subr.mxu0 0.0
  %8721 = vmatpush1.msra.mxu0 0.0
  %8722 = vmatprep.subr.mxu0 0.0
  %8723 = vmatpush1.msra.mxu0 0.0
  %8724 = vmatprep.subr.mxu0 0.0
  %8725 = vmatpush1.msra.mxu0 0.0
  %8726 = vmatprep.subr.mxu0 0.0
  %8727 = vmatpush1.msra.mxu0 0.0
  %8728 = vmatprep.subr.mxu0 0.0
  %8729 = vmatpush1.msra.mxu0 0.0
  %8730 = vmatprep.subr.mxu0 0.0
  %8731 = vmatpush1.msra.mxu0 0.0
  %8732 = vmatprep.subr.mxu0 0.0
  %8733 = vmatpush1.msra.mxu0 0.0
  %8734 = vmatprep.subr.mxu0 0.0
  %8735 = vmatpush1.msra.mxu0 0.0
  %8736 = vmatprep.subr.mxu0 0.0
  %8737 = vmatpush1.msra.mxu0 0.0
  %8738 = vmatprep.subr.mxu0 0.0
  %8739 = vmatpush1.msra.mxu0 0.0
  %8740 = vmatprep.subr.mxu0 0.0
  %8741 = vmatpush1.msra.mxu0 0.0
  %8742 = vmatprep.subr.mxu0 0.0
  %8743 = vmatpush1.msra.mxu0 0.0
  %8744 = vmatprep.subr.mxu0 0.0
  %8745 = vmatpush1.msra.mxu0 0.0
  %8746 = vmatprep.subr.mxu0 0.0
  %8747 = vmatpush1.msra.mxu0 0.0
  %8748 = vmatprep.subr.mxu0 0.0
  %8749 = vmatpush1.msra.mxu0 0.0
  %8750 = vmatprep.subr.mxu0 0.0
  %8751 = vmatpush1.msra.mxu0 0.0
  %8752 = vmatprep.subr.mxu0 0.0
  %8753 = vmatpush1.msra.mxu0 0.0
  %8754 = vmatprep.subr.mxu0 0.0
  %8755 = vmatpush1.msra.mxu0 0.0
  %8756 = vmatprep.subr.mxu0 0.0
  %8757 = vmatpush1.msra.mxu0 0.0
  %8758 = vmatprep.subr.mxu0 0.0
  %8759 = vmatpush1.msra.mxu0 0.0
  %8760 = vmatprep.mubr.f32.mxu0 0.0
  %8761 = vmatmul.mubr.f32.gmra.mrb[0].mxu0 %v8498
  %v8762 = vpop.f32.mrb[0].mxu0
  %v8763 = vadd.f32 0.0, %v8762
  %v8764 = vpop.f32.mrb[0].mxu0
  %v8765 = vadd.f32 0.0, %v8764
  %8766 = vmatprep.mubr.f32.mxu0 0.0
  %8767 = vmatmul.mubr.f32.gmra.mrb[0].mxu0 %v8501
  %v8768 = vpop.f32.mrb[0].mxu0
  %v8769 = vadd.f32 0.0, %v8768
  %v8770 = vpop.f32.mrb[0].mxu0
  %v8771 = vadd.f32 0.0, %v8770
  %8772 = vmatprep.mubr.f32.mxu0 0.0
  %8773 = vmatmul.mubr.f32.gmra.mrb[0].mxu0 %v8504
  %v8774 = vpop.f32.mrb[0].mxu0
  %v8775 = vadd.f32 0.0, %v8774
  %v8776 = vpop.f32.mrb[0].mxu0
  %v8777 = vadd.f32 0.0, %v8776
  %8778 = vdwg.mxu0
  %8779 = vmatprep.subr.mxu0 %v8694
  %8780 = vmatpush1.msra.mxu0 %v8691
  %8781 = vmatprep.subr.mxu0 0.0
  %8782 = vmatpush1.msra.mxu0 0.0
  %8783 = vmatprep.subr.mxu0 0.0
  %8784 = vmatpush1.msra.mxu0 0.0
  %8785 = vmatprep.subr.mxu0 0.0
  %8786 = vmatpush1.msra.mxu0 0.0
  %8787 = vmatprep.subr.mxu0 0.0
  %8788 = vmatpush1.msra.mxu0 0.0
  %8789 = vmatprep.subr.mxu0 0.0
  %8790 = vmatpush1.msra.mxu0 0.0
  %8791 = vmatprep.subr.mxu0 0.0
  %8792 = vmatpush1.msra.mxu0 0.0
  %8793 = vmatprep.subr.mxu0 0.0
  %8794 = vmatpush1.msra.mxu0 0.0
  %8795 = vmatprep.subr.mxu0 0.0
  %8796 = vmatpush1.msra.mxu0 0.0
  %8797 = vmatprep.subr.mxu0 0.0
  %8798 = vmatpush1.msra.mxu0 0.0
  %8799 = vmatprep.subr.mxu0 0.0
  %8800 = vmatpush1.msra.mxu0 0.0
  %8801 = vmatprep.subr.mxu0 0.0
  %8802 = vmatpush1.msra.mxu0 0.0
  %8803 = vmatprep.subr.mxu0 0.0
  %8804 = vmatpush1.msra.mxu0 0.0
  %8805 = vmatprep.subr.mxu0 0.0
  %8806 = vmatpush1.msra.mxu0 0.0
  %8807 = vmatprep.subr.mxu0 0.0
  %8808 = vmatpush1.msra.mxu0 0.0
  %8809 = vmatprep.subr.mxu0 0.0
  %8810 = vmatpush1.msra.mxu0 0.0
  %8811 = vmatprep.subr.mxu0 0.0
  %8812 = vmatpush1.msra.mxu0 0.0
  %8813 = vmatprep.subr.mxu0 0.0
  %8814 = vmatpush1.msra.mxu0 0.0
  %8815 = vmatprep.subr.mxu0 0.0
  %8816 = vmatpush1.msra.mxu0 0.0
  %8817 = vmatprep.subr.mxu0 0.0
  %8818 = vmatpush1.msra.mxu0 0.0
  %8819 = vmatprep.subr.mxu0 0.0
  %8820 = vmatpush1.msra.mxu0 0.0
  %8821 = vmatprep.subr.mxu0 0.0
  %8822 = vmatpush1.msra.mxu0 0.0
  %8823 = vmatprep.subr.mxu0 0.0
  %8824 = vmatpush1.msra.mxu0 0.0
  %8825 = vmatprep.subr.mxu0 0.0
  %8826 = vmatpush1.msra.mxu0 0.0
  %8827 = vmatprep.subr.mxu0 0.0
  %8828 = vmatpush1.msra.mxu0 0.0
  %8829 = vmatprep.subr.mxu0 0.0
  %8830 = vmatpush1.msra.mxu0 0.0
  %8831 = vmatprep.subr.mxu0 0.0
  %8832 = vmatpush1.msra.mxu0 0.0
  %8833 = vmatprep.subr.mxu0 0.0
  %8834 = vmatpush1.msra.mxu0 0.0
  %8835 = vmatprep.subr.mxu0 0.0
  %8836 = vmatpush1.msra.mxu0 0.0
  %8837 = vmatprep.subr.mxu0 0.0
  %8838 = vmatpush1.msra.mxu0 0.0
  %8839 = vmatprep.subr.mxu0 0.0
  %8840 = vmatpush1.msra.mxu0 0.0
  %8841 = vmatprep.subr.mxu0 0.0
  %8842 = vmatpush1.msra.mxu0 0.0
  %8843 = vmatprep.mubr.f32.mxu0 0.0
  %8844 = vmatmul.mubr.f32.gmra.mrb[0].mxu0 %v8498
  %v8845 = vpop.f32.mrb[0].mxu0
  %v8846 = vadd.f32 0.0, %v8845
  %v8847 = vpop.f32.mrb[0].mxu0
  %v8848 = vadd.f32 0.0, %v8847
  %8849 = vmatprep.mubr.f32.mxu0 0.0
  %8850 = vmatmul.mubr.f32.gmra.mrb[0].mxu0 %v8501
  %v8851 = vpop.f32.mrb[0].mxu0
  %v8852 = vadd.f32 0.0, %v8851
  %v8853 = vpop.f32.mrb[0].mxu0
  %v8854 = vadd.f32 0.0, %v8853
  %8855 = vmatprep.mubr.f32.mxu0 0.0
  %8856 = vmatmul.mubr.f32.gmra.mrb[0].mxu0 %v8504
  %v8857 = vpop.f32.mrb[0].mxu0
  %v8858 = vadd.f32 0.0, %v8857
  %v8859 = vpop.f32.mrb[0].mxu0
  %v8860 = vadd.f32 0.0, %v8859
  %8861 = vdwg.mxu0
  %v8862 = vsub.f32 %v7281, %v8585
  %v8863 = vsub.f32 %v7283, %v8587
  %v8864 = vsub.f32 %v8097, %v8668
  %v8865 = vsub.f32 %v8099, %v8670
  %v8866 = vsub.f32 %v7285, %v8591
  %v8867 = vsub.f32 %v7287, %v8593
  %v8868 = vsub.f32 %v8101, %v8674
  %v8869 = vsub.f32 %v8103, %v8676
  %v8870 = vsub.f32 %v7291, %v8597
  %v8871 = vsub.f32 %v7293, %v8599
  %v8872 = vsub.f32 %v8107, %v8680
  %v8873 = vsub.f32 %v8109, %v8682
  %v8874 = vmul.f32 %v8862, %v8763
  %v8875 = vmul.f32 %v8863, %v8765
  %v8876 = vmul.f32 %v8864, %v8846
  %v8877 = vmul.f32 %v8865, %v8848
  %v8878 = vmul.f32 %v8866, %v8769
  %v8879 = vmul.f32 %v8867, %v8771
  %v8880 = vmul.f32 %v8868, %v8852
  %v8881 = vmul.f32 %v8869, %v8854
  %v8882 = vmul.f32 %v8870, %v8775
  %v8883 = vmul.f32 %v8871, %v8777
  %v8884 = vmul.f32 %v8872, %v8858
  %v8885 = vmul.f32 %v8873, %v8860
  %vm8886 = vcmp.gt.f32.partialorder %v8874, 0.0
  %vm8887 = vcmp.gt.f32.partialorder %v8875, 0.0
  %vm8888 = vcmp.gt.f32.partialorder %v8876, 0.0
  %vm8889 = vcmp.gt.f32.partialorder %v8877, 0.0
  %vm8890 = vcmp.gt.f32.partialorder %v8878, 0.0
  %vm8891 = vcmp.gt.f32.partialorder %v8879, 0.0
  %vm8892 = vcmp.gt.f32.partialorder %v8880, 0.0
  %vm8893 = vcmp.gt.f32.partialorder %v8881, 0.0
  %vm8894 = vcmp.gt.f32.partialorder %v8882, 0.0
  %vm8895 = vcmp.gt.f32.partialorder %v8883, 0.0
  %vm8896 = vcmp.gt.f32.partialorder %v8884, 0.0
  %vm8897 = vcmp.gt.f32.partialorder %v8885, 0.0
  %v8898 = vmul.f32 %v8874, 0.2
  %v8899 = vmul.f32 %v8875, 0.2
  %v8900 = vmul.f32 %v8876, 0.2
  %v8901 = vmul.f32 %v8877, 0.2
  %v8902 = vmul.f32 %v8878, 0.2
  %v8903 = vmul.f32 %v8879, 0.2
  %v8904 = vmul.f32 %v8880, 0.2
  %v8905 = vmul.f32 %v8881, 0.2
  %v8906 = vmul.f32 %v8882, 0.2
  %v8907 = vmul.f32 %v8883, 0.2
  %v8908 = vmul.f32 %v8884, 0.2
  %v8909 = vmul.f32 %v8885, 0.2
  %v8910 = vsel %vm8886, %v8874, %v8898
  %v8911 = vsel %vm8887, %v8875, %v8899
  %v8912 = vsel %vm8888, %v8876, %v8900
  %v8913 = vsel %vm8889, %v8877, %v8901
  %v8914 = vsel %vm8890, %v8878, %v8902
  %v8915 = vsel %vm8891, %v8879, %v8903
  %v8916 = vsel %vm8892, %v8880, %v8904
  %v8917 = vsel %vm8893, %v8881, %v8905
  %v8918 = vsel %vm8894, %v8882, %v8906
  %v8919 = vsel %vm8895, %v8883, %v8907
  %v8920 = vsel %vm8896, %v8884, %v8908
  %v8921 = vsel %vm8897, %v8885, %v8909
  %v8923 = vsel %vm8147, %v8918, 0
  %v8926 = vsel %vm8147, %v8919, 0
  %v8929 = vsel %vm8147, %v8920, 0
  %v8932 = vsel %vm8147, %v8921, 0
  %8934 = vmatprep.subr.mxu0 %v8911
  %8935 = vmatpush1.msra.mxu0 %v8910
  %8936 = vmatprep.subr.mxu0 %v8915
  %8937 = vmatpush1.msra.mxu0 %v8914
  %8938 = vmatprep.subr.mxu0 %v8926
  %8939 = vmatpush1.msra.mxu0 %v8923
  %8940 = vmatprep.subr.mxu0 0.0
  %8941 = vmatpush1.msra.mxu0 0.0
  %8942 = vmatprep.subr.mxu0 0.0
  %8943 = vmatpush1.msra.mxu0 0.0
  %8944 = vmatprep.subr.mxu0 0.0
  %8945 = vmatpush1.msra.mxu0 0.0
  %8946 = vmatprep.subr.mxu0 0.0
  %8947 = vmatpush1.msra.mxu0 0.0
  %8948 = vmatprep.subr.mxu0 0.0
  %8949 = vmatpush1.msra.mxu0 0.0
  %8950 = vmatprep.subr.mxu0 0.0
  %8951 = vmatpush1.msra.mxu0 0.0
  %8952 = vmatprep.subr.mxu0 0.0
  %8953 = vmatpush1.msra.mxu0 0.0
  %8954 = vmatprep.subr.mxu0 0.0
  %8955 = vmatpush1.msra.mxu0 0.0
  %8956 = vmatprep.subr.mxu0 0.0
  %8957 = vmatpush1.msra.mxu0 0.0
  %8958 = vmatprep.subr.mxu0 0.0
  %8959 = vmatpush1.msra.mxu0 0.0
  %8960 = vmatprep.subr.mxu0 0.0
  %8961 = vmatpush1.msra.mxu0 0.0
  %8962 = vmatprep.subr.mxu0 0.0
  %8963 = vmatpush1.msra.mxu0 0.0
  %8964 = vmatprep.subr.mxu0 0.0
  %8965 = vmatpush1.msra.mxu0 0.0
  %8966 = vmatprep.subr.mxu0 0.0
  %8967 = vmatpush1.msra.mxu0 0.0
  %8968 = vmatprep.subr.mxu0 0.0
  %8969 = vmatpush1.msra.mxu0 0.0
  %8970 = vmatprep.subr.mxu0 0.0
  %8971 = vmatpush1.msra.mxu0 0.0
  %8972 = vmatprep.subr.mxu0 0.0
  %8973 = vmatpush1.msra.mxu0 0.0
  %8974 = vmatprep.subr.mxu0 0.0
  %8975 = vmatpush1.msra.mxu0 0.0
  %8976 = vmatprep.subr.mxu0 0.0
  %8977 = vmatpush1.msra.mxu0 0.0
  %8978 = vmatprep.subr.mxu0 0.0
  %8979 = vmatpush1.msra.mxu0 0.0
  %8980 = vmatprep.subr.mxu0 0.0
  %8981 = vmatpush1.msra.mxu0 0.0
  %8982 = vmatprep.subr.mxu0 0.0
  %8983 = vmatpush1.msra.mxu0 0.0
  %8984 = vmatprep.subr.mxu0 0.0
  %8985 = vmatpush1.msra.mxu0 0.0
  %8986 = vmatprep.subr.mxu0 0.0
  %8987 = vmatpush1.msra.mxu0 0.0
  %8988 = vmatprep.subr.mxu0 0.0
  %8989 = vmatpush1.msra.mxu0 0.0
  %8990 = vmatprep.subr.mxu0 0.0
  %8991 = vmatpush1.msra.mxu0 0.0
  %8992 = vmatprep.subr.mxu0 0.0
  %8993 = vmatpush1.msra.mxu0 0.0
  %8994 = vmatprep.subr.mxu0 0.0
  %8995 = vmatpush1.msra.mxu0 0.0
  %8996 = vmatprep.subr.mxu0 0.0
  %8997 = vmatpush1.msra.mxu0 0.0
  %8998 = vmatprep.mubr.f32.mxu0 0.0
  %8999 = vmatmul.mubr.f32.gmra.mrb[0].mxu0 %v8145
  %v9000 = vpop.f32.mrb[0].mxu0
  %v9001 = vadd.f32 0.0, %v9000
  %v9002 = vpop.f32.mrb[0].mxu0
  %v9003 = vadd.f32 0.0, %v9002
  %9004 = vdwg.mxu0
  %9005 = vmatprep.subr.mxu0 %v8913
  %9006 = vmatpush1.msra.mxu0 %v8912
  %9007 = vmatprep.subr.mxu0 %v8917
  %9008 = vmatpush1.msra.mxu0 %v8916
  %9009 = vmatprep.subr.mxu0 %v8932
  %9010 = vmatpush1.msra.mxu0 %v8929
  %9011 = vmatprep.subr.mxu0 0.0
  %9012 = vmatpush1.msra.mxu0 0.0
  %9013 = vmatprep.subr.mxu0 0.0
  %9014 = vmatpush1.msra.mxu0 0.0
  %9015 = vmatprep.subr.mxu0 0.0
  %9016 = vmatpush1.msra.mxu0 0.0
  %9017 = vmatprep.subr.mxu0 0.0
  %9018 = vmatpush1.msra.mxu0 0.0
  %9019 = vmatprep.subr.mxu0 0.0
  %9020 = vmatpush1.msra.mxu0 0.0
  %9021 = vmatprep.subr.mxu0 0.0
  %9022 = vmatpush1.msra.mxu0 0.0
  %9023 = vmatprep.subr.mxu0 0.0
  %9024 = vmatpush1.msra.mxu0 0.0
  %9025 = vmatprep.subr.mxu0 0.0
  %9026 = vmatpush1.msra.mxu0 0.0
  %9027 = vmatprep.subr.mxu0 0.0
  %9028 = vmatpush1.msra.mxu0 0.0
  %9029 = vmatprep.subr.mxu0 0.0
  %9030 = vmatpush1.msra.mxu0 0.0
  %9031 = vmatprep.subr.mxu0 0.0
  %9032 = vmatpush1.msra.mxu0 0.0
  %9033 = vmatprep.subr.mxu0 0.0
  %9034 = vmatpush1.msra.mxu0 0.0
  %9035 = vmatprep.subr.mxu0 0.0
  %9036 = vmatpush1.msra.mxu0 0.0
  %9037 = vmatprep.subr.mxu0 0.0
  %9038 = vmatpush1.msra.mxu0 0.0
  %9039 = vmatprep.subr.mxu0 0.0
  %9040 = vmatpush1.msra.mxu0 0.0
  %9041 = vmatprep.subr.mxu0 0.0
  %9042 = vmatpush1.msra.mxu0 0.0
  %9043 = vmatprep.subr.mxu0 0.0
  %9044 = vmatpush1.msra.mxu0 0.0
  %9045 = vmatprep.subr.mxu0 0.0
  %9046 = vmatpush1.msra.mxu0 0.0
  %9047 = vmatprep.subr.mxu0 0.0
  %9048 = vmatpush1.msra.mxu0 0.0
  %9049 = vmatprep.subr.mxu0 0.0
  %9050 = vmatpush1.msra.mxu0 0.0
  %9051 = vmatprep.subr.mxu0 0.0
  %9052 = vmatpush1.msra.mxu0 0.0
  %9053 = vmatprep.subr.mxu0 0.0
  %9054 = vmatpush1.msra.mxu0 0.0
  %9055 = vmatprep.subr.mxu0 0.0
  %9056 = vmatpush1.msra.mxu0 0.0
  %9057 = vmatprep.subr.mxu0 0.0
  %9058 = vmatpush1.msra.mxu0 0.0
  %9059 = vmatprep.subr.mxu0 0.0
  %9060 = vmatpush1.msra.mxu0 0.0
  %9061 = vmatprep.subr.mxu0 0.0
  %9062 = vmatpush1.msra.mxu0 0.0
  %9063 = vmatprep.subr.mxu0 0.0
  %9064 = vmatpush1.msra.mxu0 0.0
  %9065 = vmatprep.subr.mxu0 0.0
  %9066 = vmatpush1.msra.mxu0 0.0
  %9067 = vmatprep.subr.mxu0 0.0
  %9068 = vmatpush1.msra.mxu0 0.0
  %9069 = vmatprep.mubr.f32.mxu0 0.0
  %9070 = vmatmul.mubr.f32.gmra.mrb[0].mxu0 %v8145
  %v9071 = vpop.f32.mrb[0].mxu0
  %v9072 = vadd.f32 0.0, %v9071
  %v9073 = vpop.f32.mrb[0].mxu0
  %v9074 = vadd.f32 0.0, %v9073
  %9075 = vdwg.mxu0
  %v9076 = vmul.f32 %v9001, 0.11111111
  %v9077 = vmul.f32 %v9003, 0.11111111
  %v9078 = vmul.f32 %v9072, 0.11111111
  %v9079 = vmul.f32 %v9074, 0.11111111
  %v9080 = vld [vmem:[%s2] sm:$0xff]
  %v9081 = vld [vmem:[%s2 + $0x8] sm:$0xff]
  %v9082 = vld [vmem:[%s2 + $0x10] sm:$0xff]
  %v9083 = vld [vmem:[%s2 + $0x18] sm:$0xff]
  %v9084 = vld [vmem:[%s2 + $0x20] sm:$0xff]
  %v9085 = vld [vmem:[%s2 + $0x28] sm:$0xff]
  %v9086 = vld [vmem:[%s2 + $0x30] sm:$0xff]
  %v9087 = vld [vmem:[%s2 + $0x38] sm:$0xff]
  %v9088 = vld [vmem:[%s2 + $0x40] sm:$0xff]
  %v9089 = vld [vmem:[%s2 + $0x48] sm:$0xff]
  %v9090 = vld [vmem:[%s2 + $0x50] sm:$0xff]
  %v9091 = vld [vmem:[%s2 + $0x58] sm:$0xff]
  %v9092 = vld [vmem:[%s2 + $0x60] sm:$0xff]
  %v9093 = vld [vmem:[%s2 + $0x68] sm:$0xff]
  %v9094 = vld [vmem:[%s2 + $0x70] sm:$0xff]
  %v9095 = vld [vmem:[%s2 + $0x78] sm:$0xff]
  %v9096 = vld [vmem:[%s2 + $0x80] sm:$0xff]
  %v9097 = vld [vmem:[%s2 + $0x88] sm:$0xff]
  %v9098 = vld [vmem:[%s2 + $0x90] sm:$0xff]
  %v9099 = vld [vmem:[%s2 + $0x98] sm:$0xff]
  %v9100 = vld [vmem:[%s2 + $0xa0] sm:$0xff]
  %v9101 = vld [vmem:[%s2 + $0xa8] sm:$0xff]
  %v9102 = vld [vmem:[%s2 + $0xb0] sm:$0xff]
  %v9103 = vld [vmem:[%s2 + $0xb8] sm:$0xff]
  %v9104 = vld [vmem:[%s2 + $0xc0] sm:$0xff]
  %v9105 = vld [vmem:[%s2 + $0xc8] sm:$0xff]
  %v9106 = vld [vmem:[%s2 + $0xd0] sm:$0xff]
  %v9107 = vld [vmem:[%s2 + $0xd8] sm:$0xff]
  %v9108 = vld [vmem:[%s2 + $0xe0] sm:$0xff]
  %v9109 = vld [vmem:[%s2 + $0xe8] sm:$0xff]
  %v9110 = vld [vmem:[%s2 + $0xf0] sm:$0xff]
  %v9111 = vld [vmem:[%s2 + $0xf8] sm:$0xff]
  %v9112 = vld [vmem:[%s2 + $0x100] sm:$0xff]
  %v9113 = vld [vmem:[%s2 + $0x108] sm:$0xff]
  %v9114 = vld [vmem:[%s2 + $0x110] sm:$0xff]
  %v9115 = vld [vmem:[%s2 + $0x118] sm:$0xff]
  %v9116 = vld [vmem:[%s2 + $0x120] sm:$0xff]
  %v9117 = vld [vmem:[%s2 + $0x128] sm:$0xff]
  %v9118 = vld [vmem:[%s2 + $0x130] sm:$0xff]
  %v9119 = vld [vmem:[%s2 + $0x138] sm:$0xff]
  %v9120 = vld [vmem:[%s2 + $0x140] sm:$0xff]
  %v9121 = vld [vmem:[%s2 + $0x148] sm:$0xff]
  %v9122 = vld [vmem:[%s2 + $0x150] sm:$0xff]
  %v9123 = vld [vmem:[%s2 + $0x158] sm:$0xff]
  %v9124 = vld [vmem:[%s2 + $0x160] sm:$0xff]
  %v9125 = vld [vmem:[%s2 + $0x168] sm:$0xff]
  %v9126 = vld [vmem:[%s2 + $0x170] sm:$0xff]
  %v9127 = vld [vmem:[%s2 + $0x178] sm:$0xff]
  %v9128 = vld [vmem:[%s2 + $0x180] sm:$0xff]
  %v9129 = vld [vmem:[%s2 + $0x188] sm:$0xff]
  %v9130 = vld [vmem:[%s2 + $0x190] sm:$0xff]
  %v9131 = vld [vmem:[%s2 + $0x198] sm:$0xff]
  %v9132 = vld [vmem:[%s2 + $0x1a0] sm:$0xff]
  %v9133 = vld [vmem:[%s2 + $0x1a8] sm:$0xff]
  %v9134 = vld [vmem:[%s2 + $0x1b0] sm:$0xff]
  %v9135 = vld [vmem:[%s2 + $0x1b8] sm:$0xff]
  %v9136 = vld [vmem:[%s2 + $0x1c0] sm:$0xff]
  %v9137 = vld [vmem:[%s2 + $0x1c8] sm:$0xff]
  %v9138 = vld [vmem:[%s2 + $0x1d0] sm:$0xff]
  %v9139 = vld [vmem:[%s2 + $0x1d8] sm:$0xff]
  %v9140 = vld [vmem:[%s2 + $0x1e0] sm:$0xff]
  %v9141 = vld [vmem:[%s2 + $0x1e8] sm:$0xff]
  %v9142 = vld [vmem:[%s2 + $0x1f0] sm:$0xff]
  %v9143 = vld [vmem:[%s2 + $0x1f8] sm:$0xff]
  %v9144 = vld [vmem:[%s3] sm:$0x1]
  %v9146 = vlaneseq
  %v9147 = vshrl.u32 %v9146, 7
  %v9148 = vsub.s32 0, %v9147
  %v9149 = vrot.slane %v9144, %v9148
  %9151 = vmatprep.subr.mxu0 0.0
  %9152 = vmatpush1.msra.mxu0 %v9080
  %9153 = vmatprep.subr.mxu0 0.0
  %9154 = vmatpush1.msra.mxu0 %v9081
  %9155 = vmatprep.subr.mxu0 0.0
  %9156 = vmatpush1.msra.mxu0 %v9082
  %9157 = vmatprep.subr.mxu0 0.0
  %9158 = vmatpush1.msra.mxu0 %v9083
  %9159 = vmatprep.subr.mxu0 0.0
  %9160 = vmatpush1.msra.mxu0 %v9084
  %9161 = vmatprep.subr.mxu0 0.0
  %9162 = vmatpush1.msra.mxu0 %v9085
  %9163 = vmatprep.subr.mxu0 0.0
  %9164 = vmatpush1.msra.mxu0 %v9086
  %9165 = vmatprep.subr.mxu0 0.0
  %9166 = vmatpush1.msra.mxu0 %v9087
  %9167 = vmatprep.subr.mxu0 0.0
  %9168 = vmatpush1.msra.mxu0 %v9088
  %9169 = vmatprep.subr.mxu0 0.0
  %9170 = vmatpush1.msra.mxu0 %v9089
  %9171 = vmatprep.subr.mxu0 0.0
  %9172 = vmatpush1.msra.mxu0 %v9090
  %9173 = vmatprep.subr.mxu0 0.0
  %9174 = vmatpush1.msra.mxu0 %v9091
  %9175 = vmatprep.subr.mxu0 0.0
  %9176 = vmatpush1.msra.mxu0 %v9092
  %9177 = vmatprep.subr.mxu0 0.0
  %9178 = vmatpush1.msra.mxu0 %v9093
  %9179 = vmatprep.subr.mxu0 0.0
  %9180 = vmatpush1.msra.mxu0 %v9094
  %9181 = vmatprep.subr.mxu0 0.0
  %9182 = vmatpush1.msra.mxu0 %v9095
  %9183 = vmatprep.subr.mxu0 0.0
  %9184 = vmatpush1.msra.mxu0 %v9096
  %9185 = vmatprep.subr.mxu0 0.0
  %9186 = vmatpush1.msra.mxu0 %v9097
  %9187 = vmatprep.subr.mxu0 0.0
  %9188 = vmatpush1.msra.mxu0 %v9098
  %9189 = vmatprep.subr.mxu0 0.0
  %9190 = vmatpush1.msra.mxu0 %v9099
  %9191 = vmatprep.subr.mxu0 0.0
  %9192 = vmatpush1.msra.mxu0 %v9100
  %9193 = vmatprep.subr.mxu0 0.0
  %9194 = vmatpush1.msra.mxu0 %v9101
  %9195 = vmatprep.subr.mxu0 0.0
  %9196 = vmatpush1.msra.mxu0 %v9102
  %9197 = vmatprep.subr.mxu0 0.0
  %9198 = vmatpush1.msra.mxu0 %v9103
  %9199 = vmatprep.subr.mxu0 0.0
  %9200 = vmatpush1.msra.mxu0 %v9104
  %9201 = vmatprep.subr.mxu0 0.0
  %9202 = vmatpush1.msra.mxu0 %v9105
  %9203 = vmatprep.subr.mxu0 0.0
  %9204 = vmatpush1.msra.mxu0 %v9106
  %9205 = vmatprep.subr.mxu0 0.0
  %9206 = vmatpush1.msra.mxu0 %v9107
  %9207 = vmatprep.subr.mxu0 0.0
  %9208 = vmatpush1.msra.mxu0 %v9108
  %9209 = vmatprep.subr.mxu0 0.0
  %9210 = vmatpush1.msra.mxu0 %v9109
  %9211 = vmatprep.subr.mxu0 0.0
  %9212 = vmatpush1.msra.mxu0 %v9110
  %9213 = vmatprep.subr.mxu0 0.0
  %9214 = vmatpush1.msra.mxu0 %v9111
  %9215 = vmatprep.mubr.f32.mxu0 %v9077
  %9216 = vmatmul.mubr.f32.gmra.mrb[0].mxu0 %v9076
  %v9217 = vpop.f32.mrb[0].mxu0
  %v9218 = vadd.f32 %v9149, %v9217
  %v9219 = vpop.f32.mrb[0].mxu0
  %9220 = vdwg.mxu0
  %9221 = vmatprep.subr.mxu0 0.0
  %9222 = vmatpush1.msra.mxu0 %v9112
  %9223 = vmatprep.subr.mxu0 0.0
  %9224 = vmatpush1.msra.mxu0 %v9113
  %9225 = vmatprep.subr.mxu0 0.0
  %9226 = vmatpush1.msra.mxu0 %v9114
  %9227 = vmatprep.subr.mxu0 0.0
  %9228 = vmatpush1.msra.mxu0 %v9115
  %9229 = vmatprep.subr.mxu0 0.0
  %9230 = vmatpush1.msra.mxu0 %v9116
  %9231 = vmatprep.subr.mxu0 0.0
  %9232 = vmatpush1.msra.mxu0 %v9117
  %9233 = vmatprep.subr.mxu0 0.0
  %9234 = vmatpush1.msra.mxu0 %v9118
  %9235 = vmatprep.subr.mxu0 0.0
  %9236 = vmatpush1.msra.mxu0 %v9119
  %9237 = vmatprep.subr.mxu0 0.0
  %9238 = vmatpush1.msra.mxu0 %v9120
  %9239 = vmatprep.subr.mxu0 0.0
  %9240 = vmatpush1.msra.mxu0 %v9121
  %9241 = vmatprep.subr.mxu0 0.0
  %9242 = vmatpush1.msra.mxu0 %v9122
  %9243 = vmatprep.subr.mxu0 0.0
  %9244 = vmatpush1.msra.mxu0 %v9123
  %9245 = vmatprep.subr.mxu0 0.0
  %9246 = vmatpush1.msra.mxu0 %v9124
  %9247 = vmatprep.subr.mxu0 0.0
  %9248 = vmatpush1.msra.mxu0 %v9125
  %9249 = vmatprep.subr.mxu0 0.0
  %9250 = vmatpush1.msra.mxu0 %v9126
  %9251 = vmatprep.subr.mxu0 0.0
  %9252 = vmatpush1.msra.mxu0 %v9127
  %9253 = vmatprep.subr.mxu0 0.0
  %9254 = vmatpush1.msra.mxu0 %v9128
  %9255 = vmatprep.subr.mxu0 0.0
  %9256 = vmatpush1.msra.mxu0 %v9129
  %9257 = vmatprep.subr.mxu0 0.0
  %9258 = vmatpush1.msra.mxu0 %v9130
  %9259 = vmatprep.subr.mxu0 0.0
  %9260 = vmatpush1.msra.mxu0 %v9131
  %9261 = vmatprep.subr.mxu0 0.0
  %9262 = vmatpush1.msra.mxu0 %v9132
  %9263 = vmatprep.subr.mxu0 0.0
  %9264 = vmatpush1.msra.mxu0 %v9133
  %9265 = vmatprep.subr.mxu0 0.0
  %9266 = vmatpush1.msra.mxu0 %v9134
  %9267 = vmatprep.subr.mxu0 0.0
  %9268 = vmatpush1.msra.mxu0 %v9135
  %9269 = vmatprep.subr.mxu0 0.0
  %9270 = vmatpush1.msra.mxu0 %v9136
  %9271 = vmatprep.subr.mxu0 0.0
  %9272 = vmatpush1.msra.mxu0 %v9137
  %9273 = vmatprep.subr.mxu0 0.0
  %9274 = vmatpush1.msra.mxu0 %v9138
  %9275 = vmatprep.subr.mxu0 0.0
  %9276 = vmatpush1.msra.mxu0 %v9139
  %9277 = vmatprep.subr.mxu0 0.0
  %9278 = vmatpush1.msra.mxu0 %v9140
  %9279 = vmatprep.subr.mxu0 0.0
  %9280 = vmatpush1.msra.mxu0 %v9141
  %9281 = vmatprep.subr.mxu0 0.0
  %9282 = vmatpush1.msra.mxu0 %v9142
  %9283 = vmatprep.subr.mxu0 0.0
  %9284 = vmatpush1.msra.mxu0 %v9143
  %9285 = vmatprep.mubr.f32.mxu0 %v9079
  %9286 = vmatmul.mubr.f32.gmra.mrb[0].mxu0 %v9078
  %v9287 = vpop.f32.mrb[0].mxu0
  %v9288 = vadd.f32 %v9218, %v9287
  %v9289 = vpop.f32.mrb[0].mxu0
  %9290 = vdwg.mxu0
  %9291 = vst [vmem:[%s4] sm:$0x3] %v9288
  // Predicated region
  $region18: #{discriminator_forward.7} parent=0 // pred_check
    _
  $region19: #{discriminator_forward.7} parent=0 // pred_check_branch
    %9293 = sbr.rel (0) target = $region21
  $region20: #{discriminator_forward.7} parent=0 // pred_region
    _
  $region21: #{discriminator_forward.7} parent=0 // pred_fallthru
    _
  // Predicated region
  $region22: #{discriminator_forward.7} parent=0 // pred_check
    _
  $region23: #{discriminator_forward.7} parent=0 // pred_check_branch
    %9295 = sbr.rel (0) target = $region25
  $region24: #{discriminator_forward.7} parent=0 // pred_region
    _
  $region25: #{discriminator_forward.7} parent=0 // pred_fallthru
    _

</llo_original>
